<compile_context>
chip_gen: v6e
topology: v6e:2x2x1
jax: 0.10.0
libtpu: 0.0.40
codegen_flags: <defaults>
</compile_context>

<pallas_src>
import functools

import numpy as np
import jax
import jax.numpy as jnp
from jax.experimental import pallas as pl
from jax.experimental.pallas import tpu as pltpu


def _shift_rows(y, offset):
    """z[i] = y[i + offset] within the tile; zero-filled where out of range."""
    rows = abs(int(offset))
    tm, c = y.shape
    if rows == 0:
        return y
    if rows >= tm:
        return jnp.zeros_like(y)
    zeros = jnp.zeros((rows, c), y.dtype)
    if offset < 0:                                   # z[i] = y[i - rows]
        return jnp.concatenate([zeros, y[:-rows, :]], axis=0)
    return jnp.concatenate([y[rows:, :], zeros], axis=0)   # z[i] = y[i + rows]


def _block8_kernel(x_ref, wpos_ref, hpos_ref,
                   w0_ref, b0_ref, w1a_ref, b1a_ref,
                   wb_ref, bb_ref, wc_ref, bc_ref,
                   wd0_ref, wd1_ref, bd_ref,
                   o_ref, *, width, height, no_relu):
    f32, bf16 = jnp.float32, jnp.bfloat16

    x_f32 = x_ref[...]                       # (tm, 2080) f32 -- also the residual
    x_bf = x_f32.astype(bf16)
    wpos = wpos_ref[...]                     # (tm, 1) i32 : w coordinate of row
    hpos = hpos_ref[...]                     # (tm, 1) i32 : h coordinate of row

    # branch0: 1x1 conv (+ folded BN) + ReLU                          -> (tm, 192)
    x0 = jnp.maximum(
        jnp.dot(x_bf, w0_ref[...], preferred_element_type=f32) + b0_ref[...], 0.0)

    # branch1[0]: 1x1 conv (+ folded BN) + ReLU                       -> (tm, 192)
    y = jnp.maximum(
        jnp.dot(x_bf, w1a_ref[...], preferred_element_type=f32) + b1a_ref[...], 0.0)

    # branch1[1]: (1,3) conv, padding (0,1) == three shifted matmuls  -> (tm, 224)
    left = jnp.where(wpos == 0, 0.0, _shift_rows(y, -1))          # y at (h, w-1)
    right = jnp.where(wpos == width - 1, 0.0, _shift_rows(y, +1))  # y at (h, w+1)
    acc = jnp.dot(left.astype(bf16), wb_ref[0], preferred_element_type=f32)
    acc = acc + jnp.dot(y.astype(bf16), wb_ref[1], preferred_element_type=f32)
    acc = acc + jnp.dot(right.astype(bf16), wb_ref[2], preferred_element_type=f32)
    y = jnp.maximum(acc + bb_ref[...], 0.0)

    # branch1[2]: (3,1) conv, padding (1,0) == three shifted matmuls  -> (tm, 256)
    up = jnp.where(hpos == 0, 0.0, _shift_rows(y, -width))             # (h-1, w)
    down = jnp.where(hpos == height - 1, 0.0, _shift_rows(y, +width))  # (h+1, w)
    acc = jnp.dot(up.astype(bf16), wc_ref[0], preferred_element_type=f32)
    acc = acc + jnp.dot(y.astype(bf16), wc_ref[1], preferred_element_type=f32)
    acc = acc + jnp.dot(down.astype(bf16), wc_ref[2], preferred_element_type=f32)
    x1 = jnp.maximum(acc + bc_ref[...], 0.0)

    # conv2d(cat[x0, x1]) with `scale` folded into wd*/bd, + residual (+ ReLU)
    out = jnp.dot(x0.astype(bf16), wd0_ref[...], preferred_element_type=f32)
    out = out + jnp.dot(x1.astype(bf16), wd1_ref[...], preferred_element_type=f32)
    out = out + bd_ref[...] + x_f32
    if not no_relu:
        out = jnp.maximum(out, 0.0)
    o_ref[...] = out.astype(o_ref.dtype)


def _pick_rows_per_tile(n_img, hw, cap=256):
    """Rows per grid step: whole images per tile, sublane aligned, prefer >=2 steps."""
    divs = [k for k in range(1, n_img + 1)
            if n_img % k == 0 and ((k * hw) % 8 == 0 or k == n_img)]
    good = [k for k in divs if k * hw <= cap]
    if good:
        multi = [k for k in good if n_img // k >= 2]
        k = max(multi) if multi else max(good)
    else:
        k = min(divs)
    return k * hw


def block8_forward(x_nchw, params, *, scale=1.0, noReLU=False):
    n, c, h, w = x_nchw.shape
    assert c == 2080, "Block8 expects 2080 input channels"
    m = n * h * w
    xf = jnp.transpose(x_nchw, (0, 2, 3, 1)).astype(jnp.float32).reshape(m, c)

    tm = _pick_rows_per_tile(n, h * w)
    grid = (m // tm,)

    # Host-side spatial coordinates (one i32 column each); used for the 'same'
    # padding masks of the (1,3)/(3,1) convs inside the kernel.
    pos = np.arange(m, dtype=np.int32) % (h * w)
    wpos = jnp.asarray((pos % w).reshape(m, 1))
    hpos = jnp.asarray((pos // w).reshape(m, 1))

    bf16, f32 = jnp.bfloat16, jnp.float32
    w0 = params["b0_w"].astype(bf16)
    b0 = params["b0_b"].reshape(1, -1).astype(f32)
    w1a = params["b1a_w"].astype(bf16)
    b1a = params["b1a_b"].reshape(1, -1).astype(f32)
    wb = params["b1b_w"].astype(bf16)                 # (3, 192, 224)
    bb = params["b1b_b"].reshape(1, -1).astype(f32)
    wc = params["b1c_w"].astype(bf16)                 # (3, 224, 256)
    bc = params["b1c_b"].reshape(1, -1).astype(f32)
    wd0 = (params["c2_w0"] * scale).astype(bf16)      # (192, 2080), scale folded
    wd1 = (params["c2_w1"] * scale).astype(bf16)      # (256, 2080), scale folded
    bd = (params["c2_b"] * scale).reshape(1, -1).astype(f32)

    kern = functools.partial(_block8_kernel, width=w, height=h, no_relu=noReLU)

    out = pl.pallas_call(
        kern,
        out_shape=jax.ShapeDtypeStruct((m, c), jnp.float32),
        grid_spec=pltpu.PrefetchScalarGridSpec(
            num_scalar_prefetch=0,
            grid=grid,
            in_specs=[
                pl.BlockSpec((tm, c), lambda i: (i, 0)),            # x / residual
                pl.BlockSpec((tm, 1), lambda i: (i, 0)),            # wpos
                pl.BlockSpec((tm, 1), lambda i: (i, 0)),            # hpos
                pl.BlockSpec((c, 192), lambda i: (0, 0)),           # w0
                pl.BlockSpec((1, 192), lambda i: (0, 0)),           # b0
                pl.BlockSpec((c, 192), lambda i: (0, 0)),           # w1a
                pl.BlockSpec((1, 192), lambda i: (0, 0)),           # b1a
                pl.BlockSpec((3, 192, 224), lambda i: (0, 0, 0)),   # wb (kw, ci, co)
                pl.BlockSpec((1, 224), lambda i: (0, 0)),           # bb
                pl.BlockSpec((3, 224, 256), lambda i: (0, 0, 0)),   # wc (kh, ci, co)
                pl.BlockSpec((1, 256), lambda i: (0, 0)),           # bc
                pl.BlockSpec((192, c), lambda i: (0, 0)),           # wd0
                pl.BlockSpec((256, c), lambda i: (0, 0)),           # wd1
                pl.BlockSpec((1, c), lambda i: (0, 0)),             # bd
            ],
            out_specs=pl.BlockSpec((tm, c), lambda i: (i, 0)),
        ),
        compiler_params=pltpu.CompilerParams(
            dimension_semantics=("parallel",),
            vmem_limit_bytes=48 * 1024 * 1024),
    )(xf, wpos, hpos, w0, b0, w1a, b1a, wb, bb, wc, bc, wd0, wd1, bd)

    return jnp.transpose(out.reshape(n, h, w, c), (0, 3, 1, 2))   # back to NCHW


def init_block8_params(key, eps=1e-3):
    """Deterministic synthetic parameters matching Block8's shapes, BN pre-folded."""
    ks = jax.random.split(key, 10)

    def conv_w(k, shape):
        return jax.random.normal(k, shape, jnp.float32) * 0.02

    def bn(k, cdim):
        k1, k2, k3, k4 = jax.random.split(k, 4)
        gamma = 1.0 + 0.1 * jax.random.normal(k1, (cdim,), jnp.float32)
        beta = 0.1 * jax.random.normal(k2, (cdim,), jnp.float32)
        mean = 0.1 * jax.random.normal(k3, (cdim,), jnp.float32)
        var = 0.5 + jnp.abs(jax.random.normal(k4, (cdim,), jnp.float32))
        return gamma, beta, mean, var

    def fold(w_co_last, bnp):        # BN fold; output channel is the last dim of w
        gamma, beta, mean, var = bnp
        s = gamma / jnp.sqrt(var + eps)
        return w_co_last * s, beta - mean * s

    p = {}
    # branch0: BasicConv2d(2080 -> 192, 1x1);   (co,ci,1,1) -> (ci, co)
    w = jnp.transpose(conv_w(ks[0], (192, 2080, 1, 1))[:, :, 0, 0], (1, 0))
    p["b0_w"], p["b0_b"] = fold(w, bn(ks[1], 192))
    # branch1[0]: BasicConv2d(2080 -> 192, 1x1)
    w = jnp.transpose(conv_w(ks[2], (192, 2080, 1, 1))[:, :, 0, 0], (1, 0))
    p["b1a_w"], p["b1a_b"] = fold(w, bn(ks[3], 192))
    # branch1[1]: BasicConv2d(192 -> 224, (1,3), pad (0,1)); (co,ci,1,kw) -> (kw, ci, co)
    w = jnp.transpose(conv_w(ks[4], (224, 192, 1, 3))[:, :, 0, :], (2, 1, 0))
    p["b1b_w"], p["b1b_b"] = fold(w, bn(ks[5], 224))
    # branch1[2]: BasicConv2d(224 -> 256, (3,1), pad (1,0)); (co,ci,kh,1) -> (kh, ci, co)
    w = jnp.transpose(conv_w(ks[6], (256, 224, 3, 1))[:, :, :, 0], (2, 1, 0))
    p["b1c_w"], p["b1c_b"] = fold(w, bn(ks[7], 256))
    # conv2d: Conv2d(448 -> 2080, 1x1, bias=True); split K into x0 (192) / x1 (256)
    w = jnp.transpose(conv_w(ks[8], (2080, 448, 1, 1))[:, :, 0, 0], (1, 0))   # (448, 2080)
    p["c2_w0"], p["c2_w1"] = w[:192], w[192:]
    p["c2_b"] = 0.02 * jax.random.normal(ks[9], (2080,), jnp.float32)
    return p


if __name__ == "__main__":
    key = jax.random.PRNGKey(0)
    kx, kp = jax.random.split(key)

    # Channels are fixed at 2080 by the module definition; small batch/spatial.
    N, C, H, W = 2, 2080, 8, 8
    x = jax.random.normal(kx, (N, C, H, W), jnp.float32)
    params = init_block8_params(kp)

    fwd = jax.jit(functools.partial(block8_forward, scale=1.0, noReLU=False))
    out = jax.block_until_ready(fwd(x, params))
    assert out.shape == (N, C, H, W), out.shape
    assert bool(jnp.isfinite(out).all()), "non-finite output"
    print("KERNEL_OK")
</pallas_src>

<mosaic_0001>
module attributes {stable_mosaic.version = 11 : i64} {
  func.func @_block8_kernel(%arg0: i32, %arg1: memref<64x2080xf32, #tpu.memory_space<vmem>>, %arg2: memref<64x1xi32, #tpu.memory_space<vmem>>, %arg3: memref<64x1xi32, #tpu.memory_space<vmem>>, %arg4: memref<2080x192xbf16, #tpu.memory_space<vmem>>, %arg5: memref<1x192xf32, #tpu.memory_space<vmem>>, %arg6: memref<2080x192xbf16, #tpu.memory_space<vmem>>, %arg7: memref<1x192xf32, #tpu.memory_space<vmem>>, %arg8: memref<3x192x224xbf16, #tpu.memory_space<vmem>>, %arg9: memref<1x224xf32, #tpu.memory_space<vmem>>, %arg10: memref<3x224x256xbf16, #tpu.memory_space<vmem>>, %arg11: memref<1x256xf32, #tpu.memory_space<vmem>>, %arg12: memref<192x2080xbf16, #tpu.memory_space<vmem>>, %arg13: memref<256x2080xbf16, #tpu.memory_space<vmem>>, %arg14: memref<1x2080xf32, #tpu.memory_space<vmem>>, %arg15: memref<64x2080xf32, #tpu.memory_space<vmem>>) attributes {dimension_semantics = [#tpu.dimension_semantics<parallel>], iteration_bounds = array<i64: 2>, scalar_prefetch = 0 : i64, scratch_operands = 0 : i64, tpu.core_type = #tpu.core_type<tc>, window_params = [{transform_indices = @transform_0, window_bounds = array<i64: 64, 2080>}, {transform_indices = @transform_1, window_bounds = array<i64: 64, 1>}, {transform_indices = @transform_2, window_bounds = array<i64: 64, 1>}, {pipeline_mode = #tpu.pipeline_mode<synchronous>, transform_indices = @transform_3, window_bounds = array<i64: 2080, 192>}, {pipeline_mode = #tpu.pipeline_mode<synchronous>, transform_indices = @transform_4, window_bounds = array<i64: 1, 192>}, {pipeline_mode = #tpu.pipeline_mode<synchronous>, transform_indices = @transform_5, window_bounds = array<i64: 2080, 192>}, {pipeline_mode = #tpu.pipeline_mode<synchronous>, transform_indices = @transform_6, window_bounds = array<i64: 1, 192>}, {pipeline_mode = #tpu.pipeline_mode<synchronous>, transform_indices = @transform_7, window_bounds = array<i64: 3, 192, 224>}, {pipeline_mode = #tpu.pipeline_mode<synchronous>, transform_indices = @transform_8, window_bounds = array<i64: 1, 224>}, {pipeline_mode = #tpu.pipeline_mode<synchronous>, transform_indices = @transform_9, window_bounds = array<i64: 3, 224, 256>}, {pipeline_mode = #tpu.pipeline_mode<synchronous>, transform_indices = @transform_10, window_bounds = array<i64: 1, 256>}, {pipeline_mode = #tpu.pipeline_mode<synchronous>, transform_indices = @transform_11, window_bounds = array<i64: 192, 2080>}, {pipeline_mode = #tpu.pipeline_mode<synchronous>, transform_indices = @transform_12, window_bounds = array<i64: 256, 2080>}, {pipeline_mode = #tpu.pipeline_mode<synchronous>, transform_indices = @transform_13, window_bounds = array<i64: 1, 2080>}, {transform_indices = @transform_14, window_bounds = array<i64: 64, 2080>}]} {
    %c0 = arith.constant 0 : index
    %c0_0 = arith.constant 0 : index
    %0 = vector.load %arg1[%c0, %c0_0] : memref<64x2080xf32, #tpu.memory_space<vmem>>, vector<64x2080xf32>
    %1 = arith.truncf %0 : vector<64x2080xf32> to vector<64x2080xbf16>
    %c0_1 = arith.constant 0 : index
    %c0_2 = arith.constant 0 : index
    %2 = vector.load %arg2[%c0_1, %c0_2] : memref<64x1xi32, #tpu.memory_space<vmem>>, vector<64x1xi32>
    %c0_3 = arith.constant 0 : index
    %c0_4 = arith.constant 0 : index
    %3 = vector.load %arg3[%c0_3, %c0_4] : memref<64x1xi32, #tpu.memory_space<vmem>>, vector<64x1xi32>
    %c0_5 = arith.constant 0 : index
    %c0_6 = arith.constant 0 : index
    %4 = vector.load %arg4[%c0_5, %c0_6] : memref<2080x192xbf16, #tpu.memory_space<vmem>>, vector<2080x192xbf16>
    %cst = arith.constant dense<0.000000e+00> : vector<64x192xf32>
    %5 = tpu.matmul %1, %4, %cst {dimension_numbers = #tpu.dot_dimension_numbers<[1], [0], [0], [1], [0, 0, 1, 1], [], []>} : vector<64x2080xbf16>, vector<2080x192xbf16>, vector<64x192xf32> -> vector<64x192xf32>
    %c0_7 = arith.constant 0 : index
    %c0_8 = arith.constant 0 : index
    %6 = vector.load %arg5[%c0_7, %c0_8] : memref<1x192xf32, #tpu.memory_space<vmem>>, vector<1x192xf32>
    %7 = vector.broadcast %6 : vector<1x192xf32> to vector<64x192xf32>
    %8 = arith.addf %5, %7 : vector<64x192xf32>
    %cst_9 = arith.constant 0.000000e+00 : f32
    %9 = vector.broadcast %cst_9 : f32 to vector<64x192xf32>
    %10 = arith.maximumf %8, %9 : vector<64x192xf32>
    %c0_10 = arith.constant 0 : index
    %c0_11 = arith.constant 0 : index
    %11 = vector.load %arg6[%c0_10, %c0_11] : memref<2080x192xbf16, #tpu.memory_space<vmem>>, vector<2080x192xbf16>
    %cst_12 = arith.constant dense<0.000000e+00> : vector<64x192xf32>
    %12 = tpu.matmul %1, %11, %cst_12 {dimension_numbers = #tpu.dot_dimension_numbers<[1], [0], [0], [1], [0, 0, 1, 1], [], []>} : vector<64x2080xbf16>, vector<2080x192xbf16>, vector<64x192xf32> -> vector<64x192xf32>
    %c0_13 = arith.constant 0 : index
    %c0_14 = arith.constant 0 : index
    %13 = vector.load %arg7[%c0_13, %c0_14] : memref<1x192xf32, #tpu.memory_space<vmem>>, vector<1x192xf32>
    %14 = vector.broadcast %13 : vector<1x192xf32> to vector<64x192xf32>
    %15 = arith.addf %12, %14 : vector<64x192xf32>
    %cst_15 = arith.constant 0.000000e+00 : f32
    %16 = vector.broadcast %cst_15 : f32 to vector<64x192xf32>
    %17 = arith.maximumf %15, %16 : vector<64x192xf32>
    %c0_i32 = arith.constant 0 : i32
    %18 = vector.broadcast %c0_i32 : i32 to vector<64x1xi32>
    %19 = arith.cmpi eq, %2, %18 : vector<64x1xi32>
    %cst_16 = arith.constant 0.000000e+00 : f32
    %20 = vector.broadcast %cst_16 : f32 to vector<1x192xf32>
    %21 = vector.extract_strided_slice %17 {offsets = [0, 0], sizes = [63, 192], strides = [1, 1]} : vector<64x192xf32> to vector<63x192xf32>
    %22 = tpu.concatenate %20, %21 in 0 : vector<1x192xf32>, vector<63x192xf32> -> vector<64x192xf32>
    %cst_17 = arith.constant 0.000000e+00 : f32
    %23 = vector.shape_cast %19 : vector<64x1xi1> to vector<64x1xi1>
    %24 = vector.broadcast %23 : vector<64x1xi1> to vector<64x192xi1>
    %25 = vector.broadcast %cst_17 : f32 to vector<64x192xf32>
    %26 = arith.select %24, %25, %22 : vector<64x192xi1>, vector<64x192xf32>
    %c7_i32 = arith.constant 7 : i32
    %27 = vector.broadcast %c7_i32 : i32 to vector<64x1xi32>
    %28 = arith.cmpi eq, %2, %27 : vector<64x1xi32>
    %cst_18 = arith.constant 0.000000e+00 : f32
    %29 = vector.broadcast %cst_18 : f32 to vector<1x192xf32>
    %30 = vector.extract_strided_slice %17 {offsets = [1, 0], sizes = [63, 192], strides = [1, 1]} : vector<64x192xf32> to vector<63x192xf32>
    %31 = tpu.concatenate %30, %29 in 0 : vector<63x192xf32>, vector<1x192xf32> -> vector<64x192xf32>
    %cst_19 = arith.constant 0.000000e+00 : f32
    %32 = vector.shape_cast %28 : vector<64x1xi1> to vector<64x1xi1>
    %33 = vector.broadcast %32 : vector<64x1xi1> to vector<64x192xi1>
    %34 = vector.broadcast %cst_19 : f32 to vector<64x192xf32>
    %35 = arith.select %33, %34, %31 : vector<64x192xi1>, vector<64x192xf32>
    %36 = arith.truncf %26 : vector<64x192xf32> to vector<64x192xbf16>
    %c0_20 = arith.constant 0 : index
    %c0_21 = arith.constant 0 : index
    %c0_22 = arith.constant 0 : index
    %37 = vector.load %arg8[%c0_20, %c0_21, %c0_22] : memref<3x192x224xbf16, #tpu.memory_space<vmem>>, vector<1x192x224xbf16>
    %38 = vector.shape_cast %37 : vector<1x192x224xbf16> to vector<192x224xbf16>
    %cst_23 = arith.constant dense<0.000000e+00> : vector<64x224xf32>
    %39 = tpu.matmul %36, %38, %cst_23 {dimension_numbers = #tpu.dot_dimension_numbers<[1], [0], [0], [1], [0, 0, 1, 1], [], []>} : vector<64x192xbf16>, vector<192x224xbf16>, vector<64x224xf32> -> vector<64x224xf32>
    %40 = arith.truncf %17 : vector<64x192xf32> to vector<64x192xbf16>
    %c1 = arith.constant 1 : index
    %c0_24 = arith.constant 0 : index
    %c0_25 = arith.constant 0 : index
    %41 = vector.load %arg8[%c1, %c0_24, %c0_25] : memref<3x192x224xbf16, #tpu.memory_space<vmem>>, vector<1x192x224xbf16>
    %42 = vector.shape_cast %41 : vector<1x192x224xbf16> to vector<192x224xbf16>
    %cst_26 = arith.constant dense<0.000000e+00> : vector<64x224xf32>
    %43 = tpu.matmul %40, %42, %cst_26 {dimension_numbers = #tpu.dot_dimension_numbers<[1], [0], [0], [1], [0, 0, 1, 1], [], []>} : vector<64x192xbf16>, vector<192x224xbf16>, vector<64x224xf32> -> vector<64x224xf32>
    %44 = arith.addf %39, %43 : vector<64x224xf32>
    %45 = arith.truncf %35 : vector<64x192xf32> to vector<64x192xbf16>
    %c2 = arith.constant 2 : index
    %c0_27 = arith.constant 0 : index
    %c0_28 = arith.constant 0 : index
    %46 = vector.load %arg8[%c2, %c0_27, %c0_28] : memref<3x192x224xbf16, #tpu.memory_space<vmem>>, vector<1x192x224xbf16>
    %47 = vector.shape_cast %46 : vector<1x192x224xbf16> to vector<192x224xbf16>
    %cst_29 = arith.constant dense<0.000000e+00> : vector<64x224xf32>
    %48 = tpu.matmul %45, %47, %cst_29 {dimension_numbers = #tpu.dot_dimension_numbers<[1], [0], [0], [1], [0, 0, 1, 1], [], []>} : vector<64x192xbf16>, vector<192x224xbf16>, vector<64x224xf32> -> vector<64x224xf32>
    %49 = arith.addf %44, %48 : vector<64x224xf32>
    %c0_30 = arith.constant 0 : index
    %c0_31 = arith.constant 0 : index
    %50 = vector.load %arg9[%c0_30, %c0_31] : memref<1x224xf32, #tpu.memory_space<vmem>>, vector<1x224xf32>
    %51 = vector.broadcast %50 : vector<1x224xf32> to vector<64x224xf32>
    %52 = arith.addf %49, %51 : vector<64x224xf32>
    %cst_32 = arith.constant 0.000000e+00 : f32
    %53 = vector.broadcast %cst_32 : f32 to vector<64x224xf32>
    %54 = arith.maximumf %52, %53 : vector<64x224xf32>
    %c0_i32_33 = arith.constant 0 : i32
    %55 = vector.broadcast %c0_i32_33 : i32 to vector<64x1xi32>
    %56 = arith.cmpi eq, %3, %55 : vector<64x1xi32>
    %cst_34 = arith.constant 0.000000e+00 : f32
    %57 = vector.broadcast %cst_34 : f32 to vector<8x224xf32>
    %58 = vector.extract_strided_slice %54 {offsets = [0, 0], sizes = [56, 224], strides = [1, 1]} : vector<64x224xf32> to vector<56x224xf32>
    %59 = tpu.concatenate %57, %58 in 0 : vector<8x224xf32>, vector<56x224xf32> -> vector<64x224xf32>
    %cst_35 = arith.constant 0.000000e+00 : f32
    %60 = vector.shape_cast %56 : vector<64x1xi1> to vector<64x1xi1>
    %61 = vector.broadcast %60 : vector<64x1xi1> to vector<64x224xi1>
    %62 = vector.broadcast %cst_35 : f32 to vector<64x224xf32>
    %63 = arith.select %61, %62, %59 : vector<64x224xi1>, vector<64x224xf32>
    %c7_i32_36 = arith.constant 7 : i32
    %64 = vector.broadcast %c7_i32_36 : i32 to vector<64x1xi32>
    %65 = arith.cmpi eq, %3, %64 : vector<64x1xi32>
    %cst_37 = arith.constant 0.000000e+00 : f32
    %66 = vector.broadcast %cst_37 : f32 to vector<8x224xf32>
    %67 = vector.extract_strided_slice %54 {offsets = [8, 0], sizes = [56, 224], strides = [1, 1]} : vector<64x224xf32> to vector<56x224xf32>
    %68 = tpu.concatenate %67, %66 in 0 : vector<56x224xf32>, vector<8x224xf32> -> vector<64x224xf32>
    %cst_38 = arith.constant 0.000000e+00 : f32
    %69 = vector.shape_cast %65 : vector<64x1xi1> to vector<64x1xi1>
    %70 = vector.broadcast %69 : vector<64x1xi1> to vector<64x224xi1>
    %71 = vector.broadcast %cst_38 : f32 to vector<64x224xf32>
    %72 = arith.select %70, %71, %68 : vector<64x224xi1>, vector<64x224xf32>
    %73 = arith.truncf %63 : vector<64x224xf32> to vector<64x224xbf16>
    %c0_39 = arith.constant 0 : index
    %c0_40 = arith.constant 0 : index
    %c0_41 = arith.constant 0 : index
    %74 = vector.load %arg10[%c0_39, %c0_40, %c0_41] : memref<3x224x256xbf16, #tpu.memory_space<vmem>>, vector<1x224x256xbf16>
    %75 = vector.shape_cast %74 : vector<1x224x256xbf16> to vector<224x256xbf16>
    %cst_42 = arith.constant dense<0.000000e+00> : vector<64x256xf32>
    %76 = tpu.matmul %73, %75, %cst_42 {dimension_numbers = #tpu.dot_dimension_numbers<[1], [0], [0], [1], [0, 0, 1, 1], [], []>} : vector<64x224xbf16>, vector<224x256xbf16>, vector<64x256xf32> -> vector<64x256xf32>
    %77 = arith.truncf %54 : vector<64x224xf32> to vector<64x224xbf16>
    %c1_43 = arith.constant 1 : index
    %c0_44 = arith.constant 0 : index
    %c0_45 = arith.constant 0 : index
    %78 = vector.load %arg10[%c1_43, %c0_44, %c0_45] : memref<3x224x256xbf16, #tpu.memory_space<vmem>>, vector<1x224x256xbf16>
    %79 = vector.shape_cast %78 : vector<1x224x256xbf16> to vector<224x256xbf16>
    %cst_46 = arith.constant dense<0.000000e+00> : vector<64x256xf32>
    %80 = tpu.matmul %77, %79, %cst_46 {dimension_numbers = #tpu.dot_dimension_numbers<[1], [0], [0], [1], [0, 0, 1, 1], [], []>} : vector<64x224xbf16>, vector<224x256xbf16>, vector<64x256xf32> -> vector<64x256xf32>
    %81 = arith.addf %76, %80 : vector<64x256xf32>
    %82 = arith.truncf %72 : vector<64x224xf32> to vector<64x224xbf16>
    %c2_47 = arith.constant 2 : index
    %c0_48 = arith.constant 0 : index
    %c0_49 = arith.constant 0 : index
    %83 = vector.load %arg10[%c2_47, %c0_48, %c0_49] : memref<3x224x256xbf16, #tpu.memory_space<vmem>>, vector<1x224x256xbf16>
    %84 = vector.shape_cast %83 : vector<1x224x256xbf16> to vector<224x256xbf16>
    %cst_50 = arith.constant dense<0.000000e+00> : vector<64x256xf32>
    %85 = tpu.matmul %82, %84, %cst_50 {dimension_numbers = #tpu.dot_dimension_numbers<[1], [0], [0], [1], [0, 0, 1, 1], [], []>} : vector<64x224xbf16>, vector<224x256xbf16>, vector<64x256xf32> -> vector<64x256xf32>
    %86 = arith.addf %81, %85 : vector<64x256xf32>
    %c0_51 = arith.constant 0 : index
    %c0_52 = arith.constant 0 : index
    %87 = vector.load %arg11[%c0_51, %c0_52] : memref<1x256xf32, #tpu.memory_space<vmem>>, vector<1x256xf32>
    %88 = vector.broadcast %87 : vector<1x256xf32> to vector<64x256xf32>
    %89 = arith.addf %86, %88 : vector<64x256xf32>
    %cst_53 = arith.constant 0.000000e+00 : f32
    %90 = vector.broadcast %cst_53 : f32 to vector<64x256xf32>
    %91 = arith.maximumf %89, %90 : vector<64x256xf32>
    %92 = arith.truncf %10 : vector<64x192xf32> to vector<64x192xbf16>
    %c0_54 = arith.constant 0 : index
    %c0_55 = arith.constant 0 : index
    %93 = vector.load %arg12[%c0_54, %c0_55] : memref<192x2080xbf16, #tpu.memory_space<vmem>>, vector<192x2080xbf16>
    %cst_56 = arith.constant dense<0.000000e+00> : vector<64x2080xf32>
    %94 = tpu.matmul %92, %93, %cst_56 {dimension_numbers = #tpu.dot_dimension_numbers<[1], [0], [0], [1], [0, 0, 1, 1], [], []>} : vector<64x192xbf16>, vector<192x2080xbf16>, vector<64x2080xf32> -> vector<64x2080xf32>
    %95 = arith.truncf %91 : vector<64x256xf32> to vector<64x256xbf16>
    %c0_57 = arith.constant 0 : index
    %c0_58 = arith.constant 0 : index
    %96 = vector.load %arg13[%c0_57, %c0_58] : memref<256x2080xbf16, #tpu.memory_space<vmem>>, vector<256x2080xbf16>
    %cst_59 = arith.constant dense<0.000000e+00> : vector<64x2080xf32>
    %97 = tpu.matmul %95, %96, %cst_59 {dimension_numbers = #tpu.dot_dimension_numbers<[1], [0], [0], [1], [0, 0, 1, 1], [], []>} : vector<64x256xbf16>, vector<256x2080xbf16>, vector<64x2080xf32> -> vector<64x2080xf32>
    %98 = arith.addf %94, %97 : vector<64x2080xf32>
    %c0_60 = arith.constant 0 : index
    %c0_61 = arith.constant 0 : index
    %99 = vector.load %arg14[%c0_60, %c0_61] : memref<1x2080xf32, #tpu.memory_space<vmem>>, vector<1x2080xf32>
    %100 = vector.broadcast %99 : vector<1x2080xf32> to vector<64x2080xf32>
    %101 = arith.addf %98, %100 : vector<64x2080xf32>
    %102 = arith.addf %101, %0 : vector<64x2080xf32>
    %cst_62 = arith.constant 0.000000e+00 : f32
    %103 = vector.broadcast %cst_62 : f32 to vector<64x2080xf32>
    %104 = arith.maximumf %102, %103 : vector<64x2080xf32>
    %c0_63 = arith.constant 0 : index
    %c0_64 = arith.constant 0 : index
    %105 = vector.load %arg15[%c0_63, %c0_64] : memref<64x2080xf32, #tpu.memory_space<vmem>>, vector<64x2080xf32>
    tpu.vector_store %arg15[%c0_63, %c0_64], %104 {strides = array<i32>} : memref<64x2080xf32, #tpu.memory_space<vmem>>, vector<64x2080xf32>,
    return
  }
  func.func @transform_0(%arg0: i32) -> (i32, i32) {
    %c0_i32 = arith.constant 0 : i32
    %c0_i32_0 = arith.constant 0 : i32
    return %arg0, %c0_i32 : i32, i32
  }
  func.func @transform_1(%arg0: i32) -> (i32, i32) {
    %c0_i32 = arith.constant 0 : i32
    %c0_i32_0 = arith.constant 0 : i32
    return %arg0, %c0_i32 : i32, i32
  }
  func.func @transform_2(%arg0: i32) -> (i32, i32) {
    %c0_i32 = arith.constant 0 : i32
    %c0_i32_0 = arith.constant 0 : i32
    return %arg0, %c0_i32 : i32, i32
  }
  func.func @transform_3(%arg0: i32) -> (i32, i32) {
    %c0_i32 = arith.constant 0 : i32
    %c0_i32_0 = arith.constant 0 : i32
    %c0_i32_1 = arith.constant 0 : i32
    return %c0_i32, %c0_i32_0 : i32, i32
  }
  func.func @transform_4(%arg0: i32) -> (i32, i32) {
    %c0_i32 = arith.constant 0 : i32
    %c0_i32_0 = arith.constant 0 : i32
    %c0_i32_1 = arith.constant 0 : i32
    return %c0_i32, %c0_i32_0 : i32, i32
  }
  func.func @transform_5(%arg0: i32) -> (i32, i32) {
    %c0_i32 = arith.constant 0 : i32
    %c0_i32_0 = arith.constant 0 : i32
    %c0_i32_1 = arith.constant 0 : i32
    return %c0_i32, %c0_i32_0 : i32, i32
  }
  func.func @transform_6(%arg0: i32) -> (i32, i32) {
    %c0_i32 = arith.constant 0 : i32
    %c0_i32_0 = arith.constant 0 : i32
    %c0_i32_1 = arith.constant 0 : i32
    return %c0_i32, %c0_i32_0 : i32, i32
  }
  func.func @transform_7(%arg0: i32) -> (i32, i32, i32) {
    %c0_i32 = arith.constant 0 : i32
    %c0_i32_0 = arith.constant 0 : i32
    %c0_i32_1 = arith.constant 0 : i32
    %c0_i32_2 = arith.constant 0 : i32
    return %c0_i32, %c0_i32_0, %c0_i32_1 : i32, i32, i32
  }
  func.func @transform_8(%arg0: i32) -> (i32, i32) {
    %c0_i32 = arith.constant 0 : i32
    %c0_i32_0 = arith.constant 0 : i32
    %c0_i32_1 = arith.constant 0 : i32
    return %c0_i32, %c0_i32_0 : i32, i32
  }
  func.func @transform_9(%arg0: i32) -> (i32, i32, i32) {
    %c0_i32 = arith.constant 0 : i32
    %c0_i32_0 = arith.constant 0 : i32
    %c0_i32_1 = arith.constant 0 : i32
    %c0_i32_2 = arith.constant 0 : i32
    return %c0_i32, %c0_i32_0, %c0_i32_1 : i32, i32, i32
  }
  func.func @transform_10(%arg0: i32) -> (i32, i32) {
    %c0_i32 = arith.constant 0 : i32
    %c0_i32_0 = arith.constant 0 : i32
    %c0_i32_1 = arith.constant 0 : i32
    return %c0_i32, %c0_i32_0 : i32, i32
  }
  func.func @transform_11(%arg0: i32) -> (i32, i32) {
    %c0_i32 = arith.constant 0 : i32
    %c0_i32_0 = arith.constant 0 : i32
    %c0_i32_1 = arith.constant 0 : i32
    return %c0_i32, %c0_i32_0 : i32, i32
  }
  func.func @transform_12(%arg0: i32) -> (i32, i32) {
    %c0_i32 = arith.constant 0 : i32
    %c0_i32_0 = arith.constant 0 : i32
    %c0_i32_1 = arith.constant 0 : i32
    return %c0_i32, %c0_i32_0 : i32, i32
  }
  func.func @transform_13(%arg0: i32) -> (i32, i32) {
    %c0_i32 = arith.constant 0 : i32
    %c0_i32_0 = arith.constant 0 : i32
    %c0_i32_1 = arith.constant 0 : i32
    return %c0_i32, %c0_i32_0 : i32, i32
  }
  func.func @transform_14(%arg0: i32) -> (i32, i32) {
    %c0_i32 = arith.constant 0 : i32
    %c0_i32_0 = arith.constant 0 : i32
    return %arg0, %c0_i32 : i32, i32
  }
}

</mosaic_0001>

<llo_original>
// kernel: block8_forward.1
$region0: #{block8_forward.1}
  #allocation0 [shape = 'u32[]', space=smem, size = 0x4, offset = 0x4, fixed_abs, tag = 'smem constant byte address 0x4 - core index']
  #allocation1 [shape = 'u32[144,128]{1,0:T(1,128)}', space=vmem, size = 0x12000, scoped, tag = 'internal scratch']
  %s0 = inlined_call_operand.vmem [shape: f32[128,2080], index: 0, kind: input, shape index: {}]
  %s1 = inlined_call_operand.vmem [shape: s32[128,1], index: 1, kind: input, shape index: {}]
  %s2 = inlined_call_operand.vmem [shape: s32[128,1], index: 2, kind: input, shape index: {}]
  %s3 = inlined_call_operand.vmem [shape: bf16[2080,192], index: 3, kind: input, shape index: {}]
  %s4 = inlined_call_operand.vmem [shape: f32[1,192], index: 4, kind: input, shape index: {}]
  %s5 = inlined_call_operand.vmem [shape: bf16[2080,192], index: 5, kind: input, shape index: {}]
  %s6 = inlined_call_operand.vmem [shape: f32[1,192], index: 6, kind: input, shape index: {}]
  %s7 = inlined_call_operand.vmem [shape: bf16[3,192,224], index: 7, kind: input, shape index: {}]
  %s8 = inlined_call_operand.vmem [shape: f32[1,224], index: 8, kind: input, shape index: {}]
  %s9 = inlined_call_operand.vmem [shape: bf16[3,224,256], index: 9, kind: input, shape index: {}]
  %s10 = inlined_call_operand.vmem [shape: f32[1,256], index: 10, kind: input, shape index: {}]
  %s11 = inlined_call_operand.vmem [shape: bf16[192,2080], index: 11, kind: input, shape index: {}]
  %s12 = inlined_call_operand.vmem [shape: bf16[256,2080], index: 12, kind: input, shape index: {}]
  %s13 = inlined_call_operand.vmem [shape: f32[1,2080], index: 13, kind: input, shape index: {}]
  %s14 = inlined_call_operand.hbm [shape: f32[128,2080], index: 14, kind: output, shape index: {}]
  %s15 = sld [smem:[#allocation0]]
  $region89: #{block8_forward.1} parent=0
    _
  %s17 = ssub.s32 1, %s15
  %s18 = scalar_select 0, %s17, %s15
  $region1: #{block8_forward.1} parent=0
    #allocation2 [shape = 'u8[1114112]{0}', space=vmem, size = 0x110000, scoped, tag = 'output window, operand 0']
    #allocation3 [shape = 's32[2]{0}', space=sflag, size = 0x8, scoped, tag = 'scoped memory for block8_forward.1']
    %19 = vsyncpa [#allocation3], 0
    %s20 = scalar_lea.sflag [#allocation3], 1
    %21 = vsyncpa %s20, 0
    loop: start=0, step=1, limit=4
    $region2: #{block8_forward.1} parent=1 // loop_pre_header
      _
    $region3: #{block8_forward.1} parent=1 // loop_header
      %s23 = sphi 0, %s27
      %p24 = scmp.ge.s32.totalorder %s23, 4
      %s33 = sphi 0, %s35
      %s36 = sphi 0, %s33
      %s37 = sphi 0, %s36
      %s53 = sphi 0, %s37
      %s59 = sphi 0, %s61
      %s62 = sphi 0, %s59
      %s63 = sphi 0, %s62
      %s79 = sphi 0, %s63
      %s85 = sphi 0, %s87
      %s88 = sphi 0, %s85
      %s89 = sphi 0, %s88
      %s105 = sphi 0, %s89
      %s109 = sphi 0, %s109
      %s111 = sphi 0, %s109
      %s112 = sphi 0, %s111
      %s126 = sphi 0, %s112
      %s130 = sphi 0, %s130
      %s132 = sphi 0, %s130
      %s133 = sphi 0, %s132
      %s147 = sphi 0, %s133
      %s151 = sphi 0, %s151
      %s153 = sphi 0, %s151
      %s154 = sphi 0, %s153
      %s168 = sphi 0, %s154
      %s172 = sphi 0, %s172
      %s174 = sphi 0, %s172
      %s175 = sphi 0, %s174
      %s189 = sphi 0, %s175
      %s193 = sphi 0, %s193
      %s195 = sphi 0, %s193
      %s196 = sphi 0, %s195
      %s210 = sphi 0, %s196
      %s214 = sphi 0, %s214
      %s216 = sphi 0, %s214
      %s217 = sphi 0, %s216
      %s231 = sphi 0, %s217
      %s235 = sphi 0, %s235
      %s237 = sphi 0, %s235
      %s238 = sphi 0, %s237
      %s252 = sphi 0, %s238
      %s256 = sphi 0, %s256
      %s258 = sphi 0, %s256
      %s259 = sphi 0, %s258
      %s273 = sphi 0, %s259
      %s277 = sphi 0, %s277
      %s279 = sphi 0, %s277
      %s280 = sphi 0, %s279
      %s294 = sphi 0, %s280
      %s298 = sphi 0, %s298
      %s300 = sphi 0, %s298
      %s301 = sphi 0, %s300
      %s315 = sphi 0, %s301
      %s319 = sphi 0, %s319
      %s321 = sphi 0, %s319
      %s322 = sphi 0, %s321
      %s336 = sphi 0, %s322
      %s342 = sphi 0, %s344
      %s345 = sphi 0, %s342
      %s346 = sphi 0, %s345
      %s362 = sphi 0, %s346
    $region4: #{block8_forward.1} parent=1 // loop_header_branch
      %26 = sbr.rel (%p24) target = $region8
    $region5: #{block8_forward.1} parent=1 // loop_body
      %s28 = ssub.s32 %s23, 1
      %s29 = ssub.s32 %s23, 2
      %s30 = sadd.s32 %s23, 1
      %s31 = ssub.s32 %s23, %s30
      %p32 = scmp.eq.s32.totalorder %s31, 0
      %s34 = sadd.s32 %s33, 1
      %s35 = scalar_select %p32, %s33, %s34
      %p38 = pneg %p32
      %p39 = scmp.eq.s32.totalorder %s23, 1
      %p40 = por %p38, %p39
      %p41 = scmp.ne.s32.totalorder %s33, %s36
      %p42 = scmp.eq.s32.totalorder %s23, 0
      %p43 = por %p41, %p42
      %p44 = scmp.ne.s32.totalorder %s33, %s36
      %p45 = scmp.eq.s32.totalorder %s28, 1
      %p46 = por %p44, %p45
      %p47 = scmp.ne.s32.totalorder %s36, %s37
      %p48 = scmp.eq.s32.totalorder %s28, 0
      %p49 = por %p47, %p48
      %p50 = scmp.ne.s32.totalorder %s36, %s37
      %p51 = scmp.eq.s32.totalorder %s29, 1
      %p52 = por %p50, %p51
      %p54 = scmp.ne.s32.totalorder %s37, %s53
      %p55 = scmp.eq.s32.totalorder %s29, 0
      %p56 = por %p54, %p55
      %s57 = ssub.s32 %s23, %s30
      %p58 = scmp.eq.s32.totalorder %s57, 0
      %s60 = sadd.s32 %s59, 1
      %s61 = scalar_select %p58, %s59, %s60
      %p64 = pneg %p58
      %p65 = scmp.eq.s32.totalorder %s23, 1
      %p66 = por %p64, %p65
      %p67 = scmp.ne.s32.totalorder %s59, %s62
      %p68 = scmp.eq.s32.totalorder %s23, 0
      %p69 = por %p67, %p68
      %p70 = scmp.ne.s32.totalorder %s59, %s62
      %p71 = scmp.eq.s32.totalorder %s28, 1
      %p72 = por %p70, %p71
      %p73 = scmp.ne.s32.totalorder %s62, %s63
      %p74 = scmp.eq.s32.totalorder %s28, 0
      %p75 = por %p73, %p74
      %p76 = scmp.ne.s32.totalorder %s62, %s63
      %p77 = scmp.eq.s32.totalorder %s29, 1
      %p78 = por %p76, %p77
      %p80 = scmp.ne.s32.totalorder %s63, %s79
      %p81 = scmp.eq.s32.totalorder %s29, 0
      %p82 = por %p80, %p81
      %s83 = ssub.s32 %s23, %s30
      %p84 = scmp.eq.s32.totalorder %s83, 0
      %s86 = sadd.s32 %s85, 1
      %s87 = scalar_select %p84, %s85, %s86
      %p90 = pneg %p84
      %p91 = scmp.eq.s32.totalorder %s23, 1
      %p92 = por %p90, %p91
      %p93 = scmp.ne.s32.totalorder %s85, %s88
      %p94 = scmp.eq.s32.totalorder %s23, 0
      %p95 = por %p93, %p94
      %p96 = scmp.ne.s32.totalorder %s85, %s88
      %p97 = scmp.eq.s32.totalorder %s28, 1
      %p98 = por %p96, %p97
      %p99 = scmp.ne.s32.totalorder %s88, %s89
      %p100 = scmp.eq.s32.totalorder %s28, 0
      %p101 = por %p99, %p100
      %p102 = scmp.ne.s32.totalorder %s88, %s89
      %p103 = scmp.eq.s32.totalorder %s29, 1
      %p104 = por %p102, %p103
      %p106 = scmp.ne.s32.totalorder %s89, %s105
      %p107 = scmp.eq.s32.totalorder %s29, 0
      %p108 = por %p106, %p107
      %s110 = sadd.s32 %s109, 1
      %p113 = scmp.eq.s32.totalorder %s23, 1
      %p114 = scmp.ne.s32.totalorder %s109, %s111
      %p115 = scmp.eq.s32.totalorder %s23, 0
      %p116 = por %p114, %p115
      %p117 = scmp.ne.s32.totalorder %s109, %s111
      %p118 = scmp.eq.s32.totalorder %s28, 1
      %p119 = por %p117, %p118
      %p120 = scmp.ne.s32.totalorder %s111, %s112
      %p121 = scmp.eq.s32.totalorder %s28, 0
      %p122 = por %p120, %p121
      %p123 = scmp.ne.s32.totalorder %s111, %s112
      %p124 = scmp.eq.s32.totalorder %s29, 1
      %p125 = por %p123, %p124
      %p127 = scmp.ne.s32.totalorder %s112, %s126
      %p128 = scmp.eq.s32.totalorder %s29, 0
      %p129 = por %p127, %p128
      %s131 = sadd.s32 %s130, 1
      %p134 = scmp.eq.s32.totalorder %s23, 1
      %p135 = scmp.ne.s32.totalorder %s130, %s132
      %p136 = scmp.eq.s32.totalorder %s23, 0
      %p137 = por %p135, %p136
      %p138 = scmp.ne.s32.totalorder %s130, %s132
      %p139 = scmp.eq.s32.totalorder %s28, 1
      %p140 = por %p138, %p139
      %p141 = scmp.ne.s32.totalorder %s132, %s133
      %p142 = scmp.eq.s32.totalorder %s28, 0
      %p143 = por %p141, %p142
      %p144 = scmp.ne.s32.totalorder %s132, %s133
      %p145 = scmp.eq.s32.totalorder %s29, 1
      %p146 = por %p144, %p145
      %p148 = scmp.ne.s32.totalorder %s133, %s147
      %p149 = scmp.eq.s32.totalorder %s29, 0
      %p150 = por %p148, %p149
      %s152 = sadd.s32 %s151, 1
      %p155 = scmp.eq.s32.totalorder %s23, 1
      %p156 = scmp.ne.s32.totalorder %s151, %s153
      %p157 = scmp.eq.s32.totalorder %s23, 0
      %p158 = por %p156, %p157
      %p159 = scmp.ne.s32.totalorder %s151, %s153
      %p160 = scmp.eq.s32.totalorder %s28, 1
      %p161 = por %p159, %p160
      %p162 = scmp.ne.s32.totalorder %s153, %s154
      %p163 = scmp.eq.s32.totalorder %s28, 0
      %p164 = por %p162, %p163
      %p165 = scmp.ne.s32.totalorder %s153, %s154
      %p166 = scmp.eq.s32.totalorder %s29, 1
      %p167 = por %p165, %p166
      %p169 = scmp.ne.s32.totalorder %s154, %s168
      %p170 = scmp.eq.s32.totalorder %s29, 0
      %p171 = por %p169, %p170
      %s173 = sadd.s32 %s172, 1
      %p176 = scmp.eq.s32.totalorder %s23, 1
      %p177 = scmp.ne.s32.totalorder %s172, %s174
      %p178 = scmp.eq.s32.totalorder %s23, 0
      %p179 = por %p177, %p178
      %p180 = scmp.ne.s32.totalorder %s172, %s174
      %p181 = scmp.eq.s32.totalorder %s28, 1
      %p182 = por %p180, %p181
      %p183 = scmp.ne.s32.totalorder %s174, %s175
      %p184 = scmp.eq.s32.totalorder %s28, 0
      %p185 = por %p183, %p184
      %p186 = scmp.ne.s32.totalorder %s174, %s175
      %p187 = scmp.eq.s32.totalorder %s29, 1
      %p188 = por %p186, %p187
      %p190 = scmp.ne.s32.totalorder %s175, %s189
      %p191 = scmp.eq.s32.totalorder %s29, 0
      %p192 = por %p190, %p191
      %s194 = sadd.s32 %s193, 1
      %p197 = scmp.eq.s32.totalorder %s23, 1
      %p198 = scmp.ne.s32.totalorder %s193, %s195
      %p199 = scmp.eq.s32.totalorder %s23, 0
      %p200 = por %p198, %p199
      %p201 = scmp.ne.s32.totalorder %s193, %s195
      %p202 = scmp.eq.s32.totalorder %s28, 1
      %p203 = por %p201, %p202
      %p204 = scmp.ne.s32.totalorder %s195, %s196
      %p205 = scmp.eq.s32.totalorder %s28, 0
      %p206 = por %p204, %p205
      %p207 = scmp.ne.s32.totalorder %s195, %s196
      %p208 = scmp.eq.s32.totalorder %s29, 1
      %p209 = por %p207, %p208
      %p211 = scmp.ne.s32.totalorder %s196, %s210
      %p212 = scmp.eq.s32.totalorder %s29, 0
      %p213 = por %p211, %p212
      %s215 = sadd.s32 %s214, 1
      %p218 = scmp.eq.s32.totalorder %s23, 1
      %p219 = scmp.ne.s32.totalorder %s214, %s216
      %p220 = scmp.eq.s32.totalorder %s23, 0
      %p221 = por %p219, %p220
      %p222 = scmp.ne.s32.totalorder %s214, %s216
      %p223 = scmp.eq.s32.totalorder %s28, 1
      %p224 = por %p222, %p223
      %p225 = scmp.ne.s32.totalorder %s216, %s217
      %p226 = scmp.eq.s32.totalorder %s28, 0
      %p227 = por %p225, %p226
      %p228 = scmp.ne.s32.totalorder %s216, %s217
      %p229 = scmp.eq.s32.totalorder %s29, 1
      %p230 = por %p228, %p229
      %p232 = scmp.ne.s32.totalorder %s217, %s231
      %p233 = scmp.eq.s32.totalorder %s29, 0
      %p234 = por %p232, %p233
      %s236 = sadd.s32 %s235, 1
      %p239 = scmp.eq.s32.totalorder %s23, 1
      %p240 = scmp.ne.s32.totalorder %s235, %s237
      %p241 = scmp.eq.s32.totalorder %s23, 0
      %p242 = por %p240, %p241
      %p243 = scmp.ne.s32.totalorder %s235, %s237
      %p244 = scmp.eq.s32.totalorder %s28, 1
      %p245 = por %p243, %p244
      %p246 = scmp.ne.s32.totalorder %s237, %s238
      %p247 = scmp.eq.s32.totalorder %s28, 0
      %p248 = por %p246, %p247
      %p249 = scmp.ne.s32.totalorder %s237, %s238
      %p250 = scmp.eq.s32.totalorder %s29, 1
      %p251 = por %p249, %p250
      %p253 = scmp.ne.s32.totalorder %s238, %s252
      %p254 = scmp.eq.s32.totalorder %s29, 0
      %p255 = por %p253, %p254
      %s257 = sadd.s32 %s256, 1
      %p260 = scmp.eq.s32.totalorder %s23, 1
      %p261 = scmp.ne.s32.totalorder %s256, %s258
      %p262 = scmp.eq.s32.totalorder %s23, 0
      %p263 = por %p261, %p262
      %p264 = scmp.ne.s32.totalorder %s256, %s258
      %p265 = scmp.eq.s32.totalorder %s28, 1
      %p266 = por %p264, %p265
      %p267 = scmp.ne.s32.totalorder %s258, %s259
      %p268 = scmp.eq.s32.totalorder %s28, 0
      %p269 = por %p267, %p268
      %p270 = scmp.ne.s32.totalorder %s258, %s259
      %p271 = scmp.eq.s32.totalorder %s29, 1
      %p272 = por %p270, %p271
      %p274 = scmp.ne.s32.totalorder %s259, %s273
      %p275 = scmp.eq.s32.totalorder %s29, 0
      %p276 = por %p274, %p275
      %s278 = sadd.s32 %s277, 1
      %p281 = scmp.eq.s32.totalorder %s23, 1
      %p282 = scmp.ne.s32.totalorder %s277, %s279
      %p283 = scmp.eq.s32.totalorder %s23, 0
      %p284 = por %p282, %p283
      %p285 = scmp.ne.s32.totalorder %s277, %s279
      %p286 = scmp.eq.s32.totalorder %s28, 1
      %p287 = por %p285, %p286
      %p288 = scmp.ne.s32.totalorder %s279, %s280
      %p289 = scmp.eq.s32.totalorder %s28, 0
      %p290 = por %p288, %p289
      %p291 = scmp.ne.s32.totalorder %s279, %s280
      %p292 = scmp.eq.s32.totalorder %s29, 1
      %p293 = por %p291, %p292
      %p295 = scmp.ne.s32.totalorder %s280, %s294
      %p296 = scmp.eq.s32.totalorder %s29, 0
      %p297 = por %p295, %p296
      %s299 = sadd.s32 %s298, 1
      %p302 = scmp.eq.s32.totalorder %s23, 1
      %p303 = scmp.ne.s32.totalorder %s298, %s300
      %p304 = scmp.eq.s32.totalorder %s23, 0
      %p305 = por %p303, %p304
      %p306 = scmp.ne.s32.totalorder %s298, %s300
      %p307 = scmp.eq.s32.totalorder %s28, 1
      %p308 = por %p306, %p307
      %p309 = scmp.ne.s32.totalorder %s300, %s301
      %p310 = scmp.eq.s32.totalorder %s28, 0
      %p311 = por %p309, %p310
      %p312 = scmp.ne.s32.totalorder %s300, %s301
      %p313 = scmp.eq.s32.totalorder %s29, 1
      %p314 = por %p312, %p313
      %p316 = scmp.ne.s32.totalorder %s301, %s315
      %p317 = scmp.eq.s32.totalorder %s29, 0
      %p318 = por %p316, %p317
      %s320 = sadd.s32 %s319, 1
      %p323 = scmp.eq.s32.totalorder %s23, 1
      %p324 = scmp.ne.s32.totalorder %s319, %s321
      %p325 = scmp.eq.s32.totalorder %s23, 0
      %p326 = por %p324, %p325
      %p327 = scmp.ne.s32.totalorder %s319, %s321
      %p328 = scmp.eq.s32.totalorder %s28, 1
      %p329 = por %p327, %p328
      %p330 = scmp.ne.s32.totalorder %s321, %s322
      %p331 = scmp.eq.s32.totalorder %s28, 0
      %p332 = por %p330, %p331
      %p333 = scmp.ne.s32.totalorder %s321, %s322
      %p334 = scmp.eq.s32.totalorder %s29, 1
      %p335 = por %p333, %p334
      %p337 = scmp.ne.s32.totalorder %s322, %s336
      %p338 = scmp.eq.s32.totalorder %s29, 0
      %p339 = por %p337, %p338
      %s340 = ssub.s32 %s23, %s30
      %p341 = scmp.eq.s32.totalorder %s340, 0
      %s343 = sadd.s32 %s342, 1
      %s344 = scalar_select %p341, %s342, %s343
      %p347 = pneg %p341
      %p348 = scmp.eq.s32.totalorder %s23, 1
      %p349 = por %p347, %p348
      %p350 = scmp.ne.s32.totalorder %s342, %s345
      %p351 = scmp.eq.s32.totalorder %s23, 0
      %p352 = por %p350, %p351
      %p353 = scmp.ne.s32.totalorder %s342, %s345
      %p354 = scmp.eq.s32.totalorder %s28, 1
      %p355 = por %p353, %p354
      %p356 = scmp.ne.s32.totalorder %s345, %s346
      %p357 = scmp.eq.s32.totalorder %s28, 0
      %p358 = por %p356, %p357
      %p359 = scmp.ne.s32.totalorder %s345, %s346
      %p360 = scmp.eq.s32.totalorder %s29, 1
      %p361 = por %p359, %p360
      %p363 = scmp.ne.s32.totalorder %s346, %s362
      %p364 = scmp.eq.s32.totalorder %s29, 0
      %p365 = por %p363, %p364
      %p366 = scmp.le.s32.totalorder 1, %s23
      %p367 = scmp.lt.s32.totalorder %s23, 3
      %p368 = pnand %p366, %p367
      %p369 = pneg %p368
      // Predicated region
      $region9: #{block8_forward.1} parent=5 // pred_check
        _
      $region10: #{block8_forward.1} parent=5 // pred_check_branch
        %371 = sbr.rel (%p368) target = $region12
      $region11: #{block8_forward.1} parent=5 // pred_region
        %s372 = ssub.s32 %s23, 1
        // Predicated region
        $region13: #{block8_forward.1} parent=11 // pred_check
          %p373 = pneg %p122
        $region14: #{block8_forward.1} parent=11 // pred_check_branch
          %375 = sbr.rel (%p373) target = $region16
        $region15: #{block8_forward.1} parent=11 // pred_region
          _
        $region16: #{block8_forward.1} parent=11 // pred_fallthru
          _
        // Predicated region
        $region17: #{block8_forward.1} parent=11 // pred_check
          %p376 = pneg %p143
        $region18: #{block8_forward.1} parent=11 // pred_check_branch
          %378 = sbr.rel (%p376) target = $region20
        $region19: #{block8_forward.1} parent=11 // pred_region
          _
        $region20: #{block8_forward.1} parent=11 // pred_fallthru
          _
        // Predicated region
        $region21: #{block8_forward.1} parent=11 // pred_check
          %p379 = pneg %p164
        $region22: #{block8_forward.1} parent=11 // pred_check_branch
          %381 = sbr.rel (%p379) target = $region24
        $region23: #{block8_forward.1} parent=11 // pred_region
          _
        $region24: #{block8_forward.1} parent=11 // pred_fallthru
          _
        // Predicated region
        $region25: #{block8_forward.1} parent=11 // pred_check
          %p382 = pneg %p185
        $region26: #{block8_forward.1} parent=11 // pred_check_branch
          %384 = sbr.rel (%p382) target = $region28
        $region27: #{block8_forward.1} parent=11 // pred_region
          _
        $region28: #{block8_forward.1} parent=11 // pred_fallthru
          _
        // Predicated region
        $region29: #{block8_forward.1} parent=11 // pred_check
          %p385 = pneg %p206
        $region30: #{block8_forward.1} parent=11 // pred_check_branch
          %387 = sbr.rel (%p385) target = $region32
        $region31: #{block8_forward.1} parent=11 // pred_region
          _
        $region32: #{block8_forward.1} parent=11 // pred_fallthru
          _
        // Predicated region
        $region33: #{block8_forward.1} parent=11 // pred_check
          %p388 = pneg %p227
        $region34: #{block8_forward.1} parent=11 // pred_check_branch
          %390 = sbr.rel (%p388) target = $region36
        $region35: #{block8_forward.1} parent=11 // pred_region
          _
        $region36: #{block8_forward.1} parent=11 // pred_fallthru
          _
        // Predicated region
        $region37: #{block8_forward.1} parent=11 // pred_check
          %p391 = pneg %p248
        $region38: #{block8_forward.1} parent=11 // pred_check_branch
          %393 = sbr.rel (%p391) target = $region40
        $region39: #{block8_forward.1} parent=11 // pred_region
          _
        $region40: #{block8_forward.1} parent=11 // pred_fallthru
          _
        // Predicated region
        $region41: #{block8_forward.1} parent=11 // pred_check
          %p394 = pneg %p269
        $region42: #{block8_forward.1} parent=11 // pred_check_branch
          %396 = sbr.rel (%p394) target = $region44
        $region43: #{block8_forward.1} parent=11 // pred_region
          _
        $region44: #{block8_forward.1} parent=11 // pred_fallthru
          _
        // Predicated region
        $region45: #{block8_forward.1} parent=11 // pred_check
          %p397 = pneg %p290
        $region46: #{block8_forward.1} parent=11 // pred_check_branch
          %399 = sbr.rel (%p397) target = $region48
        $region47: #{block8_forward.1} parent=11 // pred_region
          _
        $region48: #{block8_forward.1} parent=11 // pred_fallthru
          _
        // Predicated region
        $region49: #{block8_forward.1} parent=11 // pred_check
          %p400 = pneg %p311
        $region50: #{block8_forward.1} parent=11 // pred_check_branch
          %402 = sbr.rel (%p400) target = $region52
        $region51: #{block8_forward.1} parent=11 // pred_region
          _
        $region52: #{block8_forward.1} parent=11 // pred_fallthru
          _
        // Predicated region
        $region53: #{block8_forward.1} parent=11 // pred_check
          %p403 = pneg %p332
        $region54: #{block8_forward.1} parent=11 // pred_check_branch
          %405 = sbr.rel (%p403) target = $region56
        $region55: #{block8_forward.1} parent=11 // pred_region
          _
        $region56: #{block8_forward.1} parent=11 // pred_fallthru
          _
      $region12: #{block8_forward.1} parent=5 // pred_fallthru
        _
      %p406 = scmp.lt.s32.totalorder %s23, 2
      // Predicated region
      $region57: #{block8_forward.1} parent=5 // pred_check
        %p407 = pneg %p406
      $region58: #{block8_forward.1} parent=5 // pred_check_branch
        %409 = sbr.rel (%p407) target = $region60
      $region59: #{block8_forward.1} parent=5 // pred_region
        // Predicated region
        $region61: #{block8_forward.1} parent=59 // pred_check
          %p410 = pneg %p43
        $region62: #{block8_forward.1} parent=59 // pred_check_branch
          %412 = sbr.rel (%p410) target = $region64
        $region63: #{block8_forward.1} parent=59 // pred_region
          %s413 = smul.u32 8, %s23
          %p414 = scmp.lt.s32.totalorder %s413, 15
          %s415 = scalar_select %p414, %s413, 15
          %s416 = smul.addr %s415, 17
          %s417 = smul.addr %s416, 8
          %s418 = scalar_lea.vmem %s0, %s417
          %s419 = smul.u32 8, %s23
        $region64: #{block8_forward.1} parent=59 // pred_fallthru
          _
        // Predicated region
        $region65: #{block8_forward.1} parent=59 // pred_check
          %p420 = pneg %p69
        $region66: #{block8_forward.1} parent=59 // pred_check_branch
          %422 = sbr.rel (%p420) target = $region68
        $region67: #{block8_forward.1} parent=59 // pred_region
          %s423 = smul.u32 8, %s23
          %p424 = scmp.lt.s32.totalorder %s423, 15
          %s425 = scalar_select %p424, %s423, 15
          %s426 = smul.addr %s425, 8
          %s427 = scalar_lea.vmem %s1, %s426
          %s428 = smul.u32 8, %s23
        $region68: #{block8_forward.1} parent=59 // pred_fallthru
          _
        // Predicated region
        $region69: #{block8_forward.1} parent=59 // pred_check
          %p429 = pneg %p95
        $region70: #{block8_forward.1} parent=59 // pred_check_branch
          %431 = sbr.rel (%p429) target = $region72
        $region71: #{block8_forward.1} parent=59 // pred_region
          %s432 = smul.u32 8, %s23
          %p433 = scmp.lt.s32.totalorder %s432, 15
          %s434 = scalar_select %p433, %s432, 15
          %s435 = smul.addr %s434, 8
          %s436 = scalar_lea.vmem %s2, %s435
          %s437 = smul.u32 8, %s23
        $region72: #{block8_forward.1} parent=59 // pred_fallthru
          _
      $region60: #{block8_forward.1} parent=5 // pred_fallthru
        _
      %p438 = scmp.le.s32.totalorder 1, %s23
      %p439 = scmp.lt.s32.totalorder %s23, 3
      %p440 = pnand %p438, %p439
      %p441 = pneg %p440
      // Predicated region
      $region73: #{block8_forward.1} parent=5 // pred_check
        _
      $region74: #{block8_forward.1} parent=5 // pred_check_branch
        %443 = sbr.rel (%p440) target = $region76
      $region75: #{block8_forward.1} parent=5 // pred_region
        %s444 = ssub.s32 %s23, 1
        %s445 = smul.u32 8, %s28
        %p446 = scmp.lt.s32.totalorder %s445, 15
        %s447 = scalar_select %p446, %s445, 15
        %s448 = smul.addr %s447, 17
        %s449 = smul.addr %s448, 8
        %s450 = scalar_lea.vmem %s0, %s449
        %p451 = pneg %p49
        %p452 = pneg %p46
        %s453 = smul.u32 8, %s28
        %p454 = scmp.lt.s32.totalorder %s453, 15
        %s455 = scalar_select %p454, %s453, 15
        %s456 = smul.addr %s455, 8
        %s457 = scalar_lea.vmem %s1, %s456
        %p458 = pneg %p75
        %p459 = pneg %p72
        %s460 = smul.u32 8, %s28
        %p461 = scmp.lt.s32.totalorder %s460, 15
        %s462 = scalar_select %p461, %s460, 15
        %s463 = smul.addr %s462, 8
        %s464 = scalar_lea.vmem %s2, %s463
        %p465 = pneg %p101
        %p466 = pneg %p98
        %p467 = pneg %p122
        %p468 = pneg %p119
        %p469 = pneg %p143
        %p470 = pneg %p140
        %p471 = pneg %p164
        %p472 = pneg %p161
        %p473 = pneg %p185
        %p474 = pneg %p182
        %p475 = pneg %p206
        %p476 = pneg %p203
        %p477 = pneg %p227
        %p478 = pneg %p224
        %p479 = pneg %p248
        %p480 = pneg %p245
        %p481 = pneg %p269
        %p482 = pneg %p266
        %p483 = pneg %p290
        %p484 = pneg %p287
        %p485 = pneg %p311
        %p486 = pneg %p308
        %p487 = pneg %p332
        %p488 = pneg %p329
        %p489 = pneg %p358
        %p490 = pneg %p355
        %s491 = sand.u32 %s345, 1
        %s492 = scalar_lea.sflag [#allocation3], %s491
        %s493 = sand.u32 %s345, 1
        %s494 = smul.addr %s493, 1088
        %s495 = scalar_lea.vmem [#allocation2], %s494
        %s496 = smul.u32 8, %s28
        %p497 = scmp.lt.s32.totalorder %s496, 15
        %s498 = scalar_select %p497, %s496, 15
        %s499 = smul.addr %s498, 17
        %s500 = smul.addr %s499, 8
        %s501 = scalar_lea.vmem %s0, %s500
        %s502 = smul.u32 8, %s28
        %s503 = smul.u32 8, %s28
        %p504 = scmp.lt.s32.totalorder %s503, 15
        %s505 = scalar_select %p504, %s503, 15
        %s506 = smul.addr %s505, 8
        %s507 = scalar_lea.vmem %s1, %s506
        %s508 = smul.u32 8, %s28
        %s509 = smul.u32 8, %s28
        %p510 = scmp.lt.s32.totalorder %s509, 15
        %s511 = scalar_select %p510, %s509, 15
        %s512 = smul.addr %s511, 8
        %s513 = scalar_lea.vmem %s2, %s512
        %s514 = smul.u32 8, %s28
        %s515 = smul.u32 8, %s28
        %v517 = vld [vmem:[%s501] sm:$0xff]
        %v518 = vld [vmem:[%s501 + $0x8] sm:$0xff]
        %v519 = vld [vmem:[%s501 + $0x10] sm:$0xff]
        %v520 = vld [vmem:[%s501 + $0x18] sm:$0xff]
        %v521 = vld [vmem:[%s501 + $0x20] sm:$0xff]
        %v522 = vld [vmem:[%s501 + $0x28] sm:$0xff]
        %v523 = vld [vmem:[%s501 + $0x30] sm:$0xff]
        %v524 = vld [vmem:[%s501 + $0x38] sm:$0xff]
        %v525 = vld [vmem:[%s501 + $0x40] sm:$0xff]
        %v526 = vld [vmem:[%s501 + $0x48] sm:$0xff]
        %v527 = vld [vmem:[%s501 + $0x50] sm:$0xff]
        %v528 = vld [vmem:[%s501 + $0x58] sm:$0xff]
        %v529 = vld [vmem:[%s501 + $0x60] sm:$0xff]
        %v530 = vld [vmem:[%s501 + $0x68] sm:$0xff]
        %v531 = vld [vmem:[%s501 + $0x70] sm:$0xff]
        %v532 = vld [vmem:[%s501 + $0x78] sm:$0xff]
        %v533 = vld [vmem:[%s501 + $0x80] sm:$0xff]
        %v534 = vld [vmem:[%s501 + $0x88] sm:$0xff]
        %v535 = vld [vmem:[%s501 + $0x90] sm:$0xff]
        %v536 = vld [vmem:[%s501 + $0x98] sm:$0xff]
        %v537 = vld [vmem:[%s501 + $0xa0] sm:$0xff]
        %v538 = vld [vmem:[%s501 + $0xa8] sm:$0xff]
        %v539 = vld [vmem:[%s501 + $0xb0] sm:$0xff]
        %v540 = vld [vmem:[%s501 + $0xb8] sm:$0xff]
        %v541 = vld [vmem:[%s501 + $0xc0] sm:$0xff]
        %v542 = vld [vmem:[%s501 + $0xc8] sm:$0xff]
        %v543 = vld [vmem:[%s501 + $0xd0] sm:$0xff]
        %v544 = vld [vmem:[%s501 + $0xd8] sm:$0xff]
        %v545 = vld [vmem:[%s501 + $0xe0] sm:$0xff]
        %v546 = vld [vmem:[%s501 + $0xe8] sm:$0xff]
        %v547 = vld [vmem:[%s501 + $0xf0] sm:$0xff]
        %v548 = vld [vmem:[%s501 + $0xf8] sm:$0xff]
        %v549 = vld [vmem:[%s501 + $0x100] sm:$0xff]
        %v550 = vld [vmem:[%s501 + $0x108] sm:$0xff]
        %v551 = vld [vmem:[%s501 + $0x110] sm:$0xff]
        %v552 = vld [vmem:[%s501 + $0x118] sm:$0xff]
        %v553 = vld [vmem:[%s501 + $0x120] sm:$0xff]
        %v554 = vld [vmem:[%s501 + $0x128] sm:$0xff]
        %v555 = vld [vmem:[%s501 + $0x130] sm:$0xff]
        %v556 = vld [vmem:[%s501 + $0x138] sm:$0xff]
        %v557 = vld [vmem:[%s501 + $0x140] sm:$0xff]
        %v558 = vld [vmem:[%s501 + $0x148] sm:$0xff]
        %v559 = vld [vmem:[%s501 + $0x150] sm:$0xff]
        %v560 = vld [vmem:[%s501 + $0x158] sm:$0xff]
        %v561 = vld [vmem:[%s501 + $0x160] sm:$0xff]
        %v562 = vld [vmem:[%s501 + $0x168] sm:$0xff]
        %v563 = vld [vmem:[%s501 + $0x170] sm:$0xff]
        %v564 = vld [vmem:[%s501 + $0x178] sm:$0xff]
        %v565 = vld [vmem:[%s501 + $0x180] sm:$0xff]
        %v566 = vld [vmem:[%s501 + $0x188] sm:$0xff]
        %v567 = vld [vmem:[%s501 + $0x190] sm:$0xff]
        %v568 = vld [vmem:[%s501 + $0x198] sm:$0xff]
        %v569 = vld [vmem:[%s501 + $0x1a0] sm:$0xff]
        %v570 = vld [vmem:[%s501 + $0x1a8] sm:$0xff]
        %v571 = vld [vmem:[%s501 + $0x1b0] sm:$0xff]
        %v572 = vld [vmem:[%s501 + $0x1b8] sm:$0xff]
        %v573 = vld [vmem:[%s501 + $0x1c0] sm:$0xff]
        %v574 = vld [vmem:[%s501 + $0x1c8] sm:$0xff]
        %v575 = vld [vmem:[%s501 + $0x1d0] sm:$0xff]
        %v576 = vld [vmem:[%s501 + $0x1d8] sm:$0xff]
        %v577 = vld [vmem:[%s501 + $0x1e0] sm:$0xff]
        %v578 = vld [vmem:[%s501 + $0x1e8] sm:$0xff]
        %v579 = vld [vmem:[%s501 + $0x1f0] sm:$0xff]
        %v580 = vld [vmem:[%s501 + $0x1f8] sm:$0xff]
        %v581 = vld [vmem:[%s501 + $0x200] sm:$0xff]
        %v582 = vld [vmem:[%s501 + $0x208] sm:$0xff]
        %v583 = vld [vmem:[%s501 + $0x210] sm:$0xff]
        %v584 = vld [vmem:[%s501 + $0x218] sm:$0xff]
        %v585 = vld [vmem:[%s501 + $0x220] sm:$0xff]
        %v586 = vld [vmem:[%s501 + $0x228] sm:$0xff]
        %v587 = vld [vmem:[%s501 + $0x230] sm:$0xff]
        %v588 = vld [vmem:[%s501 + $0x238] sm:$0xff]
        %v589 = vld [vmem:[%s501 + $0x240] sm:$0xff]
        %v590 = vld [vmem:[%s501 + $0x248] sm:$0xff]
        %v591 = vld [vmem:[%s501 + $0x250] sm:$0xff]
        %v592 = vld [vmem:[%s501 + $0x258] sm:$0xff]
        %v593 = vld [vmem:[%s501 + $0x260] sm:$0xff]
        %v594 = vld [vmem:[%s501 + $0x268] sm:$0xff]
        %v595 = vld [vmem:[%s501 + $0x270] sm:$0xff]
        %v596 = vld [vmem:[%s501 + $0x278] sm:$0xff]
        %v597 = vld [vmem:[%s501 + $0x280] sm:$0xff]
        %v598 = vld [vmem:[%s501 + $0x288] sm:$0xff]
        %v599 = vld [vmem:[%s501 + $0x290] sm:$0xff]
        %v600 = vld [vmem:[%s501 + $0x298] sm:$0xff]
        %v601 = vld [vmem:[%s501 + $0x2a0] sm:$0xff]
        %v602 = vld [vmem:[%s501 + $0x2a8] sm:$0xff]
        %v603 = vld [vmem:[%s501 + $0x2b0] sm:$0xff]
        %v604 = vld [vmem:[%s501 + $0x2b8] sm:$0xff]
        %v605 = vld [vmem:[%s501 + $0x2c0] sm:$0xff]
        %v606 = vld [vmem:[%s501 + $0x2c8] sm:$0xff]
        %v607 = vld [vmem:[%s501 + $0x2d0] sm:$0xff]
        %v608 = vld [vmem:[%s501 + $0x2d8] sm:$0xff]
        %v609 = vld [vmem:[%s501 + $0x2e0] sm:$0xff]
        %v610 = vld [vmem:[%s501 + $0x2e8] sm:$0xff]
        %v611 = vld [vmem:[%s501 + $0x2f0] sm:$0xff]
        %v612 = vld [vmem:[%s501 + $0x2f8] sm:$0xff]
        %v613 = vld [vmem:[%s501 + $0x300] sm:$0xff]
        %v614 = vld [vmem:[%s501 + $0x308] sm:$0xff]
        %v615 = vld [vmem:[%s501 + $0x310] sm:$0xff]
        %v616 = vld [vmem:[%s501 + $0x318] sm:$0xff]
        %v617 = vld [vmem:[%s501 + $0x320] sm:$0xff]
        %v618 = vld [vmem:[%s501 + $0x328] sm:$0xff]
        %v619 = vld [vmem:[%s501 + $0x330] sm:$0xff]
        %v620 = vld [vmem:[%s501 + $0x338] sm:$0xff]
        %v621 = vld [vmem:[%s501 + $0x340] sm:$0xff]
        %v622 = vld [vmem:[%s501 + $0x348] sm:$0xff]
        %v623 = vld [vmem:[%s501 + $0x350] sm:$0xff]
        %v624 = vld [vmem:[%s501 + $0x358] sm:$0xff]
        %v625 = vld [vmem:[%s501 + $0x360] sm:$0xff]
        %v626 = vld [vmem:[%s501 + $0x368] sm:$0xff]
        %v627 = vld [vmem:[%s501 + $0x370] sm:$0xff]
        %v628 = vld [vmem:[%s501 + $0x378] sm:$0xff]
        %v629 = vld [vmem:[%s501 + $0x380] sm:$0xff]
        %v630 = vld [vmem:[%s501 + $0x388] sm:$0xff]
        %v631 = vld [vmem:[%s501 + $0x390] sm:$0xff]
        %v632 = vld [vmem:[%s501 + $0x398] sm:$0xff]
        %v633 = vld [vmem:[%s501 + $0x3a0] sm:$0xff]
        %v634 = vld [vmem:[%s501 + $0x3a8] sm:$0xff]
        %v635 = vld [vmem:[%s501 + $0x3b0] sm:$0xff]
        %v636 = vld [vmem:[%s501 + $0x3b8] sm:$0xff]
        %v637 = vld [vmem:[%s501 + $0x3c0] sm:$0xff]
        %v638 = vld [vmem:[%s501 + $0x3c8] sm:$0xff]
        %v639 = vld [vmem:[%s501 + $0x3d0] sm:$0xff]
        %v640 = vld [vmem:[%s501 + $0x3d8] sm:$0xff]
        %v641 = vld [vmem:[%s501 + $0x3e0] sm:$0xff]
        %v642 = vld [vmem:[%s501 + $0x3e8] sm:$0xff]
        %v643 = vld [vmem:[%s501 + $0x3f0] sm:$0xff]
        %v644 = vld [vmem:[%s501 + $0x3f8] sm:$0xff]
        %v645 = vld [vmem:[%s501 + $0x400] sm:$0xff]
        %v646 = vld [vmem:[%s501 + $0x408] sm:$0xff]
        %v647 = vld [vmem:[%s501 + $0x410] sm:$0xff]
        %v648 = vld [vmem:[%s501 + $0x418] sm:$0xff]
        %v649 = vld [vmem:[%s501 + $0x420] sm:$0xff]
        %v650 = vld [vmem:[%s501 + $0x428] sm:$0xff]
        %v651 = vld [vmem:[%s501 + $0x430] sm:$0xff]
        %v652 = vld [vmem:[%s501 + $0x438] sm:$0xff]
        %v653 = vpack.c.bf16 %v534, %v517
        %v654 = vpack.c.bf16 %v535, %v518
        %v655 = vpack.c.bf16 %v536, %v519
        %v656 = vpack.c.bf16 %v537, %v520
        %v657 = vpack.c.bf16 %v538, %v521
        %v658 = vpack.c.bf16 %v539, %v522
        %v659 = vpack.c.bf16 %v540, %v523
        %v660 = vpack.c.bf16 %v541, %v524
        %v661 = vpack.c.bf16 %v542, %v525
        %v662 = vpack.c.bf16 %v543, %v526
        %v663 = vpack.c.bf16 %v544, %v527
        %v664 = vpack.c.bf16 %v545, %v528
        %v665 = vpack.c.bf16 %v546, %v529
        %v666 = vpack.c.bf16 %v547, %v530
        %v667 = vpack.c.bf16 %v548, %v531
        %v668 = vpack.c.bf16 %v549, %v532
        %v669 = vpack.c.bf16 %v550, %v533
        %v670 = vpack.c.bf16 %v568, %v551
        %v671 = vpack.c.bf16 %v569, %v552
        %v672 = vpack.c.bf16 %v570, %v553
        %v673 = vpack.c.bf16 %v571, %v554
        %v674 = vpack.c.bf16 %v572, %v555
        %v675 = vpack.c.bf16 %v573, %v556
        %v676 = vpack.c.bf16 %v574, %v557
        %v677 = vpack.c.bf16 %v575, %v558
        %v678 = vpack.c.bf16 %v576, %v559
        %v679 = vpack.c.bf16 %v577, %v560
        %v680 = vpack.c.bf16 %v578, %v561
        %v681 = vpack.c.bf16 %v579, %v562
        %v682 = vpack.c.bf16 %v580, %v563
        %v683 = vpack.c.bf16 %v581, %v564
        %v684 = vpack.c.bf16 %v582, %v565
        %v685 = vpack.c.bf16 %v583, %v566
        %v686 = vpack.c.bf16 %v584, %v567
        %v687 = vpack.c.bf16 %v602, %v585
        %v688 = vpack.c.bf16 %v603, %v586
        %v689 = vpack.c.bf16 %v604, %v587
        %v690 = vpack.c.bf16 %v605, %v588
        %v691 = vpack.c.bf16 %v606, %v589
        %v692 = vpack.c.bf16 %v607, %v590
        %v693 = vpack.c.bf16 %v608, %v591
        %v694 = vpack.c.bf16 %v609, %v592
        %v695 = vpack.c.bf16 %v610, %v593
        %v696 = vpack.c.bf16 %v611, %v594
        %v697 = vpack.c.bf16 %v612, %v595
        %v698 = vpack.c.bf16 %v613, %v596
        %v699 = vpack.c.bf16 %v614, %v597
        %v700 = vpack.c.bf16 %v615, %v598
        %v701 = vpack.c.bf16 %v616, %v599
        %v702 = vpack.c.bf16 %v617, %v600
        %v703 = vpack.c.bf16 %v618, %v601
        %v704 = vpack.c.bf16 %v636, %v619
        %v705 = vpack.c.bf16 %v637, %v620
        %v706 = vpack.c.bf16 %v638, %v621
        %v707 = vpack.c.bf16 %v639, %v622
        %v708 = vpack.c.bf16 %v640, %v623
        %v709 = vpack.c.bf16 %v641, %v624
        %v710 = vpack.c.bf16 %v642, %v625
        %v711 = vpack.c.bf16 %v643, %v626
        %v712 = vpack.c.bf16 %v644, %v627
        %v713 = vpack.c.bf16 %v645, %v628
        %v714 = vpack.c.bf16 %v646, %v629
        %v715 = vpack.c.bf16 %v647, %v630
        %v716 = vpack.c.bf16 %v648, %v631
        %v717 = vpack.c.bf16 %v649, %v632
        %v718 = vpack.c.bf16 %v650, %v633
        %v719 = vpack.c.bf16 %v651, %v634
        %v720 = vpack.c.bf16 %v652, %v635
        %v721 = vld [vmem:[%s507] sm:$0xff]
        %v722 = vld [vmem:[%s507 + $0x8] sm:$0xff]
        %v723 = vld [vmem:[%s507 + $0x10] sm:$0xff]
        %v724 = vld [vmem:[%s507 + $0x18] sm:$0xff]
        %v725 = vld [vmem:[%s507 + $0x20] sm:$0xff]
        %v726 = vld [vmem:[%s507 + $0x28] sm:$0xff]
        %v727 = vld [vmem:[%s507 + $0x30] sm:$0xff]
        %v728 = vld [vmem:[%s507 + $0x38] sm:$0xff]
        %v729 = vld [vmem:[%s513] sm:$0xff]
        %v730 = vld [vmem:[%s513 + $0x8] sm:$0xff]
        %v731 = vld [vmem:[%s513 + $0x10] sm:$0xff]
        %v732 = vld [vmem:[%s513 + $0x18] sm:$0xff]
        %v733 = vld [vmem:[%s513 + $0x20] sm:$0xff]
        %v734 = vld [vmem:[%s513 + $0x28] sm:$0xff]
        %v735 = vld [vmem:[%s513 + $0x30] sm:$0xff]
        %v736 = vld [vmem:[%s513 + $0x38] sm:$0xff]
        %v737 = vld [vmem:[%s3] sm:$0xff]
        %v738 = vld [vmem:[%s3 + $0x8] sm:$0xff]
        %v739 = vld [vmem:[%s3 + $0x10] sm:$0xff]
        %v740 = vld [vmem:[%s3 + $0x18] sm:$0xff]
        %v741 = vld [vmem:[%s3 + $0x20] sm:$0xff]
        %v742 = vld [vmem:[%s3 + $0x28] sm:$0xff]
        %v743 = vld [vmem:[%s3 + $0x30] sm:$0xff]
        %v744 = vld [vmem:[%s3 + $0x38] sm:$0xff]
        %v745 = vld [vmem:[%s3 + $0x40] sm:$0xff]
        %v746 = vld [vmem:[%s3 + $0x48] sm:$0xff]
        %v747 = vld [vmem:[%s3 + $0x50] sm:$0xff]
        %v748 = vld [vmem:[%s3 + $0x58] sm:$0xff]
        %v749 = vld [vmem:[%s3 + $0x60] sm:$0xff]
        %v750 = vld [vmem:[%s3 + $0x68] sm:$0xff]
        %v751 = vld [vmem:[%s3 + $0x70] sm:$0xff]
        %v752 = vld [vmem:[%s3 + $0x78] sm:$0xff]
        %v753 = vld [vmem:[%s3 + $0x80] sm:$0xff]
        %v754 = vld [vmem:[%s3 + $0x88] sm:$0xff]
        %v755 = vld [vmem:[%s3 + $0x90] sm:$0xff]
        %v756 = vld [vmem:[%s3 + $0x98] sm:$0xff]
        %v757 = vld [vmem:[%s3 + $0xa0] sm:$0xff]
        %v758 = vld [vmem:[%s3 + $0xa8] sm:$0xff]
        %v759 = vld [vmem:[%s3 + $0xb0] sm:$0xff]
        %v760 = vld [vmem:[%s3 + $0xb8] sm:$0xff]
        %v761 = vld [vmem:[%s3 + $0xc0] sm:$0xff]
        %v762 = vld [vmem:[%s3 + $0xc8] sm:$0xff]
        %v763 = vld [vmem:[%s3 + $0xd0] sm:$0xff]
        %v764 = vld [vmem:[%s3 + $0xd8] sm:$0xff]
        %v765 = vld [vmem:[%s3 + $0xe0] sm:$0xff]
        %v766 = vld [vmem:[%s3 + $0xe8] sm:$0xff]
        %v767 = vld [vmem:[%s3 + $0xf0] sm:$0xff]
        %v768 = vld [vmem:[%s3 + $0xf8] sm:$0xff]
        %v769 = vld [vmem:[%s3 + $0x100] sm:$0xff]
        %v770 = vld [vmem:[%s3 + $0x108] sm:$0xff]
        %v771 = vld [vmem:[%s3 + $0x110] sm:$0xff]
        %v772 = vld [vmem:[%s3 + $0x118] sm:$0xff]
        %v773 = vld [vmem:[%s3 + $0x120] sm:$0xff]
        %v774 = vld [vmem:[%s3 + $0x128] sm:$0xff]
        %v775 = vld [vmem:[%s3 + $0x130] sm:$0xff]
        %v776 = vld [vmem:[%s3 + $0x138] sm:$0xff]
        %v777 = vld [vmem:[%s3 + $0x140] sm:$0xff]
        %v778 = vld [vmem:[%s3 + $0x148] sm:$0xff]
        %v779 = vld [vmem:[%s3 + $0x150] sm:$0xff]
        %v780 = vld [vmem:[%s3 + $0x158] sm:$0xff]
        %v781 = vld [vmem:[%s3 + $0x160] sm:$0xff]
        %v782 = vld [vmem:[%s3 + $0x168] sm:$0xff]
        %v783 = vld [vmem:[%s3 + $0x170] sm:$0xff]
        %v784 = vld [vmem:[%s3 + $0x178] sm:$0xff]
        %v785 = vld [vmem:[%s3 + $0x180] sm:$0xff]
        %v786 = vld [vmem:[%s3 + $0x188] sm:$0xff]
        %v787 = vld [vmem:[%s3 + $0x190] sm:$0xff]
        %v788 = vld [vmem:[%s3 + $0x198] sm:$0xff]
        %v789 = vld [vmem:[%s3 + $0x1a0] sm:$0xff]
        %v790 = vld [vmem:[%s3 + $0x1a8] sm:$0xff]
        %v791 = vld [vmem:[%s3 + $0x1b0] sm:$0xff]
        %v792 = vld [vmem:[%s3 + $0x1b8] sm:$0xff]
        %v793 = vld [vmem:[%s3 + $0x1c0] sm:$0xff]
        %v794 = vld [vmem:[%s3 + $0x1c8] sm:$0xff]
        %v795 = vld [vmem:[%s3 + $0x1d0] sm:$0xff]
        %v796 = vld [vmem:[%s3 + $0x1d8] sm:$0xff]
        %v797 = vld [vmem:[%s3 + $0x1e0] sm:$0xff]
        %v798 = vld [vmem:[%s3 + $0x1e8] sm:$0xff]
        %v799 = vld [vmem:[%s3 + $0x1f0] sm:$0xff]
        %v800 = vld [vmem:[%s3 + $0x1f8] sm:$0xff]
        %v801 = vld [vmem:[%s3 + $0x200] sm:$0xff]
        %v802 = vld [vmem:[%s3 + $0x208] sm:$0xff]
        %v803 = vld [vmem:[%s3 + $0x210] sm:$0xff]
        %v804 = vld [vmem:[%s3 + $0x218] sm:$0xff]
        %v805 = vld [vmem:[%s3 + $0x220] sm:$0xff]
        %v806 = vld [vmem:[%s3 + $0x228] sm:$0xff]
        %v807 = vld [vmem:[%s3 + $0x230] sm:$0xff]
        %v808 = vld [vmem:[%s3 + $0x238] sm:$0xff]
        %v809 = vld [vmem:[%s3 + $0x240] sm:$0xff]
        %v810 = vld [vmem:[%s3 + $0x248] sm:$0xff]
        %v811 = vld [vmem:[%s3 + $0x250] sm:$0xff]
        %v812 = vld [vmem:[%s3 + $0x258] sm:$0xff]
        %v813 = vld [vmem:[%s3 + $0x260] sm:$0xff]
        %v814 = vld [vmem:[%s3 + $0x268] sm:$0xff]
        %v815 = vld [vmem:[%s3 + $0x270] sm:$0xff]
        %v816 = vld [vmem:[%s3 + $0x278] sm:$0xff]
        %v817 = vld [vmem:[%s3 + $0x280] sm:$0xff]
        %v818 = vld [vmem:[%s3 + $0x288] sm:$0xff]
        %v819 = vld [vmem:[%s3 + $0x290] sm:$0xff]
        %v820 = vld [vmem:[%s3 + $0x298] sm:$0xff]
        %v821 = vld [vmem:[%s3 + $0x2a0] sm:$0xff]
        %v822 = vld [vmem:[%s3 + $0x2a8] sm:$0xff]
        %v823 = vld [vmem:[%s3 + $0x2b0] sm:$0xff]
        %v824 = vld [vmem:[%s3 + $0x2b8] sm:$0xff]
        %v825 = vld [vmem:[%s3 + $0x2c0] sm:$0xff]
        %v826 = vld [vmem:[%s3 + $0x2c8] sm:$0xff]
        %v827 = vld [vmem:[%s3 + $0x2d0] sm:$0xff]
        %v828 = vld [vmem:[%s3 + $0x2d8] sm:$0xff]
        %v829 = vld [vmem:[%s3 + $0x2e0] sm:$0xff]
        %v830 = vld [vmem:[%s3 + $0x2e8] sm:$0xff]
        %v831 = vld [vmem:[%s3 + $0x2f0] sm:$0xff]
        %v832 = vld [vmem:[%s3 + $0x2f8] sm:$0xff]
        %v833 = vld [vmem:[%s3 + $0x300] sm:$0xff]
        %v834 = vld [vmem:[%s3 + $0x308] sm:$0xff]
        %v835 = vld [vmem:[%s3 + $0x310] sm:$0xff]
        %v836 = vld [vmem:[%s3 + $0x318] sm:$0xff]
        %v837 = vld [vmem:[%s3 + $0x320] sm:$0xff]
        %v838 = vld [vmem:[%s3 + $0x328] sm:$0xff]
        %v839 = vld [vmem:[%s3 + $0x330] sm:$0xff]
        %v840 = vld [vmem:[%s3 + $0x338] sm:$0xff]
        %v841 = vld [vmem:[%s3 + $0x340] sm:$0xff]
        %v842 = vld [vmem:[%s3 + $0x348] sm:$0xff]
        %v843 = vld [vmem:[%s3 + $0x350] sm:$0xff]
        %v844 = vld [vmem:[%s3 + $0x358] sm:$0xff]
        %v845 = vld [vmem:[%s3 + $0x360] sm:$0xff]
        %v846 = vld [vmem:[%s3 + $0x368] sm:$0xff]
        %v847 = vld [vmem:[%s3 + $0x370] sm:$0xff]
        %v848 = vld [vmem:[%s3 + $0x378] sm:$0xff]
        %v849 = vld [vmem:[%s3 + $0x380] sm:$0xff]
        %v850 = vld [vmem:[%s3 + $0x388] sm:$0xff]
        %v851 = vld [vmem:[%s3 + $0x390] sm:$0xff]
        %v852 = vld [vmem:[%s3 + $0x398] sm:$0xff]
        %v853 = vld [vmem:[%s3 + $0x3a0] sm:$0xff]
        %v854 = vld [vmem:[%s3 + $0x3a8] sm:$0xff]
        %v855 = vld [vmem:[%s3 + $0x3b0] sm:$0xff]
        %v856 = vld [vmem:[%s3 + $0x3b8] sm:$0xff]
        %v857 = vld [vmem:[%s3 + $0x3c0] sm:$0xff]
        %v858 = vld [vmem:[%s3 + $0x3c8] sm:$0xff]
        %v859 = vld [vmem:[%s3 + $0x3d0] sm:$0xff]
        %v860 = vld [vmem:[%s3 + $0x3d8] sm:$0xff]
        %v861 = vld [vmem:[%s3 + $0x3e0] sm:$0xff]
        %v862 = vld [vmem:[%s3 + $0x3e8] sm:$0xff]
        %v863 = vld [vmem:[%s3 + $0x3f0] sm:$0xff]
        %v864 = vld [vmem:[%s3 + $0x3f8] sm:$0xff]
        %v865 = vld [vmem:[%s3 + $0x400] sm:$0xff]
        %v866 = vld [vmem:[%s3 + $0x408] sm:$0xff]
        %v867 = vld [vmem:[%s3 + $0x410] sm:$0xff]
        %v868 = vld [vmem:[%s3 + $0x418] sm:$0xff]
        %v869 = vld [vmem:[%s3 + $0x420] sm:$0xff]
        %v870 = vld [vmem:[%s3 + $0x428] sm:$0xff]
        %v871 = vld [vmem:[%s3 + $0x430] sm:$0xff]
        %v872 = vld [vmem:[%s3 + $0x438] sm:$0xff]
        %v873 = vld [vmem:[%s3 + $0x440] sm:$0xff]
        %v874 = vld [vmem:[%s3 + $0x448] sm:$0xff]
        %v875 = vld [vmem:[%s3 + $0x450] sm:$0xff]
        %v876 = vld [vmem:[%s3 + $0x458] sm:$0xff]
        %v877 = vld [vmem:[%s3 + $0x460] sm:$0xff]
        %v878 = vld [vmem:[%s3 + $0x468] sm:$0xff]
        %v879 = vld [vmem:[%s3 + $0x470] sm:$0xff]
        %v880 = vld [vmem:[%s3 + $0x478] sm:$0xff]
        %v881 = vld [vmem:[%s3 + $0x480] sm:$0xff]
        %v882 = vld [vmem:[%s3 + $0x488] sm:$0xff]
        %v883 = vld [vmem:[%s3 + $0x490] sm:$0xff]
        %v884 = vld [vmem:[%s3 + $0x498] sm:$0xff]
        %v885 = vld [vmem:[%s3 + $0x4a0] sm:$0xff]
        %v886 = vld [vmem:[%s3 + $0x4a8] sm:$0xff]
        %v887 = vld [vmem:[%s3 + $0x4b0] sm:$0xff]
        %v888 = vld [vmem:[%s3 + $0x4b8] sm:$0xff]
        %v889 = vld [vmem:[%s3 + $0x4c0] sm:$0xff]
        %v890 = vld [vmem:[%s3 + $0x4c8] sm:$0xff]
        %v891 = vld [vmem:[%s3 + $0x4d0] sm:$0xff]
        %v892 = vld [vmem:[%s3 + $0x4d8] sm:$0xff]
        %v893 = vld [vmem:[%s3 + $0x4e0] sm:$0xff]
        %v894 = vld [vmem:[%s3 + $0x4e8] sm:$0xff]
        %v895 = vld [vmem:[%s3 + $0x4f0] sm:$0xff]
        %v896 = vld [vmem:[%s3 + $0x4f8] sm:$0xff]
        %v897 = vld [vmem:[%s3 + $0x500] sm:$0xff]
        %v898 = vld [vmem:[%s3 + $0x508] sm:$0xff]
        %v899 = vld [vmem:[%s3 + $0x510] sm:$0xff]
        %v900 = vld [vmem:[%s3 + $0x518] sm:$0xff]
        %v901 = vld [vmem:[%s3 + $0x520] sm:$0xff]
        %v902 = vld [vmem:[%s3 + $0x528] sm:$0xff]
        %v903 = vld [vmem:[%s3 + $0x530] sm:$0xff]
        %v904 = vld [vmem:[%s3 + $0x538] sm:$0xff]
        %v905 = vld [vmem:[%s3 + $0x540] sm:$0xff]
        %v906 = vld [vmem:[%s3 + $0x548] sm:$0xff]
        %v907 = vld [vmem:[%s3 + $0x550] sm:$0xff]
        %v908 = vld [vmem:[%s3 + $0x558] sm:$0xff]
        %v909 = vld [vmem:[%s3 + $0x560] sm:$0xff]
        %v910 = vld [vmem:[%s3 + $0x568] sm:$0xff]
        %v911 = vld [vmem:[%s3 + $0x570] sm:$0xff]
        %v912 = vld [vmem:[%s3 + $0x578] sm:$0xff]
        %v913 = vld [vmem:[%s3 + $0x580] sm:$0xff]
        %v914 = vld [vmem:[%s3 + $0x588] sm:$0xff]
        %v915 = vld [vmem:[%s3 + $0x590] sm:$0xff]
        %v916 = vld [vmem:[%s3 + $0x598] sm:$0xff]
        %v917 = vld [vmem:[%s3 + $0x5a0] sm:$0xff]
        %v918 = vld [vmem:[%s3 + $0x5a8] sm:$0xff]
        %v919 = vld [vmem:[%s3 + $0x5b0] sm:$0xff]
        %v920 = vld [vmem:[%s3 + $0x5b8] sm:$0xff]
        %v921 = vld [vmem:[%s3 + $0x5c0] sm:$0xff]
        %v922 = vld [vmem:[%s3 + $0x5c8] sm:$0xff]
        %v923 = vld [vmem:[%s3 + $0x5d0] sm:$0xff]
        %v924 = vld [vmem:[%s3 + $0x5d8] sm:$0xff]
        %v925 = vld [vmem:[%s3 + $0x5e0] sm:$0xff]
        %v926 = vld [vmem:[%s3 + $0x5e8] sm:$0xff]
        %v927 = vld [vmem:[%s3 + $0x5f0] sm:$0xff]
        %v928 = vld [vmem:[%s3 + $0x5f8] sm:$0xff]
        %v929 = vld [vmem:[%s3 + $0x600] sm:$0xff]
        %v930 = vld [vmem:[%s3 + $0x608] sm:$0xff]
        %v931 = vld [vmem:[%s3 + $0x610] sm:$0xff]
        %v932 = vld [vmem:[%s3 + $0x618] sm:$0xff]
        %v933 = vld [vmem:[%s3 + $0x620] sm:$0xff]
        %v934 = vld [vmem:[%s3 + $0x628] sm:$0xff]
        %v935 = vld [vmem:[%s3 + $0x630] sm:$0xff]
        %v936 = vld [vmem:[%s3 + $0x638] sm:$0xff]
        %v937 = vld [vmem:[%s3 + $0x640] sm:$0xff]
        %v938 = vld [vmem:[%s3 + $0x648] sm:$0xff]
        %v939 = vld [vmem:[%s3 + $0x650] sm:$0xff]
        %v940 = vld [vmem:[%s3 + $0x658] sm:$0xff]
        %v941 = vld [vmem:[%s3 + $0x660] sm:$0xff]
        %v942 = vld [vmem:[%s3 + $0x668] sm:$0xff]
        %v943 = vld [vmem:[%s3 + $0x670] sm:$0xff]
        %v944 = vld [vmem:[%s3 + $0x678] sm:$0xff]
        %v945 = vld [vmem:[%s3 + $0x680] sm:$0xff]
        %v946 = vld [vmem:[%s3 + $0x688] sm:$0xff]
        %v947 = vld [vmem:[%s3 + $0x690] sm:$0xff]
        %v948 = vld [vmem:[%s3 + $0x698] sm:$0xff]
        %v949 = vld [vmem:[%s3 + $0x6a0] sm:$0xff]
        %v950 = vld [vmem:[%s3 + $0x6a8] sm:$0xff]
        %v951 = vld [vmem:[%s3 + $0x6b0] sm:$0xff]
        %v952 = vld [vmem:[%s3 + $0x6b8] sm:$0xff]
        %v953 = vld [vmem:[%s3 + $0x6c0] sm:$0xff]
        %v954 = vld [vmem:[%s3 + $0x6c8] sm:$0xff]
        %v955 = vld [vmem:[%s3 + $0x6d0] sm:$0xff]
        %v956 = vld [vmem:[%s3 + $0x6d8] sm:$0xff]
        %v957 = vld [vmem:[%s3 + $0x6e0] sm:$0xff]
        %v958 = vld [vmem:[%s3 + $0x6e8] sm:$0xff]
        %v959 = vld [vmem:[%s3 + $0x6f0] sm:$0xff]
        %v960 = vld [vmem:[%s3 + $0x6f8] sm:$0xff]
        %v961 = vld [vmem:[%s3 + $0x700] sm:$0xff]
        %v962 = vld [vmem:[%s3 + $0x708] sm:$0xff]
        %v963 = vld [vmem:[%s3 + $0x710] sm:$0xff]
        %v964 = vld [vmem:[%s3 + $0x718] sm:$0xff]
        %v965 = vld [vmem:[%s3 + $0x720] sm:$0xff]
        %v966 = vld [vmem:[%s3 + $0x728] sm:$0xff]
        %v967 = vld [vmem:[%s3 + $0x730] sm:$0xff]
        %v968 = vld [vmem:[%s3 + $0x738] sm:$0xff]
        %v969 = vld [vmem:[%s3 + $0x740] sm:$0xff]
        %v970 = vld [vmem:[%s3 + $0x748] sm:$0xff]
        %v971 = vld [vmem:[%s3 + $0x750] sm:$0xff]
        %v972 = vld [vmem:[%s3 + $0x758] sm:$0xff]
        %v973 = vld [vmem:[%s3 + $0x760] sm:$0xff]
        %v974 = vld [vmem:[%s3 + $0x768] sm:$0xff]
        %v975 = vld [vmem:[%s3 + $0x770] sm:$0xff]
        %v976 = vld [vmem:[%s3 + $0x778] sm:$0xff]
        %v977 = vld [vmem:[%s3 + $0x780] sm:$0xff]
        %v978 = vld [vmem:[%s3 + $0x788] sm:$0xff]
        %v979 = vld [vmem:[%s3 + $0x790] sm:$0xff]
        %v980 = vld [vmem:[%s3 + $0x798] sm:$0xff]
        %v981 = vld [vmem:[%s3 + $0x7a0] sm:$0xff]
        %v982 = vld [vmem:[%s3 + $0x7a8] sm:$0xff]
        %v983 = vld [vmem:[%s3 + $0x7b0] sm:$0xff]
        %v984 = vld [vmem:[%s3 + $0x7b8] sm:$0xff]
        %v985 = vld [vmem:[%s3 + $0x7c0] sm:$0xff]
        %v986 = vld [vmem:[%s3 + $0x7c8] sm:$0xff]
        %v987 = vld [vmem:[%s3 + $0x7d0] sm:$0xff]
        %v988 = vld [vmem:[%s3 + $0x7d8] sm:$0xff]
        %v989 = vld [vmem:[%s3 + $0x7e0] sm:$0xff]
        %v990 = vld [vmem:[%s3 + $0x7e8] sm:$0xff]
        %v991 = vld [vmem:[%s3 + $0x7f0] sm:$0xff]
        %v992 = vld [vmem:[%s3 + $0x7f8] sm:$0xff]
        %v993 = vld [vmem:[%s3 + $0x800] sm:$0xff]
        %v994 = vld [vmem:[%s3 + $0x808] sm:$0xff]
        %v995 = vld [vmem:[%s3 + $0x810] sm:$0xff]
        %v996 = vld [vmem:[%s3 + $0x818] sm:$0xff]
        %v997 = vld [vmem:[%s4] sm:$0x3]
        %v999 = vlaneseq
        %v1000 = vshrl.u32 %v999, 7
        %v1001 = vsub.s32 0, %v1000
        %v1002 = vrot.slane %v997, %v1001
        %v1003 = vlaneseq
        %v1004 = vshrl.u32 %v1003, 7
        %v1005 = vsub.s32 1, %v1004
        %v1006 = vrot.slane %v997, %v1005
        %v1269 = vunpack.c.l.b16 %v737
        %v1270 = vunpack.c.h.b16 %v737
        %v1271 = vunpack.c.l.b16 %v738
        %v1272 = vunpack.c.h.b16 %v738
        %v1273 = vunpack.c.l.b16 %v739
        %v1274 = vunpack.c.h.b16 %v739
        %v1275 = vunpack.c.l.b16 %v740
        %v1276 = vunpack.c.h.b16 %v740
        %v1277 = vunpack.c.l.b16 %v741
        %v1278 = vunpack.c.h.b16 %v741
        %v1279 = vunpack.c.l.b16 %v742
        %v1280 = vunpack.c.h.b16 %v742
        %v1281 = vunpack.c.l.b16 %v743
        %v1282 = vunpack.c.h.b16 %v743
        %v1283 = vunpack.c.l.b16 %v744
        %v1284 = vunpack.c.h.b16 %v744
        %v1285 = vunpack.c.l.b16 %v745
        %v1286 = vunpack.c.h.b16 %v745
        %v1287 = vunpack.c.l.b16 %v746
        %v1288 = vunpack.c.h.b16 %v746
        %v1289 = vunpack.c.l.b16 %v747
        %v1290 = vunpack.c.h.b16 %v747
        %v1291 = vunpack.c.l.b16 %v748
        %v1292 = vunpack.c.h.b16 %v748
        %v1293 = vunpack.c.l.b16 %v749
        %v1294 = vunpack.c.h.b16 %v749
        %v1295 = vunpack.c.l.b16 %v750
        %v1296 = vunpack.c.h.b16 %v750
        %v1297 = vunpack.c.l.b16 %v751
        %v1298 = vunpack.c.h.b16 %v751
        %v1299 = vunpack.c.l.b16 %v752
        %v1300 = vunpack.c.h.b16 %v752
        %v1301 = vunpack.c.l.b16 %v753
        %v1302 = vunpack.c.h.b16 %v753
        %v1303 = vunpack.c.l.b16 %v754
        %v1304 = vunpack.c.h.b16 %v754
        %v1305 = vunpack.c.l.b16 %v755
        %v1306 = vunpack.c.h.b16 %v755
        %v1307 = vunpack.c.l.b16 %v756
        %v1308 = vunpack.c.h.b16 %v756
        %v1309 = vunpack.c.l.b16 %v757
        %v1310 = vunpack.c.h.b16 %v757
        %v1311 = vunpack.c.l.b16 %v758
        %v1312 = vunpack.c.h.b16 %v758
        %v1313 = vunpack.c.l.b16 %v759
        %v1314 = vunpack.c.h.b16 %v759
        %v1315 = vunpack.c.l.b16 %v760
        %v1316 = vunpack.c.h.b16 %v760
        %v1317 = vunpack.c.l.b16 %v761
        %v1318 = vunpack.c.h.b16 %v761
        %v1319 = vunpack.c.l.b16 %v762
        %v1320 = vunpack.c.h.b16 %v762
        %v1321 = vunpack.c.l.b16 %v763
        %v1322 = vunpack.c.h.b16 %v763
        %v1323 = vunpack.c.l.b16 %v764
        %v1324 = vunpack.c.h.b16 %v764
        %v1325 = vunpack.c.l.b16 %v765
        %v1326 = vunpack.c.h.b16 %v765
        %v1327 = vunpack.c.l.b16 %v766
        %v1328 = vunpack.c.h.b16 %v766
        %v1329 = vunpack.c.l.b16 %v767
        %v1330 = vunpack.c.h.b16 %v767
        %v1331 = vunpack.c.l.b16 %v768
        %v1332 = vunpack.c.h.b16 %v768
        %v1333 = vunpack.c.l.b16 %v769
        %v1334 = vunpack.c.h.b16 %v769
        %v1335 = vunpack.c.l.b16 %v770
        %v1336 = vunpack.c.h.b16 %v770
        %v1337 = vunpack.c.l.b16 %v771
        %v1338 = vunpack.c.h.b16 %v771
        %v1339 = vunpack.c.l.b16 %v772
        %v1340 = vunpack.c.h.b16 %v772
        %v1341 = vunpack.c.l.b16 %v773
        %v1342 = vunpack.c.h.b16 %v773
        %v1343 = vunpack.c.l.b16 %v774
        %v1344 = vunpack.c.h.b16 %v774
        %v1345 = vunpack.c.l.b16 %v775
        %v1346 = vunpack.c.h.b16 %v775
        %v1347 = vunpack.c.l.b16 %v776
        %v1348 = vunpack.c.h.b16 %v776
        %v1349 = vunpack.c.l.b16 %v777
        %v1350 = vunpack.c.h.b16 %v777
        %v1351 = vunpack.c.l.b16 %v778
        %v1352 = vunpack.c.h.b16 %v778
        %v1353 = vunpack.c.l.b16 %v779
        %v1354 = vunpack.c.h.b16 %v779
        %v1355 = vunpack.c.l.b16 %v780
        %v1356 = vunpack.c.h.b16 %v780
        %v1357 = vunpack.c.l.b16 %v781
        %v1358 = vunpack.c.h.b16 %v781
        %v1359 = vunpack.c.l.b16 %v782
        %v1360 = vunpack.c.h.b16 %v782
        %v1361 = vunpack.c.l.b16 %v783
        %v1362 = vunpack.c.h.b16 %v783
        %v1363 = vunpack.c.l.b16 %v784
        %v1364 = vunpack.c.h.b16 %v784
        %v1365 = vunpack.c.l.b16 %v785
        %v1366 = vunpack.c.h.b16 %v785
        %v1367 = vunpack.c.l.b16 %v786
        %v1368 = vunpack.c.h.b16 %v786
        %v1369 = vunpack.c.l.b16 %v787
        %v1370 = vunpack.c.h.b16 %v787
        %v1371 = vunpack.c.l.b16 %v788
        %v1372 = vunpack.c.h.b16 %v788
        %v1373 = vunpack.c.l.b16 %v789
        %v1374 = vunpack.c.h.b16 %v789
        %v1375 = vunpack.c.l.b16 %v790
        %v1376 = vunpack.c.h.b16 %v790
        %v1377 = vunpack.c.l.b16 %v791
        %v1378 = vunpack.c.h.b16 %v791
        %v1379 = vunpack.c.l.b16 %v792
        %v1380 = vunpack.c.h.b16 %v792
        %v1381 = vunpack.c.l.b16 %v793
        %v1382 = vunpack.c.h.b16 %v793
        %v1383 = vunpack.c.l.b16 %v794
        %v1384 = vunpack.c.h.b16 %v794
        %v1385 = vunpack.c.l.b16 %v795
        %v1386 = vunpack.c.h.b16 %v795
        %v1387 = vunpack.c.l.b16 %v796
        %v1388 = vunpack.c.h.b16 %v796
        %v1389 = vunpack.c.l.b16 %v797
        %v1390 = vunpack.c.h.b16 %v797
        %v1391 = vunpack.c.l.b16 %v798
        %v1392 = vunpack.c.h.b16 %v798
        %v1393 = vunpack.c.l.b16 %v799
        %v1394 = vunpack.c.h.b16 %v799
        %v1395 = vunpack.c.l.b16 %v800
        %v1396 = vunpack.c.h.b16 %v800
        %v1397 = vunpack.c.l.b16 %v801
        %v1398 = vunpack.c.h.b16 %v801
        %v1399 = vunpack.c.l.b16 %v802
        %v1400 = vunpack.c.h.b16 %v802
        %v1401 = vunpack.c.l.b16 %v803
        %v1402 = vunpack.c.h.b16 %v803
        %v1403 = vunpack.c.l.b16 %v804
        %v1404 = vunpack.c.h.b16 %v804
        %v1405 = vunpack.c.l.b16 %v805
        %v1406 = vunpack.c.h.b16 %v805
        %v1407 = vunpack.c.l.b16 %v806
        %v1408 = vunpack.c.h.b16 %v806
        %v1409 = vunpack.c.l.b16 %v807
        %v1410 = vunpack.c.h.b16 %v807
        %v1411 = vunpack.c.l.b16 %v808
        %v1412 = vunpack.c.h.b16 %v808
        %v1413 = vunpack.c.l.b16 %v809
        %v1414 = vunpack.c.h.b16 %v809
        %v1415 = vunpack.c.l.b16 %v810
        %v1416 = vunpack.c.h.b16 %v810
        %v1417 = vunpack.c.l.b16 %v811
        %v1418 = vunpack.c.h.b16 %v811
        %v1419 = vunpack.c.l.b16 %v812
        %v1420 = vunpack.c.h.b16 %v812
        %v1421 = vunpack.c.l.b16 %v813
        %v1422 = vunpack.c.h.b16 %v813
        %v1423 = vunpack.c.l.b16 %v814
        %v1424 = vunpack.c.h.b16 %v814
        %v1425 = vunpack.c.l.b16 %v815
        %v1426 = vunpack.c.h.b16 %v815
        %v1427 = vunpack.c.l.b16 %v816
        %v1428 = vunpack.c.h.b16 %v816
        %v1429 = vunpack.c.l.b16 %v817
        %v1430 = vunpack.c.h.b16 %v817
        %v1431 = vunpack.c.l.b16 %v818
        %v1432 = vunpack.c.h.b16 %v818
        %v1433 = vunpack.c.l.b16 %v819
        %v1434 = vunpack.c.h.b16 %v819
        %v1435 = vunpack.c.l.b16 %v820
        %v1436 = vunpack.c.h.b16 %v820
        %v1437 = vunpack.c.l.b16 %v821
        %v1438 = vunpack.c.h.b16 %v821
        %v1439 = vunpack.c.l.b16 %v822
        %v1440 = vunpack.c.h.b16 %v822
        %v1441 = vunpack.c.l.b16 %v823
        %v1442 = vunpack.c.h.b16 %v823
        %v1443 = vunpack.c.l.b16 %v824
        %v1444 = vunpack.c.h.b16 %v824
        %v1445 = vunpack.c.l.b16 %v825
        %v1446 = vunpack.c.h.b16 %v825
        %v1447 = vunpack.c.l.b16 %v826
        %v1448 = vunpack.c.h.b16 %v826
        %v1449 = vunpack.c.l.b16 %v827
        %v1450 = vunpack.c.h.b16 %v827
        %v1451 = vunpack.c.l.b16 %v828
        %v1452 = vunpack.c.h.b16 %v828
        %v1453 = vunpack.c.l.b16 %v829
        %v1454 = vunpack.c.h.b16 %v829
        %v1455 = vunpack.c.l.b16 %v830
        %v1456 = vunpack.c.h.b16 %v830
        %v1457 = vunpack.c.l.b16 %v831
        %v1458 = vunpack.c.h.b16 %v831
        %v1459 = vunpack.c.l.b16 %v832
        %v1460 = vunpack.c.h.b16 %v832
        %v1461 = vunpack.c.l.b16 %v833
        %v1462 = vunpack.c.h.b16 %v833
        %v1463 = vunpack.c.l.b16 %v834
        %v1464 = vunpack.c.h.b16 %v834
        %v1465 = vunpack.c.l.b16 %v835
        %v1466 = vunpack.c.h.b16 %v835
        %v1467 = vunpack.c.l.b16 %v836
        %v1468 = vunpack.c.h.b16 %v836
        %v1469 = vunpack.c.l.b16 %v837
        %v1470 = vunpack.c.h.b16 %v837
        %v1471 = vunpack.c.l.b16 %v838
        %v1472 = vunpack.c.h.b16 %v838
        %v1473 = vunpack.c.l.b16 %v839
        %v1474 = vunpack.c.h.b16 %v839
        %v1475 = vunpack.c.l.b16 %v840
        %v1476 = vunpack.c.h.b16 %v840
        %v1477 = vunpack.c.l.b16 %v841
        %v1478 = vunpack.c.h.b16 %v841
        %v1479 = vunpack.c.l.b16 %v842
        %v1480 = vunpack.c.h.b16 %v842
        %v1481 = vunpack.c.l.b16 %v843
        %v1482 = vunpack.c.h.b16 %v843
        %v1483 = vunpack.c.l.b16 %v844
        %v1484 = vunpack.c.h.b16 %v844
        %v1485 = vunpack.c.l.b16 %v845
        %v1486 = vunpack.c.h.b16 %v845
        %v1487 = vunpack.c.l.b16 %v846
        %v1488 = vunpack.c.h.b16 %v846
        %v1489 = vunpack.c.l.b16 %v847
        %v1490 = vunpack.c.h.b16 %v847
        %v1491 = vunpack.c.l.b16 %v848
        %v1492 = vunpack.c.h.b16 %v848
        %v1493 = vunpack.c.l.b16 %v849
        %v1494 = vunpack.c.h.b16 %v849
        %v1495 = vunpack.c.l.b16 %v850
        %v1496 = vunpack.c.h.b16 %v850
        %v1497 = vunpack.c.l.b16 %v851
        %v1498 = vunpack.c.h.b16 %v851
        %v1499 = vunpack.c.l.b16 %v852
        %v1500 = vunpack.c.h.b16 %v852
        %v1501 = vunpack.c.l.b16 %v853
        %v1502 = vunpack.c.h.b16 %v853
        %v1503 = vunpack.c.l.b16 %v854
        %v1504 = vunpack.c.h.b16 %v854
        %v1505 = vunpack.c.l.b16 %v855
        %v1506 = vunpack.c.h.b16 %v855
        %v1507 = vunpack.c.l.b16 %v856
        %v1508 = vunpack.c.h.b16 %v856
        %v1509 = vunpack.c.l.b16 %v857
        %v1510 = vunpack.c.h.b16 %v857
        %v1511 = vunpack.c.l.b16 %v858
        %v1512 = vunpack.c.h.b16 %v858
        %v1513 = vunpack.c.l.b16 %v859
        %v1514 = vunpack.c.h.b16 %v859
        %v1515 = vunpack.c.l.b16 %v860
        %v1516 = vunpack.c.h.b16 %v860
        %v1517 = vunpack.c.l.b16 %v861
        %v1518 = vunpack.c.h.b16 %v861
        %v1519 = vunpack.c.l.b16 %v862
        %v1520 = vunpack.c.h.b16 %v862
        %v1521 = vunpack.c.l.b16 %v863
        %v1522 = vunpack.c.h.b16 %v863
        %v1523 = vunpack.c.l.b16 %v864
        %v1524 = vunpack.c.h.b16 %v864
        %v1525 = vunpack.c.l.b16 %v865
        %v1526 = vunpack.c.h.b16 %v865
        %v1527 = vunpack.c.l.b16 %v866
        %v1528 = vunpack.c.h.b16 %v866
        %v1529 = vunpack.c.l.b16 %v867
        %v1530 = vunpack.c.h.b16 %v867
        %v1531 = vunpack.c.l.b16 %v868
        %v1532 = vunpack.c.h.b16 %v868
        %v1533 = vunpack.c.l.b16 %v869
        %v1534 = vunpack.c.h.b16 %v869
        %v1535 = vunpack.c.l.b16 %v870
        %v1536 = vunpack.c.h.b16 %v870
        %v1537 = vunpack.c.l.b16 %v871
        %v1538 = vunpack.c.h.b16 %v871
        %v1539 = vunpack.c.l.b16 %v872
        %v1540 = vunpack.c.h.b16 %v872
        %v1541 = vunpack.c.l.b16 %v873
        %v1542 = vunpack.c.h.b16 %v873
        %v1543 = vunpack.c.l.b16 %v874
        %v1544 = vunpack.c.h.b16 %v874
        %v1545 = vunpack.c.l.b16 %v875
        %v1546 = vunpack.c.h.b16 %v875
        %v1547 = vunpack.c.l.b16 %v876
        %v1548 = vunpack.c.h.b16 %v876
        %v1549 = vunpack.c.l.b16 %v877
        %v1550 = vunpack.c.h.b16 %v877
        %v1551 = vunpack.c.l.b16 %v878
        %v1552 = vunpack.c.h.b16 %v878
        %v1553 = vunpack.c.l.b16 %v879
        %v1554 = vunpack.c.h.b16 %v879
        %v1555 = vunpack.c.l.b16 %v880
        %v1556 = vunpack.c.h.b16 %v880
        %v1557 = vunpack.c.l.b16 %v881
        %v1558 = vunpack.c.h.b16 %v881
        %v1559 = vunpack.c.l.b16 %v882
        %v1560 = vunpack.c.h.b16 %v882
        %v1561 = vunpack.c.l.b16 %v883
        %v1562 = vunpack.c.h.b16 %v883
        %v1563 = vunpack.c.l.b16 %v884
        %v1564 = vunpack.c.h.b16 %v884
        %v1565 = vunpack.c.l.b16 %v885
        %v1566 = vunpack.c.h.b16 %v885
        %v1567 = vunpack.c.l.b16 %v886
        %v1568 = vunpack.c.h.b16 %v886
        %v1569 = vunpack.c.l.b16 %v887
        %v1570 = vunpack.c.h.b16 %v887
        %v1571 = vunpack.c.l.b16 %v888
        %v1572 = vunpack.c.h.b16 %v888
        %v1573 = vunpack.c.l.b16 %v889
        %v1574 = vunpack.c.h.b16 %v889
        %v1575 = vunpack.c.l.b16 %v890
        %v1576 = vunpack.c.h.b16 %v890
        %v1577 = vunpack.c.l.b16 %v891
        %v1578 = vunpack.c.h.b16 %v891
        %v1579 = vunpack.c.l.b16 %v892
        %v1580 = vunpack.c.h.b16 %v892
        %v1581 = vunpack.c.l.b16 %v893
        %v1582 = vunpack.c.h.b16 %v893
        %v1583 = vunpack.c.l.b16 %v894
        %v1584 = vunpack.c.h.b16 %v894
        %v1585 = vunpack.c.l.b16 %v895
        %v1586 = vunpack.c.h.b16 %v895
        %v1587 = vunpack.c.l.b16 %v896
        %v1588 = vunpack.c.h.b16 %v896
        %v1589 = vunpack.c.l.b16 %v897
        %v1590 = vunpack.c.h.b16 %v897
        %v1591 = vunpack.c.l.b16 %v898
        %v1592 = vunpack.c.h.b16 %v898
        %v1593 = vunpack.c.l.b16 %v899
        %v1594 = vunpack.c.h.b16 %v899
        %v1595 = vunpack.c.l.b16 %v900
        %v1596 = vunpack.c.h.b16 %v900
        %v1597 = vunpack.c.l.b16 %v901
        %v1598 = vunpack.c.h.b16 %v901
        %v1599 = vunpack.c.l.b16 %v902
        %v1600 = vunpack.c.h.b16 %v902
        %v1601 = vunpack.c.l.b16 %v903
        %v1602 = vunpack.c.h.b16 %v903
        %v1603 = vunpack.c.l.b16 %v904
        %v1604 = vunpack.c.h.b16 %v904
        %v1605 = vunpack.c.l.b16 %v905
        %v1606 = vunpack.c.h.b16 %v905
        %v1607 = vunpack.c.l.b16 %v906
        %v1608 = vunpack.c.h.b16 %v906
        %v1609 = vunpack.c.l.b16 %v907
        %v1610 = vunpack.c.h.b16 %v907
        %v1611 = vunpack.c.l.b16 %v908
        %v1612 = vunpack.c.h.b16 %v908
        %v1613 = vunpack.c.l.b16 %v909
        %v1614 = vunpack.c.h.b16 %v909
        %v1615 = vunpack.c.l.b16 %v910
        %v1616 = vunpack.c.h.b16 %v910
        %v1617 = vunpack.c.l.b16 %v911
        %v1618 = vunpack.c.h.b16 %v911
        %v1619 = vunpack.c.l.b16 %v912
        %v1620 = vunpack.c.h.b16 %v912
        %v1621 = vunpack.c.l.b16 %v913
        %v1622 = vunpack.c.h.b16 %v913
        %v1623 = vunpack.c.l.b16 %v914
        %v1624 = vunpack.c.h.b16 %v914
        %v1625 = vunpack.c.l.b16 %v915
        %v1626 = vunpack.c.h.b16 %v915
        %v1627 = vunpack.c.l.b16 %v916
        %v1628 = vunpack.c.h.b16 %v916
        %v1629 = vunpack.c.l.b16 %v917
        %v1630 = vunpack.c.h.b16 %v917
        %v1631 = vunpack.c.l.b16 %v918
        %v1632 = vunpack.c.h.b16 %v918
        %v1633 = vunpack.c.l.b16 %v919
        %v1634 = vunpack.c.h.b16 %v919
        %v1635 = vunpack.c.l.b16 %v920
        %v1636 = vunpack.c.h.b16 %v920
        %v1637 = vunpack.c.l.b16 %v921
        %v1638 = vunpack.c.h.b16 %v921
        %v1639 = vunpack.c.l.b16 %v922
        %v1640 = vunpack.c.h.b16 %v922
        %v1641 = vunpack.c.l.b16 %v923
        %v1642 = vunpack.c.h.b16 %v923
        %v1643 = vunpack.c.l.b16 %v924
        %v1644 = vunpack.c.h.b16 %v924
        %v1645 = vunpack.c.l.b16 %v925
        %v1646 = vunpack.c.h.b16 %v925
        %v1647 = vunpack.c.l.b16 %v926
        %v1648 = vunpack.c.h.b16 %v926
        %v1649 = vunpack.c.l.b16 %v927
        %v1650 = vunpack.c.h.b16 %v927
        %v1651 = vunpack.c.l.b16 %v928
        %v1652 = vunpack.c.h.b16 %v928
        %v1653 = vunpack.c.l.b16 %v929
        %v1654 = vunpack.c.h.b16 %v929
        %v1655 = vunpack.c.l.b16 %v930
        %v1656 = vunpack.c.h.b16 %v930
        %v1657 = vunpack.c.l.b16 %v931
        %v1658 = vunpack.c.h.b16 %v931
        %v1659 = vunpack.c.l.b16 %v932
        %v1660 = vunpack.c.h.b16 %v932
        %v1661 = vunpack.c.l.b16 %v933
        %v1662 = vunpack.c.h.b16 %v933
        %v1663 = vunpack.c.l.b16 %v934
        %v1664 = vunpack.c.h.b16 %v934
        %v1665 = vunpack.c.l.b16 %v935
        %v1666 = vunpack.c.h.b16 %v935
        %v1667 = vunpack.c.l.b16 %v936
        %v1668 = vunpack.c.h.b16 %v936
        %v1669 = vunpack.c.l.b16 %v937
        %v1670 = vunpack.c.h.b16 %v937
        %v1671 = vunpack.c.l.b16 %v938
        %v1672 = vunpack.c.h.b16 %v938
        %v1673 = vunpack.c.l.b16 %v939
        %v1674 = vunpack.c.h.b16 %v939
        %v1675 = vunpack.c.l.b16 %v940
        %v1676 = vunpack.c.h.b16 %v940
        %v1677 = vunpack.c.l.b16 %v941
        %v1678 = vunpack.c.h.b16 %v941
        %v1679 = vunpack.c.l.b16 %v942
        %v1680 = vunpack.c.h.b16 %v942
        %v1681 = vunpack.c.l.b16 %v943
        %v1682 = vunpack.c.h.b16 %v943
        %v1683 = vunpack.c.l.b16 %v944
        %v1684 = vunpack.c.h.b16 %v944
        %v1685 = vunpack.c.l.b16 %v945
        %v1686 = vunpack.c.h.b16 %v945
        %v1687 = vunpack.c.l.b16 %v946
        %v1688 = vunpack.c.h.b16 %v946
        %v1689 = vunpack.c.l.b16 %v947
        %v1690 = vunpack.c.h.b16 %v947
        %v1691 = vunpack.c.l.b16 %v948
        %v1692 = vunpack.c.h.b16 %v948
        %v1693 = vunpack.c.l.b16 %v949
        %v1694 = vunpack.c.h.b16 %v949
        %v1695 = vunpack.c.l.b16 %v950
        %v1696 = vunpack.c.h.b16 %v950
        %v1697 = vunpack.c.l.b16 %v951
        %v1698 = vunpack.c.h.b16 %v951
        %v1699 = vunpack.c.l.b16 %v952
        %v1700 = vunpack.c.h.b16 %v952
        %v1701 = vunpack.c.l.b16 %v953
        %v1702 = vunpack.c.h.b16 %v953
        %v1703 = vunpack.c.l.b16 %v954
        %v1704 = vunpack.c.h.b16 %v954
        %v1705 = vunpack.c.l.b16 %v955
        %v1706 = vunpack.c.h.b16 %v955
        %v1707 = vunpack.c.l.b16 %v956
        %v1708 = vunpack.c.h.b16 %v956
        %v1709 = vunpack.c.l.b16 %v957
        %v1710 = vunpack.c.h.b16 %v957
        %v1711 = vunpack.c.l.b16 %v958
        %v1712 = vunpack.c.h.b16 %v958
        %v1713 = vunpack.c.l.b16 %v959
        %v1714 = vunpack.c.h.b16 %v959
        %v1715 = vunpack.c.l.b16 %v960
        %v1716 = vunpack.c.h.b16 %v960
        %v1717 = vunpack.c.l.b16 %v961
        %v1718 = vunpack.c.h.b16 %v961
        %v1719 = vunpack.c.l.b16 %v962
        %v1720 = vunpack.c.h.b16 %v962
        %v1721 = vunpack.c.l.b16 %v963
        %v1722 = vunpack.c.h.b16 %v963
        %v1723 = vunpack.c.l.b16 %v964
        %v1724 = vunpack.c.h.b16 %v964
        %v1725 = vunpack.c.l.b16 %v965
        %v1726 = vunpack.c.h.b16 %v965
        %v1727 = vunpack.c.l.b16 %v966
        %v1728 = vunpack.c.h.b16 %v966
        %v1729 = vunpack.c.l.b16 %v967
        %v1730 = vunpack.c.h.b16 %v967
        %v1731 = vunpack.c.l.b16 %v968
        %v1732 = vunpack.c.h.b16 %v968
        %v1733 = vunpack.c.l.b16 %v969
        %v1734 = vunpack.c.h.b16 %v969
        %v1735 = vunpack.c.l.b16 %v970
        %v1736 = vunpack.c.h.b16 %v970
        %v1737 = vunpack.c.l.b16 %v971
        %v1738 = vunpack.c.h.b16 %v971
        %v1739 = vunpack.c.l.b16 %v972
        %v1740 = vunpack.c.h.b16 %v972
        %v1741 = vunpack.c.l.b16 %v973
        %v1742 = vunpack.c.h.b16 %v973
        %v1743 = vunpack.c.l.b16 %v974
        %v1744 = vunpack.c.h.b16 %v974
        %v1745 = vunpack.c.l.b16 %v975
        %v1746 = vunpack.c.h.b16 %v975
        %v1747 = vunpack.c.l.b16 %v976
        %v1748 = vunpack.c.h.b16 %v976
        %v1749 = vunpack.c.l.b16 %v977
        %v1750 = vunpack.c.h.b16 %v977
        %v1751 = vunpack.c.l.b16 %v978
        %v1752 = vunpack.c.h.b16 %v978
        %v1753 = vunpack.c.l.b16 %v979
        %v1754 = vunpack.c.h.b16 %v979
        %v1755 = vunpack.c.l.b16 %v980
        %v1756 = vunpack.c.h.b16 %v980
        %v1757 = vunpack.c.l.b16 %v981
        %v1758 = vunpack.c.h.b16 %v981
        %v1759 = vunpack.c.l.b16 %v982
        %v1760 = vunpack.c.h.b16 %v982
        %v1761 = vunpack.c.l.b16 %v983
        %v1762 = vunpack.c.h.b16 %v983
        %v1763 = vunpack.c.l.b16 %v984
        %v1764 = vunpack.c.h.b16 %v984
        %v1765 = vunpack.c.l.b16 %v985
        %v1766 = vunpack.c.h.b16 %v985
        %v1767 = vunpack.c.l.b16 %v986
        %v1768 = vunpack.c.h.b16 %v986
        %v1769 = vunpack.c.l.b16 %v987
        %v1770 = vunpack.c.h.b16 %v987
        %v1771 = vunpack.c.l.b16 %v988
        %v1772 = vunpack.c.h.b16 %v988
        %v1773 = vunpack.c.l.b16 %v989
        %v1774 = vunpack.c.h.b16 %v989
        %v1775 = vunpack.c.l.b16 %v990
        %v1776 = vunpack.c.h.b16 %v990
        %v1777 = vunpack.c.l.b16 %v991
        %v1778 = vunpack.c.h.b16 %v991
        %v1779 = vunpack.c.l.b16 %v992
        %v1780 = vunpack.c.h.b16 %v992
        %v1781 = vunpack.c.l.b16 %v993
        %v1782 = vunpack.c.h.b16 %v993
        %v1783 = vunpack.c.l.b16 %v994
        %v1784 = vunpack.c.h.b16 %v994
        %v1785 = vunpack.c.l.b16 %v995
        %v1786 = vunpack.c.h.b16 %v995
        %v1787 = vunpack.c.l.b16 %v996
        %v1788 = vunpack.c.h.b16 %v996
        %v1789 = vpack.c.b16 %v1271, %v1269
        %v1790 = vpack.c.b16 %v1272, %v1270
        %v1791 = vpack.c.b16 %v1275, %v1273
        %v1792 = vpack.c.b16 %v1276, %v1274
        %v1793 = vpack.c.b16 %v1279, %v1277
        %v1794 = vpack.c.b16 %v1280, %v1278
        %v1795 = vpack.c.b16 %v1283, %v1281
        %v1796 = vpack.c.b16 %v1284, %v1282
        %v1797 = vpack.c.b16 %v1287, %v1285
        %v1798 = vpack.c.b16 %v1288, %v1286
        %v1799 = vpack.c.b16 %v1291, %v1289
        %v1800 = vpack.c.b16 %v1292, %v1290
        %v1801 = vpack.c.b16 %v1295, %v1293
        %v1802 = vpack.c.b16 %v1296, %v1294
        %v1803 = vpack.c.b16 %v1299, %v1297
        %v1804 = vpack.c.b16 %v1300, %v1298
        %v1805 = vpack.c.b16 %v1303, %v1301
        %v1806 = vpack.c.b16 %v1304, %v1302
        %v1807 = vpack.c.b16 %v1307, %v1305
        %v1808 = vpack.c.b16 %v1308, %v1306
        %v1809 = vpack.c.b16 %v1311, %v1309
        %v1810 = vpack.c.b16 %v1312, %v1310
        %v1811 = vpack.c.b16 %v1315, %v1313
        %v1812 = vpack.c.b16 %v1316, %v1314
        %v1813 = vpack.c.b16 %v1319, %v1317
        %v1814 = vpack.c.b16 %v1320, %v1318
        %v1815 = vpack.c.b16 %v1323, %v1321
        %v1816 = vpack.c.b16 %v1324, %v1322
        %v1817 = vpack.c.b16 %v1327, %v1325
        %v1818 = vpack.c.b16 %v1328, %v1326
        %v1819 = vpack.c.b16 %v1331, %v1329
        %v1820 = vpack.c.b16 %v1332, %v1330
        %v1821 = vpack.c.b16 %v1335, %v1333
        %v1822 = vpack.c.b16 %v1336, %v1334
        %v1823 = vpack.c.b16 %v1339, %v1337
        %v1824 = vpack.c.b16 %v1340, %v1338
        %v1825 = vpack.c.b16 %v1343, %v1341
        %v1826 = vpack.c.b16 %v1344, %v1342
        %v1827 = vpack.c.b16 %v1347, %v1345
        %v1828 = vpack.c.b16 %v1348, %v1346
        %v1829 = vpack.c.b16 %v1351, %v1349
        %v1830 = vpack.c.b16 %v1352, %v1350
        %v1831 = vpack.c.b16 %v1355, %v1353
        %v1832 = vpack.c.b16 %v1356, %v1354
        %v1833 = vpack.c.b16 %v1359, %v1357
        %v1834 = vpack.c.b16 %v1360, %v1358
        %v1835 = vpack.c.b16 %v1363, %v1361
        %v1836 = vpack.c.b16 %v1364, %v1362
        %v1837 = vpack.c.b16 %v1367, %v1365
        %v1838 = vpack.c.b16 %v1368, %v1366
        %v1839 = vpack.c.b16 %v1371, %v1369
        %v1840 = vpack.c.b16 %v1372, %v1370
        %v1841 = vpack.c.b16 %v1375, %v1373
        %v1842 = vpack.c.b16 %v1376, %v1374
        %v1843 = vpack.c.b16 %v1379, %v1377
        %v1844 = vpack.c.b16 %v1380, %v1378
        %v1845 = vpack.c.b16 %v1383, %v1381
        %v1846 = vpack.c.b16 %v1384, %v1382
        %v1847 = vpack.c.b16 %v1387, %v1385
        %v1848 = vpack.c.b16 %v1388, %v1386
        %v1849 = vpack.c.b16 %v1391, %v1389
        %v1850 = vpack.c.b16 %v1392, %v1390
        %v1851 = vpack.c.b16 %v1395, %v1393
        %v1852 = vpack.c.b16 %v1396, %v1394
        %v1853 = vpack.c.b16 %v1399, %v1397
        %v1854 = vpack.c.b16 %v1400, %v1398
        %v1855 = vpack.c.b16 %v1403, %v1401
        %v1856 = vpack.c.b16 %v1404, %v1402
        %v1857 = vpack.c.b16 %v1407, %v1405
        %v1858 = vpack.c.b16 %v1408, %v1406
        %v1859 = vpack.c.b16 %v1411, %v1409
        %v1860 = vpack.c.b16 %v1412, %v1410
        %v1861 = vpack.c.b16 %v1415, %v1413
        %v1862 = vpack.c.b16 %v1416, %v1414
        %v1863 = vpack.c.b16 %v1419, %v1417
        %v1864 = vpack.c.b16 %v1420, %v1418
        %v1865 = vpack.c.b16 %v1423, %v1421
        %v1866 = vpack.c.b16 %v1424, %v1422
        %v1867 = vpack.c.b16 %v1427, %v1425
        %v1868 = vpack.c.b16 %v1428, %v1426
        %v1869 = vpack.c.b16 %v1431, %v1429
        %v1870 = vpack.c.b16 %v1432, %v1430
        %v1871 = vpack.c.b16 %v1435, %v1433
        %v1872 = vpack.c.b16 %v1436, %v1434
        %v1873 = vpack.c.b16 %v1439, %v1437
        %v1874 = vpack.c.b16 %v1440, %v1438
        %v1875 = vpack.c.b16 %v1443, %v1441
        %v1876 = vpack.c.b16 %v1444, %v1442
        %v1877 = vpack.c.b16 %v1447, %v1445
        %v1878 = vpack.c.b16 %v1448, %v1446
        %v1879 = vpack.c.b16 %v1451, %v1449
        %v1880 = vpack.c.b16 %v1452, %v1450
        %v1881 = vpack.c.b16 %v1455, %v1453
        %v1882 = vpack.c.b16 %v1456, %v1454
        %v1883 = vpack.c.b16 %v1459, %v1457
        %v1884 = vpack.c.b16 %v1460, %v1458
        %v1885 = vpack.c.b16 %v1463, %v1461
        %v1886 = vpack.c.b16 %v1464, %v1462
        %v1887 = vpack.c.b16 %v1467, %v1465
        %v1888 = vpack.c.b16 %v1468, %v1466
        %v1889 = vpack.c.b16 %v1471, %v1469
        %v1890 = vpack.c.b16 %v1472, %v1470
        %v1891 = vpack.c.b16 %v1475, %v1473
        %v1892 = vpack.c.b16 %v1476, %v1474
        %v1893 = vpack.c.b16 %v1479, %v1477
        %v1894 = vpack.c.b16 %v1480, %v1478
        %v1895 = vpack.c.b16 %v1483, %v1481
        %v1896 = vpack.c.b16 %v1484, %v1482
        %v1897 = vpack.c.b16 %v1487, %v1485
        %v1898 = vpack.c.b16 %v1488, %v1486
        %v1899 = vpack.c.b16 %v1491, %v1489
        %v1900 = vpack.c.b16 %v1492, %v1490
        %v1901 = vpack.c.b16 %v1495, %v1493
        %v1902 = vpack.c.b16 %v1496, %v1494
        %v1903 = vpack.c.b16 %v1499, %v1497
        %v1904 = vpack.c.b16 %v1500, %v1498
        %v1905 = vpack.c.b16 %v1503, %v1501
        %v1906 = vpack.c.b16 %v1504, %v1502
        %v1907 = vpack.c.b16 %v1507, %v1505
        %v1908 = vpack.c.b16 %v1508, %v1506
        %v1909 = vpack.c.b16 %v1511, %v1509
        %v1910 = vpack.c.b16 %v1512, %v1510
        %v1911 = vpack.c.b16 %v1515, %v1513
        %v1912 = vpack.c.b16 %v1516, %v1514
        %v1913 = vpack.c.b16 %v1519, %v1517
        %v1914 = vpack.c.b16 %v1520, %v1518
        %v1915 = vpack.c.b16 %v1523, %v1521
        %v1916 = vpack.c.b16 %v1524, %v1522
        %v1917 = vpack.c.b16 %v1527, %v1525
        %v1918 = vpack.c.b16 %v1528, %v1526
        %v1919 = vpack.c.b16 %v1531, %v1529
        %v1920 = vpack.c.b16 %v1532, %v1530
        %v1921 = vpack.c.b16 %v1535, %v1533
        %v1922 = vpack.c.b16 %v1536, %v1534
        %v1923 = vpack.c.b16 %v1539, %v1537
        %v1924 = vpack.c.b16 %v1540, %v1538
        %v1925 = vpack.c.b16 %v1543, %v1541
        %v1926 = vpack.c.b16 %v1544, %v1542
        %v1927 = vpack.c.b16 %v1547, %v1545
        %v1928 = vpack.c.b16 %v1548, %v1546
        %v1929 = vpack.c.b16 %v1551, %v1549
        %v1930 = vpack.c.b16 %v1552, %v1550
        %v1931 = vpack.c.b16 %v1555, %v1553
        %v1932 = vpack.c.b16 %v1556, %v1554
        %v1933 = vpack.c.b16 %v1559, %v1557
        %v1934 = vpack.c.b16 %v1560, %v1558
        %v1935 = vpack.c.b16 %v1563, %v1561
        %v1936 = vpack.c.b16 %v1564, %v1562
        %v1937 = vpack.c.b16 %v1567, %v1565
        %v1938 = vpack.c.b16 %v1568, %v1566
        %v1939 = vpack.c.b16 %v1571, %v1569
        %v1940 = vpack.c.b16 %v1572, %v1570
        %v1941 = vpack.c.b16 %v1575, %v1573
        %v1942 = vpack.c.b16 %v1576, %v1574
        %v1943 = vpack.c.b16 %v1579, %v1577
        %v1944 = vpack.c.b16 %v1580, %v1578
        %v1945 = vpack.c.b16 %v1583, %v1581
        %v1946 = vpack.c.b16 %v1584, %v1582
        %v1947 = vpack.c.b16 %v1587, %v1585
        %v1948 = vpack.c.b16 %v1588, %v1586
        %v1949 = vpack.c.b16 %v1591, %v1589
        %v1950 = vpack.c.b16 %v1592, %v1590
        %v1951 = vpack.c.b16 %v1595, %v1593
        %v1952 = vpack.c.b16 %v1596, %v1594
        %v1953 = vpack.c.b16 %v1599, %v1597
        %v1954 = vpack.c.b16 %v1600, %v1598
        %v1955 = vpack.c.b16 %v1603, %v1601
        %v1956 = vpack.c.b16 %v1604, %v1602
        %v1957 = vpack.c.b16 %v1607, %v1605
        %v1958 = vpack.c.b16 %v1608, %v1606
        %v1959 = vpack.c.b16 %v1611, %v1609
        %v1960 = vpack.c.b16 %v1612, %v1610
        %v1961 = vpack.c.b16 %v1615, %v1613
        %v1962 = vpack.c.b16 %v1616, %v1614
        %v1963 = vpack.c.b16 %v1619, %v1617
        %v1964 = vpack.c.b16 %v1620, %v1618
        %v1965 = vpack.c.b16 %v1623, %v1621
        %v1966 = vpack.c.b16 %v1624, %v1622
        %v1967 = vpack.c.b16 %v1627, %v1625
        %v1968 = vpack.c.b16 %v1628, %v1626
        %v1969 = vpack.c.b16 %v1631, %v1629
        %v1970 = vpack.c.b16 %v1632, %v1630
        %v1971 = vpack.c.b16 %v1635, %v1633
        %v1972 = vpack.c.b16 %v1636, %v1634
        %v1973 = vpack.c.b16 %v1639, %v1637
        %v1974 = vpack.c.b16 %v1640, %v1638
        %v1975 = vpack.c.b16 %v1643, %v1641
        %v1976 = vpack.c.b16 %v1644, %v1642
        %v1977 = vpack.c.b16 %v1647, %v1645
        %v1978 = vpack.c.b16 %v1648, %v1646
        %v1979 = vpack.c.b16 %v1651, %v1649
        %v1980 = vpack.c.b16 %v1652, %v1650
        %v1981 = vpack.c.b16 %v1655, %v1653
        %v1982 = vpack.c.b16 %v1656, %v1654
        %v1983 = vpack.c.b16 %v1659, %v1657
        %v1984 = vpack.c.b16 %v1660, %v1658
        %v1985 = vpack.c.b16 %v1663, %v1661
        %v1986 = vpack.c.b16 %v1664, %v1662
        %v1987 = vpack.c.b16 %v1667, %v1665
        %v1988 = vpack.c.b16 %v1668, %v1666
        %v1989 = vpack.c.b16 %v1671, %v1669
        %v1990 = vpack.c.b16 %v1672, %v1670
        %v1991 = vpack.c.b16 %v1675, %v1673
        %v1992 = vpack.c.b16 %v1676, %v1674
        %v1993 = vpack.c.b16 %v1679, %v1677
        %v1994 = vpack.c.b16 %v1680, %v1678
        %v1995 = vpack.c.b16 %v1683, %v1681
        %v1996 = vpack.c.b16 %v1684, %v1682
        %v1997 = vpack.c.b16 %v1687, %v1685
        %v1998 = vpack.c.b16 %v1688, %v1686
        %v1999 = vpack.c.b16 %v1691, %v1689
        %v2000 = vpack.c.b16 %v1692, %v1690
        %v2001 = vpack.c.b16 %v1695, %v1693
        %v2002 = vpack.c.b16 %v1696, %v1694
        %v2003 = vpack.c.b16 %v1699, %v1697
        %v2004 = vpack.c.b16 %v1700, %v1698
        %v2005 = vpack.c.b16 %v1703, %v1701
        %v2006 = vpack.c.b16 %v1704, %v1702
        %v2007 = vpack.c.b16 %v1707, %v1705
        %v2008 = vpack.c.b16 %v1708, %v1706
        %v2009 = vpack.c.b16 %v1711, %v1709
        %v2010 = vpack.c.b16 %v1712, %v1710
        %v2011 = vpack.c.b16 %v1715, %v1713
        %v2012 = vpack.c.b16 %v1716, %v1714
        %v2013 = vpack.c.b16 %v1719, %v1717
        %v2014 = vpack.c.b16 %v1720, %v1718
        %v2015 = vpack.c.b16 %v1723, %v1721
        %v2016 = vpack.c.b16 %v1724, %v1722
        %v2017 = vpack.c.b16 %v1727, %v1725
        %v2018 = vpack.c.b16 %v1728, %v1726
        %v2019 = vpack.c.b16 %v1731, %v1729
        %v2020 = vpack.c.b16 %v1732, %v1730
        %v2021 = vpack.c.b16 %v1735, %v1733
        %v2022 = vpack.c.b16 %v1736, %v1734
        %v2023 = vpack.c.b16 %v1739, %v1737
        %v2024 = vpack.c.b16 %v1740, %v1738
        %v2025 = vpack.c.b16 %v1743, %v1741
        %v2026 = vpack.c.b16 %v1744, %v1742
        %v2027 = vpack.c.b16 %v1747, %v1745
        %v2028 = vpack.c.b16 %v1748, %v1746
        %v2029 = vpack.c.b16 %v1751, %v1749
        %v2030 = vpack.c.b16 %v1752, %v1750
        %v2031 = vpack.c.b16 %v1755, %v1753
        %v2032 = vpack.c.b16 %v1756, %v1754
        %v2033 = vpack.c.b16 %v1759, %v1757
        %v2034 = vpack.c.b16 %v1760, %v1758
        %v2035 = vpack.c.b16 %v1763, %v1761
        %v2036 = vpack.c.b16 %v1764, %v1762
        %v2037 = vpack.c.b16 %v1767, %v1765
        %v2038 = vpack.c.b16 %v1768, %v1766
        %v2039 = vpack.c.b16 %v1771, %v1769
        %v2040 = vpack.c.b16 %v1772, %v1770
        %v2041 = vpack.c.b16 %v1775, %v1773
        %v2042 = vpack.c.b16 %v1776, %v1774
        %v2043 = vpack.c.b16 %v1779, %v1777
        %v2044 = vpack.c.b16 %v1780, %v1778
        %v2045 = vpack.c.b16 %v1783, %v1781
        %v2046 = vpack.c.b16 %v1784, %v1782
        %v2047 = vpack.c.b16 %v1787, %v1785
        %v2048 = vpack.c.b16 %v1788, %v1786
        %vm2309 = vcmask 261120
        %v2311 = vsel %vm2309, %v669, 0
        %v2314 = vsel %vm2309, %v686, 0
        %v2317 = vsel %vm2309, %v703, 0
        %v2320 = vsel %vm2309, %v720, 0
        %2322 = vmatprep.subr.bf16.mxu0 %v1804
        %2323 = vmatpush1.bf16.msra.mxu0 %v1803
        %2324 = vmatprep.subr.bf16.mxu0 %v1802
        %2325 = vmatpush1.bf16.msra.mxu0 %v1801
        %2326 = vmatprep.subr.bf16.mxu0 %v1800
        %2327 = vmatpush1.bf16.msra.mxu0 %v1799
        %2328 = vmatprep.subr.bf16.mxu0 %v1798
        %2329 = vmatpush1.bf16.msra.mxu0 %v1797
        %2330 = vmatprep.subr.bf16.mxu0 %v1796
        %2331 = vmatpush1.bf16.msra.mxu0 %v1795
        %2332 = vmatprep.subr.bf16.mxu0 %v1794
        %2333 = vmatpush1.bf16.msra.mxu0 %v1793
        %2334 = vmatprep.subr.bf16.mxu0 %v1792
        %2335 = vmatpush1.bf16.msra.mxu0 %v1791
        %2336 = vmatprep.subr.bf16.mxu0 %v1790
        %2337 = vmatpush1.bf16.msra.mxu0 %v1789
        %2338 = vmatprep.subr.bf16.mxu0 %v1820
        %2339 = vmatpush2.bf16.msra.mxu0 %v1819
        %2340 = vmatprep.subr.bf16.mxu0 %v1818
        %2341 = vmatpush2.bf16.msra.mxu0 %v1817
        %2342 = vmatprep.subr.bf16.mxu0 %v1816
        %2343 = vmatpush2.bf16.msra.mxu0 %v1815
        %2344 = vmatprep.subr.bf16.mxu0 %v1814
        %2345 = vmatpush2.bf16.msra.mxu0 %v1813
        %2346 = vmatprep.subr.bf16.mxu0 %v1812
        %2347 = vmatpush2.bf16.msra.mxu0 %v1811
        %2348 = vmatprep.subr.bf16.mxu0 %v1810
        %2349 = vmatpush2.bf16.msra.mxu0 %v1809
        %2350 = vmatprep.subr.bf16.mxu0 %v1808
        %2351 = vmatpush2.bf16.msra.mxu0 %v1807
        %2352 = vmatprep.subr.bf16.mxu0 %v1806
        %2353 = vmatpush2.bf16.msra.mxu0 %v1805
        %2354 = vmatprep.mubr.bf16.mxu0 %v654
        %2355 = vmatmul.mubr.bf16.gmra.mxu0 %v653
        %v2356 = vpop.f32.mrf.mxu0
        %v2357 = vadd.f32 %v1002, %v2356
        %v2358 = vpop.f32.mrf.mxu0
        %v2359 = vadd.f32 %v1006, %v2358
        %v2360 = vpop.f32.mrf.mxu0
        %v2361 = vadd.f32 %v1002, %v2360
        %v2362 = vpop.f32.mrf.mxu0
        %v2363 = vadd.f32 %v1006, %v2362
        %2364 = vmatprep.mubr.bf16.mxu0 %v671
        %2365 = vmatmul.mubr.bf16.gmra.mxu0 %v670
        %v2366 = vpop.f32.mrf.mxu0
        %v2367 = vadd.f32 %v1002, %v2366
        %v2368 = vpop.f32.mrf.mxu0
        %v2369 = vadd.f32 %v1006, %v2368
        %v2370 = vpop.f32.mrf.mxu0
        %v2371 = vadd.f32 %v1002, %v2370
        %v2372 = vpop.f32.mrf.mxu0
        %v2373 = vadd.f32 %v1006, %v2372
        %2374 = vmatprep.mubr.bf16.mxu0 %v688
        %2375 = vmatmul.mubr.bf16.gmra.mxu0 %v687
        %v2376 = vpop.f32.mrf.mxu0
        %v2377 = vadd.f32 %v1002, %v2376
        %v2378 = vpop.f32.mrf.mxu0
        %v2379 = vadd.f32 %v1006, %v2378
        %v2380 = vpop.f32.mrf.mxu0
        %v2381 = vadd.f32 %v1002, %v2380
        %v2382 = vpop.f32.mrf.mxu0
        %v2383 = vadd.f32 %v1006, %v2382
        %2384 = vmatprep.mubr.bf16.mxu0 %v705
        %2385 = vmatmul.mubr.bf16.gmra.mxu0 %v704
        %v2386 = vpop.f32.mrf.mxu0
        %v2387 = vadd.f32 %v1002, %v2386
        %v2388 = vpop.f32.mrf.mxu0
        %v2389 = vadd.f32 %v1006, %v2388
        %v2390 = vpop.f32.mrf.mxu0
        %v2391 = vadd.f32 %v1002, %v2390
        %v2392 = vpop.f32.mrf.mxu0
        %v2393 = vadd.f32 %v1006, %v2392
        %2394 = vdwg.mxu0
        %2395 = vmatprep.subr.bf16.mxu0 %v1836
        %2396 = vmatpush1.bf16.msra.mxu0 %v1835
        %2397 = vmatprep.subr.bf16.mxu0 %v1834
        %2398 = vmatpush1.bf16.msra.mxu0 %v1833
        %2399 = vmatprep.subr.bf16.mxu0 %v1832
        %2400 = vmatpush1.bf16.msra.mxu0 %v1831
        %2401 = vmatprep.subr.bf16.mxu0 %v1830
        %2402 = vmatpush1.bf16.msra.mxu0 %v1829
        %2403 = vmatprep.subr.bf16.mxu0 %v1828
        %2404 = vmatpush1.bf16.msra.mxu0 %v1827
        %2405 = vmatprep.subr.bf16.mxu0 %v1826
        %2406 = vmatpush1.bf16.msra.mxu0 %v1825
        %2407 = vmatprep.subr.bf16.mxu0 %v1824
        %2408 = vmatpush1.bf16.msra.mxu0 %v1823
        %2409 = vmatprep.subr.bf16.mxu0 %v1822
        %2410 = vmatpush1.bf16.msra.mxu0 %v1821
        %2411 = vmatprep.subr.bf16.mxu0 %v1852
        %2412 = vmatpush2.bf16.msra.mxu0 %v1851
        %2413 = vmatprep.subr.bf16.mxu0 %v1850
        %2414 = vmatpush2.bf16.msra.mxu0 %v1849
        %2415 = vmatprep.subr.bf16.mxu0 %v1848
        %2416 = vmatpush2.bf16.msra.mxu0 %v1847
        %2417 = vmatprep.subr.bf16.mxu0 %v1846
        %2418 = vmatpush2.bf16.msra.mxu0 %v1845
        %2419 = vmatprep.subr.bf16.mxu0 %v1844
        %2420 = vmatpush2.bf16.msra.mxu0 %v1843
        %2421 = vmatprep.subr.bf16.mxu0 %v1842
        %2422 = vmatpush2.bf16.msra.mxu0 %v1841
        %2423 = vmatprep.subr.bf16.mxu0 %v1840
        %2424 = vmatpush2.bf16.msra.mxu0 %v1839
        %2425 = vmatprep.subr.bf16.mxu0 %v1838
        %2426 = vmatpush2.bf16.msra.mxu0 %v1837
        %2427 = vmatprep.mubr.bf16.mxu0 %v656
        %2428 = vmatmul.mubr.bf16.gmra.mxu0 %v655
        %v2429 = vpop.f32.mrf.mxu0
        %v2430 = vadd.f32 %v2357, %v2429
        %v2431 = vpop.f32.mrf.mxu0
        %v2432 = vadd.f32 %v2359, %v2431
        %v2433 = vpop.f32.mrf.mxu0
        %v2434 = vadd.f32 %v2361, %v2433
        %v2435 = vpop.f32.mrf.mxu0
        %v2436 = vadd.f32 %v2363, %v2435
        %2437 = vmatprep.mubr.bf16.mxu0 %v673
        %2438 = vmatmul.mubr.bf16.gmra.mxu0 %v672
        %v2439 = vpop.f32.mrf.mxu0
        %v2440 = vadd.f32 %v2367, %v2439
        %v2441 = vpop.f32.mrf.mxu0
        %v2442 = vadd.f32 %v2369, %v2441
        %v2443 = vpop.f32.mrf.mxu0
        %v2444 = vadd.f32 %v2371, %v2443
        %v2445 = vpop.f32.mrf.mxu0
        %v2446 = vadd.f32 %v2373, %v2445
        %2447 = vmatprep.mubr.bf16.mxu0 %v690
        %2448 = vmatmul.mubr.bf16.gmra.mxu0 %v689
        %v2449 = vpop.f32.mrf.mxu0
        %v2450 = vadd.f32 %v2377, %v2449
        %v2451 = vpop.f32.mrf.mxu0
        %v2452 = vadd.f32 %v2379, %v2451
        %v2453 = vpop.f32.mrf.mxu0
        %v2454 = vadd.f32 %v2381, %v2453
        %v2455 = vpop.f32.mrf.mxu0
        %v2456 = vadd.f32 %v2383, %v2455
        %2457 = vmatprep.mubr.bf16.mxu0 %v707
        %2458 = vmatmul.mubr.bf16.gmra.mxu0 %v706
        %v2459 = vpop.f32.mrf.mxu0
        %v2460 = vadd.f32 %v2387, %v2459
        %v2461 = vpop.f32.mrf.mxu0
        %v2462 = vadd.f32 %v2389, %v2461
        %v2463 = vpop.f32.mrf.mxu0
        %v2464 = vadd.f32 %v2391, %v2463
        %v2465 = vpop.f32.mrf.mxu0
        %v2466 = vadd.f32 %v2393, %v2465
        %2467 = vdwg.mxu0
        %2468 = vmatprep.subr.bf16.mxu0 %v1868
        %2469 = vmatpush1.bf16.msra.mxu0 %v1867
        %2470 = vmatprep.subr.bf16.mxu0 %v1866
        %2471 = vmatpush1.bf16.msra.mxu0 %v1865
        %2472 = vmatprep.subr.bf16.mxu0 %v1864
        %2473 = vmatpush1.bf16.msra.mxu0 %v1863
        %2474 = vmatprep.subr.bf16.mxu0 %v1862
        %2475 = vmatpush1.bf16.msra.mxu0 %v1861
        %2476 = vmatprep.subr.bf16.mxu0 %v1860
        %2477 = vmatpush1.bf16.msra.mxu0 %v1859
        %2478 = vmatprep.subr.bf16.mxu0 %v1858
        %2479 = vmatpush1.bf16.msra.mxu0 %v1857
        %2480 = vmatprep.subr.bf16.mxu0 %v1856
        %2481 = vmatpush1.bf16.msra.mxu0 %v1855
        %2482 = vmatprep.subr.bf16.mxu0 %v1854
        %2483 = vmatpush1.bf16.msra.mxu0 %v1853
        %2484 = vmatprep.subr.bf16.mxu0 %v1884
        %2485 = vmatpush2.bf16.msra.mxu0 %v1883
        %2486 = vmatprep.subr.bf16.mxu0 %v1882
        %2487 = vmatpush2.bf16.msra.mxu0 %v1881
        %2488 = vmatprep.subr.bf16.mxu0 %v1880
        %2489 = vmatpush2.bf16.msra.mxu0 %v1879
        %2490 = vmatprep.subr.bf16.mxu0 %v1878
        %2491 = vmatpush2.bf16.msra.mxu0 %v1877
        %2492 = vmatprep.subr.bf16.mxu0 %v1876
        %2493 = vmatpush2.bf16.msra.mxu0 %v1875
        %2494 = vmatprep.subr.bf16.mxu0 %v1874
        %2495 = vmatpush2.bf16.msra.mxu0 %v1873
        %2496 = vmatprep.subr.bf16.mxu0 %v1872
        %2497 = vmatpush2.bf16.msra.mxu0 %v1871
        %2498 = vmatprep.subr.bf16.mxu0 %v1870
        %2499 = vmatpush2.bf16.msra.mxu0 %v1869
        %2500 = vmatprep.mubr.bf16.mxu0 %v658
        %2501 = vmatmul.mubr.bf16.gmra.mxu0 %v657
        %v2502 = vpop.f32.mrf.mxu0
        %v2503 = vadd.f32 %v2430, %v2502
        %v2504 = vpop.f32.mrf.mxu0
        %v2505 = vadd.f32 %v2432, %v2504
        %v2506 = vpop.f32.mrf.mxu0
        %v2507 = vadd.f32 %v2434, %v2506
        %v2508 = vpop.f32.mrf.mxu0
        %v2509 = vadd.f32 %v2436, %v2508
        %2510 = vmatprep.mubr.bf16.mxu0 %v675
        %2511 = vmatmul.mubr.bf16.gmra.mxu0 %v674
        %v2512 = vpop.f32.mrf.mxu0
        %v2513 = vadd.f32 %v2440, %v2512
        %v2514 = vpop.f32.mrf.mxu0
        %v2515 = vadd.f32 %v2442, %v2514
        %v2516 = vpop.f32.mrf.mxu0
        %v2517 = vadd.f32 %v2444, %v2516
        %v2518 = vpop.f32.mrf.mxu0
        %v2519 = vadd.f32 %v2446, %v2518
        %2520 = vmatprep.mubr.bf16.mxu0 %v692
        %2521 = vmatmul.mubr.bf16.gmra.mxu0 %v691
        %v2522 = vpop.f32.mrf.mxu0
        %v2523 = vadd.f32 %v2450, %v2522
        %v2524 = vpop.f32.mrf.mxu0
        %v2525 = vadd.f32 %v2452, %v2524
        %v2526 = vpop.f32.mrf.mxu0
        %v2527 = vadd.f32 %v2454, %v2526
        %v2528 = vpop.f32.mrf.mxu0
        %v2529 = vadd.f32 %v2456, %v2528
        %2530 = vmatprep.mubr.bf16.mxu0 %v709
        %2531 = vmatmul.mubr.bf16.gmra.mxu0 %v708
        %v2532 = vpop.f32.mrf.mxu0
        %v2533 = vadd.f32 %v2460, %v2532
        %v2534 = vpop.f32.mrf.mxu0
        %v2535 = vadd.f32 %v2462, %v2534
        %v2536 = vpop.f32.mrf.mxu0
        %v2537 = vadd.f32 %v2464, %v2536
        %v2538 = vpop.f32.mrf.mxu0
        %v2539 = vadd.f32 %v2466, %v2538
        %2540 = vdwg.mxu0
        %2541 = vmatprep.subr.bf16.mxu0 %v1900
        %2542 = vmatpush1.bf16.msra.mxu0 %v1899
        %2543 = vmatprep.subr.bf16.mxu0 %v1898
        %2544 = vmatpush1.bf16.msra.mxu0 %v1897
        %2545 = vmatprep.subr.bf16.mxu0 %v1896
        %2546 = vmatpush1.bf16.msra.mxu0 %v1895
        %2547 = vmatprep.subr.bf16.mxu0 %v1894
        %2548 = vmatpush1.bf16.msra.mxu0 %v1893
        %2549 = vmatprep.subr.bf16.mxu0 %v1892
        %2550 = vmatpush1.bf16.msra.mxu0 %v1891
        %2551 = vmatprep.subr.bf16.mxu0 %v1890
        %2552 = vmatpush1.bf16.msra.mxu0 %v1889
        %2553 = vmatprep.subr.bf16.mxu0 %v1888
        %2554 = vmatpush1.bf16.msra.mxu0 %v1887
        %2555 = vmatprep.subr.bf16.mxu0 %v1886
        %2556 = vmatpush1.bf16.msra.mxu0 %v1885
        %2557 = vmatprep.subr.bf16.mxu0 %v1916
        %2558 = vmatpush2.bf16.msra.mxu0 %v1915
        %2559 = vmatprep.subr.bf16.mxu0 %v1914
        %2560 = vmatpush2.bf16.msra.mxu0 %v1913
        %2561 = vmatprep.subr.bf16.mxu0 %v1912
        %2562 = vmatpush2.bf16.msra.mxu0 %v1911
        %2563 = vmatprep.subr.bf16.mxu0 %v1910
        %2564 = vmatpush2.bf16.msra.mxu0 %v1909
        %2565 = vmatprep.subr.bf16.mxu0 %v1908
        %2566 = vmatpush2.bf16.msra.mxu0 %v1907
        %2567 = vmatprep.subr.bf16.mxu0 %v1906
        %2568 = vmatpush2.bf16.msra.mxu0 %v1905
        %2569 = vmatprep.subr.bf16.mxu0 %v1904
        %2570 = vmatpush2.bf16.msra.mxu0 %v1903
        %2571 = vmatprep.subr.bf16.mxu0 %v1902
        %2572 = vmatpush2.bf16.msra.mxu0 %v1901
        %2573 = vmatprep.mubr.bf16.mxu0 %v660
        %2574 = vmatmul.mubr.bf16.gmra.mxu0 %v659
        %v2575 = vpop.f32.mrf.mxu0
        %v2576 = vadd.f32 %v2503, %v2575
        %v2577 = vpop.f32.mrf.mxu0
        %v2578 = vadd.f32 %v2505, %v2577
        %v2579 = vpop.f32.mrf.mxu0
        %v2580 = vadd.f32 %v2507, %v2579
        %v2581 = vpop.f32.mrf.mxu0
        %v2582 = vadd.f32 %v2509, %v2581
        %2583 = vmatprep.mubr.bf16.mxu0 %v677
        %2584 = vmatmul.mubr.bf16.gmra.mxu0 %v676
        %v2585 = vpop.f32.mrf.mxu0
        %v2586 = vadd.f32 %v2513, %v2585
        %v2587 = vpop.f32.mrf.mxu0
        %v2588 = vadd.f32 %v2515, %v2587
        %v2589 = vpop.f32.mrf.mxu0
        %v2590 = vadd.f32 %v2517, %v2589
        %v2591 = vpop.f32.mrf.mxu0
        %v2592 = vadd.f32 %v2519, %v2591
        %2593 = vmatprep.mubr.bf16.mxu0 %v694
        %2594 = vmatmul.mubr.bf16.gmra.mxu0 %v693
        %v2595 = vpop.f32.mrf.mxu0
        %v2596 = vadd.f32 %v2523, %v2595
        %v2597 = vpop.f32.mrf.mxu0
        %v2598 = vadd.f32 %v2525, %v2597
        %v2599 = vpop.f32.mrf.mxu0
        %v2600 = vadd.f32 %v2527, %v2599
        %v2601 = vpop.f32.mrf.mxu0
        %v2602 = vadd.f32 %v2529, %v2601
        %2603 = vmatprep.mubr.bf16.mxu0 %v711
        %2604 = vmatmul.mubr.bf16.gmra.mxu0 %v710
        %v2605 = vpop.f32.mrf.mxu0
        %v2606 = vadd.f32 %v2533, %v2605
        %v2607 = vpop.f32.mrf.mxu0
        %v2608 = vadd.f32 %v2535, %v2607
        %v2609 = vpop.f32.mrf.mxu0
        %v2610 = vadd.f32 %v2537, %v2609
        %v2611 = vpop.f32.mrf.mxu0
        %v2612 = vadd.f32 %v2539, %v2611
        %2613 = vdwg.mxu0
        %2614 = vmatprep.subr.bf16.mxu0 %v1932
        %2615 = vmatpush1.bf16.msra.mxu0 %v1931
        %2616 = vmatprep.subr.bf16.mxu0 %v1930
        %2617 = vmatpush1.bf16.msra.mxu0 %v1929
        %2618 = vmatprep.subr.bf16.mxu0 %v1928
        %2619 = vmatpush1.bf16.msra.mxu0 %v1927
        %2620 = vmatprep.subr.bf16.mxu0 %v1926
        %2621 = vmatpush1.bf16.msra.mxu0 %v1925
        %2622 = vmatprep.subr.bf16.mxu0 %v1924
        %2623 = vmatpush1.bf16.msra.mxu0 %v1923
        %2624 = vmatprep.subr.bf16.mxu0 %v1922
        %2625 = vmatpush1.bf16.msra.mxu0 %v1921
        %2626 = vmatprep.subr.bf16.mxu0 %v1920
        %2627 = vmatpush1.bf16.msra.mxu0 %v1919
        %2628 = vmatprep.subr.bf16.mxu0 %v1918
        %2629 = vmatpush1.bf16.msra.mxu0 %v1917
        %2630 = vmatprep.subr.bf16.mxu0 %v1948
        %2631 = vmatpush2.bf16.msra.mxu0 %v1947
        %2632 = vmatprep.subr.bf16.mxu0 %v1946
        %2633 = vmatpush2.bf16.msra.mxu0 %v1945
        %2634 = vmatprep.subr.bf16.mxu0 %v1944
        %2635 = vmatpush2.bf16.msra.mxu0 %v1943
        %2636 = vmatprep.subr.bf16.mxu0 %v1942
        %2637 = vmatpush2.bf16.msra.mxu0 %v1941
        %2638 = vmatprep.subr.bf16.mxu0 %v1940
        %2639 = vmatpush2.bf16.msra.mxu0 %v1939
        %2640 = vmatprep.subr.bf16.mxu0 %v1938
        %2641 = vmatpush2.bf16.msra.mxu0 %v1937
        %2642 = vmatprep.subr.bf16.mxu0 %v1936
        %2643 = vmatpush2.bf16.msra.mxu0 %v1935
        %2644 = vmatprep.subr.bf16.mxu0 %v1934
        %2645 = vmatpush2.bf16.msra.mxu0 %v1933
        %2646 = vmatprep.mubr.bf16.mxu0 %v662
        %2647 = vmatmul.mubr.bf16.gmra.mxu0 %v661
        %v2648 = vpop.f32.mrf.mxu0
        %v2649 = vadd.f32 %v2576, %v2648
        %v2650 = vpop.f32.mrf.mxu0
        %v2651 = vadd.f32 %v2578, %v2650
        %v2652 = vpop.f32.mrf.mxu0
        %v2653 = vadd.f32 %v2580, %v2652
        %v2654 = vpop.f32.mrf.mxu0
        %v2655 = vadd.f32 %v2582, %v2654
        %2656 = vmatprep.mubr.bf16.mxu0 %v679
        %2657 = vmatmul.mubr.bf16.gmra.mxu0 %v678
        %v2658 = vpop.f32.mrf.mxu0
        %v2659 = vadd.f32 %v2586, %v2658
        %v2660 = vpop.f32.mrf.mxu0
        %v2661 = vadd.f32 %v2588, %v2660
        %v2662 = vpop.f32.mrf.mxu0
        %v2663 = vadd.f32 %v2590, %v2662
        %v2664 = vpop.f32.mrf.mxu0
        %v2665 = vadd.f32 %v2592, %v2664
        %2666 = vmatprep.mubr.bf16.mxu0 %v696
        %2667 = vmatmul.mubr.bf16.gmra.mxu0 %v695
        %v2668 = vpop.f32.mrf.mxu0
        %v2669 = vadd.f32 %v2596, %v2668
        %v2670 = vpop.f32.mrf.mxu0
        %v2671 = vadd.f32 %v2598, %v2670
        %v2672 = vpop.f32.mrf.mxu0
        %v2673 = vadd.f32 %v2600, %v2672
        %v2674 = vpop.f32.mrf.mxu0
        %v2675 = vadd.f32 %v2602, %v2674
        %2676 = vmatprep.mubr.bf16.mxu0 %v713
        %2677 = vmatmul.mubr.bf16.gmra.mxu0 %v712
        %v2678 = vpop.f32.mrf.mxu0
        %v2679 = vadd.f32 %v2606, %v2678
        %v2680 = vpop.f32.mrf.mxu0
        %v2681 = vadd.f32 %v2608, %v2680
        %v2682 = vpop.f32.mrf.mxu0
        %v2683 = vadd.f32 %v2610, %v2682
        %v2684 = vpop.f32.mrf.mxu0
        %v2685 = vadd.f32 %v2612, %v2684
        %2686 = vdwg.mxu0
        %2687 = vmatprep.subr.bf16.mxu0 %v1964
        %2688 = vmatpush1.bf16.msra.mxu0 %v1963
        %2689 = vmatprep.subr.bf16.mxu0 %v1962
        %2690 = vmatpush1.bf16.msra.mxu0 %v1961
        %2691 = vmatprep.subr.bf16.mxu0 %v1960
        %2692 = vmatpush1.bf16.msra.mxu0 %v1959
        %2693 = vmatprep.subr.bf16.mxu0 %v1958
        %2694 = vmatpush1.bf16.msra.mxu0 %v1957
        %2695 = vmatprep.subr.bf16.mxu0 %v1956
        %2696 = vmatpush1.bf16.msra.mxu0 %v1955
        %2697 = vmatprep.subr.bf16.mxu0 %v1954
        %2698 = vmatpush1.bf16.msra.mxu0 %v1953
        %2699 = vmatprep.subr.bf16.mxu0 %v1952
        %2700 = vmatpush1.bf16.msra.mxu0 %v1951
        %2701 = vmatprep.subr.bf16.mxu0 %v1950
        %2702 = vmatpush1.bf16.msra.mxu0 %v1949
        %2703 = vmatprep.subr.bf16.mxu0 %v1980
        %2704 = vmatpush2.bf16.msra.mxu0 %v1979
        %2705 = vmatprep.subr.bf16.mxu0 %v1978
        %2706 = vmatpush2.bf16.msra.mxu0 %v1977
        %2707 = vmatprep.subr.bf16.mxu0 %v1976
        %2708 = vmatpush2.bf16.msra.mxu0 %v1975
        %2709 = vmatprep.subr.bf16.mxu0 %v1974
        %2710 = vmatpush2.bf16.msra.mxu0 %v1973
        %2711 = vmatprep.subr.bf16.mxu0 %v1972
        %2712 = vmatpush2.bf16.msra.mxu0 %v1971
        %2713 = vmatprep.subr.bf16.mxu0 %v1970
        %2714 = vmatpush2.bf16.msra.mxu0 %v1969
        %2715 = vmatprep.subr.bf16.mxu0 %v1968
        %2716 = vmatpush2.bf16.msra.mxu0 %v1967
        %2717 = vmatprep.subr.bf16.mxu0 %v1966
        %2718 = vmatpush2.bf16.msra.mxu0 %v1965
        %2719 = vmatprep.mubr.bf16.mxu0 %v664
        %2720 = vmatmul.mubr.bf16.gmra.mxu0 %v663
        %v2721 = vpop.f32.mrf.mxu0
        %v2722 = vadd.f32 %v2649, %v2721
        %v2723 = vpop.f32.mrf.mxu0
        %v2724 = vadd.f32 %v2651, %v2723
        %v2725 = vpop.f32.mrf.mxu0
        %v2726 = vadd.f32 %v2653, %v2725
        %v2727 = vpop.f32.mrf.mxu0
        %v2728 = vadd.f32 %v2655, %v2727
        %2729 = vmatprep.mubr.bf16.mxu0 %v681
        %2730 = vmatmul.mubr.bf16.gmra.mxu0 %v680
        %v2731 = vpop.f32.mrf.mxu0
        %v2732 = vadd.f32 %v2659, %v2731
        %v2733 = vpop.f32.mrf.mxu0
        %v2734 = vadd.f32 %v2661, %v2733
        %v2735 = vpop.f32.mrf.mxu0
        %v2736 = vadd.f32 %v2663, %v2735
        %v2737 = vpop.f32.mrf.mxu0
        %v2738 = vadd.f32 %v2665, %v2737
        %2739 = vmatprep.mubr.bf16.mxu0 %v698
        %2740 = vmatmul.mubr.bf16.gmra.mxu0 %v697
        %v2741 = vpop.f32.mrf.mxu0
        %v2742 = vadd.f32 %v2669, %v2741
        %v2743 = vpop.f32.mrf.mxu0
        %v2744 = vadd.f32 %v2671, %v2743
        %v2745 = vpop.f32.mrf.mxu0
        %v2746 = vadd.f32 %v2673, %v2745
        %v2747 = vpop.f32.mrf.mxu0
        %v2748 = vadd.f32 %v2675, %v2747
        %2749 = vmatprep.mubr.bf16.mxu0 %v715
        %2750 = vmatmul.mubr.bf16.gmra.mxu0 %v714
        %v2751 = vpop.f32.mrf.mxu0
        %v2752 = vadd.f32 %v2679, %v2751
        %v2753 = vpop.f32.mrf.mxu0
        %v2754 = vadd.f32 %v2681, %v2753
        %v2755 = vpop.f32.mrf.mxu0
        %v2756 = vadd.f32 %v2683, %v2755
        %v2757 = vpop.f32.mrf.mxu0
        %v2758 = vadd.f32 %v2685, %v2757
        %2759 = vdwg.mxu0
        %2760 = vmatprep.subr.bf16.mxu0 %v1996
        %2761 = vmatpush1.bf16.msra.mxu0 %v1995
        %2762 = vmatprep.subr.bf16.mxu0 %v1994
        %2763 = vmatpush1.bf16.msra.mxu0 %v1993
        %2764 = vmatprep.subr.bf16.mxu0 %v1992
        %2765 = vmatpush1.bf16.msra.mxu0 %v1991
        %2766 = vmatprep.subr.bf16.mxu0 %v1990
        %2767 = vmatpush1.bf16.msra.mxu0 %v1989
        %2768 = vmatprep.subr.bf16.mxu0 %v1988
        %2769 = vmatpush1.bf16.msra.mxu0 %v1987
        %2770 = vmatprep.subr.bf16.mxu0 %v1986
        %2771 = vmatpush1.bf16.msra.mxu0 %v1985
        %2772 = vmatprep.subr.bf16.mxu0 %v1984
        %2773 = vmatpush1.bf16.msra.mxu0 %v1983
        %2774 = vmatprep.subr.bf16.mxu0 %v1982
        %2775 = vmatpush1.bf16.msra.mxu0 %v1981
        %2776 = vmatprep.subr.bf16.mxu0 %v2012
        %2777 = vmatpush2.bf16.msra.mxu0 %v2011
        %2778 = vmatprep.subr.bf16.mxu0 %v2010
        %2779 = vmatpush2.bf16.msra.mxu0 %v2009
        %2780 = vmatprep.subr.bf16.mxu0 %v2008
        %2781 = vmatpush2.bf16.msra.mxu0 %v2007
        %2782 = vmatprep.subr.bf16.mxu0 %v2006
        %2783 = vmatpush2.bf16.msra.mxu0 %v2005
        %2784 = vmatprep.subr.bf16.mxu0 %v2004
        %2785 = vmatpush2.bf16.msra.mxu0 %v2003
        %2786 = vmatprep.subr.bf16.mxu0 %v2002
        %2787 = vmatpush2.bf16.msra.mxu0 %v2001
        %2788 = vmatprep.subr.bf16.mxu0 %v2000
        %2789 = vmatpush2.bf16.msra.mxu0 %v1999
        %2790 = vmatprep.subr.bf16.mxu0 %v1998
        %2791 = vmatpush2.bf16.msra.mxu0 %v1997
        %2792 = vmatprep.mubr.bf16.mxu0 %v666
        %2793 = vmatmul.mubr.bf16.gmra.mxu0 %v665
        %v2794 = vpop.f32.mrf.mxu0
        %v2795 = vadd.f32 %v2722, %v2794
        %v2796 = vpop.f32.mrf.mxu0
        %v2797 = vadd.f32 %v2724, %v2796
        %v2798 = vpop.f32.mrf.mxu0
        %v2799 = vadd.f32 %v2726, %v2798
        %v2800 = vpop.f32.mrf.mxu0
        %v2801 = vadd.f32 %v2728, %v2800
        %2802 = vmatprep.mubr.bf16.mxu0 %v683
        %2803 = vmatmul.mubr.bf16.gmra.mxu0 %v682
        %v2804 = vpop.f32.mrf.mxu0
        %v2805 = vadd.f32 %v2732, %v2804
        %v2806 = vpop.f32.mrf.mxu0
        %v2807 = vadd.f32 %v2734, %v2806
        %v2808 = vpop.f32.mrf.mxu0
        %v2809 = vadd.f32 %v2736, %v2808
        %v2810 = vpop.f32.mrf.mxu0
        %v2811 = vadd.f32 %v2738, %v2810
        %2812 = vmatprep.mubr.bf16.mxu0 %v700
        %2813 = vmatmul.mubr.bf16.gmra.mxu0 %v699
        %v2814 = vpop.f32.mrf.mxu0
        %v2815 = vadd.f32 %v2742, %v2814
        %v2816 = vpop.f32.mrf.mxu0
        %v2817 = vadd.f32 %v2744, %v2816
        %v2818 = vpop.f32.mrf.mxu0
        %v2819 = vadd.f32 %v2746, %v2818
        %v2820 = vpop.f32.mrf.mxu0
        %v2821 = vadd.f32 %v2748, %v2820
        %2822 = vmatprep.mubr.bf16.mxu0 %v717
        %2823 = vmatmul.mubr.bf16.gmra.mxu0 %v716
        %v2824 = vpop.f32.mrf.mxu0
        %v2825 = vadd.f32 %v2752, %v2824
        %v2826 = vpop.f32.mrf.mxu0
        %v2827 = vadd.f32 %v2754, %v2826
        %v2828 = vpop.f32.mrf.mxu0
        %v2829 = vadd.f32 %v2756, %v2828
        %v2830 = vpop.f32.mrf.mxu0
        %v2831 = vadd.f32 %v2758, %v2830
        %2832 = vdwg.mxu0
        %2833 = vmatprep.subr.bf16.mxu0 %v2028
        %2834 = vmatpush1.bf16.msra.mxu0 %v2027
        %2835 = vmatprep.subr.bf16.mxu0 %v2026
        %2836 = vmatpush1.bf16.msra.mxu0 %v2025
        %2837 = vmatprep.subr.bf16.mxu0 %v2024
        %2838 = vmatpush1.bf16.msra.mxu0 %v2023
        %2839 = vmatprep.subr.bf16.mxu0 %v2022
        %2840 = vmatpush1.bf16.msra.mxu0 %v2021
        %2841 = vmatprep.subr.bf16.mxu0 %v2020
        %2842 = vmatpush1.bf16.msra.mxu0 %v2019
        %2843 = vmatprep.subr.bf16.mxu0 %v2018
        %2844 = vmatpush1.bf16.msra.mxu0 %v2017
        %2845 = vmatprep.subr.bf16.mxu0 %v2016
        %2846 = vmatpush1.bf16.msra.mxu0 %v2015
        %2847 = vmatprep.subr.bf16.mxu0 %v2014
        %2848 = vmatpush1.bf16.msra.mxu0 %v2013
        %2849 = vmatprep.subr.bf16.mxu0 %v2044
        %2850 = vmatpush2.bf16.msra.mxu0 %v2043
        %2851 = vmatprep.subr.bf16.mxu0 %v2042
        %2852 = vmatpush2.bf16.msra.mxu0 %v2041
        %2853 = vmatprep.subr.bf16.mxu0 %v2040
        %2854 = vmatpush2.bf16.msra.mxu0 %v2039
        %2855 = vmatprep.subr.bf16.mxu0 %v2038
        %2856 = vmatpush2.bf16.msra.mxu0 %v2037
        %2857 = vmatprep.subr.bf16.mxu0 %v2036
        %2858 = vmatpush2.bf16.msra.mxu0 %v2035
        %2859 = vmatprep.subr.bf16.mxu0 %v2034
        %2860 = vmatpush2.bf16.msra.mxu0 %v2033
        %2861 = vmatprep.subr.bf16.mxu0 %v2032
        %2862 = vmatpush2.bf16.msra.mxu0 %v2031
        %2863 = vmatprep.subr.bf16.mxu0 %v2030
        %2864 = vmatpush2.bf16.msra.mxu0 %v2029
        %2865 = vmatprep.mubr.bf16.mxu0 %v668
        %2866 = vmatmul.mubr.bf16.gmra.mxu0 %v667
        %v2867 = vpop.f32.mrf.mxu0
        %v2868 = vadd.f32 %v2795, %v2867
        %v2869 = vpop.f32.mrf.mxu0
        %v2870 = vadd.f32 %v2797, %v2869
        %v2871 = vpop.f32.mrf.mxu0
        %v2872 = vadd.f32 %v2799, %v2871
        %v2873 = vpop.f32.mrf.mxu0
        %v2874 = vadd.f32 %v2801, %v2873
        %2875 = vmatprep.mubr.bf16.mxu0 %v685
        %2876 = vmatmul.mubr.bf16.gmra.mxu0 %v684
        %v2877 = vpop.f32.mrf.mxu0
        %v2878 = vadd.f32 %v2805, %v2877
        %v2879 = vpop.f32.mrf.mxu0
        %v2880 = vadd.f32 %v2807, %v2879
        %v2881 = vpop.f32.mrf.mxu0
        %v2882 = vadd.f32 %v2809, %v2881
        %v2883 = vpop.f32.mrf.mxu0
        %v2884 = vadd.f32 %v2811, %v2883
        %2885 = vmatprep.mubr.bf16.mxu0 %v702
        %2886 = vmatmul.mubr.bf16.gmra.mxu0 %v701
        %v2887 = vpop.f32.mrf.mxu0
        %v2888 = vadd.f32 %v2815, %v2887
        %v2889 = vpop.f32.mrf.mxu0
        %v2890 = vadd.f32 %v2817, %v2889
        %v2891 = vpop.f32.mrf.mxu0
        %v2892 = vadd.f32 %v2819, %v2891
        %v2893 = vpop.f32.mrf.mxu0
        %v2894 = vadd.f32 %v2821, %v2893
        %2895 = vmatprep.mubr.bf16.mxu0 %v719
        %2896 = vmatmul.mubr.bf16.gmra.mxu0 %v718
        %v2897 = vpop.f32.mrf.mxu0
        %v2898 = vadd.f32 %v2825, %v2897
        %v2899 = vpop.f32.mrf.mxu0
        %v2900 = vadd.f32 %v2827, %v2899
        %v2901 = vpop.f32.mrf.mxu0
        %v2902 = vadd.f32 %v2829, %v2901
        %v2903 = vpop.f32.mrf.mxu0
        %v2904 = vadd.f32 %v2831, %v2903
        %2905 = vdwg.mxu0
        %2906 = vmatprep.subr.bf16.mxu0 0
        %2907 = vmatpush1.bf16.msra.mxu0 0
        %2908 = vmatprep.subr.bf16.mxu0 0
        %2909 = vmatpush1.bf16.msra.mxu0 0
        %2910 = vmatprep.subr.bf16.mxu0 0
        %2911 = vmatpush1.bf16.msra.mxu0 0
        %2912 = vmatprep.subr.bf16.mxu0 0
        %2913 = vmatpush1.bf16.msra.mxu0 0
        %2914 = vmatprep.subr.bf16.mxu0 0
        %2915 = vmatpush1.bf16.msra.mxu0 0
        %2916 = vmatprep.subr.bf16.mxu0 0
        %2917 = vmatpush1.bf16.msra.mxu0 0
        %2918 = vmatprep.subr.bf16.mxu0 %v2048
        %2919 = vmatpush1.bf16.msra.mxu0 %v2047
        %2920 = vmatprep.subr.bf16.mxu0 %v2046
        %2921 = vmatpush1.bf16.msra.mxu0 %v2045
        %2922 = vmatprep.subr.bf16.mxu0 0
        %2923 = vmatpush2.bf16.msra.mxu0 0
        %2924 = vmatprep.subr.bf16.mxu0 0
        %2925 = vmatpush2.bf16.msra.mxu0 0
        %2926 = vmatprep.subr.bf16.mxu0 0
        %2927 = vmatpush2.bf16.msra.mxu0 0
        %2928 = vmatprep.subr.bf16.mxu0 0
        %2929 = vmatpush2.bf16.msra.mxu0 0
        %2930 = vmatprep.subr.bf16.mxu0 0
        %2931 = vmatpush2.bf16.msra.mxu0 0
        %2932 = vmatprep.subr.bf16.mxu0 0
        %2933 = vmatpush2.bf16.msra.mxu0 0
        %2934 = vmatprep.subr.bf16.mxu0 0
        %2935 = vmatpush2.bf16.msra.mxu0 0
        %2936 = vmatprep.subr.bf16.mxu0 0
        %2937 = vmatpush2.bf16.msra.mxu0 0
        %2938 = vmatprep.mubr.bf16.mxu0 0
        %2939 = vmatmul.mubr.bf16.gmra.mxu0 %v2311
        %v2940 = vpop.f32.mrf.mxu0
        %v2941 = vadd.f32 %v2868, %v2940
        %v2942 = vpop.f32.mrf.mxu0
        %v2943 = vadd.f32 %v2870, %v2942
        %v2944 = vpop.f32.mrf.mxu0
        %v2945 = vadd.f32 %v2872, %v2944
        %v2946 = vpop.f32.mrf.mxu0
        %v2947 = vadd.f32 %v2874, %v2946
        %2948 = vmatprep.mubr.bf16.mxu0 0
        %2949 = vmatmul.mubr.bf16.gmra.mxu0 %v2314
        %v2950 = vpop.f32.mrf.mxu0
        %v2951 = vadd.f32 %v2878, %v2950
        %v2952 = vpop.f32.mrf.mxu0
        %v2953 = vadd.f32 %v2880, %v2952
        %v2954 = vpop.f32.mrf.mxu0
        %v2955 = vadd.f32 %v2882, %v2954
        %v2956 = vpop.f32.mrf.mxu0
        %v2957 = vadd.f32 %v2884, %v2956
        %2958 = vmatprep.mubr.bf16.mxu0 0
        %2959 = vmatmul.mubr.bf16.gmra.mxu0 %v2317
        %v2960 = vpop.f32.mrf.mxu0
        %v2961 = vadd.f32 %v2888, %v2960
        %v2962 = vpop.f32.mrf.mxu0
        %v2963 = vadd.f32 %v2890, %v2962
        %v2964 = vpop.f32.mrf.mxu0
        %v2965 = vadd.f32 %v2892, %v2964
        %v2966 = vpop.f32.mrf.mxu0
        %v2967 = vadd.f32 %v2894, %v2966
        %2968 = vmatprep.mubr.bf16.mxu0 0
        %2969 = vmatmul.mubr.bf16.gmra.mxu0 %v2320
        %v2970 = vpop.f32.mrf.mxu0
        %v2971 = vadd.f32 %v2898, %v2970
        %v2972 = vpop.f32.mrf.mxu0
        %v2973 = vadd.f32 %v2900, %v2972
        %v2974 = vpop.f32.mrf.mxu0
        %v2975 = vadd.f32 %v2902, %v2974
        %v2976 = vpop.f32.mrf.mxu0
        %v2977 = vadd.f32 %v2904, %v2976
        %2978 = vdwg.mxu0
        %v2979 = vmax.f32 %v2941, 0.0
        %v2980 = vmax.f32 %v2943, 0.0
        %v2981 = vmax.f32 %v2945, 0.0
        %v2982 = vmax.f32 %v2947, 0.0
        %v2983 = vmax.f32 %v2951, 0.0
        %v2984 = vmax.f32 %v2953, 0.0
        %v2985 = vmax.f32 %v2955, 0.0
        %v2986 = vmax.f32 %v2957, 0.0
        %v2987 = vmax.f32 %v2961, 0.0
        %v2988 = vmax.f32 %v2963, 0.0
        %v2989 = vmax.f32 %v2965, 0.0
        %v2990 = vmax.f32 %v2967, 0.0
        %v2991 = vmax.f32 %v2971, 0.0
        %v2992 = vmax.f32 %v2973, 0.0
        %v2993 = vmax.f32 %v2975, 0.0
        %v2994 = vmax.f32 %v2977, 0.0
        %v2995 = vld [vmem:[%s5] sm:$0xff]
        %v2996 = vld [vmem:[%s5 + $0x8] sm:$0xff]
        %v2997 = vld [vmem:[%s5 + $0x10] sm:$0xff]
        %v2998 = vld [vmem:[%s5 + $0x18] sm:$0xff]
        %v2999 = vld [vmem:[%s5 + $0x20] sm:$0xff]
        %v3000 = vld [vmem:[%s5 + $0x28] sm:$0xff]
        %v3001 = vld [vmem:[%s5 + $0x30] sm:$0xff]
        %v3002 = vld [vmem:[%s5 + $0x38] sm:$0xff]
        %v3003 = vld [vmem:[%s5 + $0x40] sm:$0xff]
        %v3004 = vld [vmem:[%s5 + $0x48] sm:$0xff]
        %v3005 = vld [vmem:[%s5 + $0x50] sm:$0xff]
        %v3006 = vld [vmem:[%s5 + $0x58] sm:$0xff]
        %v3007 = vld [vmem:[%s5 + $0x60] sm:$0xff]
        %v3008 = vld [vmem:[%s5 + $0x68] sm:$0xff]
        %v3009 = vld [vmem:[%s5 + $0x70] sm:$0xff]
        %v3010 = vld [vmem:[%s5 + $0x78] sm:$0xff]
        %v3011 = vld [vmem:[%s5 + $0x80] sm:$0xff]
        %v3012 = vld [vmem:[%s5 + $0x88] sm:$0xff]
        %v3013 = vld [vmem:[%s5 + $0x90] sm:$0xff]
        %v3014 = vld [vmem:[%s5 + $0x98] sm:$0xff]
        %v3015 = vld [vmem:[%s5 + $0xa0] sm:$0xff]
        %v3016 = vld [vmem:[%s5 + $0xa8] sm:$0xff]
        %v3017 = vld [vmem:[%s5 + $0xb0] sm:$0xff]
        %v3018 = vld [vmem:[%s5 + $0xb8] sm:$0xff]
        %v3019 = vld [vmem:[%s5 + $0xc0] sm:$0xff]
        %v3020 = vld [vmem:[%s5 + $0xc8] sm:$0xff]
        %v3021 = vld [vmem:[%s5 + $0xd0] sm:$0xff]
        %v3022 = vld [vmem:[%s5 + $0xd8] sm:$0xff]
        %v3023 = vld [vmem:[%s5 + $0xe0] sm:$0xff]
        %v3024 = vld [vmem:[%s5 + $0xe8] sm:$0xff]
        %v3025 = vld [vmem:[%s5 + $0xf0] sm:$0xff]
        %v3026 = vld [vmem:[%s5 + $0xf8] sm:$0xff]
        %v3027 = vld [vmem:[%s5 + $0x100] sm:$0xff]
        %v3028 = vld [vmem:[%s5 + $0x108] sm:$0xff]
        %v3029 = vld [vmem:[%s5 + $0x110] sm:$0xff]
        %v3030 = vld [vmem:[%s5 + $0x118] sm:$0xff]
        %v3031 = vld [vmem:[%s5 + $0x120] sm:$0xff]
        %v3032 = vld [vmem:[%s5 + $0x128] sm:$0xff]
        %v3033 = vld [vmem:[%s5 + $0x130] sm:$0xff]
        %v3034 = vld [vmem:[%s5 + $0x138] sm:$0xff]
        %v3035 = vld [vmem:[%s5 + $0x140] sm:$0xff]
        %v3036 = vld [vmem:[%s5 + $0x148] sm:$0xff]
        %v3037 = vld [vmem:[%s5 + $0x150] sm:$0xff]
        %v3038 = vld [vmem:[%s5 + $0x158] sm:$0xff]
        %v3039 = vld [vmem:[%s5 + $0x160] sm:$0xff]
        %v3040 = vld [vmem:[%s5 + $0x168] sm:$0xff]
        %v3041 = vld [vmem:[%s5 + $0x170] sm:$0xff]
        %v3042 = vld [vmem:[%s5 + $0x178] sm:$0xff]
        %v3043 = vld [vmem:[%s5 + $0x180] sm:$0xff]
        %v3044 = vld [vmem:[%s5 + $0x188] sm:$0xff]
        %v3045 = vld [vmem:[%s5 + $0x190] sm:$0xff]
        %v3046 = vld [vmem:[%s5 + $0x198] sm:$0xff]
        %v3047 = vld [vmem:[%s5 + $0x1a0] sm:$0xff]
        %v3048 = vld [vmem:[%s5 + $0x1a8] sm:$0xff]
        %v3049 = vld [vmem:[%s5 + $0x1b0] sm:$0xff]
        %v3050 = vld [vmem:[%s5 + $0x1b8] sm:$0xff]
        %v3051 = vld [vmem:[%s5 + $0x1c0] sm:$0xff]
        %v3052 = vld [vmem:[%s5 + $0x1c8] sm:$0xff]
        %v3053 = vld [vmem:[%s5 + $0x1d0] sm:$0xff]
        %v3054 = vld [vmem:[%s5 + $0x1d8] sm:$0xff]
        %v3055 = vld [vmem:[%s5 + $0x1e0] sm:$0xff]
        %v3056 = vld [vmem:[%s5 + $0x1e8] sm:$0xff]
        %v3057 = vld [vmem:[%s5 + $0x1f0] sm:$0xff]
        %v3058 = vld [vmem:[%s5 + $0x1f8] sm:$0xff]
        %v3059 = vld [vmem:[%s5 + $0x200] sm:$0xff]
        %v3060 = vld [vmem:[%s5 + $0x208] sm:$0xff]
        %v3061 = vld [vmem:[%s5 + $0x210] sm:$0xff]
        %v3062 = vld [vmem:[%s5 + $0x218] sm:$0xff]
        %v3063 = vld [vmem:[%s5 + $0x220] sm:$0xff]
        %v3064 = vld [vmem:[%s5 + $0x228] sm:$0xff]
        %v3065 = vld [vmem:[%s5 + $0x230] sm:$0xff]
        %v3066 = vld [vmem:[%s5 + $0x238] sm:$0xff]
        %v3067 = vld [vmem:[%s5 + $0x240] sm:$0xff]
        %v3068 = vld [vmem:[%s5 + $0x248] sm:$0xff]
        %v3069 = vld [vmem:[%s5 + $0x250] sm:$0xff]
        %v3070 = vld [vmem:[%s5 + $0x258] sm:$0xff]
        %v3071 = vld [vmem:[%s5 + $0x260] sm:$0xff]
        %v3072 = vld [vmem:[%s5 + $0x268] sm:$0xff]
        %v3073 = vld [vmem:[%s5 + $0x270] sm:$0xff]
        %v3074 = vld [vmem:[%s5 + $0x278] sm:$0xff]
        %v3075 = vld [vmem:[%s5 + $0x280] sm:$0xff]
        %v3076 = vld [vmem:[%s5 + $0x288] sm:$0xff]
        %v3077 = vld [vmem:[%s5 + $0x290] sm:$0xff]
        %v3078 = vld [vmem:[%s5 + $0x298] sm:$0xff]
        %v3079 = vld [vmem:[%s5 + $0x2a0] sm:$0xff]
        %v3080 = vld [vmem:[%s5 + $0x2a8] sm:$0xff]
        %v3081 = vld [vmem:[%s5 + $0x2b0] sm:$0xff]
        %v3082 = vld [vmem:[%s5 + $0x2b8] sm:$0xff]
        %v3083 = vld [vmem:[%s5 + $0x2c0] sm:$0xff]
        %v3084 = vld [vmem:[%s5 + $0x2c8] sm:$0xff]
        %v3085 = vld [vmem:[%s5 + $0x2d0] sm:$0xff]
        %v3086 = vld [vmem:[%s5 + $0x2d8] sm:$0xff]
        %v3087 = vld [vmem:[%s5 + $0x2e0] sm:$0xff]
        %v3088 = vld [vmem:[%s5 + $0x2e8] sm:$0xff]
        %v3089 = vld [vmem:[%s5 + $0x2f0] sm:$0xff]
        %v3090 = vld [vmem:[%s5 + $0x2f8] sm:$0xff]
        %v3091 = vld [vmem:[%s5 + $0x300] sm:$0xff]
        %v3092 = vld [vmem:[%s5 + $0x308] sm:$0xff]
        %v3093 = vld [vmem:[%s5 + $0x310] sm:$0xff]
        %v3094 = vld [vmem:[%s5 + $0x318] sm:$0xff]
        %v3095 = vld [vmem:[%s5 + $0x320] sm:$0xff]
        %v3096 = vld [vmem:[%s5 + $0x328] sm:$0xff]
        %v3097 = vld [vmem:[%s5 + $0x330] sm:$0xff]
        %v3098 = vld [vmem:[%s5 + $0x338] sm:$0xff]
        %v3099 = vld [vmem:[%s5 + $0x340] sm:$0xff]
        %v3100 = vld [vmem:[%s5 + $0x348] sm:$0xff]
        %v3101 = vld [vmem:[%s5 + $0x350] sm:$0xff]
        %v3102 = vld [vmem:[%s5 + $0x358] sm:$0xff]
        %v3103 = vld [vmem:[%s5 + $0x360] sm:$0xff]
        %v3104 = vld [vmem:[%s5 + $0x368] sm:$0xff]
        %v3105 = vld [vmem:[%s5 + $0x370] sm:$0xff]
        %v3106 = vld [vmem:[%s5 + $0x378] sm:$0xff]
        %v3107 = vld [vmem:[%s5 + $0x380] sm:$0xff]
        %v3108 = vld [vmem:[%s5 + $0x388] sm:$0xff]
        %v3109 = vld [vmem:[%s5 + $0x390] sm:$0xff]
        %v3110 = vld [vmem:[%s5 + $0x398] sm:$0xff]
        %v3111 = vld [vmem:[%s5 + $0x3a0] sm:$0xff]
        %v3112 = vld [vmem:[%s5 + $0x3a8] sm:$0xff]
        %v3113 = vld [vmem:[%s5 + $0x3b0] sm:$0xff]
        %v3114 = vld [vmem:[%s5 + $0x3b8] sm:$0xff]
        %v3115 = vld [vmem:[%s5 + $0x3c0] sm:$0xff]
        %v3116 = vld [vmem:[%s5 + $0x3c8] sm:$0xff]
        %v3117 = vld [vmem:[%s5 + $0x3d0] sm:$0xff]
        %v3118 = vld [vmem:[%s5 + $0x3d8] sm:$0xff]
        %v3119 = vld [vmem:[%s5 + $0x3e0] sm:$0xff]
        %v3120 = vld [vmem:[%s5 + $0x3e8] sm:$0xff]
        %v3121 = vld [vmem:[%s5 + $0x3f0] sm:$0xff]
        %v3122 = vld [vmem:[%s5 + $0x3f8] sm:$0xff]
        %v3123 = vld [vmem:[%s5 + $0x400] sm:$0xff]
        %v3124 = vld [vmem:[%s5 + $0x408] sm:$0xff]
        %v3125 = vld [vmem:[%s5 + $0x410] sm:$0xff]
        %v3126 = vld [vmem:[%s5 + $0x418] sm:$0xff]
        %v3127 = vld [vmem:[%s5 + $0x420] sm:$0xff]
        %v3128 = vld [vmem:[%s5 + $0x428] sm:$0xff]
        %v3129 = vld [vmem:[%s5 + $0x430] sm:$0xff]
        %v3130 = vld [vmem:[%s5 + $0x438] sm:$0xff]
        %v3131 = vld [vmem:[%s5 + $0x440] sm:$0xff]
        %v3132 = vld [vmem:[%s5 + $0x448] sm:$0xff]
        %v3133 = vld [vmem:[%s5 + $0x450] sm:$0xff]
        %v3134 = vld [vmem:[%s5 + $0x458] sm:$0xff]
        %v3135 = vld [vmem:[%s5 + $0x460] sm:$0xff]
        %v3136 = vld [vmem:[%s5 + $0x468] sm:$0xff]
        %v3137 = vld [vmem:[%s5 + $0x470] sm:$0xff]
        %v3138 = vld [vmem:[%s5 + $0x478] sm:$0xff]
        %v3139 = vld [vmem:[%s5 + $0x480] sm:$0xff]
        %v3140 = vld [vmem:[%s5 + $0x488] sm:$0xff]
        %v3141 = vld [vmem:[%s5 + $0x490] sm:$0xff]
        %v3142 = vld [vmem:[%s5 + $0x498] sm:$0xff]
        %v3143 = vld [vmem:[%s5 + $0x4a0] sm:$0xff]
        %v3144 = vld [vmem:[%s5 + $0x4a8] sm:$0xff]
        %v3145 = vld [vmem:[%s5 + $0x4b0] sm:$0xff]
        %v3146 = vld [vmem:[%s5 + $0x4b8] sm:$0xff]
        %v3147 = vld [vmem:[%s5 + $0x4c0] sm:$0xff]
        %v3148 = vld [vmem:[%s5 + $0x4c8] sm:$0xff]
        %v3149 = vld [vmem:[%s5 + $0x4d0] sm:$0xff]
        %v3150 = vld [vmem:[%s5 + $0x4d8] sm:$0xff]
        %v3151 = vld [vmem:[%s5 + $0x4e0] sm:$0xff]
        %v3152 = vld [vmem:[%s5 + $0x4e8] sm:$0xff]
        %v3153 = vld [vmem:[%s5 + $0x4f0] sm:$0xff]
        %v3154 = vld [vmem:[%s5 + $0x4f8] sm:$0xff]
        %v3155 = vld [vmem:[%s5 + $0x500] sm:$0xff]
        %v3156 = vld [vmem:[%s5 + $0x508] sm:$0xff]
        %v3157 = vld [vmem:[%s5 + $0x510] sm:$0xff]
        %v3158 = vld [vmem:[%s5 + $0x518] sm:$0xff]
        %v3159 = vld [vmem:[%s5 + $0x520] sm:$0xff]
        %v3160 = vld [vmem:[%s5 + $0x528] sm:$0xff]
        %v3161 = vld [vmem:[%s5 + $0x530] sm:$0xff]
        %v3162 = vld [vmem:[%s5 + $0x538] sm:$0xff]
        %v3163 = vld [vmem:[%s5 + $0x540] sm:$0xff]
        %v3164 = vld [vmem:[%s5 + $0x548] sm:$0xff]
        %v3165 = vld [vmem:[%s5 + $0x550] sm:$0xff]
        %v3166 = vld [vmem:[%s5 + $0x558] sm:$0xff]
        %v3167 = vld [vmem:[%s5 + $0x560] sm:$0xff]
        %v3168 = vld [vmem:[%s5 + $0x568] sm:$0xff]
        %v3169 = vld [vmem:[%s5 + $0x570] sm:$0xff]
        %v3170 = vld [vmem:[%s5 + $0x578] sm:$0xff]
        %v3171 = vld [vmem:[%s5 + $0x580] sm:$0xff]
        %v3172 = vld [vmem:[%s5 + $0x588] sm:$0xff]
        %v3173 = vld [vmem:[%s5 + $0x590] sm:$0xff]
        %v3174 = vld [vmem:[%s5 + $0x598] sm:$0xff]
        %v3175 = vld [vmem:[%s5 + $0x5a0] sm:$0xff]
        %v3176 = vld [vmem:[%s5 + $0x5a8] sm:$0xff]
        %v3177 = vld [vmem:[%s5 + $0x5b0] sm:$0xff]
        %v3178 = vld [vmem:[%s5 + $0x5b8] sm:$0xff]
        %v3179 = vld [vmem:[%s5 + $0x5c0] sm:$0xff]
        %v3180 = vld [vmem:[%s5 + $0x5c8] sm:$0xff]
        %v3181 = vld [vmem:[%s5 + $0x5d0] sm:$0xff]
        %v3182 = vld [vmem:[%s5 + $0x5d8] sm:$0xff]
        %v3183 = vld [vmem:[%s5 + $0x5e0] sm:$0xff]
        %v3184 = vld [vmem:[%s5 + $0x5e8] sm:$0xff]
        %v3185 = vld [vmem:[%s5 + $0x5f0] sm:$0xff]
        %v3186 = vld [vmem:[%s5 + $0x5f8] sm:$0xff]
        %v3187 = vld [vmem:[%s5 + $0x600] sm:$0xff]
        %v3188 = vld [vmem:[%s5 + $0x608] sm:$0xff]
        %v3189 = vld [vmem:[%s5 + $0x610] sm:$0xff]
        %v3190 = vld [vmem:[%s5 + $0x618] sm:$0xff]
        %v3191 = vld [vmem:[%s5 + $0x620] sm:$0xff]
        %v3192 = vld [vmem:[%s5 + $0x628] sm:$0xff]
        %v3193 = vld [vmem:[%s5 + $0x630] sm:$0xff]
        %v3194 = vld [vmem:[%s5 + $0x638] sm:$0xff]
        %v3195 = vld [vmem:[%s5 + $0x640] sm:$0xff]
        %v3196 = vld [vmem:[%s5 + $0x648] sm:$0xff]
        %v3197 = vld [vmem:[%s5 + $0x650] sm:$0xff]
        %v3198 = vld [vmem:[%s5 + $0x658] sm:$0xff]
        %v3199 = vld [vmem:[%s5 + $0x660] sm:$0xff]
        %v3200 = vld [vmem:[%s5 + $0x668] sm:$0xff]
        %v3201 = vld [vmem:[%s5 + $0x670] sm:$0xff]
        %v3202 = vld [vmem:[%s5 + $0x678] sm:$0xff]
        %v3203 = vld [vmem:[%s5 + $0x680] sm:$0xff]
        %v3204 = vld [vmem:[%s5 + $0x688] sm:$0xff]
        %v3205 = vld [vmem:[%s5 + $0x690] sm:$0xff]
        %v3206 = vld [vmem:[%s5 + $0x698] sm:$0xff]
        %v3207 = vld [vmem:[%s5 + $0x6a0] sm:$0xff]
        %v3208 = vld [vmem:[%s5 + $0x6a8] sm:$0xff]
        %v3209 = vld [vmem:[%s5 + $0x6b0] sm:$0xff]
        %v3210 = vld [vmem:[%s5 + $0x6b8] sm:$0xff]
        %v3211 = vld [vmem:[%s5 + $0x6c0] sm:$0xff]
        %v3212 = vld [vmem:[%s5 + $0x6c8] sm:$0xff]
        %v3213 = vld [vmem:[%s5 + $0x6d0] sm:$0xff]
        %v3214 = vld [vmem:[%s5 + $0x6d8] sm:$0xff]
        %v3215 = vld [vmem:[%s5 + $0x6e0] sm:$0xff]
        %v3216 = vld [vmem:[%s5 + $0x6e8] sm:$0xff]
        %v3217 = vld [vmem:[%s5 + $0x6f0] sm:$0xff]
        %v3218 = vld [vmem:[%s5 + $0x6f8] sm:$0xff]
        %v3219 = vld [vmem:[%s5 + $0x700] sm:$0xff]
        %v3220 = vld [vmem:[%s5 + $0x708] sm:$0xff]
        %v3221 = vld [vmem:[%s5 + $0x710] sm:$0xff]
        %v3222 = vld [vmem:[%s5 + $0x718] sm:$0xff]
        %v3223 = vld [vmem:[%s5 + $0x720] sm:$0xff]
        %v3224 = vld [vmem:[%s5 + $0x728] sm:$0xff]
        %v3225 = vld [vmem:[%s5 + $0x730] sm:$0xff]
        %v3226 = vld [vmem:[%s5 + $0x738] sm:$0xff]
        %v3227 = vld [vmem:[%s5 + $0x740] sm:$0xff]
        %v3228 = vld [vmem:[%s5 + $0x748] sm:$0xff]
        %v3229 = vld [vmem:[%s5 + $0x750] sm:$0xff]
        %v3230 = vld [vmem:[%s5 + $0x758] sm:$0xff]
        %v3231 = vld [vmem:[%s5 + $0x760] sm:$0xff]
        %v3232 = vld [vmem:[%s5 + $0x768] sm:$0xff]
        %v3233 = vld [vmem:[%s5 + $0x770] sm:$0xff]
        %v3234 = vld [vmem:[%s5 + $0x778] sm:$0xff]
        %v3235 = vld [vmem:[%s5 + $0x780] sm:$0xff]
        %v3236 = vld [vmem:[%s5 + $0x788] sm:$0xff]
        %v3237 = vld [vmem:[%s5 + $0x790] sm:$0xff]
        %v3238 = vld [vmem:[%s5 + $0x798] sm:$0xff]
        %v3239 = vld [vmem:[%s5 + $0x7a0] sm:$0xff]
        %v3240 = vld [vmem:[%s5 + $0x7a8] sm:$0xff]
        %v3241 = vld [vmem:[%s5 + $0x7b0] sm:$0xff]
        %v3242 = vld [vmem:[%s5 + $0x7b8] sm:$0xff]
        %v3243 = vld [vmem:[%s5 + $0x7c0] sm:$0xff]
        %v3244 = vld [vmem:[%s5 + $0x7c8] sm:$0xff]
        %v3245 = vld [vmem:[%s5 + $0x7d0] sm:$0xff]
        %v3246 = vld [vmem:[%s5 + $0x7d8] sm:$0xff]
        %v3247 = vld [vmem:[%s5 + $0x7e0] sm:$0xff]
        %v3248 = vld [vmem:[%s5 + $0x7e8] sm:$0xff]
        %v3249 = vld [vmem:[%s5 + $0x7f0] sm:$0xff]
        %v3250 = vld [vmem:[%s5 + $0x7f8] sm:$0xff]
        %v3251 = vld [vmem:[%s5 + $0x800] sm:$0xff]
        %v3252 = vld [vmem:[%s5 + $0x808] sm:$0xff]
        %v3253 = vld [vmem:[%s5 + $0x810] sm:$0xff]
        %v3254 = vld [vmem:[%s5 + $0x818] sm:$0xff]
        %v3255 = vld [vmem:[%s6] sm:$0x3]
        %v3257 = vlaneseq
        %v3258 = vshrl.u32 %v3257, 7
        %v3259 = vsub.s32 0, %v3258
        %v3260 = vrot.slane %v3255, %v3259
        %v3261 = vlaneseq
        %v3262 = vshrl.u32 %v3261, 7
        %v3263 = vsub.s32 1, %v3262
        %v3264 = vrot.slane %v3255, %v3263
        %v3527 = vunpack.c.l.b16 %v2995
        %v3528 = vunpack.c.h.b16 %v2995
        %v3529 = vunpack.c.l.b16 %v2996
        %v3530 = vunpack.c.h.b16 %v2996
        %v3531 = vunpack.c.l.b16 %v2997
        %v3532 = vunpack.c.h.b16 %v2997
        %v3533 = vunpack.c.l.b16 %v2998
        %v3534 = vunpack.c.h.b16 %v2998
        %v3535 = vunpack.c.l.b16 %v2999
        %v3536 = vunpack.c.h.b16 %v2999
        %v3537 = vunpack.c.l.b16 %v3000
        %v3538 = vunpack.c.h.b16 %v3000
        %v3539 = vunpack.c.l.b16 %v3001
        %v3540 = vunpack.c.h.b16 %v3001
        %v3541 = vunpack.c.l.b16 %v3002
        %v3542 = vunpack.c.h.b16 %v3002
        %v3543 = vunpack.c.l.b16 %v3003
        %v3544 = vunpack.c.h.b16 %v3003
        %v3545 = vunpack.c.l.b16 %v3004
        %v3546 = vunpack.c.h.b16 %v3004
        %v3547 = vunpack.c.l.b16 %v3005
        %v3548 = vunpack.c.h.b16 %v3005
        %v3549 = vunpack.c.l.b16 %v3006
        %v3550 = vunpack.c.h.b16 %v3006
        %v3551 = vunpack.c.l.b16 %v3007
        %v3552 = vunpack.c.h.b16 %v3007
        %v3553 = vunpack.c.l.b16 %v3008
        %v3554 = vunpack.c.h.b16 %v3008
        %v3555 = vunpack.c.l.b16 %v3009
        %v3556 = vunpack.c.h.b16 %v3009
        %v3557 = vunpack.c.l.b16 %v3010
        %v3558 = vunpack.c.h.b16 %v3010
        %v3559 = vunpack.c.l.b16 %v3011
        %v3560 = vunpack.c.h.b16 %v3011
        %v3561 = vunpack.c.l.b16 %v3012
        %v3562 = vunpack.c.h.b16 %v3012
        %v3563 = vunpack.c.l.b16 %v3013
        %v3564 = vunpack.c.h.b16 %v3013
        %v3565 = vunpack.c.l.b16 %v3014
        %v3566 = vunpack.c.h.b16 %v3014
        %v3567 = vunpack.c.l.b16 %v3015
        %v3568 = vunpack.c.h.b16 %v3015
        %v3569 = vunpack.c.l.b16 %v3016
        %v3570 = vunpack.c.h.b16 %v3016
        %v3571 = vunpack.c.l.b16 %v3017
        %v3572 = vunpack.c.h.b16 %v3017
        %v3573 = vunpack.c.l.b16 %v3018
        %v3574 = vunpack.c.h.b16 %v3018
        %v3575 = vunpack.c.l.b16 %v3019
        %v3576 = vunpack.c.h.b16 %v3019
        %v3577 = vunpack.c.l.b16 %v3020
        %v3578 = vunpack.c.h.b16 %v3020
        %v3579 = vunpack.c.l.b16 %v3021
        %v3580 = vunpack.c.h.b16 %v3021
        %v3581 = vunpack.c.l.b16 %v3022
        %v3582 = vunpack.c.h.b16 %v3022
        %v3583 = vunpack.c.l.b16 %v3023
        %v3584 = vunpack.c.h.b16 %v3023
        %v3585 = vunpack.c.l.b16 %v3024
        %v3586 = vunpack.c.h.b16 %v3024
        %v3587 = vunpack.c.l.b16 %v3025
        %v3588 = vunpack.c.h.b16 %v3025
        %v3589 = vunpack.c.l.b16 %v3026
        %v3590 = vunpack.c.h.b16 %v3026
        %v3591 = vunpack.c.l.b16 %v3027
        %v3592 = vunpack.c.h.b16 %v3027
        %v3593 = vunpack.c.l.b16 %v3028
        %v3594 = vunpack.c.h.b16 %v3028
        %v3595 = vunpack.c.l.b16 %v3029
        %v3596 = vunpack.c.h.b16 %v3029
        %v3597 = vunpack.c.l.b16 %v3030
        %v3598 = vunpack.c.h.b16 %v3030
        %v3599 = vunpack.c.l.b16 %v3031
        %v3600 = vunpack.c.h.b16 %v3031
        %v3601 = vunpack.c.l.b16 %v3032
        %v3602 = vunpack.c.h.b16 %v3032
        %v3603 = vunpack.c.l.b16 %v3033
        %v3604 = vunpack.c.h.b16 %v3033
        %v3605 = vunpack.c.l.b16 %v3034
        %v3606 = vunpack.c.h.b16 %v3034
        %v3607 = vunpack.c.l.b16 %v3035
        %v3608 = vunpack.c.h.b16 %v3035
        %v3609 = vunpack.c.l.b16 %v3036
        %v3610 = vunpack.c.h.b16 %v3036
        %v3611 = vunpack.c.l.b16 %v3037
        %v3612 = vunpack.c.h.b16 %v3037
        %v3613 = vunpack.c.l.b16 %v3038
        %v3614 = vunpack.c.h.b16 %v3038
        %v3615 = vunpack.c.l.b16 %v3039
        %v3616 = vunpack.c.h.b16 %v3039
        %v3617 = vunpack.c.l.b16 %v3040
        %v3618 = vunpack.c.h.b16 %v3040
        %v3619 = vunpack.c.l.b16 %v3041
        %v3620 = vunpack.c.h.b16 %v3041
        %v3621 = vunpack.c.l.b16 %v3042
        %v3622 = vunpack.c.h.b16 %v3042
        %v3623 = vunpack.c.l.b16 %v3043
        %v3624 = vunpack.c.h.b16 %v3043
        %v3625 = vunpack.c.l.b16 %v3044
        %v3626 = vunpack.c.h.b16 %v3044
        %v3627 = vunpack.c.l.b16 %v3045
        %v3628 = vunpack.c.h.b16 %v3045
        %v3629 = vunpack.c.l.b16 %v3046
        %v3630 = vunpack.c.h.b16 %v3046
        %v3631 = vunpack.c.l.b16 %v3047
        %v3632 = vunpack.c.h.b16 %v3047
        %v3633 = vunpack.c.l.b16 %v3048
        %v3634 = vunpack.c.h.b16 %v3048
        %v3635 = vunpack.c.l.b16 %v3049
        %v3636 = vunpack.c.h.b16 %v3049
        %v3637 = vunpack.c.l.b16 %v3050
        %v3638 = vunpack.c.h.b16 %v3050
        %v3639 = vunpack.c.l.b16 %v3051
        %v3640 = vunpack.c.h.b16 %v3051
        %v3641 = vunpack.c.l.b16 %v3052
        %v3642 = vunpack.c.h.b16 %v3052
        %v3643 = vunpack.c.l.b16 %v3053
        %v3644 = vunpack.c.h.b16 %v3053
        %v3645 = vunpack.c.l.b16 %v3054
        %v3646 = vunpack.c.h.b16 %v3054
        %v3647 = vunpack.c.l.b16 %v3055
        %v3648 = vunpack.c.h.b16 %v3055
        %v3649 = vunpack.c.l.b16 %v3056
        %v3650 = vunpack.c.h.b16 %v3056
        %v3651 = vunpack.c.l.b16 %v3057
        %v3652 = vunpack.c.h.b16 %v3057
        %v3653 = vunpack.c.l.b16 %v3058
        %v3654 = vunpack.c.h.b16 %v3058
        %v3655 = vunpack.c.l.b16 %v3059
        %v3656 = vunpack.c.h.b16 %v3059
        %v3657 = vunpack.c.l.b16 %v3060
        %v3658 = vunpack.c.h.b16 %v3060
        %v3659 = vunpack.c.l.b16 %v3061
        %v3660 = vunpack.c.h.b16 %v3061
        %v3661 = vunpack.c.l.b16 %v3062
        %v3662 = vunpack.c.h.b16 %v3062
        %v3663 = vunpack.c.l.b16 %v3063
        %v3664 = vunpack.c.h.b16 %v3063
        %v3665 = vunpack.c.l.b16 %v3064
        %v3666 = vunpack.c.h.b16 %v3064
        %v3667 = vunpack.c.l.b16 %v3065
        %v3668 = vunpack.c.h.b16 %v3065
        %v3669 = vunpack.c.l.b16 %v3066
        %v3670 = vunpack.c.h.b16 %v3066
        %v3671 = vunpack.c.l.b16 %v3067
        %v3672 = vunpack.c.h.b16 %v3067
        %v3673 = vunpack.c.l.b16 %v3068
        %v3674 = vunpack.c.h.b16 %v3068
        %v3675 = vunpack.c.l.b16 %v3069
        %v3676 = vunpack.c.h.b16 %v3069
        %v3677 = vunpack.c.l.b16 %v3070
        %v3678 = vunpack.c.h.b16 %v3070
        %v3679 = vunpack.c.l.b16 %v3071
        %v3680 = vunpack.c.h.b16 %v3071
        %v3681 = vunpack.c.l.b16 %v3072
        %v3682 = vunpack.c.h.b16 %v3072
        %v3683 = vunpack.c.l.b16 %v3073
        %v3684 = vunpack.c.h.b16 %v3073
        %v3685 = vunpack.c.l.b16 %v3074
        %v3686 = vunpack.c.h.b16 %v3074
        %v3687 = vunpack.c.l.b16 %v3075
        %v3688 = vunpack.c.h.b16 %v3075
        %v3689 = vunpack.c.l.b16 %v3076
        %v3690 = vunpack.c.h.b16 %v3076
        %v3691 = vunpack.c.l.b16 %v3077
        %v3692 = vunpack.c.h.b16 %v3077
        %v3693 = vunpack.c.l.b16 %v3078
        %v3694 = vunpack.c.h.b16 %v3078
        %v3695 = vunpack.c.l.b16 %v3079
        %v3696 = vunpack.c.h.b16 %v3079
        %v3697 = vunpack.c.l.b16 %v3080
        %v3698 = vunpack.c.h.b16 %v3080
        %v3699 = vunpack.c.l.b16 %v3081
        %v3700 = vunpack.c.h.b16 %v3081
        %v3701 = vunpack.c.l.b16 %v3082
        %v3702 = vunpack.c.h.b16 %v3082
        %v3703 = vunpack.c.l.b16 %v3083
        %v3704 = vunpack.c.h.b16 %v3083
        %v3705 = vunpack.c.l.b16 %v3084
        %v3706 = vunpack.c.h.b16 %v3084
        %v3707 = vunpack.c.l.b16 %v3085
        %v3708 = vunpack.c.h.b16 %v3085
        %v3709 = vunpack.c.l.b16 %v3086
        %v3710 = vunpack.c.h.b16 %v3086
        %v3711 = vunpack.c.l.b16 %v3087
        %v3712 = vunpack.c.h.b16 %v3087
        %v3713 = vunpack.c.l.b16 %v3088
        %v3714 = vunpack.c.h.b16 %v3088
        %v3715 = vunpack.c.l.b16 %v3089
        %v3716 = vunpack.c.h.b16 %v3089
        %v3717 = vunpack.c.l.b16 %v3090
        %v3718 = vunpack.c.h.b16 %v3090
        %v3719 = vunpack.c.l.b16 %v3091
        %v3720 = vunpack.c.h.b16 %v3091
        %v3721 = vunpack.c.l.b16 %v3092
        %v3722 = vunpack.c.h.b16 %v3092
        %v3723 = vunpack.c.l.b16 %v3093
        %v3724 = vunpack.c.h.b16 %v3093
        %v3725 = vunpack.c.l.b16 %v3094
        %v3726 = vunpack.c.h.b16 %v3094
        %v3727 = vunpack.c.l.b16 %v3095
        %v3728 = vunpack.c.h.b16 %v3095
        %v3729 = vunpack.c.l.b16 %v3096
        %v3730 = vunpack.c.h.b16 %v3096
        %v3731 = vunpack.c.l.b16 %v3097
        %v3732 = vunpack.c.h.b16 %v3097
        %v3733 = vunpack.c.l.b16 %v3098
        %v3734 = vunpack.c.h.b16 %v3098
        %v3735 = vunpack.c.l.b16 %v3099
        %v3736 = vunpack.c.h.b16 %v3099
        %v3737 = vunpack.c.l.b16 %v3100
        %v3738 = vunpack.c.h.b16 %v3100
        %v3739 = vunpack.c.l.b16 %v3101
        %v3740 = vunpack.c.h.b16 %v3101
        %v3741 = vunpack.c.l.b16 %v3102
        %v3742 = vunpack.c.h.b16 %v3102
        %v3743 = vunpack.c.l.b16 %v3103
        %v3744 = vunpack.c.h.b16 %v3103
        %v3745 = vunpack.c.l.b16 %v3104
        %v3746 = vunpack.c.h.b16 %v3104
        %v3747 = vunpack.c.l.b16 %v3105
        %v3748 = vunpack.c.h.b16 %v3105
        %v3749 = vunpack.c.l.b16 %v3106
        %v3750 = vunpack.c.h.b16 %v3106
        %v3751 = vunpack.c.l.b16 %v3107
        %v3752 = vunpack.c.h.b16 %v3107
        %v3753 = vunpack.c.l.b16 %v3108
        %v3754 = vunpack.c.h.b16 %v3108
        %v3755 = vunpack.c.l.b16 %v3109
        %v3756 = vunpack.c.h.b16 %v3109
        %v3757 = vunpack.c.l.b16 %v3110
        %v3758 = vunpack.c.h.b16 %v3110
        %v3759 = vunpack.c.l.b16 %v3111
        %v3760 = vunpack.c.h.b16 %v3111
        %v3761 = vunpack.c.l.b16 %v3112
        %v3762 = vunpack.c.h.b16 %v3112
        %v3763 = vunpack.c.l.b16 %v3113
        %v3764 = vunpack.c.h.b16 %v3113
        %v3765 = vunpack.c.l.b16 %v3114
        %v3766 = vunpack.c.h.b16 %v3114
        %v3767 = vunpack.c.l.b16 %v3115
        %v3768 = vunpack.c.h.b16 %v3115
        %v3769 = vunpack.c.l.b16 %v3116
        %v3770 = vunpack.c.h.b16 %v3116
        %v3771 = vunpack.c.l.b16 %v3117
        %v3772 = vunpack.c.h.b16 %v3117
        %v3773 = vunpack.c.l.b16 %v3118
        %v3774 = vunpack.c.h.b16 %v3118
        %v3775 = vunpack.c.l.b16 %v3119
        %v3776 = vunpack.c.h.b16 %v3119
        %v3777 = vunpack.c.l.b16 %v3120
        %v3778 = vunpack.c.h.b16 %v3120
        %v3779 = vunpack.c.l.b16 %v3121
        %v3780 = vunpack.c.h.b16 %v3121
        %v3781 = vunpack.c.l.b16 %v3122
        %v3782 = vunpack.c.h.b16 %v3122
        %v3783 = vunpack.c.l.b16 %v3123
        %v3784 = vunpack.c.h.b16 %v3123
        %v3785 = vunpack.c.l.b16 %v3124
        %v3786 = vunpack.c.h.b16 %v3124
        %v3787 = vunpack.c.l.b16 %v3125
        %v3788 = vunpack.c.h.b16 %v3125
        %v3789 = vunpack.c.l.b16 %v3126
        %v3790 = vunpack.c.h.b16 %v3126
        %v3791 = vunpack.c.l.b16 %v3127
        %v3792 = vunpack.c.h.b16 %v3127
        %v3793 = vunpack.c.l.b16 %v3128
        %v3794 = vunpack.c.h.b16 %v3128
        %v3795 = vunpack.c.l.b16 %v3129
        %v3796 = vunpack.c.h.b16 %v3129
        %v3797 = vunpack.c.l.b16 %v3130
        %v3798 = vunpack.c.h.b16 %v3130
        %v3799 = vunpack.c.l.b16 %v3131
        %v3800 = vunpack.c.h.b16 %v3131
        %v3801 = vunpack.c.l.b16 %v3132
        %v3802 = vunpack.c.h.b16 %v3132
        %v3803 = vunpack.c.l.b16 %v3133
        %v3804 = vunpack.c.h.b16 %v3133
        %v3805 = vunpack.c.l.b16 %v3134
        %v3806 = vunpack.c.h.b16 %v3134
        %v3807 = vunpack.c.l.b16 %v3135
        %v3808 = vunpack.c.h.b16 %v3135
        %v3809 = vunpack.c.l.b16 %v3136
        %v3810 = vunpack.c.h.b16 %v3136
        %v3811 = vunpack.c.l.b16 %v3137
        %v3812 = vunpack.c.h.b16 %v3137
        %v3813 = vunpack.c.l.b16 %v3138
        %v3814 = vunpack.c.h.b16 %v3138
        %v3815 = vunpack.c.l.b16 %v3139
        %v3816 = vunpack.c.h.b16 %v3139
        %v3817 = vunpack.c.l.b16 %v3140
        %v3818 = vunpack.c.h.b16 %v3140
        %v3819 = vunpack.c.l.b16 %v3141
        %v3820 = vunpack.c.h.b16 %v3141
        %v3821 = vunpack.c.l.b16 %v3142
        %v3822 = vunpack.c.h.b16 %v3142
        %v3823 = vunpack.c.l.b16 %v3143
        %v3824 = vunpack.c.h.b16 %v3143
        %v3825 = vunpack.c.l.b16 %v3144
        %v3826 = vunpack.c.h.b16 %v3144
        %v3827 = vunpack.c.l.b16 %v3145
        %v3828 = vunpack.c.h.b16 %v3145
        %v3829 = vunpack.c.l.b16 %v3146
        %v3830 = vunpack.c.h.b16 %v3146
        %v3831 = vunpack.c.l.b16 %v3147
        %v3832 = vunpack.c.h.b16 %v3147
        %v3833 = vunpack.c.l.b16 %v3148
        %v3834 = vunpack.c.h.b16 %v3148
        %v3835 = vunpack.c.l.b16 %v3149
        %v3836 = vunpack.c.h.b16 %v3149
        %v3837 = vunpack.c.l.b16 %v3150
        %v3838 = vunpack.c.h.b16 %v3150
        %v3839 = vunpack.c.l.b16 %v3151
        %v3840 = vunpack.c.h.b16 %v3151
        %v3841 = vunpack.c.l.b16 %v3152
        %v3842 = vunpack.c.h.b16 %v3152
        %v3843 = vunpack.c.l.b16 %v3153
        %v3844 = vunpack.c.h.b16 %v3153
        %v3845 = vunpack.c.l.b16 %v3154
        %v3846 = vunpack.c.h.b16 %v3154
        %v3847 = vunpack.c.l.b16 %v3155
        %v3848 = vunpack.c.h.b16 %v3155
        %v3849 = vunpack.c.l.b16 %v3156
        %v3850 = vunpack.c.h.b16 %v3156
        %v3851 = vunpack.c.l.b16 %v3157
        %v3852 = vunpack.c.h.b16 %v3157
        %v3853 = vunpack.c.l.b16 %v3158
        %v3854 = vunpack.c.h.b16 %v3158
        %v3855 = vunpack.c.l.b16 %v3159
        %v3856 = vunpack.c.h.b16 %v3159
        %v3857 = vunpack.c.l.b16 %v3160
        %v3858 = vunpack.c.h.b16 %v3160
        %v3859 = vunpack.c.l.b16 %v3161
        %v3860 = vunpack.c.h.b16 %v3161
        %v3861 = vunpack.c.l.b16 %v3162
        %v3862 = vunpack.c.h.b16 %v3162
        %v3863 = vunpack.c.l.b16 %v3163
        %v3864 = vunpack.c.h.b16 %v3163
        %v3865 = vunpack.c.l.b16 %v3164
        %v3866 = vunpack.c.h.b16 %v3164
        %v3867 = vunpack.c.l.b16 %v3165
        %v3868 = vunpack.c.h.b16 %v3165
        %v3869 = vunpack.c.l.b16 %v3166
        %v3870 = vunpack.c.h.b16 %v3166
        %v3871 = vunpack.c.l.b16 %v3167
        %v3872 = vunpack.c.h.b16 %v3167
        %v3873 = vunpack.c.l.b16 %v3168
        %v3874 = vunpack.c.h.b16 %v3168
        %v3875 = vunpack.c.l.b16 %v3169
        %v3876 = vunpack.c.h.b16 %v3169
        %v3877 = vunpack.c.l.b16 %v3170
        %v3878 = vunpack.c.h.b16 %v3170
        %v3879 = vunpack.c.l.b16 %v3171
        %v3880 = vunpack.c.h.b16 %v3171
        %v3881 = vunpack.c.l.b16 %v3172
        %v3882 = vunpack.c.h.b16 %v3172
        %v3883 = vunpack.c.l.b16 %v3173
        %v3884 = vunpack.c.h.b16 %v3173
        %v3885 = vunpack.c.l.b16 %v3174
        %v3886 = vunpack.c.h.b16 %v3174
        %v3887 = vunpack.c.l.b16 %v3175
        %v3888 = vunpack.c.h.b16 %v3175
        %v3889 = vunpack.c.l.b16 %v3176
        %v3890 = vunpack.c.h.b16 %v3176
        %v3891 = vunpack.c.l.b16 %v3177
        %v3892 = vunpack.c.h.b16 %v3177
        %v3893 = vunpack.c.l.b16 %v3178
        %v3894 = vunpack.c.h.b16 %v3178
        %v3895 = vunpack.c.l.b16 %v3179
        %v3896 = vunpack.c.h.b16 %v3179
        %v3897 = vunpack.c.l.b16 %v3180
        %v3898 = vunpack.c.h.b16 %v3180
        %v3899 = vunpack.c.l.b16 %v3181
        %v3900 = vunpack.c.h.b16 %v3181
        %v3901 = vunpack.c.l.b16 %v3182
        %v3902 = vunpack.c.h.b16 %v3182
        %v3903 = vunpack.c.l.b16 %v3183
        %v3904 = vunpack.c.h.b16 %v3183
        %v3905 = vunpack.c.l.b16 %v3184
        %v3906 = vunpack.c.h.b16 %v3184
        %v3907 = vunpack.c.l.b16 %v3185
        %v3908 = vunpack.c.h.b16 %v3185
        %v3909 = vunpack.c.l.b16 %v3186
        %v3910 = vunpack.c.h.b16 %v3186
        %v3911 = vunpack.c.l.b16 %v3187
        %v3912 = vunpack.c.h.b16 %v3187
        %v3913 = vunpack.c.l.b16 %v3188
        %v3914 = vunpack.c.h.b16 %v3188
        %v3915 = vunpack.c.l.b16 %v3189
        %v3916 = vunpack.c.h.b16 %v3189
        %v3917 = vunpack.c.l.b16 %v3190
        %v3918 = vunpack.c.h.b16 %v3190
        %v3919 = vunpack.c.l.b16 %v3191
        %v3920 = vunpack.c.h.b16 %v3191
        %v3921 = vunpack.c.l.b16 %v3192
        %v3922 = vunpack.c.h.b16 %v3192
        %v3923 = vunpack.c.l.b16 %v3193
        %v3924 = vunpack.c.h.b16 %v3193
        %v3925 = vunpack.c.l.b16 %v3194
        %v3926 = vunpack.c.h.b16 %v3194
        %v3927 = vunpack.c.l.b16 %v3195
        %v3928 = vunpack.c.h.b16 %v3195
        %v3929 = vunpack.c.l.b16 %v3196
        %v3930 = vunpack.c.h.b16 %v3196
        %v3931 = vunpack.c.l.b16 %v3197
        %v3932 = vunpack.c.h.b16 %v3197
        %v3933 = vunpack.c.l.b16 %v3198
        %v3934 = vunpack.c.h.b16 %v3198
        %v3935 = vunpack.c.l.b16 %v3199
        %v3936 = vunpack.c.h.b16 %v3199
        %v3937 = vunpack.c.l.b16 %v3200
        %v3938 = vunpack.c.h.b16 %v3200
        %v3939 = vunpack.c.l.b16 %v3201
        %v3940 = vunpack.c.h.b16 %v3201
        %v3941 = vunpack.c.l.b16 %v3202
        %v3942 = vunpack.c.h.b16 %v3202
        %v3943 = vunpack.c.l.b16 %v3203
        %v3944 = vunpack.c.h.b16 %v3203
        %v3945 = vunpack.c.l.b16 %v3204
        %v3946 = vunpack.c.h.b16 %v3204
        %v3947 = vunpack.c.l.b16 %v3205
        %v3948 = vunpack.c.h.b16 %v3205
        %v3949 = vunpack.c.l.b16 %v3206
        %v3950 = vunpack.c.h.b16 %v3206
        %v3951 = vunpack.c.l.b16 %v3207
        %v3952 = vunpack.c.h.b16 %v3207
        %v3953 = vunpack.c.l.b16 %v3208
        %v3954 = vunpack.c.h.b16 %v3208
        %v3955 = vunpack.c.l.b16 %v3209
        %v3956 = vunpack.c.h.b16 %v3209
        %v3957 = vunpack.c.l.b16 %v3210
        %v3958 = vunpack.c.h.b16 %v3210
        %v3959 = vunpack.c.l.b16 %v3211
        %v3960 = vunpack.c.h.b16 %v3211
        %v3961 = vunpack.c.l.b16 %v3212
        %v3962 = vunpack.c.h.b16 %v3212
        %v3963 = vunpack.c.l.b16 %v3213
        %v3964 = vunpack.c.h.b16 %v3213
        %v3965 = vunpack.c.l.b16 %v3214
        %v3966 = vunpack.c.h.b16 %v3214
        %v3967 = vunpack.c.l.b16 %v3215
        %v3968 = vunpack.c.h.b16 %v3215
        %v3969 = vunpack.c.l.b16 %v3216
        %v3970 = vunpack.c.h.b16 %v3216
        %v3971 = vunpack.c.l.b16 %v3217
        %v3972 = vunpack.c.h.b16 %v3217
        %v3973 = vunpack.c.l.b16 %v3218
        %v3974 = vunpack.c.h.b16 %v3218
        %v3975 = vunpack.c.l.b16 %v3219
        %v3976 = vunpack.c.h.b16 %v3219
        %v3977 = vunpack.c.l.b16 %v3220
        %v3978 = vunpack.c.h.b16 %v3220
        %v3979 = vunpack.c.l.b16 %v3221
        %v3980 = vunpack.c.h.b16 %v3221
        %v3981 = vunpack.c.l.b16 %v3222
        %v3982 = vunpack.c.h.b16 %v3222
        %v3983 = vunpack.c.l.b16 %v3223
        %v3984 = vunpack.c.h.b16 %v3223
        %v3985 = vunpack.c.l.b16 %v3224
        %v3986 = vunpack.c.h.b16 %v3224
        %v3987 = vunpack.c.l.b16 %v3225
        %v3988 = vunpack.c.h.b16 %v3225
        %v3989 = vunpack.c.l.b16 %v3226
        %v3990 = vunpack.c.h.b16 %v3226
        %v3991 = vunpack.c.l.b16 %v3227
        %v3992 = vunpack.c.h.b16 %v3227
        %v3993 = vunpack.c.l.b16 %v3228
        %v3994 = vunpack.c.h.b16 %v3228
        %v3995 = vunpack.c.l.b16 %v3229
        %v3996 = vunpack.c.h.b16 %v3229
        %v3997 = vunpack.c.l.b16 %v3230
        %v3998 = vunpack.c.h.b16 %v3230
        %v3999 = vunpack.c.l.b16 %v3231
        %v4000 = vunpack.c.h.b16 %v3231
        %v4001 = vunpack.c.l.b16 %v3232
        %v4002 = vunpack.c.h.b16 %v3232
        %v4003 = vunpack.c.l.b16 %v3233
        %v4004 = vunpack.c.h.b16 %v3233
        %v4005 = vunpack.c.l.b16 %v3234
        %v4006 = vunpack.c.h.b16 %v3234
        %v4007 = vunpack.c.l.b16 %v3235
        %v4008 = vunpack.c.h.b16 %v3235
        %v4009 = vunpack.c.l.b16 %v3236
        %v4010 = vunpack.c.h.b16 %v3236
        %v4011 = vunpack.c.l.b16 %v3237
        %v4012 = vunpack.c.h.b16 %v3237
        %v4013 = vunpack.c.l.b16 %v3238
        %v4014 = vunpack.c.h.b16 %v3238
        %v4015 = vunpack.c.l.b16 %v3239
        %v4016 = vunpack.c.h.b16 %v3239
        %v4017 = vunpack.c.l.b16 %v3240
        %v4018 = vunpack.c.h.b16 %v3240
        %v4019 = vunpack.c.l.b16 %v3241
        %v4020 = vunpack.c.h.b16 %v3241
        %v4021 = vunpack.c.l.b16 %v3242
        %v4022 = vunpack.c.h.b16 %v3242
        %v4023 = vunpack.c.l.b16 %v3243
        %v4024 = vunpack.c.h.b16 %v3243
        %v4025 = vunpack.c.l.b16 %v3244
        %v4026 = vunpack.c.h.b16 %v3244
        %v4027 = vunpack.c.l.b16 %v3245
        %v4028 = vunpack.c.h.b16 %v3245
        %v4029 = vunpack.c.l.b16 %v3246
        %v4030 = vunpack.c.h.b16 %v3246
        %v4031 = vunpack.c.l.b16 %v3247
        %v4032 = vunpack.c.h.b16 %v3247
        %v4033 = vunpack.c.l.b16 %v3248
        %v4034 = vunpack.c.h.b16 %v3248
        %v4035 = vunpack.c.l.b16 %v3249
        %v4036 = vunpack.c.h.b16 %v3249
        %v4037 = vunpack.c.l.b16 %v3250
        %v4038 = vunpack.c.h.b16 %v3250
        %v4039 = vunpack.c.l.b16 %v3251
        %v4040 = vunpack.c.h.b16 %v3251
        %v4041 = vunpack.c.l.b16 %v3252
        %v4042 = vunpack.c.h.b16 %v3252
        %v4043 = vunpack.c.l.b16 %v3253
        %v4044 = vunpack.c.h.b16 %v3253
        %v4045 = vunpack.c.l.b16 %v3254
        %v4046 = vunpack.c.h.b16 %v3254
        %v4047 = vpack.c.b16 %v3529, %v3527
        %v4048 = vpack.c.b16 %v3530, %v3528
        %v4049 = vpack.c.b16 %v3533, %v3531
        %v4050 = vpack.c.b16 %v3534, %v3532
        %v4051 = vpack.c.b16 %v3537, %v3535
        %v4052 = vpack.c.b16 %v3538, %v3536
        %v4053 = vpack.c.b16 %v3541, %v3539
        %v4054 = vpack.c.b16 %v3542, %v3540
        %v4055 = vpack.c.b16 %v3545, %v3543
        %v4056 = vpack.c.b16 %v3546, %v3544
        %v4057 = vpack.c.b16 %v3549, %v3547
        %v4058 = vpack.c.b16 %v3550, %v3548
        %v4059 = vpack.c.b16 %v3553, %v3551
        %v4060 = vpack.c.b16 %v3554, %v3552
        %v4061 = vpack.c.b16 %v3557, %v3555
        %v4062 = vpack.c.b16 %v3558, %v3556
        %v4063 = vpack.c.b16 %v3561, %v3559
        %v4064 = vpack.c.b16 %v3562, %v3560
        %v4065 = vpack.c.b16 %v3565, %v3563
        %v4066 = vpack.c.b16 %v3566, %v3564
        %v4067 = vpack.c.b16 %v3569, %v3567
        %v4068 = vpack.c.b16 %v3570, %v3568
        %v4069 = vpack.c.b16 %v3573, %v3571
        %v4070 = vpack.c.b16 %v3574, %v3572
        %v4071 = vpack.c.b16 %v3577, %v3575
        %v4072 = vpack.c.b16 %v3578, %v3576
        %v4073 = vpack.c.b16 %v3581, %v3579
        %v4074 = vpack.c.b16 %v3582, %v3580
        %v4075 = vpack.c.b16 %v3585, %v3583
        %v4076 = vpack.c.b16 %v3586, %v3584
        %v4077 = vpack.c.b16 %v3589, %v3587
        %v4078 = vpack.c.b16 %v3590, %v3588
        %v4079 = vpack.c.b16 %v3593, %v3591
        %v4080 = vpack.c.b16 %v3594, %v3592
        %v4081 = vpack.c.b16 %v3597, %v3595
        %v4082 = vpack.c.b16 %v3598, %v3596
        %v4083 = vpack.c.b16 %v3601, %v3599
        %v4084 = vpack.c.b16 %v3602, %v3600
        %v4085 = vpack.c.b16 %v3605, %v3603
        %v4086 = vpack.c.b16 %v3606, %v3604
        %v4087 = vpack.c.b16 %v3609, %v3607
        %v4088 = vpack.c.b16 %v3610, %v3608
        %v4089 = vpack.c.b16 %v3613, %v3611
        %v4090 = vpack.c.b16 %v3614, %v3612
        %v4091 = vpack.c.b16 %v3617, %v3615
        %v4092 = vpack.c.b16 %v3618, %v3616
        %v4093 = vpack.c.b16 %v3621, %v3619
        %v4094 = vpack.c.b16 %v3622, %v3620
        %v4095 = vpack.c.b16 %v3625, %v3623
        %v4096 = vpack.c.b16 %v3626, %v3624
        %v4097 = vpack.c.b16 %v3629, %v3627
        %v4098 = vpack.c.b16 %v3630, %v3628
        %v4099 = vpack.c.b16 %v3633, %v3631
        %v4100 = vpack.c.b16 %v3634, %v3632
        %v4101 = vpack.c.b16 %v3637, %v3635
        %v4102 = vpack.c.b16 %v3638, %v3636
        %v4103 = vpack.c.b16 %v3641, %v3639
        %v4104 = vpack.c.b16 %v3642, %v3640
        %v4105 = vpack.c.b16 %v3645, %v3643
        %v4106 = vpack.c.b16 %v3646, %v3644
        %v4107 = vpack.c.b16 %v3649, %v3647
        %v4108 = vpack.c.b16 %v3650, %v3648
        %v4109 = vpack.c.b16 %v3653, %v3651
        %v4110 = vpack.c.b16 %v3654, %v3652
        %v4111 = vpack.c.b16 %v3657, %v3655
        %v4112 = vpack.c.b16 %v3658, %v3656
        %v4113 = vpack.c.b16 %v3661, %v3659
        %v4114 = vpack.c.b16 %v3662, %v3660
        %v4115 = vpack.c.b16 %v3665, %v3663
        %v4116 = vpack.c.b16 %v3666, %v3664
        %v4117 = vpack.c.b16 %v3669, %v3667
        %v4118 = vpack.c.b16 %v3670, %v3668
        %v4119 = vpack.c.b16 %v3673, %v3671
        %v4120 = vpack.c.b16 %v3674, %v3672
        %v4121 = vpack.c.b16 %v3677, %v3675
        %v4122 = vpack.c.b16 %v3678, %v3676
        %v4123 = vpack.c.b16 %v3681, %v3679
        %v4124 = vpack.c.b16 %v3682, %v3680
        %v4125 = vpack.c.b16 %v3685, %v3683
        %v4126 = vpack.c.b16 %v3686, %v3684
        %v4127 = vpack.c.b16 %v3689, %v3687
        %v4128 = vpack.c.b16 %v3690, %v3688
        %v4129 = vpack.c.b16 %v3693, %v3691
        %v4130 = vpack.c.b16 %v3694, %v3692
        %v4131 = vpack.c.b16 %v3697, %v3695
        %v4132 = vpack.c.b16 %v3698, %v3696
        %v4133 = vpack.c.b16 %v3701, %v3699
        %v4134 = vpack.c.b16 %v3702, %v3700
        %v4135 = vpack.c.b16 %v3705, %v3703
        %v4136 = vpack.c.b16 %v3706, %v3704
        %v4137 = vpack.c.b16 %v3709, %v3707
        %v4138 = vpack.c.b16 %v3710, %v3708
        %v4139 = vpack.c.b16 %v3713, %v3711
        %v4140 = vpack.c.b16 %v3714, %v3712
        %v4141 = vpack.c.b16 %v3717, %v3715
        %v4142 = vpack.c.b16 %v3718, %v3716
        %v4143 = vpack.c.b16 %v3721, %v3719
        %v4144 = vpack.c.b16 %v3722, %v3720
        %v4145 = vpack.c.b16 %v3725, %v3723
        %v4146 = vpack.c.b16 %v3726, %v3724
        %v4147 = vpack.c.b16 %v3729, %v3727
        %v4148 = vpack.c.b16 %v3730, %v3728
        %v4149 = vpack.c.b16 %v3733, %v3731
        %v4150 = vpack.c.b16 %v3734, %v3732
        %v4151 = vpack.c.b16 %v3737, %v3735
        %v4152 = vpack.c.b16 %v3738, %v3736
        %v4153 = vpack.c.b16 %v3741, %v3739
        %v4154 = vpack.c.b16 %v3742, %v3740
        %v4155 = vpack.c.b16 %v3745, %v3743
        %v4156 = vpack.c.b16 %v3746, %v3744
        %v4157 = vpack.c.b16 %v3749, %v3747
        %v4158 = vpack.c.b16 %v3750, %v3748
        %v4159 = vpack.c.b16 %v3753, %v3751
        %v4160 = vpack.c.b16 %v3754, %v3752
        %v4161 = vpack.c.b16 %v3757, %v3755
        %v4162 = vpack.c.b16 %v3758, %v3756
        %v4163 = vpack.c.b16 %v3761, %v3759
        %v4164 = vpack.c.b16 %v3762, %v3760
        %v4165 = vpack.c.b16 %v3765, %v3763
        %v4166 = vpack.c.b16 %v3766, %v3764
        %v4167 = vpack.c.b16 %v3769, %v3767
        %v4168 = vpack.c.b16 %v3770, %v3768
        %v4169 = vpack.c.b16 %v3773, %v3771
        %v4170 = vpack.c.b16 %v3774, %v3772
        %v4171 = vpack.c.b16 %v3777, %v3775
        %v4172 = vpack.c.b16 %v3778, %v3776
        %v4173 = vpack.c.b16 %v3781, %v3779
        %v4174 = vpack.c.b16 %v3782, %v3780
        %v4175 = vpack.c.b16 %v3785, %v3783
        %v4176 = vpack.c.b16 %v3786, %v3784
        %v4177 = vpack.c.b16 %v3789, %v3787
        %v4178 = vpack.c.b16 %v3790, %v3788
        %v4179 = vpack.c.b16 %v3793, %v3791
        %v4180 = vpack.c.b16 %v3794, %v3792
        %v4181 = vpack.c.b16 %v3797, %v3795
        %v4182 = vpack.c.b16 %v3798, %v3796
        %v4183 = vpack.c.b16 %v3801, %v3799
        %v4184 = vpack.c.b16 %v3802, %v3800
        %v4185 = vpack.c.b16 %v3805, %v3803
        %v4186 = vpack.c.b16 %v3806, %v3804
        %v4187 = vpack.c.b16 %v3809, %v3807
        %v4188 = vpack.c.b16 %v3810, %v3808
        %v4189 = vpack.c.b16 %v3813, %v3811
        %v4190 = vpack.c.b16 %v3814, %v3812
        %v4191 = vpack.c.b16 %v3817, %v3815
        %v4192 = vpack.c.b16 %v3818, %v3816
        %v4193 = vpack.c.b16 %v3821, %v3819
        %v4194 = vpack.c.b16 %v3822, %v3820
        %v4195 = vpack.c.b16 %v3825, %v3823
        %v4196 = vpack.c.b16 %v3826, %v3824
        %v4197 = vpack.c.b16 %v3829, %v3827
        %v4198 = vpack.c.b16 %v3830, %v3828
        %v4199 = vpack.c.b16 %v3833, %v3831
        %v4200 = vpack.c.b16 %v3834, %v3832
        %v4201 = vpack.c.b16 %v3837, %v3835
        %v4202 = vpack.c.b16 %v3838, %v3836
        %v4203 = vpack.c.b16 %v3841, %v3839
        %v4204 = vpack.c.b16 %v3842, %v3840
        %v4205 = vpack.c.b16 %v3845, %v3843
        %v4206 = vpack.c.b16 %v3846, %v3844
        %v4207 = vpack.c.b16 %v3849, %v3847
        %v4208 = vpack.c.b16 %v3850, %v3848
        %v4209 = vpack.c.b16 %v3853, %v3851
        %v4210 = vpack.c.b16 %v3854, %v3852
        %v4211 = vpack.c.b16 %v3857, %v3855
        %v4212 = vpack.c.b16 %v3858, %v3856
        %v4213 = vpack.c.b16 %v3861, %v3859
        %v4214 = vpack.c.b16 %v3862, %v3860
        %v4215 = vpack.c.b16 %v3865, %v3863
        %v4216 = vpack.c.b16 %v3866, %v3864
        %v4217 = vpack.c.b16 %v3869, %v3867
        %v4218 = vpack.c.b16 %v3870, %v3868
        %v4219 = vpack.c.b16 %v3873, %v3871
        %v4220 = vpack.c.b16 %v3874, %v3872
        %v4221 = vpack.c.b16 %v3877, %v3875
        %v4222 = vpack.c.b16 %v3878, %v3876
        %v4223 = vpack.c.b16 %v3881, %v3879
        %v4224 = vpack.c.b16 %v3882, %v3880
        %v4225 = vpack.c.b16 %v3885, %v3883
        %v4226 = vpack.c.b16 %v3886, %v3884
        %v4227 = vpack.c.b16 %v3889, %v3887
        %v4228 = vpack.c.b16 %v3890, %v3888
        %v4229 = vpack.c.b16 %v3893, %v3891
        %v4230 = vpack.c.b16 %v3894, %v3892
        %v4231 = vpack.c.b16 %v3897, %v3895
        %v4232 = vpack.c.b16 %v3898, %v3896
        %v4233 = vpack.c.b16 %v3901, %v3899
        %v4234 = vpack.c.b16 %v3902, %v3900
        %v4235 = vpack.c.b16 %v3905, %v3903
        %v4236 = vpack.c.b16 %v3906, %v3904
        %v4237 = vpack.c.b16 %v3909, %v3907
        %v4238 = vpack.c.b16 %v3910, %v3908
        %v4239 = vpack.c.b16 %v3913, %v3911
        %v4240 = vpack.c.b16 %v3914, %v3912
        %v4241 = vpack.c.b16 %v3917, %v3915
        %v4242 = vpack.c.b16 %v3918, %v3916
        %v4243 = vpack.c.b16 %v3921, %v3919
        %v4244 = vpack.c.b16 %v3922, %v3920
        %v4245 = vpack.c.b16 %v3925, %v3923
        %v4246 = vpack.c.b16 %v3926, %v3924
        %v4247 = vpack.c.b16 %v3929, %v3927
        %v4248 = vpack.c.b16 %v3930, %v3928
        %v4249 = vpack.c.b16 %v3933, %v3931
        %v4250 = vpack.c.b16 %v3934, %v3932
        %v4251 = vpack.c.b16 %v3937, %v3935
        %v4252 = vpack.c.b16 %v3938, %v3936
        %v4253 = vpack.c.b16 %v3941, %v3939
        %v4254 = vpack.c.b16 %v3942, %v3940
        %v4255 = vpack.c.b16 %v3945, %v3943
        %v4256 = vpack.c.b16 %v3946, %v3944
        %v4257 = vpack.c.b16 %v3949, %v3947
        %v4258 = vpack.c.b16 %v3950, %v3948
        %v4259 = vpack.c.b16 %v3953, %v3951
        %v4260 = vpack.c.b16 %v3954, %v3952
        %v4261 = vpack.c.b16 %v3957, %v3955
        %v4262 = vpack.c.b16 %v3958, %v3956
        %v4263 = vpack.c.b16 %v3961, %v3959
        %v4264 = vpack.c.b16 %v3962, %v3960
        %v4265 = vpack.c.b16 %v3965, %v3963
        %v4266 = vpack.c.b16 %v3966, %v3964
        %v4267 = vpack.c.b16 %v3969, %v3967
        %v4268 = vpack.c.b16 %v3970, %v3968
        %v4269 = vpack.c.b16 %v3973, %v3971
        %v4270 = vpack.c.b16 %v3974, %v3972
        %v4271 = vpack.c.b16 %v3977, %v3975
        %v4272 = vpack.c.b16 %v3978, %v3976
        %v4273 = vpack.c.b16 %v3981, %v3979
        %v4274 = vpack.c.b16 %v3982, %v3980
        %v4275 = vpack.c.b16 %v3985, %v3983
        %v4276 = vpack.c.b16 %v3986, %v3984
        %v4277 = vpack.c.b16 %v3989, %v3987
        %v4278 = vpack.c.b16 %v3990, %v3988
        %v4279 = vpack.c.b16 %v3993, %v3991
        %v4280 = vpack.c.b16 %v3994, %v3992
        %v4281 = vpack.c.b16 %v3997, %v3995
        %v4282 = vpack.c.b16 %v3998, %v3996
        %v4283 = vpack.c.b16 %v4001, %v3999
        %v4284 = vpack.c.b16 %v4002, %v4000
        %v4285 = vpack.c.b16 %v4005, %v4003
        %v4286 = vpack.c.b16 %v4006, %v4004
        %v4287 = vpack.c.b16 %v4009, %v4007
        %v4288 = vpack.c.b16 %v4010, %v4008
        %v4289 = vpack.c.b16 %v4013, %v4011
        %v4290 = vpack.c.b16 %v4014, %v4012
        %v4291 = vpack.c.b16 %v4017, %v4015
        %v4292 = vpack.c.b16 %v4018, %v4016
        %v4293 = vpack.c.b16 %v4021, %v4019
        %v4294 = vpack.c.b16 %v4022, %v4020
        %v4295 = vpack.c.b16 %v4025, %v4023
        %v4296 = vpack.c.b16 %v4026, %v4024
        %v4297 = vpack.c.b16 %v4029, %v4027
        %v4298 = vpack.c.b16 %v4030, %v4028
        %v4299 = vpack.c.b16 %v4033, %v4031
        %v4300 = vpack.c.b16 %v4034, %v4032
        %v4301 = vpack.c.b16 %v4037, %v4035
        %v4302 = vpack.c.b16 %v4038, %v4036
        %v4303 = vpack.c.b16 %v4041, %v4039
        %v4304 = vpack.c.b16 %v4042, %v4040
        %v4305 = vpack.c.b16 %v4045, %v4043
        %v4306 = vpack.c.b16 %v4046, %v4044
        %4567 = vmatprep.subr.bf16.mxu0 %v4062
        %4568 = vmatpush1.bf16.msra.mxu0 %v4061
        %4569 = vmatprep.subr.bf16.mxu0 %v4060
        %4570 = vmatpush1.bf16.msra.mxu0 %v4059
        %4571 = vmatprep.subr.bf16.mxu0 %v4058
        %4572 = vmatpush1.bf16.msra.mxu0 %v4057
        %4573 = vmatprep.subr.bf16.mxu0 %v4056
        %4574 = vmatpush1.bf16.msra.mxu0 %v4055
        %4575 = vmatprep.subr.bf16.mxu0 %v4054
        %4576 = vmatpush1.bf16.msra.mxu0 %v4053
        %4577 = vmatprep.subr.bf16.mxu0 %v4052
        %4578 = vmatpush1.bf16.msra.mxu0 %v4051
        %4579 = vmatprep.subr.bf16.mxu0 %v4050
        %4580 = vmatpush1.bf16.msra.mxu0 %v4049
        %4581 = vmatprep.subr.bf16.mxu0 %v4048
        %4582 = vmatpush1.bf16.msra.mxu0 %v4047
        %4583 = vmatprep.subr.bf16.mxu0 %v4078
        %4584 = vmatpush2.bf16.msra.mxu0 %v4077
        %4585 = vmatprep.subr.bf16.mxu0 %v4076
        %4586 = vmatpush2.bf16.msra.mxu0 %v4075
        %4587 = vmatprep.subr.bf16.mxu0 %v4074
        %4588 = vmatpush2.bf16.msra.mxu0 %v4073
        %4589 = vmatprep.subr.bf16.mxu0 %v4072
        %4590 = vmatpush2.bf16.msra.mxu0 %v4071
        %4591 = vmatprep.subr.bf16.mxu0 %v4070
        %4592 = vmatpush2.bf16.msra.mxu0 %v4069
        %4593 = vmatprep.subr.bf16.mxu0 %v4068
        %4594 = vmatpush2.bf16.msra.mxu0 %v4067
        %4595 = vmatprep.subr.bf16.mxu0 %v4066
        %4596 = vmatpush2.bf16.msra.mxu0 %v4065
        %4597 = vmatprep.subr.bf16.mxu0 %v4064
        %4598 = vmatpush2.bf16.msra.mxu0 %v4063
        %4599 = vmatprep.mubr.bf16.mxu0 %v654
        %4600 = vmatmul.mubr.bf16.gmra.mxu0 %v653
        %v4601 = vpop.f32.mrf.mxu0
        %v4602 = vadd.f32 %v3260, %v4601
        %v4603 = vpop.f32.mrf.mxu0
        %v4604 = vadd.f32 %v3264, %v4603
        %v4605 = vpop.f32.mrf.mxu0
        %v4606 = vadd.f32 %v3260, %v4605
        %v4607 = vpop.f32.mrf.mxu0
        %v4608 = vadd.f32 %v3264, %v4607
        %4609 = vmatprep.mubr.bf16.mxu0 %v671
        %4610 = vmatmul.mubr.bf16.gmra.mxu0 %v670
        %v4611 = vpop.f32.mrf.mxu0
        %v4612 = vadd.f32 %v3260, %v4611
        %v4613 = vpop.f32.mrf.mxu0
        %v4614 = vadd.f32 %v3264, %v4613
        %v4615 = vpop.f32.mrf.mxu0
        %v4616 = vadd.f32 %v3260, %v4615
        %v4617 = vpop.f32.mrf.mxu0
        %v4618 = vadd.f32 %v3264, %v4617
        %4619 = vmatprep.mubr.bf16.mxu0 %v688
        %4620 = vmatmul.mubr.bf16.gmra.mxu0 %v687
        %v4621 = vpop.f32.mrf.mxu0
        %v4622 = vadd.f32 %v3260, %v4621
        %v4623 = vpop.f32.mrf.mxu0
        %v4624 = vadd.f32 %v3264, %v4623
        %v4625 = vpop.f32.mrf.mxu0
        %v4626 = vadd.f32 %v3260, %v4625
        %v4627 = vpop.f32.mrf.mxu0
        %v4628 = vadd.f32 %v3264, %v4627
        %4629 = vmatprep.mubr.bf16.mxu0 %v705
        %4630 = vmatmul.mubr.bf16.gmra.mxu0 %v704
        %v4631 = vpop.f32.mrf.mxu0
        %v4632 = vadd.f32 %v3260, %v4631
        %v4633 = vpop.f32.mrf.mxu0
        %v4634 = vadd.f32 %v3264, %v4633
        %v4635 = vpop.f32.mrf.mxu0
        %v4636 = vadd.f32 %v3260, %v4635
        %v4637 = vpop.f32.mrf.mxu0
        %v4638 = vadd.f32 %v3264, %v4637
        %4639 = vdwg.mxu0
        %4640 = vmatprep.subr.bf16.mxu0 %v4094
        %4641 = vmatpush1.bf16.msra.mxu0 %v4093
        %4642 = vmatprep.subr.bf16.mxu0 %v4092
        %4643 = vmatpush1.bf16.msra.mxu0 %v4091
        %4644 = vmatprep.subr.bf16.mxu0 %v4090
        %4645 = vmatpush1.bf16.msra.mxu0 %v4089
        %4646 = vmatprep.subr.bf16.mxu0 %v4088
        %4647 = vmatpush1.bf16.msra.mxu0 %v4087
        %4648 = vmatprep.subr.bf16.mxu0 %v4086
        %4649 = vmatpush1.bf16.msra.mxu0 %v4085
        %4650 = vmatprep.subr.bf16.mxu0 %v4084
        %4651 = vmatpush1.bf16.msra.mxu0 %v4083
        %4652 = vmatprep.subr.bf16.mxu0 %v4082
        %4653 = vmatpush1.bf16.msra.mxu0 %v4081
        %4654 = vmatprep.subr.bf16.mxu0 %v4080
        %4655 = vmatpush1.bf16.msra.mxu0 %v4079
        %4656 = vmatprep.subr.bf16.mxu0 %v4110
        %4657 = vmatpush2.bf16.msra.mxu0 %v4109
        %4658 = vmatprep.subr.bf16.mxu0 %v4108
        %4659 = vmatpush2.bf16.msra.mxu0 %v4107
        %4660 = vmatprep.subr.bf16.mxu0 %v4106
        %4661 = vmatpush2.bf16.msra.mxu0 %v4105
        %4662 = vmatprep.subr.bf16.mxu0 %v4104
        %4663 = vmatpush2.bf16.msra.mxu0 %v4103
        %4664 = vmatprep.subr.bf16.mxu0 %v4102
        %4665 = vmatpush2.bf16.msra.mxu0 %v4101
        %4666 = vmatprep.subr.bf16.mxu0 %v4100
        %4667 = vmatpush2.bf16.msra.mxu0 %v4099
        %4668 = vmatprep.subr.bf16.mxu0 %v4098
        %4669 = vmatpush2.bf16.msra.mxu0 %v4097
        %4670 = vmatprep.subr.bf16.mxu0 %v4096
        %4671 = vmatpush2.bf16.msra.mxu0 %v4095
        %4672 = vmatprep.mubr.bf16.mxu0 %v656
        %4673 = vmatmul.mubr.bf16.gmra.mxu0 %v655
        %v4674 = vpop.f32.mrf.mxu0
        %v4675 = vadd.f32 %v4602, %v4674
        %v4676 = vpop.f32.mrf.mxu0
        %v4677 = vadd.f32 %v4604, %v4676
        %v4678 = vpop.f32.mrf.mxu0
        %v4679 = vadd.f32 %v4606, %v4678
        %v4680 = vpop.f32.mrf.mxu0
        %v4681 = vadd.f32 %v4608, %v4680
        %4682 = vmatprep.mubr.bf16.mxu0 %v673
        %4683 = vmatmul.mubr.bf16.gmra.mxu0 %v672
        %v4684 = vpop.f32.mrf.mxu0
        %v4685 = vadd.f32 %v4612, %v4684
        %v4686 = vpop.f32.mrf.mxu0
        %v4687 = vadd.f32 %v4614, %v4686
        %v4688 = vpop.f32.mrf.mxu0
        %v4689 = vadd.f32 %v4616, %v4688
        %v4690 = vpop.f32.mrf.mxu0
        %v4691 = vadd.f32 %v4618, %v4690
        %4692 = vmatprep.mubr.bf16.mxu0 %v690
        %4693 = vmatmul.mubr.bf16.gmra.mxu0 %v689
        %v4694 = vpop.f32.mrf.mxu0
        %v4695 = vadd.f32 %v4622, %v4694
        %v4696 = vpop.f32.mrf.mxu0
        %v4697 = vadd.f32 %v4624, %v4696
        %v4698 = vpop.f32.mrf.mxu0
        %v4699 = vadd.f32 %v4626, %v4698
        %v4700 = vpop.f32.mrf.mxu0
        %v4701 = vadd.f32 %v4628, %v4700
        %4702 = vmatprep.mubr.bf16.mxu0 %v707
        %4703 = vmatmul.mubr.bf16.gmra.mxu0 %v706
        %v4704 = vpop.f32.mrf.mxu0
        %v4705 = vadd.f32 %v4632, %v4704
        %v4706 = vpop.f32.mrf.mxu0
        %v4707 = vadd.f32 %v4634, %v4706
        %v4708 = vpop.f32.mrf.mxu0
        %v4709 = vadd.f32 %v4636, %v4708
        %v4710 = vpop.f32.mrf.mxu0
        %v4711 = vadd.f32 %v4638, %v4710
        %4712 = vdwg.mxu0
        %4713 = vmatprep.subr.bf16.mxu0 %v4126
        %4714 = vmatpush1.bf16.msra.mxu0 %v4125
        %4715 = vmatprep.subr.bf16.mxu0 %v4124
        %4716 = vmatpush1.bf16.msra.mxu0 %v4123
        %4717 = vmatprep.subr.bf16.mxu0 %v4122
        %4718 = vmatpush1.bf16.msra.mxu0 %v4121
        %4719 = vmatprep.subr.bf16.mxu0 %v4120
        %4720 = vmatpush1.bf16.msra.mxu0 %v4119
        %4721 = vmatprep.subr.bf16.mxu0 %v4118
        %4722 = vmatpush1.bf16.msra.mxu0 %v4117
        %4723 = vmatprep.subr.bf16.mxu0 %v4116
        %4724 = vmatpush1.bf16.msra.mxu0 %v4115
        %4725 = vmatprep.subr.bf16.mxu0 %v4114
        %4726 = vmatpush1.bf16.msra.mxu0 %v4113
        %4727 = vmatprep.subr.bf16.mxu0 %v4112
        %4728 = vmatpush1.bf16.msra.mxu0 %v4111
        %4729 = vmatprep.subr.bf16.mxu0 %v4142
        %4730 = vmatpush2.bf16.msra.mxu0 %v4141
        %4731 = vmatprep.subr.bf16.mxu0 %v4140
        %4732 = vmatpush2.bf16.msra.mxu0 %v4139
        %4733 = vmatprep.subr.bf16.mxu0 %v4138
        %4734 = vmatpush2.bf16.msra.mxu0 %v4137
        %4735 = vmatprep.subr.bf16.mxu0 %v4136
        %4736 = vmatpush2.bf16.msra.mxu0 %v4135
        %4737 = vmatprep.subr.bf16.mxu0 %v4134
        %4738 = vmatpush2.bf16.msra.mxu0 %v4133
        %4739 = vmatprep.subr.bf16.mxu0 %v4132
        %4740 = vmatpush2.bf16.msra.mxu0 %v4131
        %4741 = vmatprep.subr.bf16.mxu0 %v4130
        %4742 = vmatpush2.bf16.msra.mxu0 %v4129
        %4743 = vmatprep.subr.bf16.mxu0 %v4128
        %4744 = vmatpush2.bf16.msra.mxu0 %v4127
        %4745 = vmatprep.mubr.bf16.mxu0 %v658
        %4746 = vmatmul.mubr.bf16.gmra.mxu0 %v657
        %v4747 = vpop.f32.mrf.mxu0
        %v4748 = vadd.f32 %v4675, %v4747
        %v4749 = vpop.f32.mrf.mxu0
        %v4750 = vadd.f32 %v4677, %v4749
        %v4751 = vpop.f32.mrf.mxu0
        %v4752 = vadd.f32 %v4679, %v4751
        %v4753 = vpop.f32.mrf.mxu0
        %v4754 = vadd.f32 %v4681, %v4753
        %4755 = vmatprep.mubr.bf16.mxu0 %v675
        %4756 = vmatmul.mubr.bf16.gmra.mxu0 %v674
        %v4757 = vpop.f32.mrf.mxu0
        %v4758 = vadd.f32 %v4685, %v4757
        %v4759 = vpop.f32.mrf.mxu0
        %v4760 = vadd.f32 %v4687, %v4759
        %v4761 = vpop.f32.mrf.mxu0
        %v4762 = vadd.f32 %v4689, %v4761
        %v4763 = vpop.f32.mrf.mxu0
        %v4764 = vadd.f32 %v4691, %v4763
        %4765 = vmatprep.mubr.bf16.mxu0 %v692
        %4766 = vmatmul.mubr.bf16.gmra.mxu0 %v691
        %v4767 = vpop.f32.mrf.mxu0
        %v4768 = vadd.f32 %v4695, %v4767
        %v4769 = vpop.f32.mrf.mxu0
        %v4770 = vadd.f32 %v4697, %v4769
        %v4771 = vpop.f32.mrf.mxu0
        %v4772 = vadd.f32 %v4699, %v4771
        %v4773 = vpop.f32.mrf.mxu0
        %v4774 = vadd.f32 %v4701, %v4773
        %4775 = vmatprep.mubr.bf16.mxu0 %v709
        %4776 = vmatmul.mubr.bf16.gmra.mxu0 %v708
        %v4777 = vpop.f32.mrf.mxu0
        %v4778 = vadd.f32 %v4705, %v4777
        %v4779 = vpop.f32.mrf.mxu0
        %v4780 = vadd.f32 %v4707, %v4779
        %v4781 = vpop.f32.mrf.mxu0
        %v4782 = vadd.f32 %v4709, %v4781
        %v4783 = vpop.f32.mrf.mxu0
        %v4784 = vadd.f32 %v4711, %v4783
        %4785 = vdwg.mxu0
        %4786 = vmatprep.subr.bf16.mxu0 %v4158
        %4787 = vmatpush1.bf16.msra.mxu0 %v4157
        %4788 = vmatprep.subr.bf16.mxu0 %v4156
        %4789 = vmatpush1.bf16.msra.mxu0 %v4155
        %4790 = vmatprep.subr.bf16.mxu0 %v4154
        %4791 = vmatpush1.bf16.msra.mxu0 %v4153
        %4792 = vmatprep.subr.bf16.mxu0 %v4152
        %4793 = vmatpush1.bf16.msra.mxu0 %v4151
        %4794 = vmatprep.subr.bf16.mxu0 %v4150
        %4795 = vmatpush1.bf16.msra.mxu0 %v4149
        %4796 = vmatprep.subr.bf16.mxu0 %v4148
        %4797 = vmatpush1.bf16.msra.mxu0 %v4147
        %4798 = vmatprep.subr.bf16.mxu0 %v4146
        %4799 = vmatpush1.bf16.msra.mxu0 %v4145
        %4800 = vmatprep.subr.bf16.mxu0 %v4144
        %4801 = vmatpush1.bf16.msra.mxu0 %v4143
        %4802 = vmatprep.subr.bf16.mxu0 %v4174
        %4803 = vmatpush2.bf16.msra.mxu0 %v4173
        %4804 = vmatprep.subr.bf16.mxu0 %v4172
        %4805 = vmatpush2.bf16.msra.mxu0 %v4171
        %4806 = vmatprep.subr.bf16.mxu0 %v4170
        %4807 = vmatpush2.bf16.msra.mxu0 %v4169
        %4808 = vmatprep.subr.bf16.mxu0 %v4168
        %4809 = vmatpush2.bf16.msra.mxu0 %v4167
        %4810 = vmatprep.subr.bf16.mxu0 %v4166
        %4811 = vmatpush2.bf16.msra.mxu0 %v4165
        %4812 = vmatprep.subr.bf16.mxu0 %v4164
        %4813 = vmatpush2.bf16.msra.mxu0 %v4163
        %4814 = vmatprep.subr.bf16.mxu0 %v4162
        %4815 = vmatpush2.bf16.msra.mxu0 %v4161
        %4816 = vmatprep.subr.bf16.mxu0 %v4160
        %4817 = vmatpush2.bf16.msra.mxu0 %v4159
        %4818 = vmatprep.mubr.bf16.mxu0 %v660
        %4819 = vmatmul.mubr.bf16.gmra.mxu0 %v659
        %v4820 = vpop.f32.mrf.mxu0
        %v4821 = vadd.f32 %v4748, %v4820
        %v4822 = vpop.f32.mrf.mxu0
        %v4823 = vadd.f32 %v4750, %v4822
        %v4824 = vpop.f32.mrf.mxu0
        %v4825 = vadd.f32 %v4752, %v4824
        %v4826 = vpop.f32.mrf.mxu0
        %v4827 = vadd.f32 %v4754, %v4826
        %4828 = vmatprep.mubr.bf16.mxu0 %v677
        %4829 = vmatmul.mubr.bf16.gmra.mxu0 %v676
        %v4830 = vpop.f32.mrf.mxu0
        %v4831 = vadd.f32 %v4758, %v4830
        %v4832 = vpop.f32.mrf.mxu0
        %v4833 = vadd.f32 %v4760, %v4832
        %v4834 = vpop.f32.mrf.mxu0
        %v4835 = vadd.f32 %v4762, %v4834
        %v4836 = vpop.f32.mrf.mxu0
        %v4837 = vadd.f32 %v4764, %v4836
        %4838 = vmatprep.mubr.bf16.mxu0 %v694
        %4839 = vmatmul.mubr.bf16.gmra.mxu0 %v693
        %v4840 = vpop.f32.mrf.mxu0
        %v4841 = vadd.f32 %v4768, %v4840
        %v4842 = vpop.f32.mrf.mxu0
        %v4843 = vadd.f32 %v4770, %v4842
        %v4844 = vpop.f32.mrf.mxu0
        %v4845 = vadd.f32 %v4772, %v4844
        %v4846 = vpop.f32.mrf.mxu0
        %v4847 = vadd.f32 %v4774, %v4846
        %4848 = vmatprep.mubr.bf16.mxu0 %v711
        %4849 = vmatmul.mubr.bf16.gmra.mxu0 %v710
        %v4850 = vpop.f32.mrf.mxu0
        %v4851 = vadd.f32 %v4778, %v4850
        %v4852 = vpop.f32.mrf.mxu0
        %v4853 = vadd.f32 %v4780, %v4852
        %v4854 = vpop.f32.mrf.mxu0
        %v4855 = vadd.f32 %v4782, %v4854
        %v4856 = vpop.f32.mrf.mxu0
        %v4857 = vadd.f32 %v4784, %v4856
        %4858 = vdwg.mxu0
        %4859 = vmatprep.subr.bf16.mxu0 %v4190
        %4860 = vmatpush1.bf16.msra.mxu0 %v4189
        %4861 = vmatprep.subr.bf16.mxu0 %v4188
        %4862 = vmatpush1.bf16.msra.mxu0 %v4187
        %4863 = vmatprep.subr.bf16.mxu0 %v4186
        %4864 = vmatpush1.bf16.msra.mxu0 %v4185
        %4865 = vmatprep.subr.bf16.mxu0 %v4184
        %4866 = vmatpush1.bf16.msra.mxu0 %v4183
        %4867 = vmatprep.subr.bf16.mxu0 %v4182
        %4868 = vmatpush1.bf16.msra.mxu0 %v4181
        %4869 = vmatprep.subr.bf16.mxu0 %v4180
        %4870 = vmatpush1.bf16.msra.mxu0 %v4179
        %4871 = vmatprep.subr.bf16.mxu0 %v4178
        %4872 = vmatpush1.bf16.msra.mxu0 %v4177
        %4873 = vmatprep.subr.bf16.mxu0 %v4176
        %4874 = vmatpush1.bf16.msra.mxu0 %v4175
        %4875 = vmatprep.subr.bf16.mxu0 %v4206
        %4876 = vmatpush2.bf16.msra.mxu0 %v4205
        %4877 = vmatprep.subr.bf16.mxu0 %v4204
        %4878 = vmatpush2.bf16.msra.mxu0 %v4203
        %4879 = vmatprep.subr.bf16.mxu0 %v4202
        %4880 = vmatpush2.bf16.msra.mxu0 %v4201
        %4881 = vmatprep.subr.bf16.mxu0 %v4200
        %4882 = vmatpush2.bf16.msra.mxu0 %v4199
        %4883 = vmatprep.subr.bf16.mxu0 %v4198
        %4884 = vmatpush2.bf16.msra.mxu0 %v4197
        %4885 = vmatprep.subr.bf16.mxu0 %v4196
        %4886 = vmatpush2.bf16.msra.mxu0 %v4195
        %4887 = vmatprep.subr.bf16.mxu0 %v4194
        %4888 = vmatpush2.bf16.msra.mxu0 %v4193
        %4889 = vmatprep.subr.bf16.mxu0 %v4192
        %4890 = vmatpush2.bf16.msra.mxu0 %v4191
        %4891 = vmatprep.mubr.bf16.mxu0 %v662
        %4892 = vmatmul.mubr.bf16.gmra.mxu0 %v661
        %v4893 = vpop.f32.mrf.mxu0
        %v4894 = vadd.f32 %v4821, %v4893
        %v4895 = vpop.f32.mrf.mxu0
        %v4896 = vadd.f32 %v4823, %v4895
        %v4897 = vpop.f32.mrf.mxu0
        %v4898 = vadd.f32 %v4825, %v4897
        %v4899 = vpop.f32.mrf.mxu0
        %v4900 = vadd.f32 %v4827, %v4899
        %4901 = vmatprep.mubr.bf16.mxu0 %v679
        %4902 = vmatmul.mubr.bf16.gmra.mxu0 %v678
        %v4903 = vpop.f32.mrf.mxu0
        %v4904 = vadd.f32 %v4831, %v4903
        %v4905 = vpop.f32.mrf.mxu0
        %v4906 = vadd.f32 %v4833, %v4905
        %v4907 = vpop.f32.mrf.mxu0
        %v4908 = vadd.f32 %v4835, %v4907
        %v4909 = vpop.f32.mrf.mxu0
        %v4910 = vadd.f32 %v4837, %v4909
        %4911 = vmatprep.mubr.bf16.mxu0 %v696
        %4912 = vmatmul.mubr.bf16.gmra.mxu0 %v695
        %v4913 = vpop.f32.mrf.mxu0
        %v4914 = vadd.f32 %v4841, %v4913
        %v4915 = vpop.f32.mrf.mxu0
        %v4916 = vadd.f32 %v4843, %v4915
        %v4917 = vpop.f32.mrf.mxu0
        %v4918 = vadd.f32 %v4845, %v4917
        %v4919 = vpop.f32.mrf.mxu0
        %v4920 = vadd.f32 %v4847, %v4919
        %4921 = vmatprep.mubr.bf16.mxu0 %v713
        %4922 = vmatmul.mubr.bf16.gmra.mxu0 %v712
        %v4923 = vpop.f32.mrf.mxu0
        %v4924 = vadd.f32 %v4851, %v4923
        %v4925 = vpop.f32.mrf.mxu0
        %v4926 = vadd.f32 %v4853, %v4925
        %v4927 = vpop.f32.mrf.mxu0
        %v4928 = vadd.f32 %v4855, %v4927
        %v4929 = vpop.f32.mrf.mxu0
        %v4930 = vadd.f32 %v4857, %v4929
        %4931 = vdwg.mxu0
        %4932 = vmatprep.subr.bf16.mxu0 %v4222
        %4933 = vmatpush1.bf16.msra.mxu0 %v4221
        %4934 = vmatprep.subr.bf16.mxu0 %v4220
        %4935 = vmatpush1.bf16.msra.mxu0 %v4219
        %4936 = vmatprep.subr.bf16.mxu0 %v4218
        %4937 = vmatpush1.bf16.msra.mxu0 %v4217
        %4938 = vmatprep.subr.bf16.mxu0 %v4216
        %4939 = vmatpush1.bf16.msra.mxu0 %v4215
        %4940 = vmatprep.subr.bf16.mxu0 %v4214
        %4941 = vmatpush1.bf16.msra.mxu0 %v4213
        %4942 = vmatprep.subr.bf16.mxu0 %v4212
        %4943 = vmatpush1.bf16.msra.mxu0 %v4211
        %4944 = vmatprep.subr.bf16.mxu0 %v4210
        %4945 = vmatpush1.bf16.msra.mxu0 %v4209
        %4946 = vmatprep.subr.bf16.mxu0 %v4208
        %4947 = vmatpush1.bf16.msra.mxu0 %v4207
        %4948 = vmatprep.subr.bf16.mxu0 %v4238
        %4949 = vmatpush2.bf16.msra.mxu0 %v4237
        %4950 = vmatprep.subr.bf16.mxu0 %v4236
        %4951 = vmatpush2.bf16.msra.mxu0 %v4235
        %4952 = vmatprep.subr.bf16.mxu0 %v4234
        %4953 = vmatpush2.bf16.msra.mxu0 %v4233
        %4954 = vmatprep.subr.bf16.mxu0 %v4232
        %4955 = vmatpush2.bf16.msra.mxu0 %v4231
        %4956 = vmatprep.subr.bf16.mxu0 %v4230
        %4957 = vmatpush2.bf16.msra.mxu0 %v4229
        %4958 = vmatprep.subr.bf16.mxu0 %v4228
        %4959 = vmatpush2.bf16.msra.mxu0 %v4227
        %4960 = vmatprep.subr.bf16.mxu0 %v4226
        %4961 = vmatpush2.bf16.msra.mxu0 %v4225
        %4962 = vmatprep.subr.bf16.mxu0 %v4224
        %4963 = vmatpush2.bf16.msra.mxu0 %v4223
        %4964 = vmatprep.mubr.bf16.mxu0 %v664
        %4965 = vmatmul.mubr.bf16.gmra.mxu0 %v663
        %v4966 = vpop.f32.mrf.mxu0
        %v4967 = vadd.f32 %v4894, %v4966
        %v4968 = vpop.f32.mrf.mxu0
        %v4969 = vadd.f32 %v4896, %v4968
        %v4970 = vpop.f32.mrf.mxu0
        %v4971 = vadd.f32 %v4898, %v4970
        %v4972 = vpop.f32.mrf.mxu0
        %v4973 = vadd.f32 %v4900, %v4972
        %4974 = vmatprep.mubr.bf16.mxu0 %v681
        %4975 = vmatmul.mubr.bf16.gmra.mxu0 %v680
        %v4976 = vpop.f32.mrf.mxu0
        %v4977 = vadd.f32 %v4904, %v4976
        %v4978 = vpop.f32.mrf.mxu0
        %v4979 = vadd.f32 %v4906, %v4978
        %v4980 = vpop.f32.mrf.mxu0
        %v4981 = vadd.f32 %v4908, %v4980
        %v4982 = vpop.f32.mrf.mxu0
        %v4983 = vadd.f32 %v4910, %v4982
        %4984 = vmatprep.mubr.bf16.mxu0 %v698
        %4985 = vmatmul.mubr.bf16.gmra.mxu0 %v697
        %v4986 = vpop.f32.mrf.mxu0
        %v4987 = vadd.f32 %v4914, %v4986
        %v4988 = vpop.f32.mrf.mxu0
        %v4989 = vadd.f32 %v4916, %v4988
        %v4990 = vpop.f32.mrf.mxu0
        %v4991 = vadd.f32 %v4918, %v4990
        %v4992 = vpop.f32.mrf.mxu0
        %v4993 = vadd.f32 %v4920, %v4992
        %4994 = vmatprep.mubr.bf16.mxu0 %v715
        %4995 = vmatmul.mubr.bf16.gmra.mxu0 %v714
        %v4996 = vpop.f32.mrf.mxu0
        %v4997 = vadd.f32 %v4924, %v4996
        %v4998 = vpop.f32.mrf.mxu0
        %v4999 = vadd.f32 %v4926, %v4998
        %v5000 = vpop.f32.mrf.mxu0
        %v5001 = vadd.f32 %v4928, %v5000
        %v5002 = vpop.f32.mrf.mxu0
        %v5003 = vadd.f32 %v4930, %v5002
        %5004 = vdwg.mxu0
        %5005 = vmatprep.subr.bf16.mxu0 %v4254
        %5006 = vmatpush1.bf16.msra.mxu0 %v4253
        %5007 = vmatprep.subr.bf16.mxu0 %v4252
        %5008 = vmatpush1.bf16.msra.mxu0 %v4251
        %5009 = vmatprep.subr.bf16.mxu0 %v4250
        %5010 = vmatpush1.bf16.msra.mxu0 %v4249
        %5011 = vmatprep.subr.bf16.mxu0 %v4248
        %5012 = vmatpush1.bf16.msra.mxu0 %v4247
        %5013 = vmatprep.subr.bf16.mxu0 %v4246
        %5014 = vmatpush1.bf16.msra.mxu0 %v4245
        %5015 = vmatprep.subr.bf16.mxu0 %v4244
        %5016 = vmatpush1.bf16.msra.mxu0 %v4243
        %5017 = vmatprep.subr.bf16.mxu0 %v4242
        %5018 = vmatpush1.bf16.msra.mxu0 %v4241
        %5019 = vmatprep.subr.bf16.mxu0 %v4240
        %5020 = vmatpush1.bf16.msra.mxu0 %v4239
        %5021 = vmatprep.subr.bf16.mxu0 %v4270
        %5022 = vmatpush2.bf16.msra.mxu0 %v4269
        %5023 = vmatprep.subr.bf16.mxu0 %v4268
        %5024 = vmatpush2.bf16.msra.mxu0 %v4267
        %5025 = vmatprep.subr.bf16.mxu0 %v4266
        %5026 = vmatpush2.bf16.msra.mxu0 %v4265
        %5027 = vmatprep.subr.bf16.mxu0 %v4264
        %5028 = vmatpush2.bf16.msra.mxu0 %v4263
        %5029 = vmatprep.subr.bf16.mxu0 %v4262
        %5030 = vmatpush2.bf16.msra.mxu0 %v4261
        %5031 = vmatprep.subr.bf16.mxu0 %v4260
        %5032 = vmatpush2.bf16.msra.mxu0 %v4259
        %5033 = vmatprep.subr.bf16.mxu0 %v4258
        %5034 = vmatpush2.bf16.msra.mxu0 %v4257
        %5035 = vmatprep.subr.bf16.mxu0 %v4256
        %5036 = vmatpush2.bf16.msra.mxu0 %v4255
        %5037 = vmatprep.mubr.bf16.mxu0 %v666
        %5038 = vmatmul.mubr.bf16.gmra.mxu0 %v665
        %v5039 = vpop.f32.mrf.mxu0
        %v5040 = vadd.f32 %v4967, %v5039
        %v5041 = vpop.f32.mrf.mxu0
        %v5042 = vadd.f32 %v4969, %v5041
        %v5043 = vpop.f32.mrf.mxu0
        %v5044 = vadd.f32 %v4971, %v5043
        %v5045 = vpop.f32.mrf.mxu0
        %v5046 = vadd.f32 %v4973, %v5045
        %5047 = vmatprep.mubr.bf16.mxu0 %v683
        %5048 = vmatmul.mubr.bf16.gmra.mxu0 %v682
        %v5049 = vpop.f32.mrf.mxu0
        %v5050 = vadd.f32 %v4977, %v5049
        %v5051 = vpop.f32.mrf.mxu0
        %v5052 = vadd.f32 %v4979, %v5051
        %v5053 = vpop.f32.mrf.mxu0
        %v5054 = vadd.f32 %v4981, %v5053
        %v5055 = vpop.f32.mrf.mxu0
        %v5056 = vadd.f32 %v4983, %v5055
        %5057 = vmatprep.mubr.bf16.mxu0 %v700
        %5058 = vmatmul.mubr.bf16.gmra.mxu0 %v699
        %v5059 = vpop.f32.mrf.mxu0
        %v5060 = vadd.f32 %v4987, %v5059
        %v5061 = vpop.f32.mrf.mxu0
        %v5062 = vadd.f32 %v4989, %v5061
        %v5063 = vpop.f32.mrf.mxu0
        %v5064 = vadd.f32 %v4991, %v5063
        %v5065 = vpop.f32.mrf.mxu0
        %v5066 = vadd.f32 %v4993, %v5065
        %5067 = vmatprep.mubr.bf16.mxu0 %v717
        %5068 = vmatmul.mubr.bf16.gmra.mxu0 %v716
        %v5069 = vpop.f32.mrf.mxu0
        %v5070 = vadd.f32 %v4997, %v5069
        %v5071 = vpop.f32.mrf.mxu0
        %v5072 = vadd.f32 %v4999, %v5071
        %v5073 = vpop.f32.mrf.mxu0
        %v5074 = vadd.f32 %v5001, %v5073
        %v5075 = vpop.f32.mrf.mxu0
        %v5076 = vadd.f32 %v5003, %v5075
        %5077 = vdwg.mxu0
        %5078 = vmatprep.subr.bf16.mxu0 %v4286
        %5079 = vmatpush1.bf16.msra.mxu0 %v4285
        %5080 = vmatprep.subr.bf16.mxu0 %v4284
        %5081 = vmatpush1.bf16.msra.mxu0 %v4283
        %5082 = vmatprep.subr.bf16.mxu0 %v4282
        %5083 = vmatpush1.bf16.msra.mxu0 %v4281
        %5084 = vmatprep.subr.bf16.mxu0 %v4280
        %5085 = vmatpush1.bf16.msra.mxu0 %v4279
        %5086 = vmatprep.subr.bf16.mxu0 %v4278
        %5087 = vmatpush1.bf16.msra.mxu0 %v4277
        %5088 = vmatprep.subr.bf16.mxu0 %v4276
        %5089 = vmatpush1.bf16.msra.mxu0 %v4275
        %5090 = vmatprep.subr.bf16.mxu0 %v4274
        %5091 = vmatpush1.bf16.msra.mxu0 %v4273
        %5092 = vmatprep.subr.bf16.mxu0 %v4272
        %5093 = vmatpush1.bf16.msra.mxu0 %v4271
        %5094 = vmatprep.subr.bf16.mxu0 %v4302
        %5095 = vmatpush2.bf16.msra.mxu0 %v4301
        %5096 = vmatprep.subr.bf16.mxu0 %v4300
        %5097 = vmatpush2.bf16.msra.mxu0 %v4299
        %5098 = vmatprep.subr.bf16.mxu0 %v4298
        %5099 = vmatpush2.bf16.msra.mxu0 %v4297
        %5100 = vmatprep.subr.bf16.mxu0 %v4296
        %5101 = vmatpush2.bf16.msra.mxu0 %v4295
        %5102 = vmatprep.subr.bf16.mxu0 %v4294
        %5103 = vmatpush2.bf16.msra.mxu0 %v4293
        %5104 = vmatprep.subr.bf16.mxu0 %v4292
        %5105 = vmatpush2.bf16.msra.mxu0 %v4291
        %5106 = vmatprep.subr.bf16.mxu0 %v4290
        %5107 = vmatpush2.bf16.msra.mxu0 %v4289
        %5108 = vmatprep.subr.bf16.mxu0 %v4288
        %5109 = vmatpush2.bf16.msra.mxu0 %v4287
        %5110 = vmatprep.mubr.bf16.mxu0 %v668
        %5111 = vmatmul.mubr.bf16.gmra.mxu0 %v667
        %v5112 = vpop.f32.mrf.mxu0
        %v5113 = vadd.f32 %v5040, %v5112
        %v5114 = vpop.f32.mrf.mxu0
        %v5115 = vadd.f32 %v5042, %v5114
        %v5116 = vpop.f32.mrf.mxu0
        %v5117 = vadd.f32 %v5044, %v5116
        %v5118 = vpop.f32.mrf.mxu0
        %v5119 = vadd.f32 %v5046, %v5118
        %5120 = vmatprep.mubr.bf16.mxu0 %v685
        %5121 = vmatmul.mubr.bf16.gmra.mxu0 %v684
        %v5122 = vpop.f32.mrf.mxu0
        %v5123 = vadd.f32 %v5050, %v5122
        %v5124 = vpop.f32.mrf.mxu0
        %v5125 = vadd.f32 %v5052, %v5124
        %v5126 = vpop.f32.mrf.mxu0
        %v5127 = vadd.f32 %v5054, %v5126
        %v5128 = vpop.f32.mrf.mxu0
        %v5129 = vadd.f32 %v5056, %v5128
        %5130 = vmatprep.mubr.bf16.mxu0 %v702
        %5131 = vmatmul.mubr.bf16.gmra.mxu0 %v701
        %v5132 = vpop.f32.mrf.mxu0
        %v5133 = vadd.f32 %v5060, %v5132
        %v5134 = vpop.f32.mrf.mxu0
        %v5135 = vadd.f32 %v5062, %v5134
        %v5136 = vpop.f32.mrf.mxu0
        %v5137 = vadd.f32 %v5064, %v5136
        %v5138 = vpop.f32.mrf.mxu0
        %v5139 = vadd.f32 %v5066, %v5138
        %5140 = vmatprep.mubr.bf16.mxu0 %v719
        %5141 = vmatmul.mubr.bf16.gmra.mxu0 %v718
        %v5142 = vpop.f32.mrf.mxu0
        %v5143 = vadd.f32 %v5070, %v5142
        %v5144 = vpop.f32.mrf.mxu0
        %v5145 = vadd.f32 %v5072, %v5144
        %v5146 = vpop.f32.mrf.mxu0
        %v5147 = vadd.f32 %v5074, %v5146
        %v5148 = vpop.f32.mrf.mxu0
        %v5149 = vadd.f32 %v5076, %v5148
        %5150 = vdwg.mxu0
        %5151 = vmatprep.subr.bf16.mxu0 0
        %5152 = vmatpush1.bf16.msra.mxu0 0
        %5153 = vmatprep.subr.bf16.mxu0 0
        %5154 = vmatpush1.bf16.msra.mxu0 0
        %5155 = vmatprep.subr.bf16.mxu0 0
        %5156 = vmatpush1.bf16.msra.mxu0 0
        %5157 = vmatprep.subr.bf16.mxu0 0
        %5158 = vmatpush1.bf16.msra.mxu0 0
        %5159 = vmatprep.subr.bf16.mxu0 0
        %5160 = vmatpush1.bf16.msra.mxu0 0
        %5161 = vmatprep.subr.bf16.mxu0 0
        %5162 = vmatpush1.bf16.msra.mxu0 0
        %5163 = vmatprep.subr.bf16.mxu0 %v4306
        %5164 = vmatpush1.bf16.msra.mxu0 %v4305
        %5165 = vmatprep.subr.bf16.mxu0 %v4304
        %5166 = vmatpush1.bf16.msra.mxu0 %v4303
        %5167 = vmatprep.subr.bf16.mxu0 0
        %5168 = vmatpush2.bf16.msra.mxu0 0
        %5169 = vmatprep.subr.bf16.mxu0 0
        %5170 = vmatpush2.bf16.msra.mxu0 0
        %5171 = vmatprep.subr.bf16.mxu0 0
        %5172 = vmatpush2.bf16.msra.mxu0 0
        %5173 = vmatprep.subr.bf16.mxu0 0
        %5174 = vmatpush2.bf16.msra.mxu0 0
        %5175 = vmatprep.subr.bf16.mxu0 0
        %5176 = vmatpush2.bf16.msra.mxu0 0
        %5177 = vmatprep.subr.bf16.mxu0 0
        %5178 = vmatpush2.bf16.msra.mxu0 0
        %5179 = vmatprep.subr.bf16.mxu0 0
        %5180 = vmatpush2.bf16.msra.mxu0 0
        %5181 = vmatprep.subr.bf16.mxu0 0
        %5182 = vmatpush2.bf16.msra.mxu0 0
        %5183 = vmatprep.mubr.bf16.mxu0 0
        %5184 = vmatmul.mubr.bf16.gmra.mxu0 %v2311
        %v5185 = vpop.f32.mrf.mxu0
        %v5186 = vadd.f32 %v5113, %v5185
        %v5187 = vpop.f32.mrf.mxu0
        %v5188 = vadd.f32 %v5115, %v5187
        %v5189 = vpop.f32.mrf.mxu0
        %v5190 = vadd.f32 %v5117, %v5189
        %v5191 = vpop.f32.mrf.mxu0
        %v5192 = vadd.f32 %v5119, %v5191
        %5193 = vmatprep.mubr.bf16.mxu0 0
        %5194 = vmatmul.mubr.bf16.gmra.mxu0 %v2314
        %v5195 = vpop.f32.mrf.mxu0
        %v5196 = vadd.f32 %v5123, %v5195
        %v5197 = vpop.f32.mrf.mxu0
        %v5198 = vadd.f32 %v5125, %v5197
        %v5199 = vpop.f32.mrf.mxu0
        %v5200 = vadd.f32 %v5127, %v5199
        %v5201 = vpop.f32.mrf.mxu0
        %v5202 = vadd.f32 %v5129, %v5201
        %5203 = vmatprep.mubr.bf16.mxu0 0
        %5204 = vmatmul.mubr.bf16.gmra.mxu0 %v2317
        %v5205 = vpop.f32.mrf.mxu0
        %v5206 = vadd.f32 %v5133, %v5205
        %v5207 = vpop.f32.mrf.mxu0
        %v5208 = vadd.f32 %v5135, %v5207
        %v5209 = vpop.f32.mrf.mxu0
        %v5210 = vadd.f32 %v5137, %v5209
        %v5211 = vpop.f32.mrf.mxu0
        %v5212 = vadd.f32 %v5139, %v5211
        %5213 = vmatprep.mubr.bf16.mxu0 0
        %5214 = vmatmul.mubr.bf16.gmra.mxu0 %v2320
        %v5215 = vpop.f32.mrf.mxu0
        %v5216 = vadd.f32 %v5143, %v5215
        %v5217 = vpop.f32.mrf.mxu0
        %v5218 = vadd.f32 %v5145, %v5217
        %v5219 = vpop.f32.mrf.mxu0
        %v5220 = vadd.f32 %v5147, %v5219
        %v5221 = vpop.f32.mrf.mxu0
        %v5222 = vadd.f32 %v5149, %v5221
        %5223 = vdwg.mxu0
        %v5224 = vmax.f32 %v5186, 0.0
        %v5225 = vmax.f32 %v5188, 0.0
        %v5226 = vmax.f32 %v5190, 0.0
        %v5227 = vmax.f32 %v5192, 0.0
        %v5228 = vmax.f32 %v5196, 0.0
        %v5229 = vmax.f32 %v5198, 0.0
        %v5230 = vmax.f32 %v5200, 0.0
        %v5231 = vmax.f32 %v5202, 0.0
        %v5232 = vmax.f32 %v5206, 0.0
        %v5233 = vmax.f32 %v5208, 0.0
        %v5234 = vmax.f32 %v5210, 0.0
        %v5235 = vmax.f32 %v5212, 0.0
        %v5236 = vmax.f32 %v5216, 0.0
        %v5237 = vmax.f32 %v5218, 0.0
        %v5238 = vmax.f32 %v5220, 0.0
        %v5239 = vmax.f32 %v5222, 0.0
        %vm5240 = vcmp.eq.s32.totalorder %v721, 0
        %vm5241 = vcmp.eq.s32.totalorder %v722, 0
        %vm5242 = vcmp.eq.s32.totalorder %v723, 0
        %vm5243 = vcmp.eq.s32.totalorder %v724, 0
        %vm5244 = vcmp.eq.s32.totalorder %v725, 0
        %vm5245 = vcmp.eq.s32.totalorder %v726, 0
        %vm5246 = vcmp.eq.s32.totalorder %v727, 0
        %vm5247 = vcmp.eq.s32.totalorder %v728, 0
        %vm5264 = vcmask 1040384
        %v5265 = vrot.slane %v5224, 7
        %v5266 = vrot.slane %v5225, 7
        %v5267 = vrot.slane %v5226, 7
        %v5268 = vsel %vm5264, %v5265, %v5267
        %v5269 = vrot.slane %v5227, 7
        %v5270 = vsel %vm5264, %v5266, %v5269
        %v5271 = vrot.slane %v5228, 7
        %v5272 = vsel %vm5264, %v5267, %v5271
        %v5273 = vrot.slane %v5229, 7
        %v5274 = vsel %vm5264, %v5269, %v5273
        %v5275 = vrot.slane %v5230, 7
        %v5276 = vsel %vm5264, %v5271, %v5275
        %v5277 = vrot.slane %v5231, 7
        %v5278 = vsel %vm5264, %v5273, %v5277
        %v5279 = vrot.slane %v5232, 7
        %v5280 = vsel %vm5264, %v5275, %v5279
        %v5281 = vrot.slane %v5233, 7
        %v5282 = vsel %vm5264, %v5277, %v5281
        %v5283 = vrot.slane %v5234, 7
        %v5284 = vsel %vm5264, %v5279, %v5283
        %v5285 = vrot.slane %v5235, 7
        %v5286 = vsel %vm5264, %v5281, %v5285
        %v5287 = vrot.slane %v5236, 7
        %v5288 = vsel %vm5264, %v5283, %v5287
        %v5289 = vrot.slane %v5237, 7
        %v5290 = vsel %vm5264, %v5285, %v5289
        %v5291 = vrot.slane %v5238, 7
        %v5292 = vsel %vm5264, %v5287, %v5291
        %v5293 = vrot.slane %v5239, 7
        %v5294 = vsel %vm5264, %v5289, %v5293
        %v5311 = vsel %vm5264, 0.0, %v5265
        %v5312 = vsel %vm5264, 0.0, %v5266
        %v5313 = vsel %vm5240, 1, 0
        %v5314 = vsel %vm5241, 1, 0
        %v5315 = vsel %vm5242, 1, 0
        %v5316 = vsel %vm5243, 1, 0
        %v5317 = vsel %vm5244, 1, 0
        %v5318 = vsel %vm5245, 1, 0
        %v5319 = vsel %vm5246, 1, 0
        %v5320 = vsel %vm5247, 1, 0
        %5321 = vset.pattern.permute.xlu0 0
        %5322 = vperm.xlu0 %5321, %v5313
        %v5323 = vpop.permute.xlu0 %5322
        %5324 = vset.pattern.permute.xlu0 0
        %5325 = vperm.xlu0 %5324, %v5314
        %v5326 = vpop.permute.xlu0 %5325
        %5327 = vset.pattern.permute.xlu0 0
        %5328 = vperm.xlu0 %5327, %v5315
        %v5329 = vpop.permute.xlu0 %5328
        %5330 = vset.pattern.permute.xlu0 0
        %5331 = vperm.xlu0 %5330, %v5316
        %v5332 = vpop.permute.xlu0 %5331
        %5333 = vset.pattern.permute.xlu0 0
        %5334 = vperm.xlu0 %5333, %v5317
        %v5335 = vpop.permute.xlu0 %5334
        %5336 = vset.pattern.permute.xlu0 0
        %5337 = vperm.xlu0 %5336, %v5318
        %v5338 = vpop.permute.xlu0 %5337
        %5339 = vset.pattern.permute.xlu0 0
        %5340 = vperm.xlu0 %5339, %v5319
        %v5341 = vpop.permute.xlu0 %5340
        %5342 = vset.pattern.permute.xlu0 0
        %5343 = vperm.xlu0 %5342, %v5320
        %v5344 = vpop.permute.xlu0 %5343
        %vm5345 = vcmp.eq.s32.totalorder %v5323, 1
        %vm5346 = vcmp.eq.s32.totalorder %v5326, 1
        %vm5347 = vcmp.eq.s32.totalorder %v5329, 1
        %vm5348 = vcmp.eq.s32.totalorder %v5332, 1
        %vm5349 = vcmp.eq.s32.totalorder %v5335, 1
        %vm5350 = vcmp.eq.s32.totalorder %v5338, 1
        %vm5351 = vcmp.eq.s32.totalorder %v5341, 1
        %vm5352 = vcmp.eq.s32.totalorder %v5344, 1
        %v5353 = vsel %vm5345, 0.0, %v5311
        %v5354 = vsel %vm5345, 0.0, %v5312
        %v5355 = vsel %vm5346, 0.0, %v5268
        %v5356 = vsel %vm5346, 0.0, %v5270
        %v5357 = vsel %vm5347, 0.0, %v5272
        %v5358 = vsel %vm5347, 0.0, %v5274
        %v5359 = vsel %vm5348, 0.0, %v5276
        %v5360 = vsel %vm5348, 0.0, %v5278
        %v5361 = vsel %vm5349, 0.0, %v5280
        %v5362 = vsel %vm5349, 0.0, %v5282
        %v5363 = vsel %vm5350, 0.0, %v5284
        %v5364 = vsel %vm5350, 0.0, %v5286
        %v5365 = vsel %vm5351, 0.0, %v5288
        %v5366 = vsel %vm5351, 0.0, %v5290
        %v5367 = vsel %vm5352, 0.0, %v5292
        %v5368 = vsel %vm5352, 0.0, %v5294
        %vm5369 = vcmp.eq.s32.totalorder %v721, 7
        %vm5370 = vcmp.eq.s32.totalorder %v722, 7
        %vm5371 = vcmp.eq.s32.totalorder %v723, 7
        %vm5372 = vcmp.eq.s32.totalorder %v724, 7
        %vm5373 = vcmp.eq.s32.totalorder %v725, 7
        %vm5374 = vcmp.eq.s32.totalorder %v726, 7
        %vm5375 = vcmp.eq.s32.totalorder %v727, 7
        %vm5376 = vcmp.eq.s32.totalorder %v728, 7
        %vm5377 = vcmask 1046528
        %v5378 = vrot.slane %v5224, 1
        %v5379 = vrot.slane %v5226, 1
        %v5380 = vsel %vm5377, %v5378, %v5379
        %v5381 = vrot.slane %v5225, 1
        %v5382 = vrot.slane %v5227, 1
        %v5383 = vsel %vm5377, %v5381, %v5382
        %v5384 = vrot.slane %v5228, 1
        %v5385 = vsel %vm5377, %v5379, %v5384
        %v5386 = vrot.slane %v5229, 1
        %v5387 = vsel %vm5377, %v5382, %v5386
        %v5388 = vrot.slane %v5230, 1
        %v5389 = vsel %vm5377, %v5384, %v5388
        %v5390 = vrot.slane %v5231, 1
        %v5391 = vsel %vm5377, %v5386, %v5390
        %v5392 = vrot.slane %v5232, 1
        %v5393 = vsel %vm5377, %v5388, %v5392
        %v5394 = vrot.slane %v5233, 1
        %v5395 = vsel %vm5377, %v5390, %v5394
        %v5396 = vrot.slane %v5234, 1
        %v5397 = vsel %vm5377, %v5392, %v5396
        %v5398 = vrot.slane %v5235, 1
        %v5399 = vsel %vm5377, %v5394, %v5398
        %v5400 = vrot.slane %v5236, 1
        %v5401 = vsel %vm5377, %v5396, %v5400
        %v5402 = vrot.slane %v5237, 1
        %v5403 = vsel %vm5377, %v5398, %v5402
        %v5404 = vrot.slane %v5238, 1
        %v5405 = vsel %vm5377, %v5400, %v5404
        %v5406 = vrot.slane %v5239, 1
        %v5407 = vsel %vm5377, %v5402, %v5406
        %v5424 = vsel %vm5377, %v5404, 0.0
        %v5425 = vsel %vm5377, %v5406, 0.0
        %v5426 = vsel %vm5369, 1, 0
        %v5427 = vsel %vm5370, 1, 0
        %v5428 = vsel %vm5371, 1, 0
        %v5429 = vsel %vm5372, 1, 0
        %v5430 = vsel %vm5373, 1, 0
        %v5431 = vsel %vm5374, 1, 0
        %v5432 = vsel %vm5375, 1, 0
        %v5433 = vsel %vm5376, 1, 0
        %5434 = vset.pattern.permute.xlu0 0
        %5435 = vperm.xlu0 %5434, %v5426
        %v5436 = vpop.permute.xlu0 %5435
        %5437 = vset.pattern.permute.xlu0 0
        %5438 = vperm.xlu0 %5437, %v5427
        %v5439 = vpop.permute.xlu0 %5438
        %5440 = vset.pattern.permute.xlu0 0
        %5441 = vperm.xlu0 %5440, %v5428
        %v5442 = vpop.permute.xlu0 %5441
        %5443 = vset.pattern.permute.xlu0 0
        %5444 = vperm.xlu0 %5443, %v5429
        %v5445 = vpop.permute.xlu0 %5444
        %5446 = vset.pattern.permute.xlu0 0
        %5447 = vperm.xlu0 %5446, %v5430
        %v5448 = vpop.permute.xlu0 %5447
        %5449 = vset.pattern.permute.xlu0 0
        %5450 = vperm.xlu0 %5449, %v5431
        %v5451 = vpop.permute.xlu0 %5450
        %5452 = vset.pattern.permute.xlu0 0
        %5453 = vperm.xlu0 %5452, %v5432
        %v5454 = vpop.permute.xlu0 %5453
        %5455 = vset.pattern.permute.xlu0 0
        %5456 = vperm.xlu0 %5455, %v5433
        %v5457 = vpop.permute.xlu0 %5456
        %vm5458 = vcmp.eq.s32.totalorder %v5436, 1
        %vm5459 = vcmp.eq.s32.totalorder %v5439, 1
        %vm5460 = vcmp.eq.s32.totalorder %v5442, 1
        %vm5461 = vcmp.eq.s32.totalorder %v5445, 1
        %vm5462 = vcmp.eq.s32.totalorder %v5448, 1
        %vm5463 = vcmp.eq.s32.totalorder %v5451, 1
        %vm5464 = vcmp.eq.s32.totalorder %v5454, 1
        %vm5465 = vcmp.eq.s32.totalorder %v5457, 1
        %v5466 = vsel %vm5458, 0.0, %v5380
        %v5467 = vsel %vm5458, 0.0, %v5383
        %v5468 = vsel %vm5459, 0.0, %v5385
        %v5469 = vsel %vm5459, 0.0, %v5387
        %v5470 = vsel %vm5460, 0.0, %v5389
        %v5471 = vsel %vm5460, 0.0, %v5391
        %v5472 = vsel %vm5461, 0.0, %v5393
        %v5473 = vsel %vm5461, 0.0, %v5395
        %v5474 = vsel %vm5462, 0.0, %v5397
        %v5475 = vsel %vm5462, 0.0, %v5399
        %v5476 = vsel %vm5463, 0.0, %v5401
        %v5477 = vsel %vm5463, 0.0, %v5403
        %v5478 = vsel %vm5464, 0.0, %v5405
        %v5479 = vsel %vm5464, 0.0, %v5407
        %v5480 = vsel %vm5465, 0.0, %v5424
        %v5481 = vsel %vm5465, 0.0, %v5425
        %v5482 = vpack.c.bf16 %v5355, %v5353
        %v5483 = vpack.c.bf16 %v5356, %v5354
        %v5484 = vpack.c.bf16 %v5359, %v5357
        %v5485 = vpack.c.bf16 %v5360, %v5358
        %v5486 = vpack.c.bf16 %v5363, %v5361
        %v5487 = vpack.c.bf16 %v5364, %v5362
        %v5488 = vpack.c.bf16 %v5367, %v5365
        %v5489 = vpack.c.bf16 %v5368, %v5366
        %v5490 = vld [vmem:[%s7] sm:$0xff]
        %v5491 = vld [vmem:[%s7 + $0x8] sm:$0xff]
        %v5492 = vld [vmem:[%s7 + $0x10] sm:$0xff]
        %v5493 = vld [vmem:[%s7 + $0x18] sm:$0xff]
        %v5494 = vld [vmem:[%s7 + $0x20] sm:$0xff]
        %v5495 = vld [vmem:[%s7 + $0x28] sm:$0xff]
        %v5496 = vld [vmem:[%s7 + $0x30] sm:$0xff]
        %v5497 = vld [vmem:[%s7 + $0x38] sm:$0xff]
        %v5498 = vld [vmem:[%s7 + $0x40] sm:$0xff]
        %v5499 = vld [vmem:[%s7 + $0x48] sm:$0xff]
        %v5500 = vld [vmem:[%s7 + $0x50] sm:$0xff]
        %v5501 = vld [vmem:[%s7 + $0x58] sm:$0xff]
        %v5502 = vld [vmem:[%s7 + $0x60] sm:$0xff]
        %v5503 = vld [vmem:[%s7 + $0x68] sm:$0xff]
        %v5504 = vld [vmem:[%s7 + $0x70] sm:$0xff]
        %v5505 = vld [vmem:[%s7 + $0x78] sm:$0xff]
        %v5506 = vld [vmem:[%s7 + $0x80] sm:$0xff]
        %v5507 = vld [vmem:[%s7 + $0x88] sm:$0xff]
        %v5508 = vld [vmem:[%s7 + $0x90] sm:$0xff]
        %v5509 = vld [vmem:[%s7 + $0x98] sm:$0xff]
        %v5510 = vld [vmem:[%s7 + $0xa0] sm:$0xff]
        %v5511 = vld [vmem:[%s7 + $0xa8] sm:$0xff]
        %v5512 = vld [vmem:[%s7 + $0xb0] sm:$0xff]
        %v5513 = vld [vmem:[%s7 + $0xb8] sm:$0xff]
        %v5514 = vpack.c.bf16 %v5226, %v5224
        %v5515 = vpack.c.bf16 %v5227, %v5225
        %v5516 = vpack.c.bf16 %v5230, %v5228
        %v5517 = vpack.c.bf16 %v5231, %v5229
        %v5518 = vpack.c.bf16 %v5234, %v5232
        %v5519 = vpack.c.bf16 %v5235, %v5233
        %v5520 = vpack.c.bf16 %v5238, %v5236
        %v5521 = vpack.c.bf16 %v5239, %v5237
        %s5522 = scalar_lea.vmem %s7, 192
        %v5523 = vld [vmem:[%s5522] sm:$0xff]
        %v5524 = vld [vmem:[%s5522 + $0x8] sm:$0xff]
        %v5525 = vld [vmem:[%s5522 + $0x10] sm:$0xff]
        %v5526 = vld [vmem:[%s5522 + $0x18] sm:$0xff]
        %v5527 = vld [vmem:[%s5522 + $0x20] sm:$0xff]
        %v5528 = vld [vmem:[%s5522 + $0x28] sm:$0xff]
        %v5529 = vld [vmem:[%s5522 + $0x30] sm:$0xff]
        %v5530 = vld [vmem:[%s5522 + $0x38] sm:$0xff]
        %v5531 = vld [vmem:[%s5522 + $0x40] sm:$0xff]
        %v5532 = vld [vmem:[%s5522 + $0x48] sm:$0xff]
        %v5533 = vld [vmem:[%s5522 + $0x50] sm:$0xff]
        %v5534 = vld [vmem:[%s5522 + $0x58] sm:$0xff]
        %v5535 = vld [vmem:[%s5522 + $0x60] sm:$0xff]
        %v5536 = vld [vmem:[%s5522 + $0x68] sm:$0xff]
        %v5537 = vld [vmem:[%s5522 + $0x70] sm:$0xff]
        %v5538 = vld [vmem:[%s5522 + $0x78] sm:$0xff]
        %v5539 = vld [vmem:[%s5522 + $0x80] sm:$0xff]
        %v5540 = vld [vmem:[%s5522 + $0x88] sm:$0xff]
        %v5541 = vld [vmem:[%s5522 + $0x90] sm:$0xff]
        %v5542 = vld [vmem:[%s5522 + $0x98] sm:$0xff]
        %v5543 = vld [vmem:[%s5522 + $0xa0] sm:$0xff]
        %v5544 = vld [vmem:[%s5522 + $0xa8] sm:$0xff]
        %v5545 = vld [vmem:[%s5522 + $0xb0] sm:$0xff]
        %v5546 = vld [vmem:[%s5522 + $0xb8] sm:$0xff]
        %v5571 = vunpack.c.l.b16 %v5523
        %v5572 = vunpack.c.h.b16 %v5523
        %v5573 = vunpack.c.l.b16 %v5524
        %v5574 = vunpack.c.h.b16 %v5524
        %v5575 = vunpack.c.l.b16 %v5525
        %v5576 = vunpack.c.h.b16 %v5525
        %v5577 = vunpack.c.l.b16 %v5526
        %v5578 = vunpack.c.h.b16 %v5526
        %v5579 = vunpack.c.l.b16 %v5527
        %v5580 = vunpack.c.h.b16 %v5527
        %v5581 = vunpack.c.l.b16 %v5528
        %v5582 = vunpack.c.h.b16 %v5528
        %v5583 = vunpack.c.l.b16 %v5529
        %v5584 = vunpack.c.h.b16 %v5529
        %v5585 = vunpack.c.l.b16 %v5530
        %v5586 = vunpack.c.h.b16 %v5530
        %v5587 = vunpack.c.l.b16 %v5531
        %v5588 = vunpack.c.h.b16 %v5531
        %v5589 = vunpack.c.l.b16 %v5532
        %v5590 = vunpack.c.h.b16 %v5532
        %v5591 = vunpack.c.l.b16 %v5533
        %v5592 = vunpack.c.h.b16 %v5533
        %v5593 = vunpack.c.l.b16 %v5534
        %v5594 = vunpack.c.h.b16 %v5534
        %v5595 = vunpack.c.l.b16 %v5535
        %v5596 = vunpack.c.h.b16 %v5535
        %v5597 = vunpack.c.l.b16 %v5536
        %v5598 = vunpack.c.h.b16 %v5536
        %v5599 = vunpack.c.l.b16 %v5537
        %v5600 = vunpack.c.h.b16 %v5537
        %v5601 = vunpack.c.l.b16 %v5538
        %v5602 = vunpack.c.h.b16 %v5538
        %v5603 = vunpack.c.l.b16 %v5539
        %v5604 = vunpack.c.h.b16 %v5539
        %v5605 = vunpack.c.l.b16 %v5540
        %v5606 = vunpack.c.h.b16 %v5540
        %v5607 = vunpack.c.l.b16 %v5541
        %v5608 = vunpack.c.h.b16 %v5541
        %v5609 = vunpack.c.l.b16 %v5542
        %v5610 = vunpack.c.h.b16 %v5542
        %v5611 = vunpack.c.l.b16 %v5543
        %v5612 = vunpack.c.h.b16 %v5543
        %v5613 = vunpack.c.l.b16 %v5544
        %v5614 = vunpack.c.h.b16 %v5544
        %v5615 = vunpack.c.l.b16 %v5545
        %v5616 = vunpack.c.h.b16 %v5545
        %v5617 = vunpack.c.l.b16 %v5546
        %v5618 = vunpack.c.h.b16 %v5546
        %v5619 = vpack.c.b16 %v5573, %v5571
        %v5620 = vpack.c.b16 %v5574, %v5572
        %v5621 = vpack.c.b16 %v5577, %v5575
        %v5622 = vpack.c.b16 %v5578, %v5576
        %v5623 = vpack.c.b16 %v5581, %v5579
        %v5624 = vpack.c.b16 %v5582, %v5580
        %v5625 = vpack.c.b16 %v5585, %v5583
        %v5626 = vpack.c.b16 %v5586, %v5584
        %v5627 = vpack.c.b16 %v5589, %v5587
        %v5628 = vpack.c.b16 %v5590, %v5588
        %v5629 = vpack.c.b16 %v5593, %v5591
        %v5630 = vpack.c.b16 %v5594, %v5592
        %v5631 = vpack.c.b16 %v5597, %v5595
        %v5632 = vpack.c.b16 %v5598, %v5596
        %v5633 = vpack.c.b16 %v5601, %v5599
        %v5634 = vpack.c.b16 %v5602, %v5600
        %v5635 = vpack.c.b16 %v5605, %v5603
        %v5636 = vpack.c.b16 %v5606, %v5604
        %v5637 = vpack.c.b16 %v5609, %v5607
        %v5638 = vpack.c.b16 %v5610, %v5608
        %v5639 = vpack.c.b16 %v5613, %v5611
        %v5640 = vpack.c.b16 %v5614, %v5612
        %v5641 = vpack.c.b16 %v5617, %v5615
        %v5642 = vpack.c.b16 %v5618, %v5616
        %vm5667 = vcmask 523264
        %v5669 = vsel %vm5667, %v5515, 0
        %v5672 = vsel %vm5667, %v5517, 0
        %v5675 = vsel %vm5667, %v5519, 0
        %v5678 = vsel %vm5667, %v5521, 0
        %5680 = vmatprep.subr.bf16.mxu0 %v5634
        %5681 = vmatpush1.bf16.msra.mxu0 %v5633
        %5682 = vmatprep.subr.bf16.mxu0 %v5632
        %5683 = vmatpush1.bf16.msra.mxu0 %v5631
        %5684 = vmatprep.subr.bf16.mxu0 %v5630
        %5685 = vmatpush1.bf16.msra.mxu0 %v5629
        %5686 = vmatprep.subr.bf16.mxu0 %v5628
        %5687 = vmatpush1.bf16.msra.mxu0 %v5627
        %5688 = vmatprep.subr.bf16.mxu0 %v5626
        %5689 = vmatpush1.bf16.msra.mxu0 %v5625
        %5690 = vmatprep.subr.bf16.mxu0 %v5624
        %5691 = vmatpush1.bf16.msra.mxu0 %v5623
        %5692 = vmatprep.subr.bf16.mxu0 %v5622
        %5693 = vmatpush1.bf16.msra.mxu0 %v5621
        %5694 = vmatprep.subr.bf16.mxu0 %v5620
        %5695 = vmatpush1.bf16.msra.mxu0 %v5619
        %5696 = vmatprep.subr.bf16.mxu0 0
        %5697 = vmatpush2.bf16.msra.mxu0 0
        %5698 = vmatprep.subr.bf16.mxu0 0
        %5699 = vmatpush2.bf16.msra.mxu0 0
        %5700 = vmatprep.subr.bf16.mxu0 0
        %5701 = vmatpush2.bf16.msra.mxu0 0
        %5702 = vmatprep.subr.bf16.mxu0 0
        %5703 = vmatpush2.bf16.msra.mxu0 0
        %5704 = vmatprep.subr.bf16.mxu0 %v5642
        %5705 = vmatpush2.bf16.msra.mxu0 %v5641
        %5706 = vmatprep.subr.bf16.mxu0 %v5640
        %5707 = vmatpush2.bf16.msra.mxu0 %v5639
        %5708 = vmatprep.subr.bf16.mxu0 %v5638
        %5709 = vmatpush2.bf16.msra.mxu0 %v5637
        %5710 = vmatprep.subr.bf16.mxu0 %v5636
        %5711 = vmatpush2.bf16.msra.mxu0 %v5635
        %5712 = vmatprep.mubr.bf16.mxu0 %v5669
        %5713 = vmatmul.mubr.bf16.gmra.mxu0 %v5514
        %v5714 = vpop.f32.mrf.mxu0
        %v5715 = vadd.f32 0.0, %v5714
        %v5716 = vpop.f32.mrf.mxu0
        %v5717 = vadd.f32 0.0, %v5716
        %v5718 = vpop.f32.mrf.mxu0
        %v5719 = vadd.f32 0.0, %v5718
        %v5720 = vpop.f32.mrf.mxu0
        %v5721 = vadd.f32 0.0, %v5720
        %5722 = vmatprep.mubr.bf16.mxu0 %v5672
        %5723 = vmatmul.mubr.bf16.gmra.mxu0 %v5516
        %v5724 = vpop.f32.mrf.mxu0
        %v5725 = vadd.f32 0.0, %v5724
        %v5726 = vpop.f32.mrf.mxu0
        %v5727 = vadd.f32 0.0, %v5726
        %v5728 = vpop.f32.mrf.mxu0
        %v5729 = vadd.f32 0.0, %v5728
        %v5730 = vpop.f32.mrf.mxu0
        %v5731 = vadd.f32 0.0, %v5730
        %5732 = vmatprep.mubr.bf16.mxu0 %v5675
        %5733 = vmatmul.mubr.bf16.gmra.mxu0 %v5518
        %v5734 = vpop.f32.mrf.mxu0
        %v5735 = vadd.f32 0.0, %v5734
        %v5736 = vpop.f32.mrf.mxu0
        %v5737 = vadd.f32 0.0, %v5736
        %v5738 = vpop.f32.mrf.mxu0
        %v5739 = vadd.f32 0.0, %v5738
        %v5740 = vpop.f32.mrf.mxu0
        %v5741 = vadd.f32 0.0, %v5740
        %5742 = vmatprep.mubr.bf16.mxu0 %v5678
        %5743 = vmatmul.mubr.bf16.gmra.mxu0 %v5520
        %v5744 = vpop.f32.mrf.mxu0
        %v5745 = vadd.f32 0.0, %v5744
        %v5746 = vpop.f32.mrf.mxu0
        %v5747 = vadd.f32 0.0, %v5746
        %v5748 = vpop.f32.mrf.mxu0
        %v5749 = vadd.f32 0.0, %v5748
        %v5750 = vpop.f32.mrf.mxu0
        %v5751 = vadd.f32 0.0, %v5750
        %5752 = vdwg.mxu0
        %v5777 = vunpack.c.l.b16 %v5490
        %v5778 = vunpack.c.h.b16 %v5490
        %v5779 = vunpack.c.l.b16 %v5491
        %v5780 = vunpack.c.h.b16 %v5491
        %v5781 = vunpack.c.l.b16 %v5492
        %v5782 = vunpack.c.h.b16 %v5492
        %v5783 = vunpack.c.l.b16 %v5493
        %v5784 = vunpack.c.h.b16 %v5493
        %v5785 = vunpack.c.l.b16 %v5494
        %v5786 = vunpack.c.h.b16 %v5494
        %v5787 = vunpack.c.l.b16 %v5495
        %v5788 = vunpack.c.h.b16 %v5495
        %v5789 = vunpack.c.l.b16 %v5496
        %v5790 = vunpack.c.h.b16 %v5496
        %v5791 = vunpack.c.l.b16 %v5497
        %v5792 = vunpack.c.h.b16 %v5497
        %v5793 = vunpack.c.l.b16 %v5498
        %v5794 = vunpack.c.h.b16 %v5498
        %v5795 = vunpack.c.l.b16 %v5499
        %v5796 = vunpack.c.h.b16 %v5499
        %v5797 = vunpack.c.l.b16 %v5500
        %v5798 = vunpack.c.h.b16 %v5500
        %v5799 = vunpack.c.l.b16 %v5501
        %v5800 = vunpack.c.h.b16 %v5501
        %v5801 = vunpack.c.l.b16 %v5502
        %v5802 = vunpack.c.h.b16 %v5502
        %v5803 = vunpack.c.l.b16 %v5503
        %v5804 = vunpack.c.h.b16 %v5503
        %v5805 = vunpack.c.l.b16 %v5504
        %v5806 = vunpack.c.h.b16 %v5504
        %v5807 = vunpack.c.l.b16 %v5505
        %v5808 = vunpack.c.h.b16 %v5505
        %v5809 = vunpack.c.l.b16 %v5506
        %v5810 = vunpack.c.h.b16 %v5506
        %v5811 = vunpack.c.l.b16 %v5507
        %v5812 = vunpack.c.h.b16 %v5507
        %v5813 = vunpack.c.l.b16 %v5508
        %v5814 = vunpack.c.h.b16 %v5508
        %v5815 = vunpack.c.l.b16 %v5509
        %v5816 = vunpack.c.h.b16 %v5509
        %v5817 = vunpack.c.l.b16 %v5510
        %v5818 = vunpack.c.h.b16 %v5510
        %v5819 = vunpack.c.l.b16 %v5511
        %v5820 = vunpack.c.h.b16 %v5511
        %v5821 = vunpack.c.l.b16 %v5512
        %v5822 = vunpack.c.h.b16 %v5512
        %v5823 = vunpack.c.l.b16 %v5513
        %v5824 = vunpack.c.h.b16 %v5513
        %v5825 = vpack.c.b16 %v5779, %v5777
        %v5826 = vpack.c.b16 %v5780, %v5778
        %v5827 = vpack.c.b16 %v5783, %v5781
        %v5828 = vpack.c.b16 %v5784, %v5782
        %v5829 = vpack.c.b16 %v5787, %v5785
        %v5830 = vpack.c.b16 %v5788, %v5786
        %v5831 = vpack.c.b16 %v5791, %v5789
        %v5832 = vpack.c.b16 %v5792, %v5790
        %v5833 = vpack.c.b16 %v5795, %v5793
        %v5834 = vpack.c.b16 %v5796, %v5794
        %v5835 = vpack.c.b16 %v5799, %v5797
        %v5836 = vpack.c.b16 %v5800, %v5798
        %v5837 = vpack.c.b16 %v5803, %v5801
        %v5838 = vpack.c.b16 %v5804, %v5802
        %v5839 = vpack.c.b16 %v5807, %v5805
        %v5840 = vpack.c.b16 %v5808, %v5806
        %v5841 = vpack.c.b16 %v5811, %v5809
        %v5842 = vpack.c.b16 %v5812, %v5810
        %v5843 = vpack.c.b16 %v5815, %v5813
        %v5844 = vpack.c.b16 %v5816, %v5814
        %v5845 = vpack.c.b16 %v5819, %v5817
        %v5846 = vpack.c.b16 %v5820, %v5818
        %v5847 = vpack.c.b16 %v5823, %v5821
        %v5848 = vpack.c.b16 %v5824, %v5822
        %v5874 = vsel %vm5667, %v5483, 0
        %v5877 = vsel %vm5667, %v5485, 0
        %v5880 = vsel %vm5667, %v5487, 0
        %v5883 = vsel %vm5667, %v5489, 0
        %5885 = vmatprep.subr.bf16.mxu0 %v5840
        %5886 = vmatpush1.bf16.msra.mxu0 %v5839
        %5887 = vmatprep.subr.bf16.mxu0 %v5838
        %5888 = vmatpush1.bf16.msra.mxu0 %v5837
        %5889 = vmatprep.subr.bf16.mxu0 %v5836
        %5890 = vmatpush1.bf16.msra.mxu0 %v5835
        %5891 = vmatprep.subr.bf16.mxu0 %v5834
        %5892 = vmatpush1.bf16.msra.mxu0 %v5833
        %5893 = vmatprep.subr.bf16.mxu0 %v5832
        %5894 = vmatpush1.bf16.msra.mxu0 %v5831
        %5895 = vmatprep.subr.bf16.mxu0 %v5830
        %5896 = vmatpush1.bf16.msra.mxu0 %v5829
        %5897 = vmatprep.subr.bf16.mxu0 %v5828
        %5898 = vmatpush1.bf16.msra.mxu0 %v5827
        %5899 = vmatprep.subr.bf16.mxu0 %v5826
        %5900 = vmatpush1.bf16.msra.mxu0 %v5825
        %5901 = vmatprep.subr.bf16.mxu0 0
        %5902 = vmatpush2.bf16.msra.mxu0 0
        %5903 = vmatprep.subr.bf16.mxu0 0
        %5904 = vmatpush2.bf16.msra.mxu0 0
        %5905 = vmatprep.subr.bf16.mxu0 0
        %5906 = vmatpush2.bf16.msra.mxu0 0
        %5907 = vmatprep.subr.bf16.mxu0 0
        %5908 = vmatpush2.bf16.msra.mxu0 0
        %5909 = vmatprep.subr.bf16.mxu0 %v5848
        %5910 = vmatpush2.bf16.msra.mxu0 %v5847
        %5911 = vmatprep.subr.bf16.mxu0 %v5846
        %5912 = vmatpush2.bf16.msra.mxu0 %v5845
        %5913 = vmatprep.subr.bf16.mxu0 %v5844
        %5914 = vmatpush2.bf16.msra.mxu0 %v5843
        %5915 = vmatprep.subr.bf16.mxu0 %v5842
        %5916 = vmatpush2.bf16.msra.mxu0 %v5841
        %5917 = vmatprep.mubr.bf16.mxu0 %v5874
        %5918 = vmatmul.mubr.bf16.gmra.mxu0 %v5482
        %v5919 = vpop.f32.mrf.mxu0
        %v5920 = vadd.f32 %v5715, %v5919
        %v5921 = vpop.f32.mrf.mxu0
        %v5922 = vadd.f32 %v5717, %v5921
        %v5923 = vpop.f32.mrf.mxu0
        %v5924 = vadd.f32 %v5719, %v5923
        %v5925 = vpop.f32.mrf.mxu0
        %v5926 = vadd.f32 %v5721, %v5925
        %5927 = vmatprep.mubr.bf16.mxu0 %v5877
        %5928 = vmatmul.mubr.bf16.gmra.mxu0 %v5484
        %v5929 = vpop.f32.mrf.mxu0
        %v5930 = vadd.f32 %v5725, %v5929
        %v5931 = vpop.f32.mrf.mxu0
        %v5932 = vadd.f32 %v5727, %v5931
        %v5933 = vpop.f32.mrf.mxu0
        %v5934 = vadd.f32 %v5729, %v5933
        %v5935 = vpop.f32.mrf.mxu0
        %v5936 = vadd.f32 %v5731, %v5935
        %5937 = vmatprep.mubr.bf16.mxu0 %v5880
        %5938 = vmatmul.mubr.bf16.gmra.mxu0 %v5486
        %v5939 = vpop.f32.mrf.mxu0
        %v5940 = vadd.f32 %v5735, %v5939
        %v5941 = vpop.f32.mrf.mxu0
        %v5942 = vadd.f32 %v5737, %v5941
        %v5943 = vpop.f32.mrf.mxu0
        %v5944 = vadd.f32 %v5739, %v5943
        %v5945 = vpop.f32.mrf.mxu0
        %v5946 = vadd.f32 %v5741, %v5945
        %5947 = vmatprep.mubr.bf16.mxu0 %v5883
        %5948 = vmatmul.mubr.bf16.gmra.mxu0 %v5488
        %v5949 = vpop.f32.mrf.mxu0
        %v5950 = vadd.f32 %v5745, %v5949
        %v5951 = vpop.f32.mrf.mxu0
        %v5952 = vadd.f32 %v5747, %v5951
        %v5953 = vpop.f32.mrf.mxu0
        %v5954 = vadd.f32 %v5749, %v5953
        %v5955 = vpop.f32.mrf.mxu0
        %v5956 = vadd.f32 %v5751, %v5955
        %5957 = vdwg.mxu0
        %v5958 = vpack.c.bf16 %v5468, %v5466
        %v5959 = vpack.c.bf16 %v5469, %v5467
        %v5960 = vpack.c.bf16 %v5472, %v5470
        %v5961 = vpack.c.bf16 %v5473, %v5471
        %v5962 = vpack.c.bf16 %v5476, %v5474
        %v5963 = vpack.c.bf16 %v5477, %v5475
        %v5964 = vpack.c.bf16 %v5480, %v5478
        %v5965 = vpack.c.bf16 %v5481, %v5479
        %s5966 = scalar_lea.vmem %s7, 384
        %v5967 = vld [vmem:[%s5966] sm:$0xff]
        %v5968 = vld [vmem:[%s5966 + $0x8] sm:$0xff]
        %v5969 = vld [vmem:[%s5966 + $0x10] sm:$0xff]
        %v5970 = vld [vmem:[%s5966 + $0x18] sm:$0xff]
        %v5971 = vld [vmem:[%s5966 + $0x20] sm:$0xff]
        %v5972 = vld [vmem:[%s5966 + $0x28] sm:$0xff]
        %v5973 = vld [vmem:[%s5966 + $0x30] sm:$0xff]
        %v5974 = vld [vmem:[%s5966 + $0x38] sm:$0xff]
        %v5975 = vld [vmem:[%s5966 + $0x40] sm:$0xff]
        %v5976 = vld [vmem:[%s5966 + $0x48] sm:$0xff]
        %v5977 = vld [vmem:[%s5966 + $0x50] sm:$0xff]
        %v5978 = vld [vmem:[%s5966 + $0x58] sm:$0xff]
        %v5979 = vld [vmem:[%s5966 + $0x60] sm:$0xff]
        %v5980 = vld [vmem:[%s5966 + $0x68] sm:$0xff]
        %v5981 = vld [vmem:[%s5966 + $0x70] sm:$0xff]
        %v5982 = vld [vmem:[%s5966 + $0x78] sm:$0xff]
        %v5983 = vld [vmem:[%s5966 + $0x80] sm:$0xff]
        %v5984 = vld [vmem:[%s5966 + $0x88] sm:$0xff]
        %v5985 = vld [vmem:[%s5966 + $0x90] sm:$0xff]
        %v5986 = vld [vmem:[%s5966 + $0x98] sm:$0xff]
        %v5987 = vld [vmem:[%s5966 + $0xa0] sm:$0xff]
        %v5988 = vld [vmem:[%s5966 + $0xa8] sm:$0xff]
        %v5989 = vld [vmem:[%s5966 + $0xb0] sm:$0xff]
        %v5990 = vld [vmem:[%s5966 + $0xb8] sm:$0xff]
        %v6015 = vunpack.c.l.b16 %v5967
        %v6016 = vunpack.c.h.b16 %v5967
        %v6017 = vunpack.c.l.b16 %v5968
        %v6018 = vunpack.c.h.b16 %v5968
        %v6019 = vunpack.c.l.b16 %v5969
        %v6020 = vunpack.c.h.b16 %v5969
        %v6021 = vunpack.c.l.b16 %v5970
        %v6022 = vunpack.c.h.b16 %v5970
        %v6023 = vunpack.c.l.b16 %v5971
        %v6024 = vunpack.c.h.b16 %v5971
        %v6025 = vunpack.c.l.b16 %v5972
        %v6026 = vunpack.c.h.b16 %v5972
        %v6027 = vunpack.c.l.b16 %v5973
        %v6028 = vunpack.c.h.b16 %v5973
        %v6029 = vunpack.c.l.b16 %v5974
        %v6030 = vunpack.c.h.b16 %v5974
        %v6031 = vunpack.c.l.b16 %v5975
        %v6032 = vunpack.c.h.b16 %v5975
        %v6033 = vunpack.c.l.b16 %v5976
        %v6034 = vunpack.c.h.b16 %v5976
        %v6035 = vunpack.c.l.b16 %v5977
        %v6036 = vunpack.c.h.b16 %v5977
        %v6037 = vunpack.c.l.b16 %v5978
        %v6038 = vunpack.c.h.b16 %v5978
        %v6039 = vunpack.c.l.b16 %v5979
        %v6040 = vunpack.c.h.b16 %v5979
        %v6041 = vunpack.c.l.b16 %v5980
        %v6042 = vunpack.c.h.b16 %v5980
        %v6043 = vunpack.c.l.b16 %v5981
        %v6044 = vunpack.c.h.b16 %v5981
        %v6045 = vunpack.c.l.b16 %v5982
        %v6046 = vunpack.c.h.b16 %v5982
        %v6047 = vunpack.c.l.b16 %v5983
        %v6048 = vunpack.c.h.b16 %v5983
        %v6049 = vunpack.c.l.b16 %v5984
        %v6050 = vunpack.c.h.b16 %v5984
        %v6051 = vunpack.c.l.b16 %v5985
        %v6052 = vunpack.c.h.b16 %v5985
        %v6053 = vunpack.c.l.b16 %v5986
        %v6054 = vunpack.c.h.b16 %v5986
        %v6055 = vunpack.c.l.b16 %v5987
        %v6056 = vunpack.c.h.b16 %v5987
        %v6057 = vunpack.c.l.b16 %v5988
        %v6058 = vunpack.c.h.b16 %v5988
        %v6059 = vunpack.c.l.b16 %v5989
        %v6060 = vunpack.c.h.b16 %v5989
        %v6061 = vunpack.c.l.b16 %v5990
        %v6062 = vunpack.c.h.b16 %v5990
        %v6063 = vpack.c.b16 %v6017, %v6015
        %v6064 = vpack.c.b16 %v6018, %v6016
        %v6065 = vpack.c.b16 %v6021, %v6019
        %v6066 = vpack.c.b16 %v6022, %v6020
        %v6067 = vpack.c.b16 %v6025, %v6023
        %v6068 = vpack.c.b16 %v6026, %v6024
        %v6069 = vpack.c.b16 %v6029, %v6027
        %v6070 = vpack.c.b16 %v6030, %v6028
        %v6071 = vpack.c.b16 %v6033, %v6031
        %v6072 = vpack.c.b16 %v6034, %v6032
        %v6073 = vpack.c.b16 %v6037, %v6035
        %v6074 = vpack.c.b16 %v6038, %v6036
        %v6075 = vpack.c.b16 %v6041, %v6039
        %v6076 = vpack.c.b16 %v6042, %v6040
        %v6077 = vpack.c.b16 %v6045, %v6043
        %v6078 = vpack.c.b16 %v6046, %v6044
        %v6079 = vpack.c.b16 %v6049, %v6047
        %v6080 = vpack.c.b16 %v6050, %v6048
        %v6081 = vpack.c.b16 %v6053, %v6051
        %v6082 = vpack.c.b16 %v6054, %v6052
        %v6083 = vpack.c.b16 %v6057, %v6055
        %v6084 = vpack.c.b16 %v6058, %v6056
        %v6085 = vpack.c.b16 %v6061, %v6059
        %v6086 = vpack.c.b16 %v6062, %v6060
        %v6112 = vsel %vm5667, %v5959, 0
        %v6115 = vsel %vm5667, %v5961, 0
        %v6118 = vsel %vm5667, %v5963, 0
        %v6121 = vsel %vm5667, %v5965, 0
        %6123 = vmatprep.subr.bf16.mxu0 %v6078
        %6124 = vmatpush1.bf16.msra.mxu0 %v6077
        %6125 = vmatprep.subr.bf16.mxu0 %v6076
        %6126 = vmatpush1.bf16.msra.mxu0 %v6075
        %6127 = vmatprep.subr.bf16.mxu0 %v6074
        %6128 = vmatpush1.bf16.msra.mxu0 %v6073
        %6129 = vmatprep.subr.bf16.mxu0 %v6072
        %6130 = vmatpush1.bf16.msra.mxu0 %v6071
        %6131 = vmatprep.subr.bf16.mxu0 %v6070
        %6132 = vmatpush1.bf16.msra.mxu0 %v6069
        %6133 = vmatprep.subr.bf16.mxu0 %v6068
        %6134 = vmatpush1.bf16.msra.mxu0 %v6067
        %6135 = vmatprep.subr.bf16.mxu0 %v6066
        %6136 = vmatpush1.bf16.msra.mxu0 %v6065
        %6137 = vmatprep.subr.bf16.mxu0 %v6064
        %6138 = vmatpush1.bf16.msra.mxu0 %v6063
        %6139 = vmatprep.subr.bf16.mxu0 0
        %6140 = vmatpush2.bf16.msra.mxu0 0
        %6141 = vmatprep.subr.bf16.mxu0 0
        %6142 = vmatpush2.bf16.msra.mxu0 0
        %6143 = vmatprep.subr.bf16.mxu0 0
        %6144 = vmatpush2.bf16.msra.mxu0 0
        %6145 = vmatprep.subr.bf16.mxu0 0
        %6146 = vmatpush2.bf16.msra.mxu0 0
        %6147 = vmatprep.subr.bf16.mxu0 %v6086
        %6148 = vmatpush2.bf16.msra.mxu0 %v6085
        %6149 = vmatprep.subr.bf16.mxu0 %v6084
        %6150 = vmatpush2.bf16.msra.mxu0 %v6083
        %6151 = vmatprep.subr.bf16.mxu0 %v6082
        %6152 = vmatpush2.bf16.msra.mxu0 %v6081
        %6153 = vmatprep.subr.bf16.mxu0 %v6080
        %6154 = vmatpush2.bf16.msra.mxu0 %v6079
        %6155 = vmatprep.mubr.bf16.mxu0 %v6112
        %6156 = vmatmul.mubr.bf16.gmra.mxu0 %v5958
        %v6157 = vpop.f32.mrf.mxu0
        %v6158 = vadd.f32 0.0, %v6157
        %v6159 = vpop.f32.mrf.mxu0
        %v6160 = vadd.f32 0.0, %v6159
        %v6161 = vpop.f32.mrf.mxu0
        %v6162 = vadd.f32 0.0, %v6161
        %v6163 = vpop.f32.mrf.mxu0
        %v6164 = vadd.f32 0.0, %v6163
        %6165 = vmatprep.mubr.bf16.mxu0 %v6115
        %6166 = vmatmul.mubr.bf16.gmra.mxu0 %v5960
        %v6167 = vpop.f32.mrf.mxu0
        %v6168 = vadd.f32 0.0, %v6167
        %v6169 = vpop.f32.mrf.mxu0
        %v6170 = vadd.f32 0.0, %v6169
        %v6171 = vpop.f32.mrf.mxu0
        %v6172 = vadd.f32 0.0, %v6171
        %v6173 = vpop.f32.mrf.mxu0
        %v6174 = vadd.f32 0.0, %v6173
        %6175 = vmatprep.mubr.bf16.mxu0 %v6118
        %6176 = vmatmul.mubr.bf16.gmra.mxu0 %v5962
        %v6177 = vpop.f32.mrf.mxu0
        %v6178 = vadd.f32 0.0, %v6177
        %v6179 = vpop.f32.mrf.mxu0
        %v6180 = vadd.f32 0.0, %v6179
        %v6181 = vpop.f32.mrf.mxu0
        %v6182 = vadd.f32 0.0, %v6181
        %v6183 = vpop.f32.mrf.mxu0
        %v6184 = vadd.f32 0.0, %v6183
        %6185 = vmatprep.mubr.bf16.mxu0 %v6121
        %6186 = vmatmul.mubr.bf16.gmra.mxu0 %v5964
        %v6187 = vpop.f32.mrf.mxu0
        %v6188 = vadd.f32 0.0, %v6187
        %v6189 = vpop.f32.mrf.mxu0
        %v6190 = vadd.f32 0.0, %v6189
        %v6191 = vpop.f32.mrf.mxu0
        %v6192 = vadd.f32 0.0, %v6191
        %v6193 = vpop.f32.mrf.mxu0
        %v6194 = vadd.f32 0.0, %v6193
        %6195 = vdwg.mxu0
        %v6196 = vadd.f32 %v5920, %v6158
        %v6197 = vadd.f32 %v5922, %v6160
        %v6198 = vadd.f32 %v5924, %v6162
        %v6199 = vadd.f32 %v5926, %v6164
        %v6200 = vadd.f32 %v5930, %v6168
        %v6201 = vadd.f32 %v5932, %v6170
        %v6202 = vadd.f32 %v5934, %v6172
        %v6203 = vadd.f32 %v5936, %v6174
        %v6204 = vadd.f32 %v5940, %v6178
        %v6205 = vadd.f32 %v5942, %v6180
        %v6206 = vadd.f32 %v5944, %v6182
        %v6207 = vadd.f32 %v5946, %v6184
        %v6208 = vadd.f32 %v5950, %v6188
        %v6209 = vadd.f32 %v5952, %v6190
        %v6210 = vadd.f32 %v5954, %v6192
        %v6211 = vadd.f32 %v5956, %v6194
        %v6212 = vld [vmem:[%s8] sm:$0x3]
        %v6214 = vlaneseq
        %v6215 = vshrl.u32 %v6214, 7
        %v6216 = vsub.s32 0, %v6215
        %v6217 = vrot.slane %v6212, %v6216
        %v6218 = vlaneseq
        %v6219 = vshrl.u32 %v6218, 7
        %v6220 = vsub.s32 1, %v6219
        %v6221 = vrot.slane %v6212, %v6220
        %v6224 = vadd.f32 %v6196, %v6217
        %v6225 = vadd.f32 %v6197, %v6221
        %v6226 = vadd.f32 %v6198, %v6217
        %v6227 = vadd.f32 %v6199, %v6221
        %v6228 = vadd.f32 %v6200, %v6217
        %v6229 = vadd.f32 %v6201, %v6221
        %v6230 = vadd.f32 %v6202, %v6217
        %v6231 = vadd.f32 %v6203, %v6221
        %v6232 = vadd.f32 %v6204, %v6217
        %v6233 = vadd.f32 %v6205, %v6221
        %v6234 = vadd.f32 %v6206, %v6217
        %v6235 = vadd.f32 %v6207, %v6221
        %v6236 = vadd.f32 %v6208, %v6217
        %v6237 = vadd.f32 %v6209, %v6221
        %v6238 = vadd.f32 %v6210, %v6217
        %v6239 = vadd.f32 %v6211, %v6221
        %v6240 = vmax.f32 %v6224, 0.0
        %v6241 = vmax.f32 %v6225, 0.0
        %v6242 = vmax.f32 %v6226, 0.0
        %v6243 = vmax.f32 %v6227, 0.0
        %v6244 = vmax.f32 %v6228, 0.0
        %v6245 = vmax.f32 %v6229, 0.0
        %v6246 = vmax.f32 %v6230, 0.0
        %v6247 = vmax.f32 %v6231, 0.0
        %v6248 = vmax.f32 %v6232, 0.0
        %v6249 = vmax.f32 %v6233, 0.0
        %v6250 = vmax.f32 %v6234, 0.0
        %v6251 = vmax.f32 %v6235, 0.0
        %v6252 = vmax.f32 %v6236, 0.0
        %v6253 = vmax.f32 %v6237, 0.0
        %v6254 = vmax.f32 %v6238, 0.0
        %v6255 = vmax.f32 %v6239, 0.0
        %vm6256 = vcmp.eq.s32.totalorder %v730, 0
        %vm6257 = vcmp.eq.s32.totalorder %v731, 0
        %vm6258 = vcmp.eq.s32.totalorder %v732, 0
        %vm6259 = vcmp.eq.s32.totalorder %v733, 0
        %vm6260 = vcmp.eq.s32.totalorder %v734, 0
        %vm6261 = vcmp.eq.s32.totalorder %v735, 0
        %vm6262 = vcmp.eq.s32.totalorder %v736, 0
        %v6263 = vsel %vm6256, 1, 0
        %v6264 = vsel %vm6257, 1, 0
        %v6265 = vsel %vm6258, 1, 0
        %v6266 = vsel %vm6259, 1, 0
        %v6267 = vsel %vm6260, 1, 0
        %v6268 = vsel %vm6261, 1, 0
        %v6269 = vsel %vm6262, 1, 0
        %6270 = vset.pattern.permute.xlu0 0
        %6271 = vperm.xlu0 %6270, %v6263
        %v6272 = vpop.permute.xlu0 %6271
        %6273 = vset.pattern.permute.xlu0 0
        %6274 = vperm.xlu0 %6273, %v6264
        %v6275 = vpop.permute.xlu0 %6274
        %6276 = vset.pattern.permute.xlu0 0
        %6277 = vperm.xlu0 %6276, %v6265
        %v6278 = vpop.permute.xlu0 %6277
        %6279 = vset.pattern.permute.xlu0 0
        %6280 = vperm.xlu0 %6279, %v6266
        %v6281 = vpop.permute.xlu0 %6280
        %6282 = vset.pattern.permute.xlu0 0
        %6283 = vperm.xlu0 %6282, %v6267
        %v6284 = vpop.permute.xlu0 %6283
        %6285 = vset.pattern.permute.xlu0 0
        %6286 = vperm.xlu0 %6285, %v6268
        %v6287 = vpop.permute.xlu0 %6286
        %6288 = vset.pattern.permute.xlu0 0
        %6289 = vperm.xlu0 %6288, %v6269
        %v6290 = vpop.permute.xlu0 %6289
        %vm6291 = vcmp.eq.s32.totalorder %v6272, 1
        %vm6292 = vcmp.eq.s32.totalorder %v6275, 1
        %vm6293 = vcmp.eq.s32.totalorder %v6278, 1
        %vm6294 = vcmp.eq.s32.totalorder %v6281, 1
        %vm6295 = vcmp.eq.s32.totalorder %v6284, 1
        %vm6296 = vcmp.eq.s32.totalorder %v6287, 1
        %vm6297 = vcmp.eq.s32.totalorder %v6290, 1
        %v6298 = vsel %vm6291, 0.0, %v6240
        %v6299 = vsel %vm6291, 0.0, %v6241
        %v6300 = vsel %vm6292, 0.0, %v6242
        %v6301 = vsel %vm6292, 0.0, %v6243
        %v6302 = vsel %vm6293, 0.0, %v6244
        %v6303 = vsel %vm6293, 0.0, %v6245
        %v6304 = vsel %vm6294, 0.0, %v6246
        %v6305 = vsel %vm6294, 0.0, %v6247
        %v6306 = vsel %vm6295, 0.0, %v6248
        %v6307 = vsel %vm6295, 0.0, %v6249
        %v6308 = vsel %vm6296, 0.0, %v6250
        %v6309 = vsel %vm6296, 0.0, %v6251
        %v6310 = vsel %vm6297, 0.0, %v6252
        %v6311 = vsel %vm6297, 0.0, %v6253
        %vm6312 = vcmp.eq.s32.totalorder %v729, 7
        %vm6313 = vcmp.eq.s32.totalorder %v730, 7
        %vm6314 = vcmp.eq.s32.totalorder %v731, 7
        %vm6315 = vcmp.eq.s32.totalorder %v732, 7
        %vm6316 = vcmp.eq.s32.totalorder %v733, 7
        %vm6317 = vcmp.eq.s32.totalorder %v734, 7
        %vm6318 = vcmp.eq.s32.totalorder %v735, 7
        %v6319 = vsel %vm6312, 1, 0
        %v6320 = vsel %vm6313, 1, 0
        %v6321 = vsel %vm6314, 1, 0
        %v6322 = vsel %vm6315, 1, 0
        %v6323 = vsel %vm6316, 1, 0
        %v6324 = vsel %vm6317, 1, 0
        %v6325 = vsel %vm6318, 1, 0
        %6326 = vset.pattern.permute.xlu0 0
        %6327 = vperm.xlu0 %6326, %v6319
        %v6328 = vpop.permute.xlu0 %6327
        %6329 = vset.pattern.permute.xlu0 0
        %6330 = vperm.xlu0 %6329, %v6320
        %v6331 = vpop.permute.xlu0 %6330
        %6332 = vset.pattern.permute.xlu0 0
        %6333 = vperm.xlu0 %6332, %v6321
        %v6334 = vpop.permute.xlu0 %6333
        %6335 = vset.pattern.permute.xlu0 0
        %6336 = vperm.xlu0 %6335, %v6322
        %v6337 = vpop.permute.xlu0 %6336
        %6338 = vset.pattern.permute.xlu0 0
        %6339 = vperm.xlu0 %6338, %v6323
        %v6340 = vpop.permute.xlu0 %6339
        %6341 = vset.pattern.permute.xlu0 0
        %6342 = vperm.xlu0 %6341, %v6324
        %v6343 = vpop.permute.xlu0 %6342
        %6344 = vset.pattern.permute.xlu0 0
        %6345 = vperm.xlu0 %6344, %v6325
        %v6346 = vpop.permute.xlu0 %6345
        %vm6347 = vcmp.eq.s32.totalorder %v6328, 1
        %vm6348 = vcmp.eq.s32.totalorder %v6331, 1
        %vm6349 = vcmp.eq.s32.totalorder %v6334, 1
        %vm6350 = vcmp.eq.s32.totalorder %v6337, 1
        %vm6351 = vcmp.eq.s32.totalorder %v6340, 1
        %vm6352 = vcmp.eq.s32.totalorder %v6343, 1
        %vm6353 = vcmp.eq.s32.totalorder %v6346, 1
        %v6354 = vsel %vm6347, 0.0, %v6242
        %v6355 = vsel %vm6347, 0.0, %v6243
        %v6356 = vsel %vm6348, 0.0, %v6244
        %v6357 = vsel %vm6348, 0.0, %v6245
        %v6358 = vsel %vm6349, 0.0, %v6246
        %v6359 = vsel %vm6349, 0.0, %v6247
        %v6360 = vsel %vm6350, 0.0, %v6248
        %v6361 = vsel %vm6350, 0.0, %v6249
        %v6362 = vsel %vm6351, 0.0, %v6250
        %v6363 = vsel %vm6351, 0.0, %v6251
        %v6364 = vsel %vm6352, 0.0, %v6252
        %v6365 = vsel %vm6352, 0.0, %v6253
        %v6366 = vsel %vm6353, 0.0, %v6254
        %v6367 = vsel %vm6353, 0.0, %v6255
        %v6368 = vpack.c.bf16 %v6298, 0.0
        %v6369 = vpack.c.bf16 %v6299, 0.0
        %v6370 = vpack.c.bf16 %v6302, %v6300
        %v6371 = vpack.c.bf16 %v6303, %v6301
        %v6372 = vpack.c.bf16 %v6306, %v6304
        %v6373 = vpack.c.bf16 %v6307, %v6305
        %v6374 = vpack.c.bf16 %v6310, %v6308
        %v6375 = vpack.c.bf16 %v6311, %v6309
        %v6376 = vld [vmem:[%s9] sm:$0xff]
        %v6377 = vld [vmem:[%s9 + $0x8] sm:$0xff]
        %v6378 = vld [vmem:[%s9 + $0x10] sm:$0xff]
        %v6379 = vld [vmem:[%s9 + $0x18] sm:$0xff]
        %v6380 = vld [vmem:[%s9 + $0x20] sm:$0xff]
        %v6381 = vld [vmem:[%s9 + $0x28] sm:$0xff]
        %v6382 = vld [vmem:[%s9 + $0x30] sm:$0xff]
        %v6383 = vld [vmem:[%s9 + $0x38] sm:$0xff]
        %v6384 = vld [vmem:[%s9 + $0x40] sm:$0xff]
        %v6385 = vld [vmem:[%s9 + $0x48] sm:$0xff]
        %v6386 = vld [vmem:[%s9 + $0x50] sm:$0xff]
        %v6387 = vld [vmem:[%s9 + $0x58] sm:$0xff]
        %v6388 = vld [vmem:[%s9 + $0x60] sm:$0xff]
        %v6389 = vld [vmem:[%s9 + $0x68] sm:$0xff]
        %v6390 = vld [vmem:[%s9 + $0x70] sm:$0xff]
        %v6391 = vld [vmem:[%s9 + $0x78] sm:$0xff]
        %v6392 = vld [vmem:[%s9 + $0x80] sm:$0xff]
        %v6393 = vld [vmem:[%s9 + $0x88] sm:$0xff]
        %v6394 = vld [vmem:[%s9 + $0x90] sm:$0xff]
        %v6395 = vld [vmem:[%s9 + $0x98] sm:$0xff]
        %v6396 = vld [vmem:[%s9 + $0xa0] sm:$0xff]
        %v6397 = vld [vmem:[%s9 + $0xa8] sm:$0xff]
        %v6398 = vld [vmem:[%s9 + $0xb0] sm:$0xff]
        %v6399 = vld [vmem:[%s9 + $0xb8] sm:$0xff]
        %v6400 = vld [vmem:[%s9 + $0xc0] sm:$0xff]
        %v6401 = vld [vmem:[%s9 + $0xc8] sm:$0xff]
        %v6402 = vld [vmem:[%s9 + $0xd0] sm:$0xff]
        %v6403 = vld [vmem:[%s9 + $0xd8] sm:$0xff]
        %v6404 = vpack.c.bf16 %v6242, %v6240
        %v6405 = vpack.c.bf16 %v6243, %v6241
        %v6406 = vpack.c.bf16 %v6246, %v6244
        %v6407 = vpack.c.bf16 %v6247, %v6245
        %v6408 = vpack.c.bf16 %v6250, %v6248
        %v6409 = vpack.c.bf16 %v6251, %v6249
        %v6410 = vpack.c.bf16 %v6254, %v6252
        %v6411 = vpack.c.bf16 %v6255, %v6253
        %s6412 = scalar_lea.vmem %s9, 224
        %v6413 = vld [vmem:[%s6412] sm:$0xff]
        %v6414 = vld [vmem:[%s6412 + $0x8] sm:$0xff]
        %v6415 = vld [vmem:[%s6412 + $0x10] sm:$0xff]
        %v6416 = vld [vmem:[%s6412 + $0x18] sm:$0xff]
        %v6417 = vld [vmem:[%s6412 + $0x20] sm:$0xff]
        %v6418 = vld [vmem:[%s6412 + $0x28] sm:$0xff]
        %v6419 = vld [vmem:[%s6412 + $0x30] sm:$0xff]
        %v6420 = vld [vmem:[%s6412 + $0x38] sm:$0xff]
        %v6421 = vld [vmem:[%s6412 + $0x40] sm:$0xff]
        %v6422 = vld [vmem:[%s6412 + $0x48] sm:$0xff]
        %v6423 = vld [vmem:[%s6412 + $0x50] sm:$0xff]
        %v6424 = vld [vmem:[%s6412 + $0x58] sm:$0xff]
        %v6425 = vld [vmem:[%s6412 + $0x60] sm:$0xff]
        %v6426 = vld [vmem:[%s6412 + $0x68] sm:$0xff]
        %v6427 = vld [vmem:[%s6412 + $0x70] sm:$0xff]
        %v6428 = vld [vmem:[%s6412 + $0x78] sm:$0xff]
        %v6429 = vld [vmem:[%s6412 + $0x80] sm:$0xff]
        %v6430 = vld [vmem:[%s6412 + $0x88] sm:$0xff]
        %v6431 = vld [vmem:[%s6412 + $0x90] sm:$0xff]
        %v6432 = vld [vmem:[%s6412 + $0x98] sm:$0xff]
        %v6433 = vld [vmem:[%s6412 + $0xa0] sm:$0xff]
        %v6434 = vld [vmem:[%s6412 + $0xa8] sm:$0xff]
        %v6435 = vld [vmem:[%s6412 + $0xb0] sm:$0xff]
        %v6436 = vld [vmem:[%s6412 + $0xb8] sm:$0xff]
        %v6437 = vld [vmem:[%s6412 + $0xc0] sm:$0xff]
        %v6438 = vld [vmem:[%s6412 + $0xc8] sm:$0xff]
        %v6439 = vld [vmem:[%s6412 + $0xd0] sm:$0xff]
        %v6440 = vld [vmem:[%s6412 + $0xd8] sm:$0xff]
        %v6469 = vunpack.c.l.b16 %v6413
        %v6470 = vunpack.c.h.b16 %v6413
        %v6471 = vunpack.c.l.b16 %v6414
        %v6472 = vunpack.c.h.b16 %v6414
        %v6473 = vunpack.c.l.b16 %v6415
        %v6474 = vunpack.c.h.b16 %v6415
        %v6475 = vunpack.c.l.b16 %v6416
        %v6476 = vunpack.c.h.b16 %v6416
        %v6477 = vunpack.c.l.b16 %v6417
        %v6478 = vunpack.c.h.b16 %v6417
        %v6479 = vunpack.c.l.b16 %v6418
        %v6480 = vunpack.c.h.b16 %v6418
        %v6481 = vunpack.c.l.b16 %v6419
        %v6482 = vunpack.c.h.b16 %v6419
        %v6483 = vunpack.c.l.b16 %v6420
        %v6484 = vunpack.c.h.b16 %v6420
        %v6485 = vunpack.c.l.b16 %v6421
        %v6486 = vunpack.c.h.b16 %v6421
        %v6487 = vunpack.c.l.b16 %v6422
        %v6488 = vunpack.c.h.b16 %v6422
        %v6489 = vunpack.c.l.b16 %v6423
        %v6490 = vunpack.c.h.b16 %v6423
        %v6491 = vunpack.c.l.b16 %v6424
        %v6492 = vunpack.c.h.b16 %v6424
        %v6493 = vunpack.c.l.b16 %v6425
        %v6494 = vunpack.c.h.b16 %v6425
        %v6495 = vunpack.c.l.b16 %v6426
        %v6496 = vunpack.c.h.b16 %v6426
        %v6497 = vunpack.c.l.b16 %v6427
        %v6498 = vunpack.c.h.b16 %v6427
        %v6499 = vunpack.c.l.b16 %v6428
        %v6500 = vunpack.c.h.b16 %v6428
        %v6501 = vunpack.c.l.b16 %v6429
        %v6502 = vunpack.c.h.b16 %v6429
        %v6503 = vunpack.c.l.b16 %v6430
        %v6504 = vunpack.c.h.b16 %v6430
        %v6505 = vunpack.c.l.b16 %v6431
        %v6506 = vunpack.c.h.b16 %v6431
        %v6507 = vunpack.c.l.b16 %v6432
        %v6508 = vunpack.c.h.b16 %v6432
        %v6509 = vunpack.c.l.b16 %v6433
        %v6510 = vunpack.c.h.b16 %v6433
        %v6511 = vunpack.c.l.b16 %v6434
        %v6512 = vunpack.c.h.b16 %v6434
        %v6513 = vunpack.c.l.b16 %v6435
        %v6514 = vunpack.c.h.b16 %v6435
        %v6515 = vunpack.c.l.b16 %v6436
        %v6516 = vunpack.c.h.b16 %v6436
        %v6517 = vunpack.c.l.b16 %v6437
        %v6518 = vunpack.c.h.b16 %v6437
        %v6519 = vunpack.c.l.b16 %v6438
        %v6520 = vunpack.c.h.b16 %v6438
        %v6521 = vunpack.c.l.b16 %v6439
        %v6522 = vunpack.c.h.b16 %v6439
        %v6523 = vunpack.c.l.b16 %v6440
        %v6524 = vunpack.c.h.b16 %v6440
        %v6525 = vpack.c.b16 %v6471, %v6469
        %v6526 = vpack.c.b16 %v6472, %v6470
        %v6527 = vpack.c.b16 %v6475, %v6473
        %v6528 = vpack.c.b16 %v6476, %v6474
        %v6529 = vpack.c.b16 %v6479, %v6477
        %v6530 = vpack.c.b16 %v6480, %v6478
        %v6531 = vpack.c.b16 %v6483, %v6481
        %v6532 = vpack.c.b16 %v6484, %v6482
        %v6533 = vpack.c.b16 %v6487, %v6485
        %v6534 = vpack.c.b16 %v6488, %v6486
        %v6535 = vpack.c.b16 %v6491, %v6489
        %v6536 = vpack.c.b16 %v6492, %v6490
        %v6537 = vpack.c.b16 %v6495, %v6493
        %v6538 = vpack.c.b16 %v6496, %v6494
        %v6539 = vpack.c.b16 %v6499, %v6497
        %v6540 = vpack.c.b16 %v6500, %v6498
        %v6541 = vpack.c.b16 %v6503, %v6501
        %v6542 = vpack.c.b16 %v6504, %v6502
        %v6543 = vpack.c.b16 %v6507, %v6505
        %v6544 = vpack.c.b16 %v6508, %v6506
        %v6545 = vpack.c.b16 %v6511, %v6509
        %v6546 = vpack.c.b16 %v6512, %v6510
        %v6547 = vpack.c.b16 %v6515, %v6513
        %v6548 = vpack.c.b16 %v6516, %v6514
        %v6549 = vpack.c.b16 %v6519, %v6517
        %v6550 = vpack.c.b16 %v6520, %v6518
        %v6551 = vpack.c.b16 %v6523, %v6521
        %v6552 = vpack.c.b16 %v6524, %v6522
        %vm6581 = vcmask 785408
        %v6583 = vsel %vm6581, %v6405, 0
        %v6586 = vsel %vm6581, %v6407, 0
        %v6589 = vsel %vm6581, %v6409, 0
        %v6592 = vsel %vm6581, %v6411, 0
        %6594 = vmatprep.subr.bf16.mxu0 %v6540
        %6595 = vmatpush1.bf16.msra.mxu0 %v6539
        %6596 = vmatprep.subr.bf16.mxu0 %v6538
        %6597 = vmatpush1.bf16.msra.mxu0 %v6537
        %6598 = vmatprep.subr.bf16.mxu0 %v6536
        %6599 = vmatpush1.bf16.msra.mxu0 %v6535
        %6600 = vmatprep.subr.bf16.mxu0 %v6534
        %6601 = vmatpush1.bf16.msra.mxu0 %v6533
        %6602 = vmatprep.subr.bf16.mxu0 %v6532
        %6603 = vmatpush1.bf16.msra.mxu0 %v6531
        %6604 = vmatprep.subr.bf16.mxu0 %v6530
        %6605 = vmatpush1.bf16.msra.mxu0 %v6529
        %6606 = vmatprep.subr.bf16.mxu0 %v6528
        %6607 = vmatpush1.bf16.msra.mxu0 %v6527
        %6608 = vmatprep.subr.bf16.mxu0 %v6526
        %6609 = vmatpush1.bf16.msra.mxu0 %v6525
        %6610 = vmatprep.subr.bf16.mxu0 0
        %6611 = vmatpush2.bf16.msra.mxu0 0
        %6612 = vmatprep.subr.bf16.mxu0 0
        %6613 = vmatpush2.bf16.msra.mxu0 0
        %6614 = vmatprep.subr.bf16.mxu0 %v6552
        %6615 = vmatpush2.bf16.msra.mxu0 %v6551
        %6616 = vmatprep.subr.bf16.mxu0 %v6550
        %6617 = vmatpush2.bf16.msra.mxu0 %v6549
        %6618 = vmatprep.subr.bf16.mxu0 %v6548
        %6619 = vmatpush2.bf16.msra.mxu0 %v6547
        %6620 = vmatprep.subr.bf16.mxu0 %v6546
        %6621 = vmatpush2.bf16.msra.mxu0 %v6545
        %6622 = vmatprep.subr.bf16.mxu0 %v6544
        %6623 = vmatpush2.bf16.msra.mxu0 %v6543
        %6624 = vmatprep.subr.bf16.mxu0 %v6542
        %6625 = vmatpush2.bf16.msra.mxu0 %v6541
        %6626 = vmatprep.mubr.bf16.mxu0 %v6583
        %6627 = vmatmul.mubr.bf16.gmra.mxu0 %v6404
        %v6628 = vpop.f32.mrf.mxu0
        %v6629 = vadd.f32 0.0, %v6628
        %v6630 = vpop.f32.mrf.mxu0
        %v6631 = vadd.f32 0.0, %v6630
        %v6632 = vpop.f32.mrf.mxu0
        %v6633 = vadd.f32 0.0, %v6632
        %v6634 = vpop.f32.mrf.mxu0
        %v6635 = vadd.f32 0.0, %v6634
        %6636 = vmatprep.mubr.bf16.mxu0 %v6586
        %6637 = vmatmul.mubr.bf16.gmra.mxu0 %v6406
        %v6638 = vpop.f32.mrf.mxu0
        %v6639 = vadd.f32 0.0, %v6638
        %v6640 = vpop.f32.mrf.mxu0
        %v6641 = vadd.f32 0.0, %v6640
        %v6642 = vpop.f32.mrf.mxu0
        %v6643 = vadd.f32 0.0, %v6642
        %v6644 = vpop.f32.mrf.mxu0
        %v6645 = vadd.f32 0.0, %v6644
        %6646 = vmatprep.mubr.bf16.mxu0 %v6589
        %6647 = vmatmul.mubr.bf16.gmra.mxu0 %v6408
        %v6648 = vpop.f32.mrf.mxu0
        %v6649 = vadd.f32 0.0, %v6648
        %v6650 = vpop.f32.mrf.mxu0
        %v6651 = vadd.f32 0.0, %v6650
        %v6652 = vpop.f32.mrf.mxu0
        %v6653 = vadd.f32 0.0, %v6652
        %v6654 = vpop.f32.mrf.mxu0
        %v6655 = vadd.f32 0.0, %v6654
        %6656 = vmatprep.mubr.bf16.mxu0 %v6592
        %6657 = vmatmul.mubr.bf16.gmra.mxu0 %v6410
        %v6658 = vpop.f32.mrf.mxu0
        %v6659 = vadd.f32 0.0, %v6658
        %v6660 = vpop.f32.mrf.mxu0
        %v6661 = vadd.f32 0.0, %v6660
        %v6662 = vpop.f32.mrf.mxu0
        %v6663 = vadd.f32 0.0, %v6662
        %v6664 = vpop.f32.mrf.mxu0
        %v6665 = vadd.f32 0.0, %v6664
        %6666 = vdwg.mxu0
        %v6695 = vunpack.c.l.b16 %v6376
        %v6696 = vunpack.c.h.b16 %v6376
        %v6697 = vunpack.c.l.b16 %v6377
        %v6698 = vunpack.c.h.b16 %v6377
        %v6699 = vunpack.c.l.b16 %v6378
        %v6700 = vunpack.c.h.b16 %v6378
        %v6701 = vunpack.c.l.b16 %v6379
        %v6702 = vunpack.c.h.b16 %v6379
        %v6703 = vunpack.c.l.b16 %v6380
        %v6704 = vunpack.c.h.b16 %v6380
        %v6705 = vunpack.c.l.b16 %v6381
        %v6706 = vunpack.c.h.b16 %v6381
        %v6707 = vunpack.c.l.b16 %v6382
        %v6708 = vunpack.c.h.b16 %v6382
        %v6709 = vunpack.c.l.b16 %v6383
        %v6710 = vunpack.c.h.b16 %v6383
        %v6711 = vunpack.c.l.b16 %v6384
        %v6712 = vunpack.c.h.b16 %v6384
        %v6713 = vunpack.c.l.b16 %v6385
        %v6714 = vunpack.c.h.b16 %v6385
        %v6715 = vunpack.c.l.b16 %v6386
        %v6716 = vunpack.c.h.b16 %v6386
        %v6717 = vunpack.c.l.b16 %v6387
        %v6718 = vunpack.c.h.b16 %v6387
        %v6719 = vunpack.c.l.b16 %v6388
        %v6720 = vunpack.c.h.b16 %v6388
        %v6721 = vunpack.c.l.b16 %v6389
        %v6722 = vunpack.c.h.b16 %v6389
        %v6723 = vunpack.c.l.b16 %v6390
        %v6724 = vunpack.c.h.b16 %v6390
        %v6725 = vunpack.c.l.b16 %v6391
        %v6726 = vunpack.c.h.b16 %v6391
        %v6727 = vunpack.c.l.b16 %v6392
        %v6728 = vunpack.c.h.b16 %v6392
        %v6729 = vunpack.c.l.b16 %v6393
        %v6730 = vunpack.c.h.b16 %v6393
        %v6731 = vunpack.c.l.b16 %v6394
        %v6732 = vunpack.c.h.b16 %v6394
        %v6733 = vunpack.c.l.b16 %v6395
        %v6734 = vunpack.c.h.b16 %v6395
        %v6735 = vunpack.c.l.b16 %v6396
        %v6736 = vunpack.c.h.b16 %v6396
        %v6737 = vunpack.c.l.b16 %v6397
        %v6738 = vunpack.c.h.b16 %v6397
        %v6739 = vunpack.c.l.b16 %v6398
        %v6740 = vunpack.c.h.b16 %v6398
        %v6741 = vunpack.c.l.b16 %v6399
        %v6742 = vunpack.c.h.b16 %v6399
        %v6743 = vunpack.c.l.b16 %v6400
        %v6744 = vunpack.c.h.b16 %v6400
        %v6745 = vunpack.c.l.b16 %v6401
        %v6746 = vunpack.c.h.b16 %v6401
        %v6747 = vunpack.c.l.b16 %v6402
        %v6748 = vunpack.c.h.b16 %v6402
        %v6749 = vunpack.c.l.b16 %v6403
        %v6750 = vunpack.c.h.b16 %v6403
        %v6751 = vpack.c.b16 %v6697, %v6695
        %v6752 = vpack.c.b16 %v6698, %v6696
        %v6753 = vpack.c.b16 %v6701, %v6699
        %v6754 = vpack.c.b16 %v6702, %v6700
        %v6755 = vpack.c.b16 %v6705, %v6703
        %v6756 = vpack.c.b16 %v6706, %v6704
        %v6757 = vpack.c.b16 %v6709, %v6707
        %v6758 = vpack.c.b16 %v6710, %v6708
        %v6759 = vpack.c.b16 %v6713, %v6711
        %v6760 = vpack.c.b16 %v6714, %v6712
        %v6761 = vpack.c.b16 %v6717, %v6715
        %v6762 = vpack.c.b16 %v6718, %v6716
        %v6763 = vpack.c.b16 %v6721, %v6719
        %v6764 = vpack.c.b16 %v6722, %v6720
        %v6765 = vpack.c.b16 %v6725, %v6723
        %v6766 = vpack.c.b16 %v6726, %v6724
        %v6767 = vpack.c.b16 %v6729, %v6727
        %v6768 = vpack.c.b16 %v6730, %v6728
        %v6769 = vpack.c.b16 %v6733, %v6731
        %v6770 = vpack.c.b16 %v6734, %v6732
        %v6771 = vpack.c.b16 %v6737, %v6735
        %v6772 = vpack.c.b16 %v6738, %v6736
        %v6773 = vpack.c.b16 %v6741, %v6739
        %v6774 = vpack.c.b16 %v6742, %v6740
        %v6775 = vpack.c.b16 %v6745, %v6743
        %v6776 = vpack.c.b16 %v6746, %v6744
        %v6777 = vpack.c.b16 %v6749, %v6747
        %v6778 = vpack.c.b16 %v6750, %v6748
        %v6808 = vsel %vm6581, %v6369, 0
        %v6811 = vsel %vm6581, %v6371, 0
        %v6814 = vsel %vm6581, %v6373, 0
        %v6817 = vsel %vm6581, %v6375, 0
        %6819 = vmatprep.subr.bf16.mxu0 %v6766
        %6820 = vmatpush1.bf16.msra.mxu0 %v6765
        %6821 = vmatprep.subr.bf16.mxu0 %v6764
        %6822 = vmatpush1.bf16.msra.mxu0 %v6763
        %6823 = vmatprep.subr.bf16.mxu0 %v6762
        %6824 = vmatpush1.bf16.msra.mxu0 %v6761
        %6825 = vmatprep.subr.bf16.mxu0 %v6760
        %6826 = vmatpush1.bf16.msra.mxu0 %v6759
        %6827 = vmatprep.subr.bf16.mxu0 %v6758
        %6828 = vmatpush1.bf16.msra.mxu0 %v6757
        %6829 = vmatprep.subr.bf16.mxu0 %v6756
        %6830 = vmatpush1.bf16.msra.mxu0 %v6755
        %6831 = vmatprep.subr.bf16.mxu0 %v6754
        %6832 = vmatpush1.bf16.msra.mxu0 %v6753
        %6833 = vmatprep.subr.bf16.mxu0 %v6752
        %6834 = vmatpush1.bf16.msra.mxu0 %v6751
        %6835 = vmatprep.subr.bf16.mxu0 0
        %6836 = vmatpush2.bf16.msra.mxu0 0
        %6837 = vmatprep.subr.bf16.mxu0 0
        %6838 = vmatpush2.bf16.msra.mxu0 0
        %6839 = vmatprep.subr.bf16.mxu0 %v6778
        %6840 = vmatpush2.bf16.msra.mxu0 %v6777
        %6841 = vmatprep.subr.bf16.mxu0 %v6776
        %6842 = vmatpush2.bf16.msra.mxu0 %v6775
        %6843 = vmatprep.subr.bf16.mxu0 %v6774
        %6844 = vmatpush2.bf16.msra.mxu0 %v6773
        %6845 = vmatprep.subr.bf16.mxu0 %v6772
        %6846 = vmatpush2.bf16.msra.mxu0 %v6771
        %6847 = vmatprep.subr.bf16.mxu0 %v6770
        %6848 = vmatpush2.bf16.msra.mxu0 %v6769
        %6849 = vmatprep.subr.bf16.mxu0 %v6768
        %6850 = vmatpush2.bf16.msra.mxu0 %v6767
        %6851 = vmatprep.mubr.bf16.mxu0 %v6808
        %6852 = vmatmul.mubr.bf16.gmra.mxu0 %v6368
        %v6853 = vpop.f32.mrf.mxu0
        %v6854 = vadd.f32 %v6629, %v6853
        %v6855 = vpop.f32.mrf.mxu0
        %v6856 = vadd.f32 %v6631, %v6855
        %v6857 = vpop.f32.mrf.mxu0
        %v6858 = vadd.f32 %v6633, %v6857
        %v6859 = vpop.f32.mrf.mxu0
        %v6860 = vadd.f32 %v6635, %v6859
        %6861 = vmatprep.mubr.bf16.mxu0 %v6811
        %6862 = vmatmul.mubr.bf16.gmra.mxu0 %v6370
        %v6863 = vpop.f32.mrf.mxu0
        %v6864 = vadd.f32 %v6639, %v6863
        %v6865 = vpop.f32.mrf.mxu0
        %v6866 = vadd.f32 %v6641, %v6865
        %v6867 = vpop.f32.mrf.mxu0
        %v6868 = vadd.f32 %v6643, %v6867
        %v6869 = vpop.f32.mrf.mxu0
        %v6870 = vadd.f32 %v6645, %v6869
        %6871 = vmatprep.mubr.bf16.mxu0 %v6814
        %6872 = vmatmul.mubr.bf16.gmra.mxu0 %v6372
        %v6873 = vpop.f32.mrf.mxu0
        %v6874 = vadd.f32 %v6649, %v6873
        %v6875 = vpop.f32.mrf.mxu0
        %v6876 = vadd.f32 %v6651, %v6875
        %v6877 = vpop.f32.mrf.mxu0
        %v6878 = vadd.f32 %v6653, %v6877
        %v6879 = vpop.f32.mrf.mxu0
        %v6880 = vadd.f32 %v6655, %v6879
        %6881 = vmatprep.mubr.bf16.mxu0 %v6817
        %6882 = vmatmul.mubr.bf16.gmra.mxu0 %v6374
        %v6883 = vpop.f32.mrf.mxu0
        %v6884 = vadd.f32 %v6659, %v6883
        %v6885 = vpop.f32.mrf.mxu0
        %v6886 = vadd.f32 %v6661, %v6885
        %v6887 = vpop.f32.mrf.mxu0
        %v6888 = vadd.f32 %v6663, %v6887
        %v6889 = vpop.f32.mrf.mxu0
        %v6890 = vadd.f32 %v6665, %v6889
        %6891 = vdwg.mxu0
        %v6892 = vpack.c.bf16 %v6356, %v6354
        %v6893 = vpack.c.bf16 %v6357, %v6355
        %v6894 = vpack.c.bf16 %v6360, %v6358
        %v6895 = vpack.c.bf16 %v6361, %v6359
        %v6896 = vpack.c.bf16 %v6364, %v6362
        %v6897 = vpack.c.bf16 %v6365, %v6363
        %v6898 = vpack.c.bf16 0.0, %v6366
        %v6899 = vpack.c.bf16 0.0, %v6367
        %s6900 = scalar_lea.vmem %s9, 448
        %v6901 = vld [vmem:[%s6900] sm:$0xff]
        %v6902 = vld [vmem:[%s6900 + $0x8] sm:$0xff]
        %v6903 = vld [vmem:[%s6900 + $0x10] sm:$0xff]
        %v6904 = vld [vmem:[%s6900 + $0x18] sm:$0xff]
        %v6905 = vld [vmem:[%s6900 + $0x20] sm:$0xff]
        %v6906 = vld [vmem:[%s6900 + $0x28] sm:$0xff]
        %v6907 = vld [vmem:[%s6900 + $0x30] sm:$0xff]
        %v6908 = vld [vmem:[%s6900 + $0x38] sm:$0xff]
        %v6909 = vld [vmem:[%s6900 + $0x40] sm:$0xff]
        %v6910 = vld [vmem:[%s6900 + $0x48] sm:$0xff]
        %v6911 = vld [vmem:[%s6900 + $0x50] sm:$0xff]
        %v6912 = vld [vmem:[%s6900 + $0x58] sm:$0xff]
        %v6913 = vld [vmem:[%s6900 + $0x60] sm:$0xff]
        %v6914 = vld [vmem:[%s6900 + $0x68] sm:$0xff]
        %v6915 = vld [vmem:[%s6900 + $0x70] sm:$0xff]
        %v6916 = vld [vmem:[%s6900 + $0x78] sm:$0xff]
        %v6917 = vld [vmem:[%s6900 + $0x80] sm:$0xff]
        %v6918 = vld [vmem:[%s6900 + $0x88] sm:$0xff]
        %v6919 = vld [vmem:[%s6900 + $0x90] sm:$0xff]
        %v6920 = vld [vmem:[%s6900 + $0x98] sm:$0xff]
        %v6921 = vld [vmem:[%s6900 + $0xa0] sm:$0xff]
        %v6922 = vld [vmem:[%s6900 + $0xa8] sm:$0xff]
        %v6923 = vld [vmem:[%s6900 + $0xb0] sm:$0xff]
        %v6924 = vld [vmem:[%s6900 + $0xb8] sm:$0xff]
        %v6925 = vld [vmem:[%s6900 + $0xc0] sm:$0xff]
        %v6926 = vld [vmem:[%s6900 + $0xc8] sm:$0xff]
        %v6927 = vld [vmem:[%s6900 + $0xd0] sm:$0xff]
        %v6928 = vld [vmem:[%s6900 + $0xd8] sm:$0xff]
        %v6957 = vunpack.c.l.b16 %v6901
        %v6958 = vunpack.c.h.b16 %v6901
        %v6959 = vunpack.c.l.b16 %v6902
        %v6960 = vunpack.c.h.b16 %v6902
        %v6961 = vunpack.c.l.b16 %v6903
        %v6962 = vunpack.c.h.b16 %v6903
        %v6963 = vunpack.c.l.b16 %v6904
        %v6964 = vunpack.c.h.b16 %v6904
        %v6965 = vunpack.c.l.b16 %v6905
        %v6966 = vunpack.c.h.b16 %v6905
        %v6967 = vunpack.c.l.b16 %v6906
        %v6968 = vunpack.c.h.b16 %v6906
        %v6969 = vunpack.c.l.b16 %v6907
        %v6970 = vunpack.c.h.b16 %v6907
        %v6971 = vunpack.c.l.b16 %v6908
        %v6972 = vunpack.c.h.b16 %v6908
        %v6973 = vunpack.c.l.b16 %v6909
        %v6974 = vunpack.c.h.b16 %v6909
        %v6975 = vunpack.c.l.b16 %v6910
        %v6976 = vunpack.c.h.b16 %v6910
        %v6977 = vunpack.c.l.b16 %v6911
        %v6978 = vunpack.c.h.b16 %v6911
        %v6979 = vunpack.c.l.b16 %v6912
        %v6980 = vunpack.c.h.b16 %v6912
        %v6981 = vunpack.c.l.b16 %v6913
        %v6982 = vunpack.c.h.b16 %v6913
        %v6983 = vunpack.c.l.b16 %v6914
        %v6984 = vunpack.c.h.b16 %v6914
        %v6985 = vunpack.c.l.b16 %v6915
        %v6986 = vunpack.c.h.b16 %v6915
        %v6987 = vunpack.c.l.b16 %v6916
        %v6988 = vunpack.c.h.b16 %v6916
        %v6989 = vunpack.c.l.b16 %v6917
        %v6990 = vunpack.c.h.b16 %v6917
        %v6991 = vunpack.c.l.b16 %v6918
        %v6992 = vunpack.c.h.b16 %v6918
        %v6993 = vunpack.c.l.b16 %v6919
        %v6994 = vunpack.c.h.b16 %v6919
        %v6995 = vunpack.c.l.b16 %v6920
        %v6996 = vunpack.c.h.b16 %v6920
        %v6997 = vunpack.c.l.b16 %v6921
        %v6998 = vunpack.c.h.b16 %v6921
        %v6999 = vunpack.c.l.b16 %v6922
        %v7000 = vunpack.c.h.b16 %v6922
        %v7001 = vunpack.c.l.b16 %v6923
        %v7002 = vunpack.c.h.b16 %v6923
        %v7003 = vunpack.c.l.b16 %v6924
        %v7004 = vunpack.c.h.b16 %v6924
        %v7005 = vunpack.c.l.b16 %v6925
        %v7006 = vunpack.c.h.b16 %v6925
        %v7007 = vunpack.c.l.b16 %v6926
        %v7008 = vunpack.c.h.b16 %v6926
        %v7009 = vunpack.c.l.b16 %v6927
        %v7010 = vunpack.c.h.b16 %v6927
        %v7011 = vunpack.c.l.b16 %v6928
        %v7012 = vunpack.c.h.b16 %v6928
        %v7013 = vpack.c.b16 %v6959, %v6957
        %v7014 = vpack.c.b16 %v6960, %v6958
        %v7015 = vpack.c.b16 %v6963, %v6961
        %v7016 = vpack.c.b16 %v6964, %v6962
        %v7017 = vpack.c.b16 %v6967, %v6965
        %v7018 = vpack.c.b16 %v6968, %v6966
        %v7019 = vpack.c.b16 %v6971, %v6969
        %v7020 = vpack.c.b16 %v6972, %v6970
        %v7021 = vpack.c.b16 %v6975, %v6973
        %v7022 = vpack.c.b16 %v6976, %v6974
        %v7023 = vpack.c.b16 %v6979, %v6977
        %v7024 = vpack.c.b16 %v6980, %v6978
        %v7025 = vpack.c.b16 %v6983, %v6981
        %v7026 = vpack.c.b16 %v6984, %v6982
        %v7027 = vpack.c.b16 %v6987, %v6985
        %v7028 = vpack.c.b16 %v6988, %v6986
        %v7029 = vpack.c.b16 %v6991, %v6989
        %v7030 = vpack.c.b16 %v6992, %v6990
        %v7031 = vpack.c.b16 %v6995, %v6993
        %v7032 = vpack.c.b16 %v6996, %v6994
        %v7033 = vpack.c.b16 %v6999, %v6997
        %v7034 = vpack.c.b16 %v7000, %v6998
        %v7035 = vpack.c.b16 %v7003, %v7001
        %v7036 = vpack.c.b16 %v7004, %v7002
        %v7037 = vpack.c.b16 %v7007, %v7005
        %v7038 = vpack.c.b16 %v7008, %v7006
        %v7039 = vpack.c.b16 %v7011, %v7009
        %v7040 = vpack.c.b16 %v7012, %v7010
        %v7070 = vsel %vm6581, %v6893, 0
        %v7073 = vsel %vm6581, %v6895, 0
        %v7076 = vsel %vm6581, %v6897, 0
        %v7079 = vsel %vm6581, %v6899, 0
        %7081 = vmatprep.subr.bf16.mxu0 %v7028
        %7082 = vmatpush1.bf16.msra.mxu0 %v7027
        %7083 = vmatprep.subr.bf16.mxu0 %v7026
        %7084 = vmatpush1.bf16.msra.mxu0 %v7025
        %7085 = vmatprep.subr.bf16.mxu0 %v7024
        %7086 = vmatpush1.bf16.msra.mxu0 %v7023
        %7087 = vmatprep.subr.bf16.mxu0 %v7022
        %7088 = vmatpush1.bf16.msra.mxu0 %v7021
        %7089 = vmatprep.subr.bf16.mxu0 %v7020
        %7090 = vmatpush1.bf16.msra.mxu0 %v7019
        %7091 = vmatprep.subr.bf16.mxu0 %v7018
        %7092 = vmatpush1.bf16.msra.mxu0 %v7017
        %7093 = vmatprep.subr.bf16.mxu0 %v7016
        %7094 = vmatpush1.bf16.msra.mxu0 %v7015
        %7095 = vmatprep.subr.bf16.mxu0 %v7014
        %7096 = vmatpush1.bf16.msra.mxu0 %v7013
        %7097 = vmatprep.subr.bf16.mxu0 0
        %7098 = vmatpush2.bf16.msra.mxu0 0
        %7099 = vmatprep.subr.bf16.mxu0 0
        %7100 = vmatpush2.bf16.msra.mxu0 0
        %7101 = vmatprep.subr.bf16.mxu0 %v7040
        %7102 = vmatpush2.bf16.msra.mxu0 %v7039
        %7103 = vmatprep.subr.bf16.mxu0 %v7038
        %7104 = vmatpush2.bf16.msra.mxu0 %v7037
        %7105 = vmatprep.subr.bf16.mxu0 %v7036
        %7106 = vmatpush2.bf16.msra.mxu0 %v7035
        %7107 = vmatprep.subr.bf16.mxu0 %v7034
        %7108 = vmatpush2.bf16.msra.mxu0 %v7033
        %7109 = vmatprep.subr.bf16.mxu0 %v7032
        %7110 = vmatpush2.bf16.msra.mxu0 %v7031
        %7111 = vmatprep.subr.bf16.mxu0 %v7030
        %7112 = vmatpush2.bf16.msra.mxu0 %v7029
        %7113 = vmatprep.mubr.bf16.mxu0 %v7070
        %7114 = vmatmul.mubr.bf16.gmra.mxu0 %v6892
        %v7115 = vpop.f32.mrf.mxu0
        %v7116 = vadd.f32 0.0, %v7115
        %v7117 = vpop.f32.mrf.mxu0
        %v7118 = vadd.f32 0.0, %v7117
        %v7119 = vpop.f32.mrf.mxu0
        %v7120 = vadd.f32 0.0, %v7119
        %v7121 = vpop.f32.mrf.mxu0
        %v7122 = vadd.f32 0.0, %v7121
        %7123 = vmatprep.mubr.bf16.mxu0 %v7073
        %7124 = vmatmul.mubr.bf16.gmra.mxu0 %v6894
        %v7125 = vpop.f32.mrf.mxu0
        %v7126 = vadd.f32 0.0, %v7125
        %v7127 = vpop.f32.mrf.mxu0
        %v7128 = vadd.f32 0.0, %v7127
        %v7129 = vpop.f32.mrf.mxu0
        %v7130 = vadd.f32 0.0, %v7129
        %v7131 = vpop.f32.mrf.mxu0
        %v7132 = vadd.f32 0.0, %v7131
        %7133 = vmatprep.mubr.bf16.mxu0 %v7076
        %7134 = vmatmul.mubr.bf16.gmra.mxu0 %v6896
        %v7135 = vpop.f32.mrf.mxu0
        %v7136 = vadd.f32 0.0, %v7135
        %v7137 = vpop.f32.mrf.mxu0
        %v7138 = vadd.f32 0.0, %v7137
        %v7139 = vpop.f32.mrf.mxu0
        %v7140 = vadd.f32 0.0, %v7139
        %v7141 = vpop.f32.mrf.mxu0
        %v7142 = vadd.f32 0.0, %v7141
        %7143 = vmatprep.mubr.bf16.mxu0 %v7079
        %7144 = vmatmul.mubr.bf16.gmra.mxu0 %v6898
        %v7145 = vpop.f32.mrf.mxu0
        %v7146 = vadd.f32 0.0, %v7145
        %v7147 = vpop.f32.mrf.mxu0
        %v7148 = vadd.f32 0.0, %v7147
        %v7149 = vpop.f32.mrf.mxu0
        %v7150 = vadd.f32 0.0, %v7149
        %v7151 = vpop.f32.mrf.mxu0
        %v7152 = vadd.f32 0.0, %v7151
        %7153 = vdwg.mxu0
        %v7154 = vadd.f32 %v6854, %v7116
        %v7155 = vadd.f32 %v6856, %v7118
        %v7156 = vadd.f32 %v6858, %v7120
        %v7157 = vadd.f32 %v6860, %v7122
        %v7158 = vadd.f32 %v6864, %v7126
        %v7159 = vadd.f32 %v6866, %v7128
        %v7160 = vadd.f32 %v6868, %v7130
        %v7161 = vadd.f32 %v6870, %v7132
        %v7162 = vadd.f32 %v6874, %v7136
        %v7163 = vadd.f32 %v6876, %v7138
        %v7164 = vadd.f32 %v6878, %v7140
        %v7165 = vadd.f32 %v6880, %v7142
        %v7166 = vadd.f32 %v6884, %v7146
        %v7167 = vadd.f32 %v6886, %v7148
        %v7168 = vadd.f32 %v6888, %v7150
        %v7169 = vadd.f32 %v6890, %v7152
        %v7170 = vld [vmem:[%s10] sm:$0x3]
        %v7172 = vlaneseq
        %v7173 = vshrl.u32 %v7172, 7
        %v7174 = vsub.s32 0, %v7173
        %v7175 = vrot.slane %v7170, %v7174
        %v7176 = vlaneseq
        %v7177 = vshrl.u32 %v7176, 7
        %v7178 = vsub.s32 1, %v7177
        %v7179 = vrot.slane %v7170, %v7178
        %v7182 = vadd.f32 %v7154, %v7175
        %v7183 = vadd.f32 %v7155, %v7179
        %v7184 = vadd.f32 %v7156, %v7175
        %v7185 = vadd.f32 %v7157, %v7179
        %v7186 = vadd.f32 %v7158, %v7175
        %v7187 = vadd.f32 %v7159, %v7179
        %v7188 = vadd.f32 %v7160, %v7175
        %v7189 = vadd.f32 %v7161, %v7179
        %v7190 = vadd.f32 %v7162, %v7175
        %v7191 = vadd.f32 %v7163, %v7179
        %v7192 = vadd.f32 %v7164, %v7175
        %v7193 = vadd.f32 %v7165, %v7179
        %v7194 = vadd.f32 %v7166, %v7175
        %v7195 = vadd.f32 %v7167, %v7179
        %v7196 = vadd.f32 %v7168, %v7175
        %v7197 = vadd.f32 %v7169, %v7179
        %v7198 = vmax.f32 %v7182, 0.0
        %v7199 = vmax.f32 %v7183, 0.0
        %v7200 = vmax.f32 %v7184, 0.0
        %v7201 = vmax.f32 %v7185, 0.0
        %v7202 = vmax.f32 %v7186, 0.0
        %v7203 = vmax.f32 %v7187, 0.0
        %v7204 = vmax.f32 %v7188, 0.0
        %v7205 = vmax.f32 %v7189, 0.0
        %v7206 = vmax.f32 %v7190, 0.0
        %v7207 = vmax.f32 %v7191, 0.0
        %v7208 = vmax.f32 %v7192, 0.0
        %v7209 = vmax.f32 %v7193, 0.0
        %v7210 = vmax.f32 %v7194, 0.0
        %v7211 = vmax.f32 %v7195, 0.0
        %v7212 = vmax.f32 %v7196, 0.0
        %v7213 = vmax.f32 %v7197, 0.0
        %v7214 = vpack.c.bf16 %v2981, %v2979
        %v7215 = vpack.c.bf16 %v2982, %v2980
        %v7216 = vpack.c.bf16 %v2985, %v2983
        %v7217 = vpack.c.bf16 %v2986, %v2984
        %v7218 = vpack.c.bf16 %v2989, %v2987
        %v7219 = vpack.c.bf16 %v2990, %v2988
        %v7220 = vpack.c.bf16 %v2993, %v2991
        %v7221 = vpack.c.bf16 %v2994, %v2992
        %v7222 = vld [vmem:[%s11] sm:$0xff]
        %v7223 = vld [vmem:[%s11 + $0x8] sm:$0xff]
        %v7224 = vld [vmem:[%s11 + $0x10] sm:$0xff]
        %v7225 = vld [vmem:[%s11 + $0x18] sm:$0xff]
        %v7226 = vld [vmem:[%s11 + $0x20] sm:$0xff]
        %v7227 = vld [vmem:[%s11 + $0x28] sm:$0xff]
        %v7228 = vld [vmem:[%s11 + $0x30] sm:$0xff]
        %v7229 = vld [vmem:[%s11 + $0x38] sm:$0xff]
        %v7230 = vld [vmem:[%s11 + $0x40] sm:$0xf]
        %v7231 = vld [vmem:[%s11 + $0x44] sm:$0xff]
        %v7232 = vld [vmem:[%s11 + $0x4c] sm:$0xff]
        %v7233 = vld [vmem:[%s11 + $0x54] sm:$0xff]
        %v7234 = vld [vmem:[%s11 + $0x5c] sm:$0xff]
        %v7235 = vld [vmem:[%s11 + $0x64] sm:$0xff]
        %v7236 = vld [vmem:[%s11 + $0x6c] sm:$0xff]
        %v7237 = vld [vmem:[%s11 + $0x74] sm:$0xff]
        %v7238 = vld [vmem:[%s11 + $0x7c] sm:$0xff]
        %v7239 = vld [vmem:[%s11 + $0x84] sm:$0xf]
        %v7240 = vld [vmem:[%s11 + $0x88] sm:$0xff]
        %v7241 = vld [vmem:[%s11 + $0x90] sm:$0xff]
        %v7242 = vld [vmem:[%s11 + $0x98] sm:$0xff]
        %v7243 = vld [vmem:[%s11 + $0xa0] sm:$0xff]
        %v7244 = vld [vmem:[%s11 + $0xa8] sm:$0xff]
        %v7245 = vld [vmem:[%s11 + $0xb0] sm:$0xff]
        %v7246 = vld [vmem:[%s11 + $0xb8] sm:$0xff]
        %v7247 = vld [vmem:[%s11 + $0xc0] sm:$0xff]
        %v7248 = vld [vmem:[%s11 + $0xc8] sm:$0xf]
        %v7249 = vld [vmem:[%s11 + $0xcc] sm:$0xff]
        %v7250 = vld [vmem:[%s11 + $0xd4] sm:$0xff]
        %v7251 = vld [vmem:[%s11 + $0xdc] sm:$0xff]
        %v7252 = vld [vmem:[%s11 + $0xe4] sm:$0xff]
        %v7253 = vld [vmem:[%s11 + $0xec] sm:$0xff]
        %v7254 = vld [vmem:[%s11 + $0xf4] sm:$0xff]
        %v7255 = vld [vmem:[%s11 + $0xfc] sm:$0xff]
        %v7256 = vld [vmem:[%s11 + $0x104] sm:$0xff]
        %v7257 = vld [vmem:[%s11 + $0x10c] sm:$0xf]
        %v7258 = vld [vmem:[%s11 + $0x110] sm:$0xff]
        %v7259 = vld [vmem:[%s11 + $0x118] sm:$0xff]
        %v7260 = vld [vmem:[%s11 + $0x120] sm:$0xff]
        %v7261 = vld [vmem:[%s11 + $0x128] sm:$0xff]
        %v7262 = vld [vmem:[%s11 + $0x130] sm:$0xff]
        %v7263 = vld [vmem:[%s11 + $0x138] sm:$0xff]
        %v7264 = vld [vmem:[%s11 + $0x140] sm:$0xff]
        %v7265 = vld [vmem:[%s11 + $0x148] sm:$0xff]
        %v7266 = vld [vmem:[%s11 + $0x150] sm:$0xf]
        %v7267 = vld [vmem:[%s11 + $0x154] sm:$0xff]
        %v7268 = vld [vmem:[%s11 + $0x15c] sm:$0xff]
        %v7269 = vld [vmem:[%s11 + $0x164] sm:$0xff]
        %v7270 = vld [vmem:[%s11 + $0x16c] sm:$0xff]
        %v7271 = vld [vmem:[%s11 + $0x174] sm:$0xff]
        %v7272 = vld [vmem:[%s11 + $0x17c] sm:$0xff]
        %v7273 = vld [vmem:[%s11 + $0x184] sm:$0xff]
        %v7274 = vld [vmem:[%s11 + $0x18c] sm:$0xff]
        %v7275 = vld [vmem:[%s11 + $0x194] sm:$0xf]
        %v7276 = vld [vmem:[%s11 + $0x198] sm:$0xff]
        %v7277 = vld [vmem:[%s11 + $0x1a0] sm:$0xff]
        %v7278 = vld [vmem:[%s11 + $0x1a8] sm:$0xff]
        %v7279 = vld [vmem:[%s11 + $0x1b0] sm:$0xff]
        %v7280 = vld [vmem:[%s11 + $0x1b8] sm:$0xff]
        %v7281 = vld [vmem:[%s11 + $0x1c0] sm:$0xff]
        %v7282 = vld [vmem:[%s11 + $0x1c8] sm:$0xff]
        %v7283 = vld [vmem:[%s11 + $0x1d0] sm:$0xff]
        %v7284 = vld [vmem:[%s11 + $0x1d8] sm:$0xf]
        %v7285 = vld [vmem:[%s11 + $0x1dc] sm:$0xff]
        %v7286 = vld [vmem:[%s11 + $0x1e4] sm:$0xff]
        %v7287 = vld [vmem:[%s11 + $0x1ec] sm:$0xff]
        %v7288 = vld [vmem:[%s11 + $0x1f4] sm:$0xff]
        %v7289 = vld [vmem:[%s11 + $0x1fc] sm:$0xff]
        %v7290 = vld [vmem:[%s11 + $0x204] sm:$0xff]
        %v7291 = vld [vmem:[%s11 + $0x20c] sm:$0xff]
        %v7292 = vld [vmem:[%s11 + $0x214] sm:$0xff]
        %v7293 = vld [vmem:[%s11 + $0x21c] sm:$0xf]
        %v7294 = vld [vmem:[%s11 + $0x220] sm:$0xff]
        %v7295 = vld [vmem:[%s11 + $0x228] sm:$0xff]
        %v7296 = vld [vmem:[%s11 + $0x230] sm:$0xff]
        %v7297 = vld [vmem:[%s11 + $0x238] sm:$0xff]
        %v7298 = vld [vmem:[%s11 + $0x240] sm:$0xff]
        %v7299 = vld [vmem:[%s11 + $0x248] sm:$0xff]
        %v7300 = vld [vmem:[%s11 + $0x250] sm:$0xff]
        %v7301 = vld [vmem:[%s11 + $0x258] sm:$0xff]
        %v7302 = vld [vmem:[%s11 + $0x260] sm:$0xf]
        %v7303 = vld [vmem:[%s11 + $0x264] sm:$0xff]
        %v7304 = vld [vmem:[%s11 + $0x26c] sm:$0xff]
        %v7305 = vld [vmem:[%s11 + $0x274] sm:$0xff]
        %v7306 = vld [vmem:[%s11 + $0x27c] sm:$0xff]
        %v7307 = vld [vmem:[%s11 + $0x284] sm:$0xff]
        %v7308 = vld [vmem:[%s11 + $0x28c] sm:$0xff]
        %v7309 = vld [vmem:[%s11 + $0x294] sm:$0xff]
        %v7310 = vld [vmem:[%s11 + $0x29c] sm:$0xff]
        %v7311 = vld [vmem:[%s11 + $0x2a4] sm:$0xf]
        %v7312 = vld [vmem:[%s11 + $0x2a8] sm:$0xff]
        %v7313 = vld [vmem:[%s11 + $0x2b0] sm:$0xff]
        %v7314 = vld [vmem:[%s11 + $0x2b8] sm:$0xff]
        %v7315 = vld [vmem:[%s11 + $0x2c0] sm:$0xff]
        %v7316 = vld [vmem:[%s11 + $0x2c8] sm:$0xff]
        %v7317 = vld [vmem:[%s11 + $0x2d0] sm:$0xff]
        %v7318 = vld [vmem:[%s11 + $0x2d8] sm:$0xff]
        %v7319 = vld [vmem:[%s11 + $0x2e0] sm:$0xff]
        %v7320 = vld [vmem:[%s11 + $0x2e8] sm:$0xf]
        %v7321 = vld [vmem:[%s11 + $0x2ec] sm:$0xff]
        %v7322 = vld [vmem:[%s11 + $0x2f4] sm:$0xff]
        %v7323 = vld [vmem:[%s11 + $0x2fc] sm:$0xff]
        %v7324 = vld [vmem:[%s11 + $0x304] sm:$0xff]
        %v7325 = vld [vmem:[%s11 + $0x30c] sm:$0xff]
        %v7326 = vld [vmem:[%s11 + $0x314] sm:$0xff]
        %v7327 = vld [vmem:[%s11 + $0x31c] sm:$0xff]
        %v7328 = vld [vmem:[%s11 + $0x324] sm:$0xff]
        %v7329 = vld [vmem:[%s11 + $0x32c] sm:$0xf]
        %v7330 = vld [vmem:[%s11 + $0x330] sm:$0xff]
        %v7331 = vld [vmem:[%s11 + $0x338] sm:$0xff]
        %v7332 = vld [vmem:[%s11 + $0x340] sm:$0xff]
        %v7333 = vld [vmem:[%s11 + $0x348] sm:$0xff]
        %v7334 = vld [vmem:[%s11 + $0x350] sm:$0xff]
        %v7335 = vld [vmem:[%s11 + $0x358] sm:$0xff]
        %v7336 = vld [vmem:[%s11 + $0x360] sm:$0xff]
        %v7337 = vld [vmem:[%s11 + $0x368] sm:$0xff]
        %v7338 = vld [vmem:[%s11 + $0x370] sm:$0xf]
        %v7339 = vld [vmem:[%s11 + $0x374] sm:$0xff]
        %v7340 = vld [vmem:[%s11 + $0x37c] sm:$0xff]
        %v7341 = vld [vmem:[%s11 + $0x384] sm:$0xff]
        %v7342 = vld [vmem:[%s11 + $0x38c] sm:$0xff]
        %v7343 = vld [vmem:[%s11 + $0x394] sm:$0xff]
        %v7344 = vld [vmem:[%s11 + $0x39c] sm:$0xff]
        %v7345 = vld [vmem:[%s11 + $0x3a4] sm:$0xff]
        %v7346 = vld [vmem:[%s11 + $0x3ac] sm:$0xff]
        %v7347 = vld [vmem:[%s11 + $0x3b4] sm:$0xf]
        %v7348 = vld [vmem:[%s11 + $0x3b8] sm:$0xff]
        %v7349 = vld [vmem:[%s11 + $0x3c0] sm:$0xff]
        %v7350 = vld [vmem:[%s11 + $0x3c8] sm:$0xff]
        %v7351 = vld [vmem:[%s11 + $0x3d0] sm:$0xff]
        %v7352 = vld [vmem:[%s11 + $0x3d8] sm:$0xff]
        %v7353 = vld [vmem:[%s11 + $0x3e0] sm:$0xff]
        %v7354 = vld [vmem:[%s11 + $0x3e8] sm:$0xff]
        %v7355 = vld [vmem:[%s11 + $0x3f0] sm:$0xff]
        %v7356 = vld [vmem:[%s11 + $0x3f8] sm:$0xf]
        %v7357 = vld [vmem:[%s11 + $0x3fc] sm:$0xff]
        %v7358 = vld [vmem:[%s11 + $0x404] sm:$0xff]
        %v7359 = vld [vmem:[%s11 + $0x40c] sm:$0xff]
        %v7360 = vld [vmem:[%s11 + $0x414] sm:$0xff]
        %v7361 = vld [vmem:[%s11 + $0x41c] sm:$0xff]
        %v7362 = vld [vmem:[%s11 + $0x424] sm:$0xff]
        %v7363 = vld [vmem:[%s11 + $0x42c] sm:$0xff]
        %v7364 = vld [vmem:[%s11 + $0x434] sm:$0xff]
        %v7365 = vld [vmem:[%s11 + $0x43c] sm:$0xf]
        %v7366 = vld [vmem:[%s11 + $0x440] sm:$0xff]
        %v7367 = vld [vmem:[%s11 + $0x448] sm:$0xff]
        %v7368 = vld [vmem:[%s11 + $0x450] sm:$0xff]
        %v7369 = vld [vmem:[%s11 + $0x458] sm:$0xff]
        %v7370 = vld [vmem:[%s11 + $0x460] sm:$0xff]
        %v7371 = vld [vmem:[%s11 + $0x468] sm:$0xff]
        %v7372 = vld [vmem:[%s11 + $0x470] sm:$0xff]
        %v7373 = vld [vmem:[%s11 + $0x478] sm:$0xff]
        %v7374 = vld [vmem:[%s11 + $0x480] sm:$0xf]
        %v7375 = vld [vmem:[%s11 + $0x484] sm:$0xff]
        %v7376 = vld [vmem:[%s11 + $0x48c] sm:$0xff]
        %v7377 = vld [vmem:[%s11 + $0x494] sm:$0xff]
        %v7378 = vld [vmem:[%s11 + $0x49c] sm:$0xff]
        %v7379 = vld [vmem:[%s11 + $0x4a4] sm:$0xff]
        %v7380 = vld [vmem:[%s11 + $0x4ac] sm:$0xff]
        %v7381 = vld [vmem:[%s11 + $0x4b4] sm:$0xff]
        %v7382 = vld [vmem:[%s11 + $0x4bc] sm:$0xff]
        %v7383 = vld [vmem:[%s11 + $0x4c4] sm:$0xf]
        %v7384 = vld [vmem:[%s11 + $0x4c8] sm:$0xff]
        %v7385 = vld [vmem:[%s11 + $0x4d0] sm:$0xff]
        %v7386 = vld [vmem:[%s11 + $0x4d8] sm:$0xff]
        %v7387 = vld [vmem:[%s11 + $0x4e0] sm:$0xff]
        %v7388 = vld [vmem:[%s11 + $0x4e8] sm:$0xff]
        %v7389 = vld [vmem:[%s11 + $0x4f0] sm:$0xff]
        %v7390 = vld [vmem:[%s11 + $0x4f8] sm:$0xff]
        %v7391 = vld [vmem:[%s11 + $0x500] sm:$0xff]
        %v7392 = vld [vmem:[%s11 + $0x508] sm:$0xf]
        %v7393 = vld [vmem:[%s11 + $0x50c] sm:$0xff]
        %v7394 = vld [vmem:[%s11 + $0x514] sm:$0xff]
        %v7395 = vld [vmem:[%s11 + $0x51c] sm:$0xff]
        %v7396 = vld [vmem:[%s11 + $0x524] sm:$0xff]
        %v7397 = vld [vmem:[%s11 + $0x52c] sm:$0xff]
        %v7398 = vld [vmem:[%s11 + $0x534] sm:$0xff]
        %v7399 = vld [vmem:[%s11 + $0x53c] sm:$0xff]
        %v7400 = vld [vmem:[%s11 + $0x544] sm:$0xff]
        %v7401 = vld [vmem:[%s11 + $0x54c] sm:$0xf]
        %v7402 = vld [vmem:[%s11 + $0x550] sm:$0xff]
        %v7403 = vld [vmem:[%s11 + $0x558] sm:$0xff]
        %v7404 = vld [vmem:[%s11 + $0x560] sm:$0xff]
        %v7405 = vld [vmem:[%s11 + $0x568] sm:$0xff]
        %v7406 = vld [vmem:[%s11 + $0x570] sm:$0xff]
        %v7407 = vld [vmem:[%s11 + $0x578] sm:$0xff]
        %v7408 = vld [vmem:[%s11 + $0x580] sm:$0xff]
        %v7409 = vld [vmem:[%s11 + $0x588] sm:$0xff]
        %v7410 = vld [vmem:[%s11 + $0x590] sm:$0xf]
        %v7411 = vld [vmem:[%s11 + $0x594] sm:$0xff]
        %v7412 = vld [vmem:[%s11 + $0x59c] sm:$0xff]
        %v7413 = vld [vmem:[%s11 + $0x5a4] sm:$0xff]
        %v7414 = vld [vmem:[%s11 + $0x5ac] sm:$0xff]
        %v7415 = vld [vmem:[%s11 + $0x5b4] sm:$0xff]
        %v7416 = vld [vmem:[%s11 + $0x5bc] sm:$0xff]
        %v7417 = vld [vmem:[%s11 + $0x5c4] sm:$0xff]
        %v7418 = vld [vmem:[%s11 + $0x5cc] sm:$0xff]
        %v7419 = vld [vmem:[%s11 + $0x5d4] sm:$0xf]
        %v7420 = vld [vmem:[%s11 + $0x5d8] sm:$0xff]
        %v7421 = vld [vmem:[%s11 + $0x5e0] sm:$0xff]
        %v7422 = vld [vmem:[%s11 + $0x5e8] sm:$0xff]
        %v7423 = vld [vmem:[%s11 + $0x5f0] sm:$0xff]
        %v7424 = vld [vmem:[%s11 + $0x5f8] sm:$0xff]
        %v7425 = vld [vmem:[%s11 + $0x600] sm:$0xff]
        %v7426 = vld [vmem:[%s11 + $0x608] sm:$0xff]
        %v7427 = vld [vmem:[%s11 + $0x610] sm:$0xff]
        %v7428 = vld [vmem:[%s11 + $0x618] sm:$0xf]
        %v7429 = vld [vmem:[%s11 + $0x61c] sm:$0xff]
        %v7430 = vld [vmem:[%s11 + $0x624] sm:$0xff]
        %v7431 = vld [vmem:[%s11 + $0x62c] sm:$0xff]
        %v7432 = vld [vmem:[%s11 + $0x634] sm:$0xff]
        %v7433 = vld [vmem:[%s11 + $0x63c] sm:$0xff]
        %v7434 = vld [vmem:[%s11 + $0x644] sm:$0xff]
        %v7435 = vld [vmem:[%s11 + $0x64c] sm:$0xff]
        %v7436 = vld [vmem:[%s11 + $0x654] sm:$0xff]
        %v7437 = vld [vmem:[%s11 + $0x65c] sm:$0xf]
        %v7438 = vpack.c.bf16 %v7200, %v7198
        %v7439 = vpack.c.bf16 %v7201, %v7199
        %v7440 = vpack.c.bf16 %v7204, %v7202
        %v7441 = vpack.c.bf16 %v7205, %v7203
        %v7442 = vpack.c.bf16 %v7208, %v7206
        %v7443 = vpack.c.bf16 %v7209, %v7207
        %v7444 = vpack.c.bf16 %v7212, %v7210
        %v7445 = vpack.c.bf16 %v7213, %v7211
        %v7446 = vld [vmem:[%s12] sm:$0xff]
        %v7447 = vld [vmem:[%s12 + $0x8] sm:$0xff]
        %v7448 = vld [vmem:[%s12 + $0x10] sm:$0xff]
        %v7449 = vld [vmem:[%s12 + $0x18] sm:$0xff]
        %v7450 = vld [vmem:[%s12 + $0x20] sm:$0xff]
        %v7451 = vld [vmem:[%s12 + $0x28] sm:$0xff]
        %v7452 = vld [vmem:[%s12 + $0x30] sm:$0xff]
        %v7453 = vld [vmem:[%s12 + $0x38] sm:$0xff]
        %v7454 = vld [vmem:[%s12 + $0x40] sm:$0xf]
        %v7455 = vld [vmem:[%s12 + $0x44] sm:$0xff]
        %v7456 = vld [vmem:[%s12 + $0x4c] sm:$0xff]
        %v7457 = vld [vmem:[%s12 + $0x54] sm:$0xff]
        %v7458 = vld [vmem:[%s12 + $0x5c] sm:$0xff]
        %v7459 = vld [vmem:[%s12 + $0x64] sm:$0xff]
        %v7460 = vld [vmem:[%s12 + $0x6c] sm:$0xff]
        %v7461 = vld [vmem:[%s12 + $0x74] sm:$0xff]
        %v7462 = vld [vmem:[%s12 + $0x7c] sm:$0xff]
        %v7463 = vld [vmem:[%s12 + $0x84] sm:$0xf]
        %v7464 = vld [vmem:[%s12 + $0x88] sm:$0xff]
        %v7465 = vld [vmem:[%s12 + $0x90] sm:$0xff]
        %v7466 = vld [vmem:[%s12 + $0x98] sm:$0xff]
        %v7467 = vld [vmem:[%s12 + $0xa0] sm:$0xff]
        %v7468 = vld [vmem:[%s12 + $0xa8] sm:$0xff]
        %v7469 = vld [vmem:[%s12 + $0xb0] sm:$0xff]
        %v7470 = vld [vmem:[%s12 + $0xb8] sm:$0xff]
        %v7471 = vld [vmem:[%s12 + $0xc0] sm:$0xff]
        %v7472 = vld [vmem:[%s12 + $0xc8] sm:$0xf]
        %v7473 = vld [vmem:[%s12 + $0xcc] sm:$0xff]
        %v7474 = vld [vmem:[%s12 + $0xd4] sm:$0xff]
        %v7475 = vld [vmem:[%s12 + $0xdc] sm:$0xff]
        %v7476 = vld [vmem:[%s12 + $0xe4] sm:$0xff]
        %v7477 = vld [vmem:[%s12 + $0xec] sm:$0xff]
        %v7478 = vld [vmem:[%s12 + $0xf4] sm:$0xff]
        %v7479 = vld [vmem:[%s12 + $0xfc] sm:$0xff]
        %v7480 = vld [vmem:[%s12 + $0x104] sm:$0xff]
        %v7481 = vld [vmem:[%s12 + $0x10c] sm:$0xf]
        %v7482 = vld [vmem:[%s12 + $0x110] sm:$0xff]
        %v7483 = vld [vmem:[%s12 + $0x118] sm:$0xff]
        %v7484 = vld [vmem:[%s12 + $0x120] sm:$0xff]
        %v7485 = vld [vmem:[%s12 + $0x128] sm:$0xff]
        %v7486 = vld [vmem:[%s12 + $0x130] sm:$0xff]
        %v7487 = vld [vmem:[%s12 + $0x138] sm:$0xff]
        %v7488 = vld [vmem:[%s12 + $0x140] sm:$0xff]
        %v7489 = vld [vmem:[%s12 + $0x148] sm:$0xff]
        %v7490 = vld [vmem:[%s12 + $0x150] sm:$0xf]
        %v7491 = vld [vmem:[%s12 + $0x154] sm:$0xff]
        %v7492 = vld [vmem:[%s12 + $0x15c] sm:$0xff]
        %v7493 = vld [vmem:[%s12 + $0x164] sm:$0xff]
        %v7494 = vld [vmem:[%s12 + $0x16c] sm:$0xff]
        %v7495 = vld [vmem:[%s12 + $0x174] sm:$0xff]
        %v7496 = vld [vmem:[%s12 + $0x17c] sm:$0xff]
        %v7497 = vld [vmem:[%s12 + $0x184] sm:$0xff]
        %v7498 = vld [vmem:[%s12 + $0x18c] sm:$0xff]
        %v7499 = vld [vmem:[%s12 + $0x194] sm:$0xf]
        %v7500 = vld [vmem:[%s12 + $0x198] sm:$0xff]
        %v7501 = vld [vmem:[%s12 + $0x1a0] sm:$0xff]
        %v7502 = vld [vmem:[%s12 + $0x1a8] sm:$0xff]
        %v7503 = vld [vmem:[%s12 + $0x1b0] sm:$0xff]
        %v7504 = vld [vmem:[%s12 + $0x1b8] sm:$0xff]
        %v7505 = vld [vmem:[%s12 + $0x1c0] sm:$0xff]
        %v7506 = vld [vmem:[%s12 + $0x1c8] sm:$0xff]
        %v7507 = vld [vmem:[%s12 + $0x1d0] sm:$0xff]
        %v7508 = vld [vmem:[%s12 + $0x1d8] sm:$0xf]
        %v7509 = vld [vmem:[%s12 + $0x1dc] sm:$0xff]
        %v7510 = vld [vmem:[%s12 + $0x1e4] sm:$0xff]
        %v7511 = vld [vmem:[%s12 + $0x1ec] sm:$0xff]
        %v7512 = vld [vmem:[%s12 + $0x1f4] sm:$0xff]
        %v7513 = vld [vmem:[%s12 + $0x1fc] sm:$0xff]
        %v7514 = vld [vmem:[%s12 + $0x204] sm:$0xff]
        %v7515 = vld [vmem:[%s12 + $0x20c] sm:$0xff]
        %v7516 = vld [vmem:[%s12 + $0x214] sm:$0xff]
        %v7517 = vld [vmem:[%s12 + $0x21c] sm:$0xf]
        %v7518 = vld [vmem:[%s12 + $0x220] sm:$0xff]
        %v7519 = vld [vmem:[%s12 + $0x228] sm:$0xff]
        %v7520 = vld [vmem:[%s12 + $0x230] sm:$0xff]
        %v7521 = vld [vmem:[%s12 + $0x238] sm:$0xff]
        %v7522 = vld [vmem:[%s12 + $0x240] sm:$0xff]
        %v7523 = vld [vmem:[%s12 + $0x248] sm:$0xff]
        %v7524 = vld [vmem:[%s12 + $0x250] sm:$0xff]
        %v7525 = vld [vmem:[%s12 + $0x258] sm:$0xff]
        %v7526 = vld [vmem:[%s12 + $0x260] sm:$0xf]
        %v7527 = vld [vmem:[%s12 + $0x264] sm:$0xff]
        %v7528 = vld [vmem:[%s12 + $0x26c] sm:$0xff]
        %v7529 = vld [vmem:[%s12 + $0x274] sm:$0xff]
        %v7530 = vld [vmem:[%s12 + $0x27c] sm:$0xff]
        %v7531 = vld [vmem:[%s12 + $0x284] sm:$0xff]
        %v7532 = vld [vmem:[%s12 + $0x28c] sm:$0xff]
        %v7533 = vld [vmem:[%s12 + $0x294] sm:$0xff]
        %v7534 = vld [vmem:[%s12 + $0x29c] sm:$0xff]
        %v7535 = vld [vmem:[%s12 + $0x2a4] sm:$0xf]
        %v7536 = vld [vmem:[%s12 + $0x2a8] sm:$0xff]
        %v7537 = vld [vmem:[%s12 + $0x2b0] sm:$0xff]
        %v7538 = vld [vmem:[%s12 + $0x2b8] sm:$0xff]
        %v7539 = vld [vmem:[%s12 + $0x2c0] sm:$0xff]
        %v7540 = vld [vmem:[%s12 + $0x2c8] sm:$0xff]
        %v7541 = vld [vmem:[%s12 + $0x2d0] sm:$0xff]
        %v7542 = vld [vmem:[%s12 + $0x2d8] sm:$0xff]
        %v7543 = vld [vmem:[%s12 + $0x2e0] sm:$0xff]
        %v7544 = vld [vmem:[%s12 + $0x2e8] sm:$0xf]
        %v7545 = vld [vmem:[%s12 + $0x2ec] sm:$0xff]
        %v7546 = vld [vmem:[%s12 + $0x2f4] sm:$0xff]
        %v7547 = vld [vmem:[%s12 + $0x2fc] sm:$0xff]
        %v7548 = vld [vmem:[%s12 + $0x304] sm:$0xff]
        %v7549 = vld [vmem:[%s12 + $0x30c] sm:$0xff]
        %v7550 = vld [vmem:[%s12 + $0x314] sm:$0xff]
        %v7551 = vld [vmem:[%s12 + $0x31c] sm:$0xff]
        %v7552 = vld [vmem:[%s12 + $0x324] sm:$0xff]
        %v7553 = vld [vmem:[%s12 + $0x32c] sm:$0xf]
        %v7554 = vld [vmem:[%s12 + $0x330] sm:$0xff]
        %v7555 = vld [vmem:[%s12 + $0x338] sm:$0xff]
        %v7556 = vld [vmem:[%s12 + $0x340] sm:$0xff]
        %v7557 = vld [vmem:[%s12 + $0x348] sm:$0xff]
        %v7558 = vld [vmem:[%s12 + $0x350] sm:$0xff]
        %v7559 = vld [vmem:[%s12 + $0x358] sm:$0xff]
        %v7560 = vld [vmem:[%s12 + $0x360] sm:$0xff]
        %v7561 = vld [vmem:[%s12 + $0x368] sm:$0xff]
        %v7562 = vld [vmem:[%s12 + $0x370] sm:$0xf]
        %v7563 = vld [vmem:[%s12 + $0x374] sm:$0xff]
        %v7564 = vld [vmem:[%s12 + $0x37c] sm:$0xff]
        %v7565 = vld [vmem:[%s12 + $0x384] sm:$0xff]
        %v7566 = vld [vmem:[%s12 + $0x38c] sm:$0xff]
        %v7567 = vld [vmem:[%s12 + $0x394] sm:$0xff]
        %v7568 = vld [vmem:[%s12 + $0x39c] sm:$0xff]
        %v7569 = vld [vmem:[%s12 + $0x3a4] sm:$0xff]
        %v7570 = vld [vmem:[%s12 + $0x3ac] sm:$0xff]
        %v7571 = vld [vmem:[%s12 + $0x3b4] sm:$0xf]
        %v7572 = vld [vmem:[%s12 + $0x3b8] sm:$0xff]
        %v7573 = vld [vmem:[%s12 + $0x3c0] sm:$0xff]
        %v7574 = vld [vmem:[%s12 + $0x3c8] sm:$0xff]
        %v7575 = vld [vmem:[%s12 + $0x3d0] sm:$0xff]
        %v7576 = vld [vmem:[%s12 + $0x3d8] sm:$0xff]
        %v7577 = vld [vmem:[%s12 + $0x3e0] sm:$0xff]
        %v7578 = vld [vmem:[%s12 + $0x3e8] sm:$0xff]
        %v7579 = vld [vmem:[%s12 + $0x3f0] sm:$0xff]
        %v7580 = vld [vmem:[%s12 + $0x3f8] sm:$0xf]
        %v7581 = vld [vmem:[%s12 + $0x3fc] sm:$0xff]
        %v7582 = vld [vmem:[%s12 + $0x404] sm:$0xff]
        %v7583 = vld [vmem:[%s12 + $0x40c] sm:$0xff]
        %v7584 = vld [vmem:[%s12 + $0x414] sm:$0xff]
        %v7585 = vld [vmem:[%s12 + $0x41c] sm:$0xff]
        %v7586 = vld [vmem:[%s12 + $0x424] sm:$0xff]
        %v7587 = vld [vmem:[%s12 + $0x42c] sm:$0xff]
        %v7588 = vld [vmem:[%s12 + $0x434] sm:$0xff]
        %v7589 = vld [vmem:[%s12 + $0x43c] sm:$0xf]
        %v7590 = vld [vmem:[%s12 + $0x440] sm:$0xff]
        %v7591 = vld [vmem:[%s12 + $0x448] sm:$0xff]
        %v7592 = vld [vmem:[%s12 + $0x450] sm:$0xff]
        %v7593 = vld [vmem:[%s12 + $0x458] sm:$0xff]
        %v7594 = vld [vmem:[%s12 + $0x460] sm:$0xff]
        %v7595 = vld [vmem:[%s12 + $0x468] sm:$0xff]
        %v7596 = vld [vmem:[%s12 + $0x470] sm:$0xff]
        %v7597 = vld [vmem:[%s12 + $0x478] sm:$0xff]
        %v7598 = vld [vmem:[%s12 + $0x480] sm:$0xf]
        %v7599 = vld [vmem:[%s12 + $0x484] sm:$0xff]
        %v7600 = vld [vmem:[%s12 + $0x48c] sm:$0xff]
        %v7601 = vld [vmem:[%s12 + $0x494] sm:$0xff]
        %v7602 = vld [vmem:[%s12 + $0x49c] sm:$0xff]
        %v7603 = vld [vmem:[%s12 + $0x4a4] sm:$0xff]
        %v7604 = vld [vmem:[%s12 + $0x4ac] sm:$0xff]
        %v7605 = vld [vmem:[%s12 + $0x4b4] sm:$0xff]
        %v7606 = vld [vmem:[%s12 + $0x4bc] sm:$0xff]
        %v7607 = vld [vmem:[%s12 + $0x4c4] sm:$0xf]
        %v7608 = vld [vmem:[%s12 + $0x4c8] sm:$0xff]
        %v7609 = vld [vmem:[%s12 + $0x4d0] sm:$0xff]
        %v7610 = vld [vmem:[%s12 + $0x4d8] sm:$0xff]
        %v7611 = vld [vmem:[%s12 + $0x4e0] sm:$0xff]
        %v7612 = vld [vmem:[%s12 + $0x4e8] sm:$0xff]
        %v7613 = vld [vmem:[%s12 + $0x4f0] sm:$0xff]
        %v7614 = vld [vmem:[%s12 + $0x4f8] sm:$0xff]
        %v7615 = vld [vmem:[%s12 + $0x500] sm:$0xff]
        %v7616 = vld [vmem:[%s12 + $0x508] sm:$0xf]
        %v7617 = vld [vmem:[%s12 + $0x50c] sm:$0xff]
        %v7618 = vld [vmem:[%s12 + $0x514] sm:$0xff]
        %v7619 = vld [vmem:[%s12 + $0x51c] sm:$0xff]
        %v7620 = vld [vmem:[%s12 + $0x524] sm:$0xff]
        %v7621 = vld [vmem:[%s12 + $0x52c] sm:$0xff]
        %v7622 = vld [vmem:[%s12 + $0x534] sm:$0xff]
        %v7623 = vld [vmem:[%s12 + $0x53c] sm:$0xff]
        %v7624 = vld [vmem:[%s12 + $0x544] sm:$0xff]
        %v7625 = vld [vmem:[%s12 + $0x54c] sm:$0xf]
        %v7626 = vld [vmem:[%s12 + $0x550] sm:$0xff]
        %v7627 = vld [vmem:[%s12 + $0x558] sm:$0xff]
        %v7628 = vld [vmem:[%s12 + $0x560] sm:$0xff]
        %v7629 = vld [vmem:[%s12 + $0x568] sm:$0xff]
        %v7630 = vld [vmem:[%s12 + $0x570] sm:$0xff]
        %v7631 = vld [vmem:[%s12 + $0x578] sm:$0xff]
        %v7632 = vld [vmem:[%s12 + $0x580] sm:$0xff]
        %v7633 = vld [vmem:[%s12 + $0x588] sm:$0xff]
        %v7634 = vld [vmem:[%s12 + $0x590] sm:$0xf]
        %v7635 = vld [vmem:[%s12 + $0x594] sm:$0xff]
        %v7636 = vld [vmem:[%s12 + $0x59c] sm:$0xff]
        %v7637 = vld [vmem:[%s12 + $0x5a4] sm:$0xff]
        %v7638 = vld [vmem:[%s12 + $0x5ac] sm:$0xff]
        %v7639 = vld [vmem:[%s12 + $0x5b4] sm:$0xff]
        %v7640 = vld [vmem:[%s12 + $0x5bc] sm:$0xff]
        %v7641 = vld [vmem:[%s12 + $0x5c4] sm:$0xff]
        %v7642 = vld [vmem:[%s12 + $0x5cc] sm:$0xff]
        %v7643 = vld [vmem:[%s12 + $0x5d4] sm:$0xf]
        %v7644 = vld [vmem:[%s12 + $0x5d8] sm:$0xff]
        %v7645 = vld [vmem:[%s12 + $0x5e0] sm:$0xff]
        %v7646 = vld [vmem:[%s12 + $0x5e8] sm:$0xff]
        %v7647 = vld [vmem:[%s12 + $0x5f0] sm:$0xff]
        %v7648 = vld [vmem:[%s12 + $0x5f8] sm:$0xff]
        %v7649 = vld [vmem:[%s12 + $0x600] sm:$0xff]
        %v7650 = vld [vmem:[%s12 + $0x608] sm:$0xff]
        %v7651 = vld [vmem:[%s12 + $0x610] sm:$0xff]
        %v7652 = vld [vmem:[%s12 + $0x618] sm:$0xf]
        %v7653 = vld [vmem:[%s12 + $0x61c] sm:$0xff]
        %v7654 = vld [vmem:[%s12 + $0x624] sm:$0xff]
        %v7655 = vld [vmem:[%s12 + $0x62c] sm:$0xff]
        %v7656 = vld [vmem:[%s12 + $0x634] sm:$0xff]
        %v7657 = vld [vmem:[%s12 + $0x63c] sm:$0xff]
        %v7658 = vld [vmem:[%s12 + $0x644] sm:$0xff]
        %v7659 = vld [vmem:[%s12 + $0x64c] sm:$0xff]
        %v7660 = vld [vmem:[%s12 + $0x654] sm:$0xff]
        %v7661 = vld [vmem:[%s12 + $0x65c] sm:$0xf]
        %v7662 = vld [vmem:[%s12 + $0x660] sm:$0xff]
        %v7663 = vld [vmem:[%s12 + $0x668] sm:$0xff]
        %v7664 = vld [vmem:[%s12 + $0x670] sm:$0xff]
        %v7665 = vld [vmem:[%s12 + $0x678] sm:$0xff]
        %v7666 = vld [vmem:[%s12 + $0x680] sm:$0xff]
        %v7667 = vld [vmem:[%s12 + $0x688] sm:$0xff]
        %v7668 = vld [vmem:[%s12 + $0x690] sm:$0xff]
        %v7669 = vld [vmem:[%s12 + $0x698] sm:$0xff]
        %v7670 = vld [vmem:[%s12 + $0x6a0] sm:$0xf]
        %v7671 = vld [vmem:[%s12 + $0x6a4] sm:$0xff]
        %v7672 = vld [vmem:[%s12 + $0x6ac] sm:$0xff]
        %v7673 = vld [vmem:[%s12 + $0x6b4] sm:$0xff]
        %v7674 = vld [vmem:[%s12 + $0x6bc] sm:$0xff]
        %v7675 = vld [vmem:[%s12 + $0x6c4] sm:$0xff]
        %v7676 = vld [vmem:[%s12 + $0x6cc] sm:$0xff]
        %v7677 = vld [vmem:[%s12 + $0x6d4] sm:$0xff]
        %v7678 = vld [vmem:[%s12 + $0x6dc] sm:$0xff]
        %v7679 = vld [vmem:[%s12 + $0x6e4] sm:$0xf]
        %v7680 = vld [vmem:[%s12 + $0x6e8] sm:$0xff]
        %v7681 = vld [vmem:[%s12 + $0x6f0] sm:$0xff]
        %v7682 = vld [vmem:[%s12 + $0x6f8] sm:$0xff]
        %v7683 = vld [vmem:[%s12 + $0x700] sm:$0xff]
        %v7684 = vld [vmem:[%s12 + $0x708] sm:$0xff]
        %v7685 = vld [vmem:[%s12 + $0x710] sm:$0xff]
        %v7686 = vld [vmem:[%s12 + $0x718] sm:$0xff]
        %v7687 = vld [vmem:[%s12 + $0x720] sm:$0xff]
        %v7688 = vld [vmem:[%s12 + $0x728] sm:$0xf]
        %v7689 = vld [vmem:[%s12 + $0x72c] sm:$0xff]
        %v7690 = vld [vmem:[%s12 + $0x734] sm:$0xff]
        %v7691 = vld [vmem:[%s12 + $0x73c] sm:$0xff]
        %v7692 = vld [vmem:[%s12 + $0x744] sm:$0xff]
        %v7693 = vld [vmem:[%s12 + $0x74c] sm:$0xff]
        %v7694 = vld [vmem:[%s12 + $0x754] sm:$0xff]
        %v7695 = vld [vmem:[%s12 + $0x75c] sm:$0xff]
        %v7696 = vld [vmem:[%s12 + $0x764] sm:$0xff]
        %v7697 = vld [vmem:[%s12 + $0x76c] sm:$0xf]
        %v7698 = vld [vmem:[%s12 + $0x770] sm:$0xff]
        %v7699 = vld [vmem:[%s12 + $0x778] sm:$0xff]
        %v7700 = vld [vmem:[%s12 + $0x780] sm:$0xff]
        %v7701 = vld [vmem:[%s12 + $0x788] sm:$0xff]
        %v7702 = vld [vmem:[%s12 + $0x790] sm:$0xff]
        %v7703 = vld [vmem:[%s12 + $0x798] sm:$0xff]
        %v7704 = vld [vmem:[%s12 + $0x7a0] sm:$0xff]
        %v7705 = vld [vmem:[%s12 + $0x7a8] sm:$0xff]
        %v7706 = vld [vmem:[%s12 + $0x7b0] sm:$0xf]
        %v7707 = vld [vmem:[%s12 + $0x7b4] sm:$0xff]
        %v7708 = vld [vmem:[%s12 + $0x7bc] sm:$0xff]
        %v7709 = vld [vmem:[%s12 + $0x7c4] sm:$0xff]
        %v7710 = vld [vmem:[%s12 + $0x7cc] sm:$0xff]
        %v7711 = vld [vmem:[%s12 + $0x7d4] sm:$0xff]
        %v7712 = vld [vmem:[%s12 + $0x7dc] sm:$0xff]
        %v7713 = vld [vmem:[%s12 + $0x7e4] sm:$0xff]
        %v7714 = vld [vmem:[%s12 + $0x7ec] sm:$0xff]
        %v7715 = vld [vmem:[%s12 + $0x7f4] sm:$0xf]
        %v7716 = vld [vmem:[%s12 + $0x7f8] sm:$0xff]
        %v7717 = vld [vmem:[%s12 + $0x800] sm:$0xff]
        %v7718 = vld [vmem:[%s12 + $0x808] sm:$0xff]
        %v7719 = vld [vmem:[%s12 + $0x810] sm:$0xff]
        %v7720 = vld [vmem:[%s12 + $0x818] sm:$0xff]
        %v7721 = vld [vmem:[%s12 + $0x820] sm:$0xff]
        %v7722 = vld [vmem:[%s12 + $0x828] sm:$0xff]
        %v7723 = vld [vmem:[%s12 + $0x830] sm:$0xff]
        %v7724 = vld [vmem:[%s12 + $0x838] sm:$0xf]
        %v7725 = vld [vmem:[%s12 + $0x83c] sm:$0xff]
        %v7726 = vld [vmem:[%s12 + $0x844] sm:$0xff]
        %v7727 = vld [vmem:[%s12 + $0x84c] sm:$0xff]
        %v7728 = vld [vmem:[%s12 + $0x854] sm:$0xff]
        %v7729 = vld [vmem:[%s12 + $0x85c] sm:$0xff]
        %v7730 = vld [vmem:[%s12 + $0x864] sm:$0xff]
        %v7731 = vld [vmem:[%s12 + $0x86c] sm:$0xff]
        %v7732 = vld [vmem:[%s12 + $0x874] sm:$0xff]
        %v7733 = vld [vmem:[%s12 + $0x87c] sm:$0xf]
        %v8022 = vunpack.c.l.b16 %v7446
        %v8023 = vunpack.c.h.b16 %v7446
        %v8024 = vunpack.c.l.b16 %v7447
        %v8025 = vunpack.c.h.b16 %v7447
        %v8026 = vunpack.c.l.b16 %v7448
        %v8027 = vunpack.c.h.b16 %v7448
        %v8028 = vunpack.c.l.b16 %v7449
        %v8029 = vunpack.c.h.b16 %v7449
        %v8030 = vunpack.c.l.b16 %v7450
        %v8031 = vunpack.c.h.b16 %v7450
        %v8032 = vunpack.c.l.b16 %v7451
        %v8033 = vunpack.c.h.b16 %v7451
        %v8034 = vunpack.c.l.b16 %v7452
        %v8035 = vunpack.c.h.b16 %v7452
        %v8036 = vunpack.c.l.b16 %v7453
        %v8037 = vunpack.c.h.b16 %v7453
        %v8038 = vunpack.c.l.b16 %v7454
        %v8039 = vunpack.c.l.b16 %v7455
        %v8040 = vunpack.c.h.b16 %v7455
        %v8041 = vunpack.c.l.b16 %v7456
        %v8042 = vunpack.c.h.b16 %v7456
        %v8043 = vunpack.c.l.b16 %v7457
        %v8044 = vunpack.c.h.b16 %v7457
        %v8045 = vunpack.c.l.b16 %v7458
        %v8046 = vunpack.c.h.b16 %v7458
        %v8047 = vunpack.c.l.b16 %v7459
        %v8048 = vunpack.c.h.b16 %v7459
        %v8049 = vunpack.c.l.b16 %v7460
        %v8050 = vunpack.c.h.b16 %v7460
        %v8051 = vunpack.c.l.b16 %v7461
        %v8052 = vunpack.c.h.b16 %v7461
        %v8053 = vunpack.c.l.b16 %v7462
        %v8054 = vunpack.c.h.b16 %v7462
        %v8055 = vunpack.c.l.b16 %v7463
        %v8056 = vunpack.c.l.b16 %v7464
        %v8057 = vunpack.c.h.b16 %v7464
        %v8058 = vunpack.c.l.b16 %v7465
        %v8059 = vunpack.c.h.b16 %v7465
        %v8060 = vunpack.c.l.b16 %v7466
        %v8061 = vunpack.c.h.b16 %v7466
        %v8062 = vunpack.c.l.b16 %v7467
        %v8063 = vunpack.c.h.b16 %v7467
        %v8064 = vunpack.c.l.b16 %v7468
        %v8065 = vunpack.c.h.b16 %v7468
        %v8066 = vunpack.c.l.b16 %v7469
        %v8067 = vunpack.c.h.b16 %v7469
        %v8068 = vunpack.c.l.b16 %v7470
        %v8069 = vunpack.c.h.b16 %v7470
        %v8070 = vunpack.c.l.b16 %v7471
        %v8071 = vunpack.c.h.b16 %v7471
        %v8072 = vunpack.c.l.b16 %v7472
        %v8073 = vunpack.c.l.b16 %v7473
        %v8074 = vunpack.c.h.b16 %v7473
        %v8075 = vunpack.c.l.b16 %v7474
        %v8076 = vunpack.c.h.b16 %v7474
        %v8077 = vunpack.c.l.b16 %v7475
        %v8078 = vunpack.c.h.b16 %v7475
        %v8079 = vunpack.c.l.b16 %v7476
        %v8080 = vunpack.c.h.b16 %v7476
        %v8081 = vunpack.c.l.b16 %v7477
        %v8082 = vunpack.c.h.b16 %v7477
        %v8083 = vunpack.c.l.b16 %v7478
        %v8084 = vunpack.c.h.b16 %v7478
        %v8085 = vunpack.c.l.b16 %v7479
        %v8086 = vunpack.c.h.b16 %v7479
        %v8087 = vunpack.c.l.b16 %v7480
        %v8088 = vunpack.c.h.b16 %v7480
        %v8089 = vunpack.c.l.b16 %v7481
        %v8090 = vunpack.c.l.b16 %v7482
        %v8091 = vunpack.c.h.b16 %v7482
        %v8092 = vunpack.c.l.b16 %v7483
        %v8093 = vunpack.c.h.b16 %v7483
        %v8094 = vunpack.c.l.b16 %v7484
        %v8095 = vunpack.c.h.b16 %v7484
        %v8096 = vunpack.c.l.b16 %v7485
        %v8097 = vunpack.c.h.b16 %v7485
        %v8098 = vunpack.c.l.b16 %v7486
        %v8099 = vunpack.c.h.b16 %v7486
        %v8100 = vunpack.c.l.b16 %v7487
        %v8101 = vunpack.c.h.b16 %v7487
        %v8102 = vunpack.c.l.b16 %v7488
        %v8103 = vunpack.c.h.b16 %v7488
        %v8104 = vunpack.c.l.b16 %v7489
        %v8105 = vunpack.c.h.b16 %v7489
        %v8106 = vunpack.c.l.b16 %v7490
        %v8107 = vunpack.c.l.b16 %v7491
        %v8108 = vunpack.c.h.b16 %v7491
        %v8109 = vunpack.c.l.b16 %v7492
        %v8110 = vunpack.c.h.b16 %v7492
        %v8111 = vunpack.c.l.b16 %v7493
        %v8112 = vunpack.c.h.b16 %v7493
        %v8113 = vunpack.c.l.b16 %v7494
        %v8114 = vunpack.c.h.b16 %v7494
        %v8115 = vunpack.c.l.b16 %v7495
        %v8116 = vunpack.c.h.b16 %v7495
        %v8117 = vunpack.c.l.b16 %v7496
        %v8118 = vunpack.c.h.b16 %v7496
        %v8119 = vunpack.c.l.b16 %v7497
        %v8120 = vunpack.c.h.b16 %v7497
        %v8121 = vunpack.c.l.b16 %v7498
        %v8122 = vunpack.c.h.b16 %v7498
        %v8123 = vunpack.c.l.b16 %v7499
        %v8124 = vunpack.c.l.b16 %v7500
        %v8125 = vunpack.c.h.b16 %v7500
        %v8126 = vunpack.c.l.b16 %v7501
        %v8127 = vunpack.c.h.b16 %v7501
        %v8128 = vunpack.c.l.b16 %v7502
        %v8129 = vunpack.c.h.b16 %v7502
        %v8130 = vunpack.c.l.b16 %v7503
        %v8131 = vunpack.c.h.b16 %v7503
        %v8132 = vunpack.c.l.b16 %v7504
        %v8133 = vunpack.c.h.b16 %v7504
        %v8134 = vunpack.c.l.b16 %v7505
        %v8135 = vunpack.c.h.b16 %v7505
        %v8136 = vunpack.c.l.b16 %v7506
        %v8137 = vunpack.c.h.b16 %v7506
        %v8138 = vunpack.c.l.b16 %v7507
        %v8139 = vunpack.c.h.b16 %v7507
        %v8140 = vunpack.c.l.b16 %v7508
        %v8141 = vunpack.c.l.b16 %v7509
        %v8142 = vunpack.c.h.b16 %v7509
        %v8143 = vunpack.c.l.b16 %v7510
        %v8144 = vunpack.c.h.b16 %v7510
        %v8145 = vunpack.c.l.b16 %v7511
        %v8146 = vunpack.c.h.b16 %v7511
        %v8147 = vunpack.c.l.b16 %v7512
        %v8148 = vunpack.c.h.b16 %v7512
        %v8149 = vunpack.c.l.b16 %v7513
        %v8150 = vunpack.c.h.b16 %v7513
        %v8151 = vunpack.c.l.b16 %v7514
        %v8152 = vunpack.c.h.b16 %v7514
        %v8153 = vunpack.c.l.b16 %v7515
        %v8154 = vunpack.c.h.b16 %v7515
        %v8155 = vunpack.c.l.b16 %v7516
        %v8156 = vunpack.c.h.b16 %v7516
        %v8157 = vunpack.c.l.b16 %v7517
        %v8158 = vunpack.c.l.b16 %v7518
        %v8159 = vunpack.c.h.b16 %v7518
        %v8160 = vunpack.c.l.b16 %v7519
        %v8161 = vunpack.c.h.b16 %v7519
        %v8162 = vunpack.c.l.b16 %v7520
        %v8163 = vunpack.c.h.b16 %v7520
        %v8164 = vunpack.c.l.b16 %v7521
        %v8165 = vunpack.c.h.b16 %v7521
        %v8166 = vunpack.c.l.b16 %v7522
        %v8167 = vunpack.c.h.b16 %v7522
        %v8168 = vunpack.c.l.b16 %v7523
        %v8169 = vunpack.c.h.b16 %v7523
        %v8170 = vunpack.c.l.b16 %v7524
        %v8171 = vunpack.c.h.b16 %v7524
        %v8172 = vunpack.c.l.b16 %v7525
        %v8173 = vunpack.c.h.b16 %v7525
        %v8174 = vunpack.c.l.b16 %v7526
        %v8175 = vunpack.c.l.b16 %v7527
        %v8176 = vunpack.c.h.b16 %v7527
        %v8177 = vunpack.c.l.b16 %v7528
        %v8178 = vunpack.c.h.b16 %v7528
        %v8179 = vunpack.c.l.b16 %v7529
        %v8180 = vunpack.c.h.b16 %v7529
        %v8181 = vunpack.c.l.b16 %v7530
        %v8182 = vunpack.c.h.b16 %v7530
        %v8183 = vunpack.c.l.b16 %v7531
        %v8184 = vunpack.c.h.b16 %v7531
        %v8185 = vunpack.c.l.b16 %v7532
        %v8186 = vunpack.c.h.b16 %v7532
        %v8187 = vunpack.c.l.b16 %v7533
        %v8188 = vunpack.c.h.b16 %v7533
        %v8189 = vunpack.c.l.b16 %v7534
        %v8190 = vunpack.c.h.b16 %v7534
        %v8191 = vunpack.c.l.b16 %v7535
        %v8192 = vunpack.c.l.b16 %v7536
        %v8193 = vunpack.c.h.b16 %v7536
        %v8194 = vunpack.c.l.b16 %v7537
        %v8195 = vunpack.c.h.b16 %v7537
        %v8196 = vunpack.c.l.b16 %v7538
        %v8197 = vunpack.c.h.b16 %v7538
        %v8198 = vunpack.c.l.b16 %v7539
        %v8199 = vunpack.c.h.b16 %v7539
        %v8200 = vunpack.c.l.b16 %v7540
        %v8201 = vunpack.c.h.b16 %v7540
        %v8202 = vunpack.c.l.b16 %v7541
        %v8203 = vunpack.c.h.b16 %v7541
        %v8204 = vunpack.c.l.b16 %v7542
        %v8205 = vunpack.c.h.b16 %v7542
        %v8206 = vunpack.c.l.b16 %v7543
        %v8207 = vunpack.c.h.b16 %v7543
        %v8208 = vunpack.c.l.b16 %v7544
        %v8209 = vunpack.c.l.b16 %v7545
        %v8210 = vunpack.c.h.b16 %v7545
        %v8211 = vunpack.c.l.b16 %v7546
        %v8212 = vunpack.c.h.b16 %v7546
        %v8213 = vunpack.c.l.b16 %v7547
        %v8214 = vunpack.c.h.b16 %v7547
        %v8215 = vunpack.c.l.b16 %v7548
        %v8216 = vunpack.c.h.b16 %v7548
        %v8217 = vunpack.c.l.b16 %v7549
        %v8218 = vunpack.c.h.b16 %v7549
        %v8219 = vunpack.c.l.b16 %v7550
        %v8220 = vunpack.c.h.b16 %v7550
        %v8221 = vunpack.c.l.b16 %v7551
        %v8222 = vunpack.c.h.b16 %v7551
        %v8223 = vunpack.c.l.b16 %v7552
        %v8224 = vunpack.c.h.b16 %v7552
        %v8225 = vunpack.c.l.b16 %v7553
        %v8226 = vunpack.c.l.b16 %v7554
        %v8227 = vunpack.c.h.b16 %v7554
        %v8228 = vunpack.c.l.b16 %v7555
        %v8229 = vunpack.c.h.b16 %v7555
        %v8230 = vunpack.c.l.b16 %v7556
        %v8231 = vunpack.c.h.b16 %v7556
        %v8232 = vunpack.c.l.b16 %v7557
        %v8233 = vunpack.c.h.b16 %v7557
        %v8234 = vunpack.c.l.b16 %v7558
        %v8235 = vunpack.c.h.b16 %v7558
        %v8236 = vunpack.c.l.b16 %v7559
        %v8237 = vunpack.c.h.b16 %v7559
        %v8238 = vunpack.c.l.b16 %v7560
        %v8239 = vunpack.c.h.b16 %v7560
        %v8240 = vunpack.c.l.b16 %v7561
        %v8241 = vunpack.c.h.b16 %v7561
        %v8242 = vunpack.c.l.b16 %v7562
        %v8243 = vunpack.c.l.b16 %v7563
        %v8244 = vunpack.c.h.b16 %v7563
        %v8245 = vunpack.c.l.b16 %v7564
        %v8246 = vunpack.c.h.b16 %v7564
        %v8247 = vunpack.c.l.b16 %v7565
        %v8248 = vunpack.c.h.b16 %v7565
        %v8249 = vunpack.c.l.b16 %v7566
        %v8250 = vunpack.c.h.b16 %v7566
        %v8251 = vunpack.c.l.b16 %v7567
        %v8252 = vunpack.c.h.b16 %v7567
        %v8253 = vunpack.c.l.b16 %v7568
        %v8254 = vunpack.c.h.b16 %v7568
        %v8255 = vunpack.c.l.b16 %v7569
        %v8256 = vunpack.c.h.b16 %v7569
        %v8257 = vunpack.c.l.b16 %v7570
        %v8258 = vunpack.c.h.b16 %v7570
        %v8259 = vunpack.c.l.b16 %v7571
        %v8260 = vunpack.c.l.b16 %v7572
        %v8261 = vunpack.c.h.b16 %v7572
        %v8262 = vunpack.c.l.b16 %v7573
        %v8263 = vunpack.c.h.b16 %v7573
        %v8264 = vunpack.c.l.b16 %v7574
        %v8265 = vunpack.c.h.b16 %v7574
        %v8266 = vunpack.c.l.b16 %v7575
        %v8267 = vunpack.c.h.b16 %v7575
        %v8268 = vunpack.c.l.b16 %v7576
        %v8269 = vunpack.c.h.b16 %v7576
        %v8270 = vunpack.c.l.b16 %v7577
        %v8271 = vunpack.c.h.b16 %v7577
        %v8272 = vunpack.c.l.b16 %v7578
        %v8273 = vunpack.c.h.b16 %v7578
        %v8274 = vunpack.c.l.b16 %v7579
        %v8275 = vunpack.c.h.b16 %v7579
        %v8276 = vunpack.c.l.b16 %v7580
        %v8277 = vunpack.c.l.b16 %v7581
        %v8278 = vunpack.c.h.b16 %v7581
        %v8279 = vunpack.c.l.b16 %v7582
        %v8280 = vunpack.c.h.b16 %v7582
        %v8281 = vunpack.c.l.b16 %v7583
        %v8282 = vunpack.c.h.b16 %v7583
        %v8283 = vunpack.c.l.b16 %v7584
        %v8284 = vunpack.c.h.b16 %v7584
        %v8285 = vunpack.c.l.b16 %v7585
        %v8286 = vunpack.c.h.b16 %v7585
        %v8287 = vunpack.c.l.b16 %v7586
        %v8288 = vunpack.c.h.b16 %v7586
        %v8289 = vunpack.c.l.b16 %v7587
        %v8290 = vunpack.c.h.b16 %v7587
        %v8291 = vunpack.c.l.b16 %v7588
        %v8292 = vunpack.c.h.b16 %v7588
        %v8293 = vunpack.c.l.b16 %v7589
        %v8294 = vunpack.c.l.b16 %v7590
        %v8295 = vunpack.c.h.b16 %v7590
        %v8296 = vunpack.c.l.b16 %v7591
        %v8297 = vunpack.c.h.b16 %v7591
        %v8298 = vunpack.c.l.b16 %v7592
        %v8299 = vunpack.c.h.b16 %v7592
        %v8300 = vunpack.c.l.b16 %v7593
        %v8301 = vunpack.c.h.b16 %v7593
        %v8302 = vunpack.c.l.b16 %v7594
        %v8303 = vunpack.c.h.b16 %v7594
        %v8304 = vunpack.c.l.b16 %v7595
        %v8305 = vunpack.c.h.b16 %v7595
        %v8306 = vunpack.c.l.b16 %v7596
        %v8307 = vunpack.c.h.b16 %v7596
        %v8308 = vunpack.c.l.b16 %v7597
        %v8309 = vunpack.c.h.b16 %v7597
        %v8310 = vunpack.c.l.b16 %v7598
        %v8311 = vunpack.c.l.b16 %v7599
        %v8312 = vunpack.c.h.b16 %v7599
        %v8313 = vunpack.c.l.b16 %v7600
        %v8314 = vunpack.c.h.b16 %v7600
        %v8315 = vunpack.c.l.b16 %v7601
        %v8316 = vunpack.c.h.b16 %v7601
        %v8317 = vunpack.c.l.b16 %v7602
        %v8318 = vunpack.c.h.b16 %v7602
        %v8319 = vunpack.c.l.b16 %v7603
        %v8320 = vunpack.c.h.b16 %v7603
        %v8321 = vunpack.c.l.b16 %v7604
        %v8322 = vunpack.c.h.b16 %v7604
        %v8323 = vunpack.c.l.b16 %v7605
        %v8324 = vunpack.c.h.b16 %v7605
        %v8325 = vunpack.c.l.b16 %v7606
        %v8326 = vunpack.c.h.b16 %v7606
        %v8327 = vunpack.c.l.b16 %v7607
        %v8328 = vunpack.c.l.b16 %v7608
        %v8329 = vunpack.c.h.b16 %v7608
        %v8330 = vunpack.c.l.b16 %v7609
        %v8331 = vunpack.c.h.b16 %v7609
        %v8332 = vunpack.c.l.b16 %v7610
        %v8333 = vunpack.c.h.b16 %v7610
        %v8334 = vunpack.c.l.b16 %v7611
        %v8335 = vunpack.c.h.b16 %v7611
        %v8336 = vunpack.c.l.b16 %v7612
        %v8337 = vunpack.c.h.b16 %v7612
        %v8338 = vunpack.c.l.b16 %v7613
        %v8339 = vunpack.c.h.b16 %v7613
        %v8340 = vunpack.c.l.b16 %v7614
        %v8341 = vunpack.c.h.b16 %v7614
        %v8342 = vunpack.c.l.b16 %v7615
        %v8343 = vunpack.c.h.b16 %v7615
        %v8344 = vunpack.c.l.b16 %v7616
        %v8345 = vunpack.c.l.b16 %v7617
        %v8346 = vunpack.c.h.b16 %v7617
        %v8347 = vunpack.c.l.b16 %v7618
        %v8348 = vunpack.c.h.b16 %v7618
        %v8349 = vunpack.c.l.b16 %v7619
        %v8350 = vunpack.c.h.b16 %v7619
        %v8351 = vunpack.c.l.b16 %v7620
        %v8352 = vunpack.c.h.b16 %v7620
        %v8353 = vunpack.c.l.b16 %v7621
        %v8354 = vunpack.c.h.b16 %v7621
        %v8355 = vunpack.c.l.b16 %v7622
        %v8356 = vunpack.c.h.b16 %v7622
        %v8357 = vunpack.c.l.b16 %v7623
        %v8358 = vunpack.c.h.b16 %v7623
        %v8359 = vunpack.c.l.b16 %v7624
        %v8360 = vunpack.c.h.b16 %v7624
        %v8361 = vunpack.c.l.b16 %v7625
        %v8362 = vunpack.c.l.b16 %v7626
        %v8363 = vunpack.c.h.b16 %v7626
        %v8364 = vunpack.c.l.b16 %v7627
        %v8365 = vunpack.c.h.b16 %v7627
        %v8366 = vunpack.c.l.b16 %v7628
        %v8367 = vunpack.c.h.b16 %v7628
        %v8368 = vunpack.c.l.b16 %v7629
        %v8369 = vunpack.c.h.b16 %v7629
        %v8370 = vunpack.c.l.b16 %v7630
        %v8371 = vunpack.c.h.b16 %v7630
        %v8372 = vunpack.c.l.b16 %v7631
        %v8373 = vunpack.c.h.b16 %v7631
        %v8374 = vunpack.c.l.b16 %v7632
        %v8375 = vunpack.c.h.b16 %v7632
        %v8376 = vunpack.c.l.b16 %v7633
        %v8377 = vunpack.c.h.b16 %v7633
        %v8378 = vunpack.c.l.b16 %v7634
        %v8379 = vunpack.c.l.b16 %v7635
        %v8380 = vunpack.c.h.b16 %v7635
        %v8381 = vunpack.c.l.b16 %v7636
        %v8382 = vunpack.c.h.b16 %v7636
        %v8383 = vunpack.c.l.b16 %v7637
        %v8384 = vunpack.c.h.b16 %v7637
        %v8385 = vunpack.c.l.b16 %v7638
        %v8386 = vunpack.c.h.b16 %v7638
        %v8387 = vunpack.c.l.b16 %v7639
        %v8388 = vunpack.c.h.b16 %v7639
        %v8389 = vunpack.c.l.b16 %v7640
        %v8390 = vunpack.c.h.b16 %v7640
        %v8391 = vunpack.c.l.b16 %v7641
        %v8392 = vunpack.c.h.b16 %v7641
        %v8393 = vunpack.c.l.b16 %v7642
        %v8394 = vunpack.c.h.b16 %v7642
        %v8395 = vunpack.c.l.b16 %v7643
        %v8396 = vunpack.c.l.b16 %v7644
        %v8397 = vunpack.c.h.b16 %v7644
        %v8398 = vunpack.c.l.b16 %v7645
        %v8399 = vunpack.c.h.b16 %v7645
        %v8400 = vunpack.c.l.b16 %v7646
        %v8401 = vunpack.c.h.b16 %v7646
        %v8402 = vunpack.c.l.b16 %v7647
        %v8403 = vunpack.c.h.b16 %v7647
        %v8404 = vunpack.c.l.b16 %v7648
        %v8405 = vunpack.c.h.b16 %v7648
        %v8406 = vunpack.c.l.b16 %v7649
        %v8407 = vunpack.c.h.b16 %v7649
        %v8408 = vunpack.c.l.b16 %v7650
        %v8409 = vunpack.c.h.b16 %v7650
        %v8410 = vunpack.c.l.b16 %v7651
        %v8411 = vunpack.c.h.b16 %v7651
        %v8412 = vunpack.c.l.b16 %v7652
        %v8413 = vunpack.c.l.b16 %v7653
        %v8414 = vunpack.c.h.b16 %v7653
        %v8415 = vunpack.c.l.b16 %v7654
        %v8416 = vunpack.c.h.b16 %v7654
        %v8417 = vunpack.c.l.b16 %v7655
        %v8418 = vunpack.c.h.b16 %v7655
        %v8419 = vunpack.c.l.b16 %v7656
        %v8420 = vunpack.c.h.b16 %v7656
        %v8421 = vunpack.c.l.b16 %v7657
        %v8422 = vunpack.c.h.b16 %v7657
        %v8423 = vunpack.c.l.b16 %v7658
        %v8424 = vunpack.c.h.b16 %v7658
        %v8425 = vunpack.c.l.b16 %v7659
        %v8426 = vunpack.c.h.b16 %v7659
        %v8427 = vunpack.c.l.b16 %v7660
        %v8428 = vunpack.c.h.b16 %v7660
        %v8429 = vunpack.c.l.b16 %v7661
        %v8430 = vunpack.c.l.b16 %v7662
        %v8431 = vunpack.c.h.b16 %v7662
        %v8432 = vunpack.c.l.b16 %v7663
        %v8433 = vunpack.c.h.b16 %v7663
        %v8434 = vunpack.c.l.b16 %v7664
        %v8435 = vunpack.c.h.b16 %v7664
        %v8436 = vunpack.c.l.b16 %v7665
        %v8437 = vunpack.c.h.b16 %v7665
        %v8438 = vunpack.c.l.b16 %v7666
        %v8439 = vunpack.c.h.b16 %v7666
        %v8440 = vunpack.c.l.b16 %v7667
        %v8441 = vunpack.c.h.b16 %v7667
        %v8442 = vunpack.c.l.b16 %v7668
        %v8443 = vunpack.c.h.b16 %v7668
        %v8444 = vunpack.c.l.b16 %v7669
        %v8445 = vunpack.c.h.b16 %v7669
        %v8446 = vunpack.c.l.b16 %v7670
        %v8447 = vunpack.c.l.b16 %v7671
        %v8448 = vunpack.c.h.b16 %v7671
        %v8449 = vunpack.c.l.b16 %v7672
        %v8450 = vunpack.c.h.b16 %v7672
        %v8451 = vunpack.c.l.b16 %v7673
        %v8452 = vunpack.c.h.b16 %v7673
        %v8453 = vunpack.c.l.b16 %v7674
        %v8454 = vunpack.c.h.b16 %v7674
        %v8455 = vunpack.c.l.b16 %v7675
        %v8456 = vunpack.c.h.b16 %v7675
        %v8457 = vunpack.c.l.b16 %v7676
        %v8458 = vunpack.c.h.b16 %v7676
        %v8459 = vunpack.c.l.b16 %v7677
        %v8460 = vunpack.c.h.b16 %v7677
        %v8461 = vunpack.c.l.b16 %v7678
        %v8462 = vunpack.c.h.b16 %v7678
        %v8463 = vunpack.c.l.b16 %v7679
        %v8464 = vunpack.c.l.b16 %v7680
        %v8465 = vunpack.c.h.b16 %v7680
        %v8466 = vunpack.c.l.b16 %v7681
        %v8467 = vunpack.c.h.b16 %v7681
        %v8468 = vunpack.c.l.b16 %v7682
        %v8469 = vunpack.c.h.b16 %v7682
        %v8470 = vunpack.c.l.b16 %v7683
        %v8471 = vunpack.c.h.b16 %v7683
        %v8472 = vunpack.c.l.b16 %v7684
        %v8473 = vunpack.c.h.b16 %v7684
        %v8474 = vunpack.c.l.b16 %v7685
        %v8475 = vunpack.c.h.b16 %v7685
        %v8476 = vunpack.c.l.b16 %v7686
        %v8477 = vunpack.c.h.b16 %v7686
        %v8478 = vunpack.c.l.b16 %v7687
        %v8479 = vunpack.c.h.b16 %v7687
        %v8480 = vunpack.c.l.b16 %v7688
        %v8481 = vunpack.c.l.b16 %v7689
        %v8482 = vunpack.c.h.b16 %v7689
        %v8483 = vunpack.c.l.b16 %v7690
        %v8484 = vunpack.c.h.b16 %v7690
        %v8485 = vunpack.c.l.b16 %v7691
        %v8486 = vunpack.c.h.b16 %v7691
        %v8487 = vunpack.c.l.b16 %v7692
        %v8488 = vunpack.c.h.b16 %v7692
        %v8489 = vunpack.c.l.b16 %v7693
        %v8490 = vunpack.c.h.b16 %v7693
        %v8491 = vunpack.c.l.b16 %v7694
        %v8492 = vunpack.c.h.b16 %v7694
        %v8493 = vunpack.c.l.b16 %v7695
        %v8494 = vunpack.c.h.b16 %v7695
        %v8495 = vunpack.c.l.b16 %v7696
        %v8496 = vunpack.c.h.b16 %v7696
        %v8497 = vunpack.c.l.b16 %v7697
        %v8498 = vunpack.c.l.b16 %v7698
        %v8499 = vunpack.c.h.b16 %v7698
        %v8500 = vunpack.c.l.b16 %v7699
        %v8501 = vunpack.c.h.b16 %v7699
        %v8502 = vunpack.c.l.b16 %v7700
        %v8503 = vunpack.c.h.b16 %v7700
        %v8504 = vunpack.c.l.b16 %v7701
        %v8505 = vunpack.c.h.b16 %v7701
        %v8506 = vunpack.c.l.b16 %v7702
        %v8507 = vunpack.c.h.b16 %v7702
        %v8508 = vunpack.c.l.b16 %v7703
        %v8509 = vunpack.c.h.b16 %v7703
        %v8510 = vunpack.c.l.b16 %v7704
        %v8511 = vunpack.c.h.b16 %v7704
        %v8512 = vunpack.c.l.b16 %v7705
        %v8513 = vunpack.c.h.b16 %v7705
        %v8514 = vunpack.c.l.b16 %v7706
        %v8515 = vunpack.c.l.b16 %v7707
        %v8516 = vunpack.c.h.b16 %v7707
        %v8517 = vunpack.c.l.b16 %v7708
        %v8518 = vunpack.c.h.b16 %v7708
        %v8519 = vunpack.c.l.b16 %v7709
        %v8520 = vunpack.c.h.b16 %v7709
        %v8521 = vunpack.c.l.b16 %v7710
        %v8522 = vunpack.c.h.b16 %v7710
        %v8523 = vunpack.c.l.b16 %v7711
        %v8524 = vunpack.c.h.b16 %v7711
        %v8525 = vunpack.c.l.b16 %v7712
        %v8526 = vunpack.c.h.b16 %v7712
        %v8527 = vunpack.c.l.b16 %v7713
        %v8528 = vunpack.c.h.b16 %v7713
        %v8529 = vunpack.c.l.b16 %v7714
        %v8530 = vunpack.c.h.b16 %v7714
        %v8531 = vunpack.c.l.b16 %v7715
        %v8532 = vunpack.c.l.b16 %v7716
        %v8533 = vunpack.c.h.b16 %v7716
        %v8534 = vunpack.c.l.b16 %v7717
        %v8535 = vunpack.c.h.b16 %v7717
        %v8536 = vunpack.c.l.b16 %v7718
        %v8537 = vunpack.c.h.b16 %v7718
        %v8538 = vunpack.c.l.b16 %v7719
        %v8539 = vunpack.c.h.b16 %v7719
        %v8540 = vunpack.c.l.b16 %v7720
        %v8541 = vunpack.c.h.b16 %v7720
        %v8542 = vunpack.c.l.b16 %v7721
        %v8543 = vunpack.c.h.b16 %v7721
        %v8544 = vunpack.c.l.b16 %v7722
        %v8545 = vunpack.c.h.b16 %v7722
        %v8546 = vunpack.c.l.b16 %v7723
        %v8547 = vunpack.c.h.b16 %v7723
        %v8548 = vunpack.c.l.b16 %v7724
        %v8549 = vunpack.c.l.b16 %v7725
        %v8550 = vunpack.c.h.b16 %v7725
        %v8551 = vunpack.c.l.b16 %v7726
        %v8552 = vunpack.c.h.b16 %v7726
        %v8553 = vunpack.c.l.b16 %v7727
        %v8554 = vunpack.c.h.b16 %v7727
        %v8555 = vunpack.c.l.b16 %v7728
        %v8556 = vunpack.c.h.b16 %v7728
        %v8557 = vunpack.c.l.b16 %v7729
        %v8558 = vunpack.c.h.b16 %v7729
        %v8559 = vunpack.c.l.b16 %v7730
        %v8560 = vunpack.c.h.b16 %v7730
        %v8561 = vunpack.c.l.b16 %v7731
        %v8562 = vunpack.c.h.b16 %v7731
        %v8563 = vunpack.c.l.b16 %v7732
        %v8564 = vunpack.c.h.b16 %v7732
        %v8565 = vunpack.c.l.b16 %v7733
        %v8566 = vpack.c.b16 %v8039, %v8022
        %v8567 = vpack.c.b16 %v8040, %v8023
        %v8568 = vpack.c.b16 %v8041, %v8024
        %v8569 = vpack.c.b16 %v8042, %v8025
        %v8570 = vpack.c.b16 %v8043, %v8026
        %v8571 = vpack.c.b16 %v8044, %v8027
        %v8572 = vpack.c.b16 %v8045, %v8028
        %v8573 = vpack.c.b16 %v8046, %v8029
        %v8574 = vpack.c.b16 %v8047, %v8030
        %v8575 = vpack.c.b16 %v8048, %v8031
        %v8576 = vpack.c.b16 %v8049, %v8032
        %v8577 = vpack.c.b16 %v8050, %v8033
        %v8578 = vpack.c.b16 %v8051, %v8034
        %v8579 = vpack.c.b16 %v8052, %v8035
        %v8580 = vpack.c.b16 %v8053, %v8036
        %v8581 = vpack.c.b16 %v8054, %v8037
        %v8582 = vpack.c.b16 %v8055, %v8038
        %v8583 = vpack.c.b16 %v8073, %v8056
        %v8584 = vpack.c.b16 %v8074, %v8057
        %v8585 = vpack.c.b16 %v8075, %v8058
        %v8586 = vpack.c.b16 %v8076, %v8059
        %v8587 = vpack.c.b16 %v8077, %v8060
        %v8588 = vpack.c.b16 %v8078, %v8061
        %v8589 = vpack.c.b16 %v8079, %v8062
        %v8590 = vpack.c.b16 %v8080, %v8063
        %v8591 = vpack.c.b16 %v8081, %v8064
        %v8592 = vpack.c.b16 %v8082, %v8065
        %v8593 = vpack.c.b16 %v8083, %v8066
        %v8594 = vpack.c.b16 %v8084, %v8067
        %v8595 = vpack.c.b16 %v8085, %v8068
        %v8596 = vpack.c.b16 %v8086, %v8069
        %v8597 = vpack.c.b16 %v8087, %v8070
        %v8598 = vpack.c.b16 %v8088, %v8071
        %v8599 = vpack.c.b16 %v8089, %v8072
        %v8600 = vpack.c.b16 %v8107, %v8090
        %v8601 = vpack.c.b16 %v8108, %v8091
        %v8602 = vpack.c.b16 %v8109, %v8092
        %v8603 = vpack.c.b16 %v8110, %v8093
        %v8604 = vpack.c.b16 %v8111, %v8094
        %v8605 = vpack.c.b16 %v8112, %v8095
        %v8606 = vpack.c.b16 %v8113, %v8096
        %v8607 = vpack.c.b16 %v8114, %v8097
        %v8608 = vpack.c.b16 %v8115, %v8098
        %v8609 = vpack.c.b16 %v8116, %v8099
        %v8610 = vpack.c.b16 %v8117, %v8100
        %v8611 = vpack.c.b16 %v8118, %v8101
        %v8612 = vpack.c.b16 %v8119, %v8102
        %v8613 = vpack.c.b16 %v8120, %v8103
        %v8614 = vpack.c.b16 %v8121, %v8104
        %v8615 = vpack.c.b16 %v8122, %v8105
        %v8616 = vpack.c.b16 %v8123, %v8106
        %v8617 = vpack.c.b16 %v8141, %v8124
        %v8618 = vpack.c.b16 %v8142, %v8125
        %v8619 = vpack.c.b16 %v8143, %v8126
        %v8620 = vpack.c.b16 %v8144, %v8127
        %v8621 = vpack.c.b16 %v8145, %v8128
        %v8622 = vpack.c.b16 %v8146, %v8129
        %v8623 = vpack.c.b16 %v8147, %v8130
        %v8624 = vpack.c.b16 %v8148, %v8131
        %v8625 = vpack.c.b16 %v8149, %v8132
        %v8626 = vpack.c.b16 %v8150, %v8133
        %v8627 = vpack.c.b16 %v8151, %v8134
        %v8628 = vpack.c.b16 %v8152, %v8135
        %v8629 = vpack.c.b16 %v8153, %v8136
        %v8630 = vpack.c.b16 %v8154, %v8137
        %v8631 = vpack.c.b16 %v8155, %v8138
        %v8632 = vpack.c.b16 %v8156, %v8139
        %v8633 = vpack.c.b16 %v8157, %v8140
        %v8634 = vpack.c.b16 %v8175, %v8158
        %v8635 = vpack.c.b16 %v8176, %v8159
        %v8636 = vpack.c.b16 %v8177, %v8160
        %v8637 = vpack.c.b16 %v8178, %v8161
        %v8638 = vpack.c.b16 %v8179, %v8162
        %v8639 = vpack.c.b16 %v8180, %v8163
        %v8640 = vpack.c.b16 %v8181, %v8164
        %v8641 = vpack.c.b16 %v8182, %v8165
        %v8642 = vpack.c.b16 %v8183, %v8166
        %v8643 = vpack.c.b16 %v8184, %v8167
        %v8644 = vpack.c.b16 %v8185, %v8168
        %v8645 = vpack.c.b16 %v8186, %v8169
        %v8646 = vpack.c.b16 %v8187, %v8170
        %v8647 = vpack.c.b16 %v8188, %v8171
        %v8648 = vpack.c.b16 %v8189, %v8172
        %v8649 = vpack.c.b16 %v8190, %v8173
        %v8650 = vpack.c.b16 %v8191, %v8174
        %v8651 = vpack.c.b16 %v8209, %v8192
        %v8652 = vpack.c.b16 %v8210, %v8193
        %v8653 = vpack.c.b16 %v8211, %v8194
        %v8654 = vpack.c.b16 %v8212, %v8195
        %v8655 = vpack.c.b16 %v8213, %v8196
        %v8656 = vpack.c.b16 %v8214, %v8197
        %v8657 = vpack.c.b16 %v8215, %v8198
        %v8658 = vpack.c.b16 %v8216, %v8199
        %v8659 = vpack.c.b16 %v8217, %v8200
        %v8660 = vpack.c.b16 %v8218, %v8201
        %v8661 = vpack.c.b16 %v8219, %v8202
        %v8662 = vpack.c.b16 %v8220, %v8203
        %v8663 = vpack.c.b16 %v8221, %v8204
        %v8664 = vpack.c.b16 %v8222, %v8205
        %v8665 = vpack.c.b16 %v8223, %v8206
        %v8666 = vpack.c.b16 %v8224, %v8207
        %v8667 = vpack.c.b16 %v8225, %v8208
        %v8668 = vpack.c.b16 %v8243, %v8226
        %v8669 = vpack.c.b16 %v8244, %v8227
        %v8670 = vpack.c.b16 %v8245, %v8228
        %v8671 = vpack.c.b16 %v8246, %v8229
        %v8672 = vpack.c.b16 %v8247, %v8230
        %v8673 = vpack.c.b16 %v8248, %v8231
        %v8674 = vpack.c.b16 %v8249, %v8232
        %v8675 = vpack.c.b16 %v8250, %v8233
        %v8676 = vpack.c.b16 %v8251, %v8234
        %v8677 = vpack.c.b16 %v8252, %v8235
        %v8678 = vpack.c.b16 %v8253, %v8236
        %v8679 = vpack.c.b16 %v8254, %v8237
        %v8680 = vpack.c.b16 %v8255, %v8238
        %v8681 = vpack.c.b16 %v8256, %v8239
        %v8682 = vpack.c.b16 %v8257, %v8240
        %v8683 = vpack.c.b16 %v8258, %v8241
        %v8684 = vpack.c.b16 %v8259, %v8242
        %v8685 = vpack.c.b16 %v8277, %v8260
        %v8686 = vpack.c.b16 %v8278, %v8261
        %v8687 = vpack.c.b16 %v8279, %v8262
        %v8688 = vpack.c.b16 %v8280, %v8263
        %v8689 = vpack.c.b16 %v8281, %v8264
        %v8690 = vpack.c.b16 %v8282, %v8265
        %v8691 = vpack.c.b16 %v8283, %v8266
        %v8692 = vpack.c.b16 %v8284, %v8267
        %v8693 = vpack.c.b16 %v8285, %v8268
        %v8694 = vpack.c.b16 %v8286, %v8269
        %v8695 = vpack.c.b16 %v8287, %v8270
        %v8696 = vpack.c.b16 %v8288, %v8271
        %v8697 = vpack.c.b16 %v8289, %v8272
        %v8698 = vpack.c.b16 %v8290, %v8273
        %v8699 = vpack.c.b16 %v8291, %v8274
        %v8700 = vpack.c.b16 %v8292, %v8275
        %v8701 = vpack.c.b16 %v8293, %v8276
        %v8702 = vpack.c.b16 %v8311, %v8294
        %v8703 = vpack.c.b16 %v8312, %v8295
        %v8704 = vpack.c.b16 %v8313, %v8296
        %v8705 = vpack.c.b16 %v8314, %v8297
        %v8706 = vpack.c.b16 %v8315, %v8298
        %v8707 = vpack.c.b16 %v8316, %v8299
        %v8708 = vpack.c.b16 %v8317, %v8300
        %v8709 = vpack.c.b16 %v8318, %v8301
        %v8710 = vpack.c.b16 %v8319, %v8302
        %v8711 = vpack.c.b16 %v8320, %v8303
        %v8712 = vpack.c.b16 %v8321, %v8304
        %v8713 = vpack.c.b16 %v8322, %v8305
        %v8714 = vpack.c.b16 %v8323, %v8306
        %v8715 = vpack.c.b16 %v8324, %v8307
        %v8716 = vpack.c.b16 %v8325, %v8308
        %v8717 = vpack.c.b16 %v8326, %v8309
        %v8718 = vpack.c.b16 %v8327, %v8310
        %v8719 = vpack.c.b16 %v8345, %v8328
        %v8720 = vpack.c.b16 %v8346, %v8329
        %v8721 = vpack.c.b16 %v8347, %v8330
        %v8722 = vpack.c.b16 %v8348, %v8331
        %v8723 = vpack.c.b16 %v8349, %v8332
        %v8724 = vpack.c.b16 %v8350, %v8333
        %v8725 = vpack.c.b16 %v8351, %v8334
        %v8726 = vpack.c.b16 %v8352, %v8335
        %v8727 = vpack.c.b16 %v8353, %v8336
        %v8728 = vpack.c.b16 %v8354, %v8337
        %v8729 = vpack.c.b16 %v8355, %v8338
        %v8730 = vpack.c.b16 %v8356, %v8339
        %v8731 = vpack.c.b16 %v8357, %v8340
        %v8732 = vpack.c.b16 %v8358, %v8341
        %v8733 = vpack.c.b16 %v8359, %v8342
        %v8734 = vpack.c.b16 %v8360, %v8343
        %v8735 = vpack.c.b16 %v8361, %v8344
        %v8736 = vpack.c.b16 %v8379, %v8362
        %v8737 = vpack.c.b16 %v8380, %v8363
        %v8738 = vpack.c.b16 %v8381, %v8364
        %v8739 = vpack.c.b16 %v8382, %v8365
        %v8740 = vpack.c.b16 %v8383, %v8366
        %v8741 = vpack.c.b16 %v8384, %v8367
        %v8742 = vpack.c.b16 %v8385, %v8368
        %v8743 = vpack.c.b16 %v8386, %v8369
        %v8744 = vpack.c.b16 %v8387, %v8370
        %v8745 = vpack.c.b16 %v8388, %v8371
        %v8746 = vpack.c.b16 %v8389, %v8372
        %v8747 = vpack.c.b16 %v8390, %v8373
        %v8748 = vpack.c.b16 %v8391, %v8374
        %v8749 = vpack.c.b16 %v8392, %v8375
        %v8750 = vpack.c.b16 %v8393, %v8376
        %v8751 = vpack.c.b16 %v8394, %v8377
        %v8752 = vpack.c.b16 %v8395, %v8378
        %v8753 = vpack.c.b16 %v8413, %v8396
        %v8754 = vpack.c.b16 %v8414, %v8397
        %v8755 = vpack.c.b16 %v8415, %v8398
        %v8756 = vpack.c.b16 %v8416, %v8399
        %v8757 = vpack.c.b16 %v8417, %v8400
        %v8758 = vpack.c.b16 %v8418, %v8401
        %v8759 = vpack.c.b16 %v8419, %v8402
        %v8760 = vpack.c.b16 %v8420, %v8403
        %v8761 = vpack.c.b16 %v8421, %v8404
        %v8762 = vpack.c.b16 %v8422, %v8405
        %v8763 = vpack.c.b16 %v8423, %v8406
        %v8764 = vpack.c.b16 %v8424, %v8407
        %v8765 = vpack.c.b16 %v8425, %v8408
        %v8766 = vpack.c.b16 %v8426, %v8409
        %v8767 = vpack.c.b16 %v8427, %v8410
        %v8768 = vpack.c.b16 %v8428, %v8411
        %v8769 = vpack.c.b16 %v8429, %v8412
        %v8770 = vpack.c.b16 %v8447, %v8430
        %v8771 = vpack.c.b16 %v8448, %v8431
        %v8772 = vpack.c.b16 %v8449, %v8432
        %v8773 = vpack.c.b16 %v8450, %v8433
        %v8774 = vpack.c.b16 %v8451, %v8434
        %v8775 = vpack.c.b16 %v8452, %v8435
        %v8776 = vpack.c.b16 %v8453, %v8436
        %v8777 = vpack.c.b16 %v8454, %v8437
        %v8778 = vpack.c.b16 %v8455, %v8438
        %v8779 = vpack.c.b16 %v8456, %v8439
        %v8780 = vpack.c.b16 %v8457, %v8440
        %v8781 = vpack.c.b16 %v8458, %v8441
        %v8782 = vpack.c.b16 %v8459, %v8442
        %v8783 = vpack.c.b16 %v8460, %v8443
        %v8784 = vpack.c.b16 %v8461, %v8444
        %v8785 = vpack.c.b16 %v8462, %v8445
        %v8786 = vpack.c.b16 %v8463, %v8446
        %v8787 = vpack.c.b16 %v8481, %v8464
        %v8788 = vpack.c.b16 %v8482, %v8465
        %v8789 = vpack.c.b16 %v8483, %v8466
        %v8790 = vpack.c.b16 %v8484, %v8467
        %v8791 = vpack.c.b16 %v8485, %v8468
        %v8792 = vpack.c.b16 %v8486, %v8469
        %v8793 = vpack.c.b16 %v8487, %v8470
        %v8794 = vpack.c.b16 %v8488, %v8471
        %v8795 = vpack.c.b16 %v8489, %v8472
        %v8796 = vpack.c.b16 %v8490, %v8473
        %v8797 = vpack.c.b16 %v8491, %v8474
        %v8798 = vpack.c.b16 %v8492, %v8475
        %v8799 = vpack.c.b16 %v8493, %v8476
        %v8800 = vpack.c.b16 %v8494, %v8477
        %v8801 = vpack.c.b16 %v8495, %v8478
        %v8802 = vpack.c.b16 %v8496, %v8479
        %v8803 = vpack.c.b16 %v8497, %v8480
        %v8804 = vpack.c.b16 %v8515, %v8498
        %v8805 = vpack.c.b16 %v8516, %v8499
        %v8806 = vpack.c.b16 %v8517, %v8500
        %v8807 = vpack.c.b16 %v8518, %v8501
        %v8808 = vpack.c.b16 %v8519, %v8502
        %v8809 = vpack.c.b16 %v8520, %v8503
        %v8810 = vpack.c.b16 %v8521, %v8504
        %v8811 = vpack.c.b16 %v8522, %v8505
        %v8812 = vpack.c.b16 %v8523, %v8506
        %v8813 = vpack.c.b16 %v8524, %v8507
        %v8814 = vpack.c.b16 %v8525, %v8508
        %v8815 = vpack.c.b16 %v8526, %v8509
        %v8816 = vpack.c.b16 %v8527, %v8510
        %v8817 = vpack.c.b16 %v8528, %v8511
        %v8818 = vpack.c.b16 %v8529, %v8512
        %v8819 = vpack.c.b16 %v8530, %v8513
        %v8820 = vpack.c.b16 %v8531, %v8514
        %v8821 = vpack.c.b16 %v8549, %v8532
        %v8822 = vpack.c.b16 %v8550, %v8533
        %v8823 = vpack.c.b16 %v8551, %v8534
        %v8824 = vpack.c.b16 %v8552, %v8535
        %v8825 = vpack.c.b16 %v8553, %v8536
        %v8826 = vpack.c.b16 %v8554, %v8537
        %v8827 = vpack.c.b16 %v8555, %v8538
        %v8828 = vpack.c.b16 %v8556, %v8539
        %v8829 = vpack.c.b16 %v8557, %v8540
        %v8830 = vpack.c.b16 %v8558, %v8541
        %v8831 = vpack.c.b16 %v8559, %v8542
        %v8832 = vpack.c.b16 %v8560, %v8543
        %v8833 = vpack.c.b16 %v8561, %v8544
        %v8834 = vpack.c.b16 %v8562, %v8545
        %v8835 = vpack.c.b16 %v8563, %v8546
        %v8836 = vpack.c.b16 %v8564, %v8547
        %v8837 = vpack.c.b16 %v8565, %v8548
        %9110 = vmatprep.subr.bf16.mxu0 %v8686
        %9111 = vmatpush1.bf16.msra.mxu0 %v8685
        %9112 = vmatprep.subr.bf16.mxu0 %v8669
        %9113 = vmatpush1.bf16.msra.mxu0 %v8668
        %9114 = vmatprep.subr.bf16.mxu0 %v8652
        %9115 = vmatpush1.bf16.msra.mxu0 %v8651
        %9116 = vmatprep.subr.bf16.mxu0 %v8635
        %9117 = vmatpush1.bf16.msra.mxu0 %v8634
        %9118 = vmatprep.subr.bf16.mxu0 %v8618
        %9119 = vmatpush1.bf16.msra.mxu0 %v8617
        %9120 = vmatprep.subr.bf16.mxu0 %v8601
        %9121 = vmatpush1.bf16.msra.mxu0 %v8600
        %9122 = vmatprep.subr.bf16.mxu0 %v8584
        %9123 = vmatpush1.bf16.msra.mxu0 %v8583
        %9124 = vmatprep.subr.bf16.mxu0 %v8567
        %9125 = vmatpush1.bf16.msra.mxu0 %v8566
        %9126 = vmatprep.subr.bf16.mxu0 %v8822
        %9127 = vmatpush2.bf16.msra.mxu0 %v8821
        %9128 = vmatprep.subr.bf16.mxu0 %v8805
        %9129 = vmatpush2.bf16.msra.mxu0 %v8804
        %9130 = vmatprep.subr.bf16.mxu0 %v8788
        %9131 = vmatpush2.bf16.msra.mxu0 %v8787
        %9132 = vmatprep.subr.bf16.mxu0 %v8771
        %9133 = vmatpush2.bf16.msra.mxu0 %v8770
        %9134 = vmatprep.subr.bf16.mxu0 %v8754
        %9135 = vmatpush2.bf16.msra.mxu0 %v8753
        %9136 = vmatprep.subr.bf16.mxu0 %v8737
        %9137 = vmatpush2.bf16.msra.mxu0 %v8736
        %9138 = vmatprep.subr.bf16.mxu0 %v8720
        %9139 = vmatpush2.bf16.msra.mxu0 %v8719
        %9140 = vmatprep.subr.bf16.mxu0 %v8703
        %9141 = vmatpush2.bf16.msra.mxu0 %v8702
        %9142 = vmatprep.mubr.bf16.mxu0 %v7439
        %9143 = vmatmul.mubr.bf16.gmra.mxu0 %v7438
        %v9144 = vpop.f32.mrf.mxu0
        %v9145 = vadd.f32 0.0, %v9144
        %v9146 = vpop.f32.mrf.mxu0
        %v9147 = vadd.f32 0.0, %v9146
        %v9148 = vpop.f32.mrf.mxu0
        %v9149 = vadd.f32 0.0, %v9148
        %v9150 = vpop.f32.mrf.mxu0
        %v9151 = vadd.f32 0.0, %v9150
        %9152 = vmatprep.mubr.bf16.mxu0 %v7441
        %9153 = vmatmul.mubr.bf16.gmra.mxu0 %v7440
        %v9154 = vpop.f32.mrf.mxu0
        %v9155 = vadd.f32 0.0, %v9154
        %v9156 = vpop.f32.mrf.mxu0
        %v9157 = vadd.f32 0.0, %v9156
        %v9158 = vpop.f32.mrf.mxu0
        %v9159 = vadd.f32 0.0, %v9158
        %v9160 = vpop.f32.mrf.mxu0
        %v9161 = vadd.f32 0.0, %v9160
        %9162 = vmatprep.mubr.bf16.mxu0 %v7443
        %9163 = vmatmul.mubr.bf16.gmra.mxu0 %v7442
        %v9164 = vpop.f32.mrf.mxu0
        %v9165 = vadd.f32 0.0, %v9164
        %v9166 = vpop.f32.mrf.mxu0
        %v9167 = vadd.f32 0.0, %v9166
        %v9168 = vpop.f32.mrf.mxu0
        %v9169 = vadd.f32 0.0, %v9168
        %v9170 = vpop.f32.mrf.mxu0
        %v9171 = vadd.f32 0.0, %v9170
        %9172 = vmatprep.mubr.bf16.mxu0 %v7445
        %9173 = vmatmul.mubr.bf16.gmra.mxu0 %v7444
        %v9174 = vpop.f32.mrf.mxu0
        %v9175 = vadd.f32 0.0, %v9174
        %v9176 = vpop.f32.mrf.mxu0
        %v9177 = vadd.f32 0.0, %v9176
        %v9178 = vpop.f32.mrf.mxu0
        %v9179 = vadd.f32 0.0, %v9178
        %v9180 = vpop.f32.mrf.mxu0
        %v9181 = vadd.f32 0.0, %v9180
        %9182 = vdwg.mxu0
        %9183 = vmatprep.subr.bf16.mxu0 %v8688
        %9184 = vmatpush1.bf16.msra.mxu0 %v8687
        %9185 = vmatprep.subr.bf16.mxu0 %v8671
        %9186 = vmatpush1.bf16.msra.mxu0 %v8670
        %9187 = vmatprep.subr.bf16.mxu0 %v8654
        %9188 = vmatpush1.bf16.msra.mxu0 %v8653
        %9189 = vmatprep.subr.bf16.mxu0 %v8637
        %9190 = vmatpush1.bf16.msra.mxu0 %v8636
        %9191 = vmatprep.subr.bf16.mxu0 %v8620
        %9192 = vmatpush1.bf16.msra.mxu0 %v8619
        %9193 = vmatprep.subr.bf16.mxu0 %v8603
        %9194 = vmatpush1.bf16.msra.mxu0 %v8602
        %9195 = vmatprep.subr.bf16.mxu0 %v8586
        %9196 = vmatpush1.bf16.msra.mxu0 %v8585
        %9197 = vmatprep.subr.bf16.mxu0 %v8569
        %9198 = vmatpush1.bf16.msra.mxu0 %v8568
        %9199 = vmatprep.subr.bf16.mxu0 %v8824
        %9200 = vmatpush2.bf16.msra.mxu0 %v8823
        %9201 = vmatprep.subr.bf16.mxu0 %v8807
        %9202 = vmatpush2.bf16.msra.mxu0 %v8806
        %9203 = vmatprep.subr.bf16.mxu0 %v8790
        %9204 = vmatpush2.bf16.msra.mxu0 %v8789
        %9205 = vmatprep.subr.bf16.mxu0 %v8773
        %9206 = vmatpush2.bf16.msra.mxu0 %v8772
        %9207 = vmatprep.subr.bf16.mxu0 %v8756
        %9208 = vmatpush2.bf16.msra.mxu0 %v8755
        %9209 = vmatprep.subr.bf16.mxu0 %v8739
        %9210 = vmatpush2.bf16.msra.mxu0 %v8738
        %9211 = vmatprep.subr.bf16.mxu0 %v8722
        %9212 = vmatpush2.bf16.msra.mxu0 %v8721
        %9213 = vmatprep.subr.bf16.mxu0 %v8705
        %9214 = vmatpush2.bf16.msra.mxu0 %v8704
        %9215 = vmatprep.mubr.bf16.mxu0 %v7439
        %9216 = vmatmul.mubr.bf16.gmra.mxu0 %v7438
        %v9217 = vpop.f32.mrf.mxu0
        %v9218 = vadd.f32 0.0, %v9217
        %v9219 = vpop.f32.mrf.mxu0
        %v9220 = vadd.f32 0.0, %v9219
        %v9221 = vpop.f32.mrf.mxu0
        %v9222 = vadd.f32 0.0, %v9221
        %v9223 = vpop.f32.mrf.mxu0
        %v9224 = vadd.f32 0.0, %v9223
        %9225 = vmatprep.mubr.bf16.mxu0 %v7441
        %9226 = vmatmul.mubr.bf16.gmra.mxu0 %v7440
        %v9227 = vpop.f32.mrf.mxu0
        %v9228 = vadd.f32 0.0, %v9227
        %v9229 = vpop.f32.mrf.mxu0
        %v9230 = vadd.f32 0.0, %v9229
        %v9231 = vpop.f32.mrf.mxu0
        %v9232 = vadd.f32 0.0, %v9231
        %v9233 = vpop.f32.mrf.mxu0
        %v9234 = vadd.f32 0.0, %v9233
        %9235 = vmatprep.mubr.bf16.mxu0 %v7443
        %9236 = vmatmul.mubr.bf16.gmra.mxu0 %v7442
        %v9237 = vpop.f32.mrf.mxu0
        %v9238 = vadd.f32 0.0, %v9237
        %v9239 = vpop.f32.mrf.mxu0
        %v9240 = vadd.f32 0.0, %v9239
        %v9241 = vpop.f32.mrf.mxu0
        %v9242 = vadd.f32 0.0, %v9241
        %v9243 = vpop.f32.mrf.mxu0
        %v9244 = vadd.f32 0.0, %v9243
        %9245 = vmatprep.mubr.bf16.mxu0 %v7445
        %9246 = vmatmul.mubr.bf16.gmra.mxu0 %v7444
        %v9247 = vpop.f32.mrf.mxu0
        %v9248 = vadd.f32 0.0, %v9247
        %v9249 = vpop.f32.mrf.mxu0
        %v9250 = vadd.f32 0.0, %v9249
        %v9251 = vpop.f32.mrf.mxu0
        %v9252 = vadd.f32 0.0, %v9251
        %v9253 = vpop.f32.mrf.mxu0
        %v9254 = vadd.f32 0.0, %v9253
        %9255 = vdwg.mxu0
        %9256 = vmatprep.subr.bf16.mxu0 %v8690
        %9257 = vmatpush1.bf16.msra.mxu0 %v8689
        %9258 = vmatprep.subr.bf16.mxu0 %v8673
        %9259 = vmatpush1.bf16.msra.mxu0 %v8672
        %9260 = vmatprep.subr.bf16.mxu0 %v8656
        %9261 = vmatpush1.bf16.msra.mxu0 %v8655
        %9262 = vmatprep.subr.bf16.mxu0 %v8639
        %9263 = vmatpush1.bf16.msra.mxu0 %v8638
        %9264 = vmatprep.subr.bf16.mxu0 %v8622
        %9265 = vmatpush1.bf16.msra.mxu0 %v8621
        %9266 = vmatprep.subr.bf16.mxu0 %v8605
        %9267 = vmatpush1.bf16.msra.mxu0 %v8604
        %9268 = vmatprep.subr.bf16.mxu0 %v8588
        %9269 = vmatpush1.bf16.msra.mxu0 %v8587
        %9270 = vmatprep.subr.bf16.mxu0 %v8571
        %9271 = vmatpush1.bf16.msra.mxu0 %v8570
        %9272 = vmatprep.subr.bf16.mxu0 %v8826
        %9273 = vmatpush2.bf16.msra.mxu0 %v8825
        %9274 = vmatprep.subr.bf16.mxu0 %v8809
        %9275 = vmatpush2.bf16.msra.mxu0 %v8808
        %9276 = vmatprep.subr.bf16.mxu0 %v8792
        %9277 = vmatpush2.bf16.msra.mxu0 %v8791
        %9278 = vmatprep.subr.bf16.mxu0 %v8775
        %9279 = vmatpush2.bf16.msra.mxu0 %v8774
        %9280 = vmatprep.subr.bf16.mxu0 %v8758
        %9281 = vmatpush2.bf16.msra.mxu0 %v8757
        %9282 = vmatprep.subr.bf16.mxu0 %v8741
        %9283 = vmatpush2.bf16.msra.mxu0 %v8740
        %9284 = vmatprep.subr.bf16.mxu0 %v8724
        %9285 = vmatpush2.bf16.msra.mxu0 %v8723
        %9286 = vmatprep.subr.bf16.mxu0 %v8707
        %9287 = vmatpush2.bf16.msra.mxu0 %v8706
        %9288 = vmatprep.mubr.bf16.mxu0 %v7439
        %9289 = vmatmul.mubr.bf16.gmra.mxu0 %v7438
        %v9290 = vpop.f32.mrf.mxu0
        %v9291 = vadd.f32 0.0, %v9290
        %v9292 = vpop.f32.mrf.mxu0
        %v9293 = vadd.f32 0.0, %v9292
        %v9294 = vpop.f32.mrf.mxu0
        %v9295 = vadd.f32 0.0, %v9294
        %v9296 = vpop.f32.mrf.mxu0
        %v9297 = vadd.f32 0.0, %v9296
        %9298 = vmatprep.mubr.bf16.mxu0 %v7441
        %9299 = vmatmul.mubr.bf16.gmra.mxu0 %v7440
        %v9300 = vpop.f32.mrf.mxu0
        %v9301 = vadd.f32 0.0, %v9300
        %v9302 = vpop.f32.mrf.mxu0
        %v9303 = vadd.f32 0.0, %v9302
        %v9304 = vpop.f32.mrf.mxu0
        %v9305 = vadd.f32 0.0, %v9304
        %v9306 = vpop.f32.mrf.mxu0
        %v9307 = vadd.f32 0.0, %v9306
        %9308 = vmatprep.mubr.bf16.mxu0 %v7443
        %9309 = vmatmul.mubr.bf16.gmra.mxu0 %v7442
        %v9310 = vpop.f32.mrf.mxu0
        %v9311 = vadd.f32 0.0, %v9310
        %v9312 = vpop.f32.mrf.mxu0
        %v9313 = vadd.f32 0.0, %v9312
        %v9314 = vpop.f32.mrf.mxu0
        %v9315 = vadd.f32 0.0, %v9314
        %v9316 = vpop.f32.mrf.mxu0
        %v9317 = vadd.f32 0.0, %v9316
        %9318 = vmatprep.mubr.bf16.mxu0 %v7445
        %9319 = vmatmul.mubr.bf16.gmra.mxu0 %v7444
        %v9320 = vpop.f32.mrf.mxu0
        %v9321 = vadd.f32 0.0, %v9320
        %v9322 = vpop.f32.mrf.mxu0
        %v9323 = vadd.f32 0.0, %v9322
        %v9324 = vpop.f32.mrf.mxu0
        %v9325 = vadd.f32 0.0, %v9324
        %v9326 = vpop.f32.mrf.mxu0
        %v9327 = vadd.f32 0.0, %v9326
        %9328 = vdwg.mxu0
        %9329 = vmatprep.subr.bf16.mxu0 %v8692
        %9330 = vmatpush1.bf16.msra.mxu0 %v8691
        %9331 = vmatprep.subr.bf16.mxu0 %v8675
        %9332 = vmatpush1.bf16.msra.mxu0 %v8674
        %9333 = vmatprep.subr.bf16.mxu0 %v8658
        %9334 = vmatpush1.bf16.msra.mxu0 %v8657
        %9335 = vmatprep.subr.bf16.mxu0 %v8641
        %9336 = vmatpush1.bf16.msra.mxu0 %v8640
        %9337 = vmatprep.subr.bf16.mxu0 %v8624
        %9338 = vmatpush1.bf16.msra.mxu0 %v8623
        %9339 = vmatprep.subr.bf16.mxu0 %v8607
        %9340 = vmatpush1.bf16.msra.mxu0 %v8606
        %9341 = vmatprep.subr.bf16.mxu0 %v8590
        %9342 = vmatpush1.bf16.msra.mxu0 %v8589
        %9343 = vmatprep.subr.bf16.mxu0 %v8573
        %9344 = vmatpush1.bf16.msra.mxu0 %v8572
        %9345 = vmatprep.subr.bf16.mxu0 %v8828
        %9346 = vmatpush2.bf16.msra.mxu0 %v8827
        %9347 = vmatprep.subr.bf16.mxu0 %v8811
        %9348 = vmatpush2.bf16.msra.mxu0 %v8810
        %9349 = vmatprep.subr.bf16.mxu0 %v8794
        %9350 = vmatpush2.bf16.msra.mxu0 %v8793
        %9351 = vmatprep.subr.bf16.mxu0 %v8777
        %9352 = vmatpush2.bf16.msra.mxu0 %v8776
        %9353 = vmatprep.subr.bf16.mxu0 %v8760
        %9354 = vmatpush2.bf16.msra.mxu0 %v8759
        %9355 = vmatprep.subr.bf16.mxu0 %v8743
        %9356 = vmatpush2.bf16.msra.mxu0 %v8742
        %9357 = vmatprep.subr.bf16.mxu0 %v8726
        %9358 = vmatpush2.bf16.msra.mxu0 %v8725
        %9359 = vmatprep.subr.bf16.mxu0 %v8709
        %9360 = vmatpush2.bf16.msra.mxu0 %v8708
        %9361 = vmatprep.mubr.bf16.mxu0 %v7439
        %9362 = vmatmul.mubr.bf16.gmra.mxu0 %v7438
        %v9363 = vpop.f32.mrf.mxu0
        %v9364 = vadd.f32 0.0, %v9363
        %v9365 = vpop.f32.mrf.mxu0
        %v9366 = vadd.f32 0.0, %v9365
        %v9367 = vpop.f32.mrf.mxu0
        %v9368 = vadd.f32 0.0, %v9367
        %v9369 = vpop.f32.mrf.mxu0
        %v9370 = vadd.f32 0.0, %v9369
        %9371 = vmatprep.mubr.bf16.mxu0 %v7441
        %9372 = vmatmul.mubr.bf16.gmra.mxu0 %v7440
        %v9373 = vpop.f32.mrf.mxu0
        %v9374 = vadd.f32 0.0, %v9373
        %v9375 = vpop.f32.mrf.mxu0
        %v9376 = vadd.f32 0.0, %v9375
        %v9377 = vpop.f32.mrf.mxu0
        %v9378 = vadd.f32 0.0, %v9377
        %v9379 = vpop.f32.mrf.mxu0
        %v9380 = vadd.f32 0.0, %v9379
        %9381 = vmatprep.mubr.bf16.mxu0 %v7443
        %9382 = vmatmul.mubr.bf16.gmra.mxu0 %v7442
        %v9383 = vpop.f32.mrf.mxu0
        %v9384 = vadd.f32 0.0, %v9383
        %v9385 = vpop.f32.mrf.mxu0
        %v9386 = vadd.f32 0.0, %v9385
        %v9387 = vpop.f32.mrf.mxu0
        %v9388 = vadd.f32 0.0, %v9387
        %v9389 = vpop.f32.mrf.mxu0
        %v9390 = vadd.f32 0.0, %v9389
        %9391 = vmatprep.mubr.bf16.mxu0 %v7445
        %9392 = vmatmul.mubr.bf16.gmra.mxu0 %v7444
        %v9393 = vpop.f32.mrf.mxu0
        %v9394 = vadd.f32 0.0, %v9393
        %v9395 = vpop.f32.mrf.mxu0
        %v9396 = vadd.f32 0.0, %v9395
        %v9397 = vpop.f32.mrf.mxu0
        %v9398 = vadd.f32 0.0, %v9397
        %v9399 = vpop.f32.mrf.mxu0
        %v9400 = vadd.f32 0.0, %v9399
        %9401 = vdwg.mxu0
        %9402 = vmatprep.subr.bf16.mxu0 %v8694
        %9403 = vmatpush1.bf16.msra.mxu0 %v8693
        %9404 = vmatprep.subr.bf16.mxu0 %v8677
        %9405 = vmatpush1.bf16.msra.mxu0 %v8676
        %9406 = vmatprep.subr.bf16.mxu0 %v8660
        %9407 = vmatpush1.bf16.msra.mxu0 %v8659
        %9408 = vmatprep.subr.bf16.mxu0 %v8643
        %9409 = vmatpush1.bf16.msra.mxu0 %v8642
        %9410 = vmatprep.subr.bf16.mxu0 %v8626
        %9411 = vmatpush1.bf16.msra.mxu0 %v8625
        %9412 = vmatprep.subr.bf16.mxu0 %v8609
        %9413 = vmatpush1.bf16.msra.mxu0 %v8608
        %9414 = vmatprep.subr.bf16.mxu0 %v8592
        %9415 = vmatpush1.bf16.msra.mxu0 %v8591
        %9416 = vmatprep.subr.bf16.mxu0 %v8575
        %9417 = vmatpush1.bf16.msra.mxu0 %v8574
        %9418 = vmatprep.subr.bf16.mxu0 %v8830
        %9419 = vmatpush2.bf16.msra.mxu0 %v8829
        %9420 = vmatprep.subr.bf16.mxu0 %v8813
        %9421 = vmatpush2.bf16.msra.mxu0 %v8812
        %9422 = vmatprep.subr.bf16.mxu0 %v8796
        %9423 = vmatpush2.bf16.msra.mxu0 %v8795
        %9424 = vmatprep.subr.bf16.mxu0 %v8779
        %9425 = vmatpush2.bf16.msra.mxu0 %v8778
        %9426 = vmatprep.subr.bf16.mxu0 %v8762
        %9427 = vmatpush2.bf16.msra.mxu0 %v8761
        %9428 = vmatprep.subr.bf16.mxu0 %v8745
        %9429 = vmatpush2.bf16.msra.mxu0 %v8744
        %9430 = vmatprep.subr.bf16.mxu0 %v8728
        %9431 = vmatpush2.bf16.msra.mxu0 %v8727
        %9432 = vmatprep.subr.bf16.mxu0 %v8711
        %9433 = vmatpush2.bf16.msra.mxu0 %v8710
        %9434 = vmatprep.mubr.bf16.mxu0 %v7439
        %9435 = vmatmul.mubr.bf16.gmra.mxu0 %v7438
        %v9436 = vpop.f32.mrf.mxu0
        %v9437 = vadd.f32 0.0, %v9436
        %v9438 = vpop.f32.mrf.mxu0
        %v9439 = vadd.f32 0.0, %v9438
        %v9440 = vpop.f32.mrf.mxu0
        %v9441 = vadd.f32 0.0, %v9440
        %v9442 = vpop.f32.mrf.mxu0
        %v9443 = vadd.f32 0.0, %v9442
        %9444 = vmatprep.mubr.bf16.mxu0 %v7441
        %9445 = vmatmul.mubr.bf16.gmra.mxu0 %v7440
        %v9446 = vpop.f32.mrf.mxu0
        %v9447 = vadd.f32 0.0, %v9446
        %v9448 = vpop.f32.mrf.mxu0
        %v9449 = vadd.f32 0.0, %v9448
        %v9450 = vpop.f32.mrf.mxu0
        %v9451 = vadd.f32 0.0, %v9450
        %v9452 = vpop.f32.mrf.mxu0
        %v9453 = vadd.f32 0.0, %v9452
        %9454 = vmatprep.mubr.bf16.mxu0 %v7443
        %9455 = vmatmul.mubr.bf16.gmra.mxu0 %v7442
        %v9456 = vpop.f32.mrf.mxu0
        %v9457 = vadd.f32 0.0, %v9456
        %v9458 = vpop.f32.mrf.mxu0
        %v9459 = vadd.f32 0.0, %v9458
        %v9460 = vpop.f32.mrf.mxu0
        %v9461 = vadd.f32 0.0, %v9460
        %v9462 = vpop.f32.mrf.mxu0
        %v9463 = vadd.f32 0.0, %v9462
        %9464 = vmatprep.mubr.bf16.mxu0 %v7445
        %9465 = vmatmul.mubr.bf16.gmra.mxu0 %v7444
        %v9466 = vpop.f32.mrf.mxu0
        %v9467 = vadd.f32 0.0, %v9466
        %v9468 = vpop.f32.mrf.mxu0
        %v9469 = vadd.f32 0.0, %v9468
        %v9470 = vpop.f32.mrf.mxu0
        %v9471 = vadd.f32 0.0, %v9470
        %v9472 = vpop.f32.mrf.mxu0
        %v9473 = vadd.f32 0.0, %v9472
        %9474 = vdwg.mxu0
        %9475 = vmatprep.subr.bf16.mxu0 %v8696
        %9476 = vmatpush1.bf16.msra.mxu0 %v8695
        %9477 = vmatprep.subr.bf16.mxu0 %v8679
        %9478 = vmatpush1.bf16.msra.mxu0 %v8678
        %9479 = vmatprep.subr.bf16.mxu0 %v8662
        %9480 = vmatpush1.bf16.msra.mxu0 %v8661
        %9481 = vmatprep.subr.bf16.mxu0 %v8645
        %9482 = vmatpush1.bf16.msra.mxu0 %v8644
        %9483 = vmatprep.subr.bf16.mxu0 %v8628
        %9484 = vmatpush1.bf16.msra.mxu0 %v8627
        %9485 = vmatprep.subr.bf16.mxu0 %v8611
        %9486 = vmatpush1.bf16.msra.mxu0 %v8610
        %9487 = vmatprep.subr.bf16.mxu0 %v8594
        %9488 = vmatpush1.bf16.msra.mxu0 %v8593
        %9489 = vmatprep.subr.bf16.mxu0 %v8577
        %9490 = vmatpush1.bf16.msra.mxu0 %v8576
        %9491 = vmatprep.subr.bf16.mxu0 %v8832
        %9492 = vmatpush2.bf16.msra.mxu0 %v8831
        %9493 = vmatprep.subr.bf16.mxu0 %v8815
        %9494 = vmatpush2.bf16.msra.mxu0 %v8814
        %9495 = vmatprep.subr.bf16.mxu0 %v8798
        %9496 = vmatpush2.bf16.msra.mxu0 %v8797
        %9497 = vmatprep.subr.bf16.mxu0 %v8781
        %9498 = vmatpush2.bf16.msra.mxu0 %v8780
        %9499 = vmatprep.subr.bf16.mxu0 %v8764
        %9500 = vmatpush2.bf16.msra.mxu0 %v8763
        %9501 = vmatprep.subr.bf16.mxu0 %v8747
        %9502 = vmatpush2.bf16.msra.mxu0 %v8746
        %9503 = vmatprep.subr.bf16.mxu0 %v8730
        %9504 = vmatpush2.bf16.msra.mxu0 %v8729
        %9505 = vmatprep.subr.bf16.mxu0 %v8713
        %9506 = vmatpush2.bf16.msra.mxu0 %v8712
        %9507 = vmatprep.mubr.bf16.mxu0 %v7439
        %9508 = vmatmul.mubr.bf16.gmra.mxu0 %v7438
        %v9509 = vpop.f32.mrf.mxu0
        %v9510 = vadd.f32 0.0, %v9509
        %v9511 = vpop.f32.mrf.mxu0
        %v9512 = vadd.f32 0.0, %v9511
        %v9513 = vpop.f32.mrf.mxu0
        %v9514 = vadd.f32 0.0, %v9513
        %v9515 = vpop.f32.mrf.mxu0
        %v9516 = vadd.f32 0.0, %v9515
        %9517 = vmatprep.mubr.bf16.mxu0 %v7441
        %9518 = vmatmul.mubr.bf16.gmra.mxu0 %v7440
        %v9519 = vpop.f32.mrf.mxu0
        %v9520 = vadd.f32 0.0, %v9519
        %v9521 = vpop.f32.mrf.mxu0
        %v9522 = vadd.f32 0.0, %v9521
        %v9523 = vpop.f32.mrf.mxu0
        %v9524 = vadd.f32 0.0, %v9523
        %v9525 = vpop.f32.mrf.mxu0
        %v9526 = vadd.f32 0.0, %v9525
        %9527 = vmatprep.mubr.bf16.mxu0 %v7443
        %9528 = vmatmul.mubr.bf16.gmra.mxu0 %v7442
        %v9529 = vpop.f32.mrf.mxu0
        %v9530 = vadd.f32 0.0, %v9529
        %v9531 = vpop.f32.mrf.mxu0
        %v9532 = vadd.f32 0.0, %v9531
        %v9533 = vpop.f32.mrf.mxu0
        %v9534 = vadd.f32 0.0, %v9533
        %v9535 = vpop.f32.mrf.mxu0
        %v9536 = vadd.f32 0.0, %v9535
        %9537 = vmatprep.mubr.bf16.mxu0 %v7445
        %9538 = vmatmul.mubr.bf16.gmra.mxu0 %v7444
        %v9539 = vpop.f32.mrf.mxu0
        %v9540 = vadd.f32 0.0, %v9539
        %v9541 = vpop.f32.mrf.mxu0
        %v9542 = vadd.f32 0.0, %v9541
        %v9543 = vpop.f32.mrf.mxu0
        %v9544 = vadd.f32 0.0, %v9543
        %v9545 = vpop.f32.mrf.mxu0
        %v9546 = vadd.f32 0.0, %v9545
        %9547 = vdwg.mxu0
        %9548 = vmatprep.subr.bf16.mxu0 %v8698
        %9549 = vmatpush1.bf16.msra.mxu0 %v8697
        %9550 = vmatprep.subr.bf16.mxu0 %v8681
        %9551 = vmatpush1.bf16.msra.mxu0 %v8680
        %9552 = vmatprep.subr.bf16.mxu0 %v8664
        %9553 = vmatpush1.bf16.msra.mxu0 %v8663
        %9554 = vmatprep.subr.bf16.mxu0 %v8647
        %9555 = vmatpush1.bf16.msra.mxu0 %v8646
        %9556 = vmatprep.subr.bf16.mxu0 %v8630
        %9557 = vmatpush1.bf16.msra.mxu0 %v8629
        %9558 = vmatprep.subr.bf16.mxu0 %v8613
        %9559 = vmatpush1.bf16.msra.mxu0 %v8612
        %9560 = vmatprep.subr.bf16.mxu0 %v8596
        %9561 = vmatpush1.bf16.msra.mxu0 %v8595
        %9562 = vmatprep.subr.bf16.mxu0 %v8579
        %9563 = vmatpush1.bf16.msra.mxu0 %v8578
        %9564 = vmatprep.subr.bf16.mxu0 %v8834
        %9565 = vmatpush2.bf16.msra.mxu0 %v8833
        %9566 = vmatprep.subr.bf16.mxu0 %v8817
        %9567 = vmatpush2.bf16.msra.mxu0 %v8816
        %9568 = vmatprep.subr.bf16.mxu0 %v8800
        %9569 = vmatpush2.bf16.msra.mxu0 %v8799
        %9570 = vmatprep.subr.bf16.mxu0 %v8783
        %9571 = vmatpush2.bf16.msra.mxu0 %v8782
        %9572 = vmatprep.subr.bf16.mxu0 %v8766
        %9573 = vmatpush2.bf16.msra.mxu0 %v8765
        %9574 = vmatprep.subr.bf16.mxu0 %v8749
        %9575 = vmatpush2.bf16.msra.mxu0 %v8748
        %9576 = vmatprep.subr.bf16.mxu0 %v8732
        %9577 = vmatpush2.bf16.msra.mxu0 %v8731
        %9578 = vmatprep.subr.bf16.mxu0 %v8715
        %9579 = vmatpush2.bf16.msra.mxu0 %v8714
        %9580 = vmatprep.mubr.bf16.mxu0 %v7439
        %9581 = vmatmul.mubr.bf16.gmra.mxu0 %v7438
        %v9582 = vpop.f32.mrf.mxu0
        %v9583 = vadd.f32 0.0, %v9582
        %v9584 = vpop.f32.mrf.mxu0
        %v9585 = vadd.f32 0.0, %v9584
        %v9586 = vpop.f32.mrf.mxu0
        %v9587 = vadd.f32 0.0, %v9586
        %v9588 = vpop.f32.mrf.mxu0
        %v9589 = vadd.f32 0.0, %v9588
        %9590 = vmatprep.mubr.bf16.mxu0 %v7441
        %9591 = vmatmul.mubr.bf16.gmra.mxu0 %v7440
        %v9592 = vpop.f32.mrf.mxu0
        %v9593 = vadd.f32 0.0, %v9592
        %v9594 = vpop.f32.mrf.mxu0
        %v9595 = vadd.f32 0.0, %v9594
        %v9596 = vpop.f32.mrf.mxu0
        %v9597 = vadd.f32 0.0, %v9596
        %v9598 = vpop.f32.mrf.mxu0
        %v9599 = vadd.f32 0.0, %v9598
        %9600 = vmatprep.mubr.bf16.mxu0 %v7443
        %9601 = vmatmul.mubr.bf16.gmra.mxu0 %v7442
        %v9602 = vpop.f32.mrf.mxu0
        %v9603 = vadd.f32 0.0, %v9602
        %v9604 = vpop.f32.mrf.mxu0
        %v9605 = vadd.f32 0.0, %v9604
        %v9606 = vpop.f32.mrf.mxu0
        %v9607 = vadd.f32 0.0, %v9606
        %v9608 = vpop.f32.mrf.mxu0
        %v9609 = vadd.f32 0.0, %v9608
        %9610 = vmatprep.mubr.bf16.mxu0 %v7445
        %9611 = vmatmul.mubr.bf16.gmra.mxu0 %v7444
        %v9612 = vpop.f32.mrf.mxu0
        %v9613 = vadd.f32 0.0, %v9612
        %v9614 = vpop.f32.mrf.mxu0
        %v9615 = vadd.f32 0.0, %v9614
        %v9616 = vpop.f32.mrf.mxu0
        %v9617 = vadd.f32 0.0, %v9616
        %v9618 = vpop.f32.mrf.mxu0
        %v9619 = vadd.f32 0.0, %v9618
        %9620 = vdwg.mxu0
        %9621 = vmatprep.subr.bf16.mxu0 %v8700
        %9622 = vmatpush1.bf16.msra.mxu0 %v8699
        %9623 = vmatprep.subr.bf16.mxu0 %v8683
        %9624 = vmatpush1.bf16.msra.mxu0 %v8682
        %9625 = vmatprep.subr.bf16.mxu0 %v8666
        %9626 = vmatpush1.bf16.msra.mxu0 %v8665
        %9627 = vmatprep.subr.bf16.mxu0 %v8649
        %9628 = vmatpush1.bf16.msra.mxu0 %v8648
        %9629 = vmatprep.subr.bf16.mxu0 %v8632
        %9630 = vmatpush1.bf16.msra.mxu0 %v8631
        %9631 = vmatprep.subr.bf16.mxu0 %v8615
        %9632 = vmatpush1.bf16.msra.mxu0 %v8614
        %9633 = vmatprep.subr.bf16.mxu0 %v8598
        %9634 = vmatpush1.bf16.msra.mxu0 %v8597
        %9635 = vmatprep.subr.bf16.mxu0 %v8581
        %9636 = vmatpush1.bf16.msra.mxu0 %v8580
        %9637 = vmatprep.subr.bf16.mxu0 %v8836
        %9638 = vmatpush2.bf16.msra.mxu0 %v8835
        %9639 = vmatprep.subr.bf16.mxu0 %v8819
        %9640 = vmatpush2.bf16.msra.mxu0 %v8818
        %9641 = vmatprep.subr.bf16.mxu0 %v8802
        %9642 = vmatpush2.bf16.msra.mxu0 %v8801
        %9643 = vmatprep.subr.bf16.mxu0 %v8785
        %9644 = vmatpush2.bf16.msra.mxu0 %v8784
        %9645 = vmatprep.subr.bf16.mxu0 %v8768
        %9646 = vmatpush2.bf16.msra.mxu0 %v8767
        %9647 = vmatprep.subr.bf16.mxu0 %v8751
        %9648 = vmatpush2.bf16.msra.mxu0 %v8750
        %9649 = vmatprep.subr.bf16.mxu0 %v8734
        %9650 = vmatpush2.bf16.msra.mxu0 %v8733
        %9651 = vmatprep.subr.bf16.mxu0 %v8717
        %9652 = vmatpush2.bf16.msra.mxu0 %v8716
        %9653 = vmatprep.mubr.bf16.mxu0 %v7439
        %9654 = vmatmul.mubr.bf16.gmra.mxu0 %v7438
        %v9655 = vpop.f32.mrf.mxu0
        %v9656 = vadd.f32 0.0, %v9655
        %v9657 = vpop.f32.mrf.mxu0
        %v9658 = vadd.f32 0.0, %v9657
        %v9659 = vpop.f32.mrf.mxu0
        %v9660 = vadd.f32 0.0, %v9659
        %v9661 = vpop.f32.mrf.mxu0
        %v9662 = vadd.f32 0.0, %v9661
        %9663 = vmatprep.mubr.bf16.mxu0 %v7441
        %9664 = vmatmul.mubr.bf16.gmra.mxu0 %v7440
        %v9665 = vpop.f32.mrf.mxu0
        %v9666 = vadd.f32 0.0, %v9665
        %v9667 = vpop.f32.mrf.mxu0
        %v9668 = vadd.f32 0.0, %v9667
        %v9669 = vpop.f32.mrf.mxu0
        %v9670 = vadd.f32 0.0, %v9669
        %v9671 = vpop.f32.mrf.mxu0
        %v9672 = vadd.f32 0.0, %v9671
        %9673 = vmatprep.mubr.bf16.mxu0 %v7443
        %9674 = vmatmul.mubr.bf16.gmra.mxu0 %v7442
        %v9675 = vpop.f32.mrf.mxu0
        %v9676 = vadd.f32 0.0, %v9675
        %v9677 = vpop.f32.mrf.mxu0
        %v9678 = vadd.f32 0.0, %v9677
        %v9679 = vpop.f32.mrf.mxu0
        %v9680 = vadd.f32 0.0, %v9679
        %v9681 = vpop.f32.mrf.mxu0
        %v9682 = vadd.f32 0.0, %v9681
        %9683 = vmatprep.mubr.bf16.mxu0 %v7445
        %9684 = vmatmul.mubr.bf16.gmra.mxu0 %v7444
        %v9685 = vpop.f32.mrf.mxu0
        %v9686 = vadd.f32 0.0, %v9685
        %v9687 = vpop.f32.mrf.mxu0
        %v9688 = vadd.f32 0.0, %v9687
        %v9689 = vpop.f32.mrf.mxu0
        %v9690 = vadd.f32 0.0, %v9689
        %v9691 = vpop.f32.mrf.mxu0
        %v9692 = vadd.f32 0.0, %v9691
        %9693 = vdwg.mxu0
        %9694 = vmatprep.subr.bf16.mxu0 0
        %9695 = vmatpush1.bf16.msra.mxu0 %v8701
        %9696 = vmatprep.subr.bf16.mxu0 0
        %9697 = vmatpush1.bf16.msra.mxu0 %v8684
        %9698 = vmatprep.subr.bf16.mxu0 0
        %9699 = vmatpush1.bf16.msra.mxu0 %v8667
        %9700 = vmatprep.subr.bf16.mxu0 0
        %9701 = vmatpush1.bf16.msra.mxu0 %v8650
        %9702 = vmatprep.subr.bf16.mxu0 0
        %9703 = vmatpush1.bf16.msra.mxu0 %v8633
        %9704 = vmatprep.subr.bf16.mxu0 0
        %9705 = vmatpush1.bf16.msra.mxu0 %v8616
        %9706 = vmatprep.subr.bf16.mxu0 0
        %9707 = vmatpush1.bf16.msra.mxu0 %v8599
        %9708 = vmatprep.subr.bf16.mxu0 0
        %9709 = vmatpush1.bf16.msra.mxu0 %v8582
        %9710 = vmatprep.subr.bf16.mxu0 0
        %9711 = vmatpush2.bf16.msra.mxu0 %v8837
        %9712 = vmatprep.subr.bf16.mxu0 0
        %9713 = vmatpush2.bf16.msra.mxu0 %v8820
        %9714 = vmatprep.subr.bf16.mxu0 0
        %9715 = vmatpush2.bf16.msra.mxu0 %v8803
        %9716 = vmatprep.subr.bf16.mxu0 0
        %9717 = vmatpush2.bf16.msra.mxu0 %v8786
        %9718 = vmatprep.subr.bf16.mxu0 0
        %9719 = vmatpush2.bf16.msra.mxu0 %v8769
        %9720 = vmatprep.subr.bf16.mxu0 0
        %9721 = vmatpush2.bf16.msra.mxu0 %v8752
        %9722 = vmatprep.subr.bf16.mxu0 0
        %9723 = vmatpush2.bf16.msra.mxu0 %v8735
        %9724 = vmatprep.subr.bf16.mxu0 0
        %9725 = vmatpush2.bf16.msra.mxu0 %v8718
        %9726 = vmatprep.mubr.bf16.mxu0 %v7439
        %9727 = vmatmul.mubr.bf16.gmra.mxu0 %v7438
        %v9728 = vpop.f32.mrf.mxu0
        %v9729 = vadd.f32 0.0, %v9728
        %v9730 = vpop.f32.mrf.mxu0
        %v9731 = vpop.f32.mrf.mxu0
        %v9732 = vadd.f32 0.0, %v9731
        %v9733 = vpop.f32.mrf.mxu0
        %9734 = vmatprep.mubr.bf16.mxu0 %v7441
        %9735 = vmatmul.mubr.bf16.gmra.mxu0 %v7440
        %v9736 = vpop.f32.mrf.mxu0
        %v9737 = vadd.f32 0.0, %v9736
        %v9738 = vpop.f32.mrf.mxu0
        %v9739 = vpop.f32.mrf.mxu0
        %v9740 = vadd.f32 0.0, %v9739
        %v9741 = vpop.f32.mrf.mxu0
        %9742 = vmatprep.mubr.bf16.mxu0 %v7443
        %9743 = vmatmul.mubr.bf16.gmra.mxu0 %v7442
        %v9744 = vpop.f32.mrf.mxu0
        %v9745 = vadd.f32 0.0, %v9744
        %v9746 = vpop.f32.mrf.mxu0
        %v9747 = vpop.f32.mrf.mxu0
        %v9748 = vadd.f32 0.0, %v9747
        %v9749 = vpop.f32.mrf.mxu0
        %9750 = vmatprep.mubr.bf16.mxu0 %v7445
        %9751 = vmatmul.mubr.bf16.gmra.mxu0 %v7444
        %v9752 = vpop.f32.mrf.mxu0
        %v9753 = vadd.f32 0.0, %v9752
        %v9754 = vpop.f32.mrf.mxu0
        %v9755 = vpop.f32.mrf.mxu0
        %v9756 = vadd.f32 0.0, %v9755
        %v9757 = vpop.f32.mrf.mxu0
        %9758 = vdwg.mxu0
        %v9975 = vunpack.c.l.b16 %v7222
        %v9976 = vunpack.c.h.b16 %v7222
        %v9977 = vunpack.c.l.b16 %v7223
        %v9978 = vunpack.c.h.b16 %v7223
        %v9979 = vunpack.c.l.b16 %v7224
        %v9980 = vunpack.c.h.b16 %v7224
        %v9981 = vunpack.c.l.b16 %v7225
        %v9982 = vunpack.c.h.b16 %v7225
        %v9983 = vunpack.c.l.b16 %v7226
        %v9984 = vunpack.c.h.b16 %v7226
        %v9985 = vunpack.c.l.b16 %v7227
        %v9986 = vunpack.c.h.b16 %v7227
        %v9987 = vunpack.c.l.b16 %v7228
        %v9988 = vunpack.c.h.b16 %v7228
        %v9989 = vunpack.c.l.b16 %v7229
        %v9990 = vunpack.c.h.b16 %v7229
        %v9991 = vunpack.c.l.b16 %v7230
        %v9992 = vunpack.c.l.b16 %v7231
        %v9993 = vunpack.c.h.b16 %v7231
        %v9994 = vunpack.c.l.b16 %v7232
        %v9995 = vunpack.c.h.b16 %v7232
        %v9996 = vunpack.c.l.b16 %v7233
        %v9997 = vunpack.c.h.b16 %v7233
        %v9998 = vunpack.c.l.b16 %v7234
        %v9999 = vunpack.c.h.b16 %v7234
        %v10000 = vunpack.c.l.b16 %v7235
        %v10001 = vunpack.c.h.b16 %v7235
        %v10002 = vunpack.c.l.b16 %v7236
        %v10003 = vunpack.c.h.b16 %v7236
        %v10004 = vunpack.c.l.b16 %v7237
        %v10005 = vunpack.c.h.b16 %v7237
        %v10006 = vunpack.c.l.b16 %v7238
        %v10007 = vunpack.c.h.b16 %v7238
        %v10008 = vunpack.c.l.b16 %v7239
        %v10009 = vunpack.c.l.b16 %v7240
        %v10010 = vunpack.c.h.b16 %v7240
        %v10011 = vunpack.c.l.b16 %v7241
        %v10012 = vunpack.c.h.b16 %v7241
        %v10013 = vunpack.c.l.b16 %v7242
        %v10014 = vunpack.c.h.b16 %v7242
        %v10015 = vunpack.c.l.b16 %v7243
        %v10016 = vunpack.c.h.b16 %v7243
        %v10017 = vunpack.c.l.b16 %v7244
        %v10018 = vunpack.c.h.b16 %v7244
        %v10019 = vunpack.c.l.b16 %v7245
        %v10020 = vunpack.c.h.b16 %v7245
        %v10021 = vunpack.c.l.b16 %v7246
        %v10022 = vunpack.c.h.b16 %v7246
        %v10023 = vunpack.c.l.b16 %v7247
        %v10024 = vunpack.c.h.b16 %v7247
        %v10025 = vunpack.c.l.b16 %v7248
        %v10026 = vunpack.c.l.b16 %v7249
        %v10027 = vunpack.c.h.b16 %v7249
        %v10028 = vunpack.c.l.b16 %v7250
        %v10029 = vunpack.c.h.b16 %v7250
        %v10030 = vunpack.c.l.b16 %v7251
        %v10031 = vunpack.c.h.b16 %v7251
        %v10032 = vunpack.c.l.b16 %v7252
        %v10033 = vunpack.c.h.b16 %v7252
        %v10034 = vunpack.c.l.b16 %v7253
        %v10035 = vunpack.c.h.b16 %v7253
        %v10036 = vunpack.c.l.b16 %v7254
        %v10037 = vunpack.c.h.b16 %v7254
        %v10038 = vunpack.c.l.b16 %v7255
        %v10039 = vunpack.c.h.b16 %v7255
        %v10040 = vunpack.c.l.b16 %v7256
        %v10041 = vunpack.c.h.b16 %v7256
        %v10042 = vunpack.c.l.b16 %v7257
        %v10043 = vunpack.c.l.b16 %v7258
        %v10044 = vunpack.c.h.b16 %v7258
        %v10045 = vunpack.c.l.b16 %v7259
        %v10046 = vunpack.c.h.b16 %v7259
        %v10047 = vunpack.c.l.b16 %v7260
        %v10048 = vunpack.c.h.b16 %v7260
        %v10049 = vunpack.c.l.b16 %v7261
        %v10050 = vunpack.c.h.b16 %v7261
        %v10051 = vunpack.c.l.b16 %v7262
        %v10052 = vunpack.c.h.b16 %v7262
        %v10053 = vunpack.c.l.b16 %v7263
        %v10054 = vunpack.c.h.b16 %v7263
        %v10055 = vunpack.c.l.b16 %v7264
        %v10056 = vunpack.c.h.b16 %v7264
        %v10057 = vunpack.c.l.b16 %v7265
        %v10058 = vunpack.c.h.b16 %v7265
        %v10059 = vunpack.c.l.b16 %v7266
        %v10060 = vunpack.c.l.b16 %v7267
        %v10061 = vunpack.c.h.b16 %v7267
        %v10062 = vunpack.c.l.b16 %v7268
        %v10063 = vunpack.c.h.b16 %v7268
        %v10064 = vunpack.c.l.b16 %v7269
        %v10065 = vunpack.c.h.b16 %v7269
        %v10066 = vunpack.c.l.b16 %v7270
        %v10067 = vunpack.c.h.b16 %v7270
        %v10068 = vunpack.c.l.b16 %v7271
        %v10069 = vunpack.c.h.b16 %v7271
        %v10070 = vunpack.c.l.b16 %v7272
        %v10071 = vunpack.c.h.b16 %v7272
        %v10072 = vunpack.c.l.b16 %v7273
        %v10073 = vunpack.c.h.b16 %v7273
        %v10074 = vunpack.c.l.b16 %v7274
        %v10075 = vunpack.c.h.b16 %v7274
        %v10076 = vunpack.c.l.b16 %v7275
        %v10077 = vunpack.c.l.b16 %v7276
        %v10078 = vunpack.c.h.b16 %v7276
        %v10079 = vunpack.c.l.b16 %v7277
        %v10080 = vunpack.c.h.b16 %v7277
        %v10081 = vunpack.c.l.b16 %v7278
        %v10082 = vunpack.c.h.b16 %v7278
        %v10083 = vunpack.c.l.b16 %v7279
        %v10084 = vunpack.c.h.b16 %v7279
        %v10085 = vunpack.c.l.b16 %v7280
        %v10086 = vunpack.c.h.b16 %v7280
        %v10087 = vunpack.c.l.b16 %v7281
        %v10088 = vunpack.c.h.b16 %v7281
        %v10089 = vunpack.c.l.b16 %v7282
        %v10090 = vunpack.c.h.b16 %v7282
        %v10091 = vunpack.c.l.b16 %v7283
        %v10092 = vunpack.c.h.b16 %v7283
        %v10093 = vunpack.c.l.b16 %v7284
        %v10094 = vunpack.c.l.b16 %v7285
        %v10095 = vunpack.c.h.b16 %v7285
        %v10096 = vunpack.c.l.b16 %v7286
        %v10097 = vunpack.c.h.b16 %v7286
        %v10098 = vunpack.c.l.b16 %v7287
        %v10099 = vunpack.c.h.b16 %v7287
        %v10100 = vunpack.c.l.b16 %v7288
        %v10101 = vunpack.c.h.b16 %v7288
        %v10102 = vunpack.c.l.b16 %v7289
        %v10103 = vunpack.c.h.b16 %v7289
        %v10104 = vunpack.c.l.b16 %v7290
        %v10105 = vunpack.c.h.b16 %v7290
        %v10106 = vunpack.c.l.b16 %v7291
        %v10107 = vunpack.c.h.b16 %v7291
        %v10108 = vunpack.c.l.b16 %v7292
        %v10109 = vunpack.c.h.b16 %v7292
        %v10110 = vunpack.c.l.b16 %v7293
        %v10111 = vunpack.c.l.b16 %v7294
        %v10112 = vunpack.c.h.b16 %v7294
        %v10113 = vunpack.c.l.b16 %v7295
        %v10114 = vunpack.c.h.b16 %v7295
        %v10115 = vunpack.c.l.b16 %v7296
        %v10116 = vunpack.c.h.b16 %v7296
        %v10117 = vunpack.c.l.b16 %v7297
        %v10118 = vunpack.c.h.b16 %v7297
        %v10119 = vunpack.c.l.b16 %v7298
        %v10120 = vunpack.c.h.b16 %v7298
        %v10121 = vunpack.c.l.b16 %v7299
        %v10122 = vunpack.c.h.b16 %v7299
        %v10123 = vunpack.c.l.b16 %v7300
        %v10124 = vunpack.c.h.b16 %v7300
        %v10125 = vunpack.c.l.b16 %v7301
        %v10126 = vunpack.c.h.b16 %v7301
        %v10127 = vunpack.c.l.b16 %v7302
        %v10128 = vunpack.c.l.b16 %v7303
        %v10129 = vunpack.c.h.b16 %v7303
        %v10130 = vunpack.c.l.b16 %v7304
        %v10131 = vunpack.c.h.b16 %v7304
        %v10132 = vunpack.c.l.b16 %v7305
        %v10133 = vunpack.c.h.b16 %v7305
        %v10134 = vunpack.c.l.b16 %v7306
        %v10135 = vunpack.c.h.b16 %v7306
        %v10136 = vunpack.c.l.b16 %v7307
        %v10137 = vunpack.c.h.b16 %v7307
        %v10138 = vunpack.c.l.b16 %v7308
        %v10139 = vunpack.c.h.b16 %v7308
        %v10140 = vunpack.c.l.b16 %v7309
        %v10141 = vunpack.c.h.b16 %v7309
        %v10142 = vunpack.c.l.b16 %v7310
        %v10143 = vunpack.c.h.b16 %v7310
        %v10144 = vunpack.c.l.b16 %v7311
        %v10145 = vunpack.c.l.b16 %v7312
        %v10146 = vunpack.c.h.b16 %v7312
        %v10147 = vunpack.c.l.b16 %v7313
        %v10148 = vunpack.c.h.b16 %v7313
        %v10149 = vunpack.c.l.b16 %v7314
        %v10150 = vunpack.c.h.b16 %v7314
        %v10151 = vunpack.c.l.b16 %v7315
        %v10152 = vunpack.c.h.b16 %v7315
        %v10153 = vunpack.c.l.b16 %v7316
        %v10154 = vunpack.c.h.b16 %v7316
        %v10155 = vunpack.c.l.b16 %v7317
        %v10156 = vunpack.c.h.b16 %v7317
        %v10157 = vunpack.c.l.b16 %v7318
        %v10158 = vunpack.c.h.b16 %v7318
        %v10159 = vunpack.c.l.b16 %v7319
        %v10160 = vunpack.c.h.b16 %v7319
        %v10161 = vunpack.c.l.b16 %v7320
        %v10162 = vunpack.c.l.b16 %v7321
        %v10163 = vunpack.c.h.b16 %v7321
        %v10164 = vunpack.c.l.b16 %v7322
        %v10165 = vunpack.c.h.b16 %v7322
        %v10166 = vunpack.c.l.b16 %v7323
        %v10167 = vunpack.c.h.b16 %v7323
        %v10168 = vunpack.c.l.b16 %v7324
        %v10169 = vunpack.c.h.b16 %v7324
        %v10170 = vunpack.c.l.b16 %v7325
        %v10171 = vunpack.c.h.b16 %v7325
        %v10172 = vunpack.c.l.b16 %v7326
        %v10173 = vunpack.c.h.b16 %v7326
        %v10174 = vunpack.c.l.b16 %v7327
        %v10175 = vunpack.c.h.b16 %v7327
        %v10176 = vunpack.c.l.b16 %v7328
        %v10177 = vunpack.c.h.b16 %v7328
        %v10178 = vunpack.c.l.b16 %v7329
        %v10179 = vunpack.c.l.b16 %v7330
        %v10180 = vunpack.c.h.b16 %v7330
        %v10181 = vunpack.c.l.b16 %v7331
        %v10182 = vunpack.c.h.b16 %v7331
        %v10183 = vunpack.c.l.b16 %v7332
        %v10184 = vunpack.c.h.b16 %v7332
        %v10185 = vunpack.c.l.b16 %v7333
        %v10186 = vunpack.c.h.b16 %v7333
        %v10187 = vunpack.c.l.b16 %v7334
        %v10188 = vunpack.c.h.b16 %v7334
        %v10189 = vunpack.c.l.b16 %v7335
        %v10190 = vunpack.c.h.b16 %v7335
        %v10191 = vunpack.c.l.b16 %v7336
        %v10192 = vunpack.c.h.b16 %v7336
        %v10193 = vunpack.c.l.b16 %v7337
        %v10194 = vunpack.c.h.b16 %v7337
        %v10195 = vunpack.c.l.b16 %v7338
        %v10196 = vunpack.c.l.b16 %v7339
        %v10197 = vunpack.c.h.b16 %v7339
        %v10198 = vunpack.c.l.b16 %v7340
        %v10199 = vunpack.c.h.b16 %v7340
        %v10200 = vunpack.c.l.b16 %v7341
        %v10201 = vunpack.c.h.b16 %v7341
        %v10202 = vunpack.c.l.b16 %v7342
        %v10203 = vunpack.c.h.b16 %v7342
        %v10204 = vunpack.c.l.b16 %v7343
        %v10205 = vunpack.c.h.b16 %v7343
        %v10206 = vunpack.c.l.b16 %v7344
        %v10207 = vunpack.c.h.b16 %v7344
        %v10208 = vunpack.c.l.b16 %v7345
        %v10209 = vunpack.c.h.b16 %v7345
        %v10210 = vunpack.c.l.b16 %v7346
        %v10211 = vunpack.c.h.b16 %v7346
        %v10212 = vunpack.c.l.b16 %v7347
        %v10213 = vunpack.c.l.b16 %v7348
        %v10214 = vunpack.c.h.b16 %v7348
        %v10215 = vunpack.c.l.b16 %v7349
        %v10216 = vunpack.c.h.b16 %v7349
        %v10217 = vunpack.c.l.b16 %v7350
        %v10218 = vunpack.c.h.b16 %v7350
        %v10219 = vunpack.c.l.b16 %v7351
        %v10220 = vunpack.c.h.b16 %v7351
        %v10221 = vunpack.c.l.b16 %v7352
        %v10222 = vunpack.c.h.b16 %v7352
        %v10223 = vunpack.c.l.b16 %v7353
        %v10224 = vunpack.c.h.b16 %v7353
        %v10225 = vunpack.c.l.b16 %v7354
        %v10226 = vunpack.c.h.b16 %v7354
        %v10227 = vunpack.c.l.b16 %v7355
        %v10228 = vunpack.c.h.b16 %v7355
        %v10229 = vunpack.c.l.b16 %v7356
        %v10230 = vunpack.c.l.b16 %v7357
        %v10231 = vunpack.c.h.b16 %v7357
        %v10232 = vunpack.c.l.b16 %v7358
        %v10233 = vunpack.c.h.b16 %v7358
        %v10234 = vunpack.c.l.b16 %v7359
        %v10235 = vunpack.c.h.b16 %v7359
        %v10236 = vunpack.c.l.b16 %v7360
        %v10237 = vunpack.c.h.b16 %v7360
        %v10238 = vunpack.c.l.b16 %v7361
        %v10239 = vunpack.c.h.b16 %v7361
        %v10240 = vunpack.c.l.b16 %v7362
        %v10241 = vunpack.c.h.b16 %v7362
        %v10242 = vunpack.c.l.b16 %v7363
        %v10243 = vunpack.c.h.b16 %v7363
        %v10244 = vunpack.c.l.b16 %v7364
        %v10245 = vunpack.c.h.b16 %v7364
        %v10246 = vunpack.c.l.b16 %v7365
        %v10247 = vunpack.c.l.b16 %v7366
        %v10248 = vunpack.c.h.b16 %v7366
        %v10249 = vunpack.c.l.b16 %v7367
        %v10250 = vunpack.c.h.b16 %v7367
        %v10251 = vunpack.c.l.b16 %v7368
        %v10252 = vunpack.c.h.b16 %v7368
        %v10253 = vunpack.c.l.b16 %v7369
        %v10254 = vunpack.c.h.b16 %v7369
        %v10255 = vunpack.c.l.b16 %v7370
        %v10256 = vunpack.c.h.b16 %v7370
        %v10257 = vunpack.c.l.b16 %v7371
        %v10258 = vunpack.c.h.b16 %v7371
        %v10259 = vunpack.c.l.b16 %v7372
        %v10260 = vunpack.c.h.b16 %v7372
        %v10261 = vunpack.c.l.b16 %v7373
        %v10262 = vunpack.c.h.b16 %v7373
        %v10263 = vunpack.c.l.b16 %v7374
        %v10264 = vunpack.c.l.b16 %v7375
        %v10265 = vunpack.c.h.b16 %v7375
        %v10266 = vunpack.c.l.b16 %v7376
        %v10267 = vunpack.c.h.b16 %v7376
        %v10268 = vunpack.c.l.b16 %v7377
        %v10269 = vunpack.c.h.b16 %v7377
        %v10270 = vunpack.c.l.b16 %v7378
        %v10271 = vunpack.c.h.b16 %v7378
        %v10272 = vunpack.c.l.b16 %v7379
        %v10273 = vunpack.c.h.b16 %v7379
        %v10274 = vunpack.c.l.b16 %v7380
        %v10275 = vunpack.c.h.b16 %v7380
        %v10276 = vunpack.c.l.b16 %v7381
        %v10277 = vunpack.c.h.b16 %v7381
        %v10278 = vunpack.c.l.b16 %v7382
        %v10279 = vunpack.c.h.b16 %v7382
        %v10280 = vunpack.c.l.b16 %v7383
        %v10281 = vunpack.c.l.b16 %v7384
        %v10282 = vunpack.c.h.b16 %v7384
        %v10283 = vunpack.c.l.b16 %v7385
        %v10284 = vunpack.c.h.b16 %v7385
        %v10285 = vunpack.c.l.b16 %v7386
        %v10286 = vunpack.c.h.b16 %v7386
        %v10287 = vunpack.c.l.b16 %v7387
        %v10288 = vunpack.c.h.b16 %v7387
        %v10289 = vunpack.c.l.b16 %v7388
        %v10290 = vunpack.c.h.b16 %v7388
        %v10291 = vunpack.c.l.b16 %v7389
        %v10292 = vunpack.c.h.b16 %v7389
        %v10293 = vunpack.c.l.b16 %v7390
        %v10294 = vunpack.c.h.b16 %v7390
        %v10295 = vunpack.c.l.b16 %v7391
        %v10296 = vunpack.c.h.b16 %v7391
        %v10297 = vunpack.c.l.b16 %v7392
        %v10298 = vunpack.c.l.b16 %v7393
        %v10299 = vunpack.c.h.b16 %v7393
        %v10300 = vunpack.c.l.b16 %v7394
        %v10301 = vunpack.c.h.b16 %v7394
        %v10302 = vunpack.c.l.b16 %v7395
        %v10303 = vunpack.c.h.b16 %v7395
        %v10304 = vunpack.c.l.b16 %v7396
        %v10305 = vunpack.c.h.b16 %v7396
        %v10306 = vunpack.c.l.b16 %v7397
        %v10307 = vunpack.c.h.b16 %v7397
        %v10308 = vunpack.c.l.b16 %v7398
        %v10309 = vunpack.c.h.b16 %v7398
        %v10310 = vunpack.c.l.b16 %v7399
        %v10311 = vunpack.c.h.b16 %v7399
        %v10312 = vunpack.c.l.b16 %v7400
        %v10313 = vunpack.c.h.b16 %v7400
        %v10314 = vunpack.c.l.b16 %v7401
        %v10315 = vunpack.c.l.b16 %v7402
        %v10316 = vunpack.c.h.b16 %v7402
        %v10317 = vunpack.c.l.b16 %v7403
        %v10318 = vunpack.c.h.b16 %v7403
        %v10319 = vunpack.c.l.b16 %v7404
        %v10320 = vunpack.c.h.b16 %v7404
        %v10321 = vunpack.c.l.b16 %v7405
        %v10322 = vunpack.c.h.b16 %v7405
        %v10323 = vunpack.c.l.b16 %v7406
        %v10324 = vunpack.c.h.b16 %v7406
        %v10325 = vunpack.c.l.b16 %v7407
        %v10326 = vunpack.c.h.b16 %v7407
        %v10327 = vunpack.c.l.b16 %v7408
        %v10328 = vunpack.c.h.b16 %v7408
        %v10329 = vunpack.c.l.b16 %v7409
        %v10330 = vunpack.c.h.b16 %v7409
        %v10331 = vunpack.c.l.b16 %v7410
        %v10332 = vunpack.c.l.b16 %v7411
        %v10333 = vunpack.c.h.b16 %v7411
        %v10334 = vunpack.c.l.b16 %v7412
        %v10335 = vunpack.c.h.b16 %v7412
        %v10336 = vunpack.c.l.b16 %v7413
        %v10337 = vunpack.c.h.b16 %v7413
        %v10338 = vunpack.c.l.b16 %v7414
        %v10339 = vunpack.c.h.b16 %v7414
        %v10340 = vunpack.c.l.b16 %v7415
        %v10341 = vunpack.c.h.b16 %v7415
        %v10342 = vunpack.c.l.b16 %v7416
        %v10343 = vunpack.c.h.b16 %v7416
        %v10344 = vunpack.c.l.b16 %v7417
        %v10345 = vunpack.c.h.b16 %v7417
        %v10346 = vunpack.c.l.b16 %v7418
        %v10347 = vunpack.c.h.b16 %v7418
        %v10348 = vunpack.c.l.b16 %v7419
        %v10349 = vunpack.c.l.b16 %v7420
        %v10350 = vunpack.c.h.b16 %v7420
        %v10351 = vunpack.c.l.b16 %v7421
        %v10352 = vunpack.c.h.b16 %v7421
        %v10353 = vunpack.c.l.b16 %v7422
        %v10354 = vunpack.c.h.b16 %v7422
        %v10355 = vunpack.c.l.b16 %v7423
        %v10356 = vunpack.c.h.b16 %v7423
        %v10357 = vunpack.c.l.b16 %v7424
        %v10358 = vunpack.c.h.b16 %v7424
        %v10359 = vunpack.c.l.b16 %v7425
        %v10360 = vunpack.c.h.b16 %v7425
        %v10361 = vunpack.c.l.b16 %v7426
        %v10362 = vunpack.c.h.b16 %v7426
        %v10363 = vunpack.c.l.b16 %v7427
        %v10364 = vunpack.c.h.b16 %v7427
        %v10365 = vunpack.c.l.b16 %v7428
        %v10366 = vunpack.c.l.b16 %v7429
        %v10367 = vunpack.c.h.b16 %v7429
        %v10368 = vunpack.c.l.b16 %v7430
        %v10369 = vunpack.c.h.b16 %v7430
        %v10370 = vunpack.c.l.b16 %v7431
        %v10371 = vunpack.c.h.b16 %v7431
        %v10372 = vunpack.c.l.b16 %v7432
        %v10373 = vunpack.c.h.b16 %v7432
        %v10374 = vunpack.c.l.b16 %v7433
        %v10375 = vunpack.c.h.b16 %v7433
        %v10376 = vunpack.c.l.b16 %v7434
        %v10377 = vunpack.c.h.b16 %v7434
        %v10378 = vunpack.c.l.b16 %v7435
        %v10379 = vunpack.c.h.b16 %v7435
        %v10380 = vunpack.c.l.b16 %v7436
        %v10381 = vunpack.c.h.b16 %v7436
        %v10382 = vunpack.c.l.b16 %v7437
        %v10383 = vpack.c.b16 %v9992, %v9975
        %v10384 = vpack.c.b16 %v9993, %v9976
        %v10385 = vpack.c.b16 %v9994, %v9977
        %v10386 = vpack.c.b16 %v9995, %v9978
        %v10387 = vpack.c.b16 %v9996, %v9979
        %v10388 = vpack.c.b16 %v9997, %v9980
        %v10389 = vpack.c.b16 %v9998, %v9981
        %v10390 = vpack.c.b16 %v9999, %v9982
        %v10391 = vpack.c.b16 %v10000, %v9983
        %v10392 = vpack.c.b16 %v10001, %v9984
        %v10393 = vpack.c.b16 %v10002, %v9985
        %v10394 = vpack.c.b16 %v10003, %v9986
        %v10395 = vpack.c.b16 %v10004, %v9987
        %v10396 = vpack.c.b16 %v10005, %v9988
        %v10397 = vpack.c.b16 %v10006, %v9989
        %v10398 = vpack.c.b16 %v10007, %v9990
        %v10399 = vpack.c.b16 %v10008, %v9991
        %v10400 = vpack.c.b16 %v10026, %v10009
        %v10401 = vpack.c.b16 %v10027, %v10010
        %v10402 = vpack.c.b16 %v10028, %v10011
        %v10403 = vpack.c.b16 %v10029, %v10012
        %v10404 = vpack.c.b16 %v10030, %v10013
        %v10405 = vpack.c.b16 %v10031, %v10014
        %v10406 = vpack.c.b16 %v10032, %v10015
        %v10407 = vpack.c.b16 %v10033, %v10016
        %v10408 = vpack.c.b16 %v10034, %v10017
        %v10409 = vpack.c.b16 %v10035, %v10018
        %v10410 = vpack.c.b16 %v10036, %v10019
        %v10411 = vpack.c.b16 %v10037, %v10020
        %v10412 = vpack.c.b16 %v10038, %v10021
        %v10413 = vpack.c.b16 %v10039, %v10022
        %v10414 = vpack.c.b16 %v10040, %v10023
        %v10415 = vpack.c.b16 %v10041, %v10024
        %v10416 = vpack.c.b16 %v10042, %v10025
        %v10417 = vpack.c.b16 %v10060, %v10043
        %v10418 = vpack.c.b16 %v10061, %v10044
        %v10419 = vpack.c.b16 %v10062, %v10045
        %v10420 = vpack.c.b16 %v10063, %v10046
        %v10421 = vpack.c.b16 %v10064, %v10047
        %v10422 = vpack.c.b16 %v10065, %v10048
        %v10423 = vpack.c.b16 %v10066, %v10049
        %v10424 = vpack.c.b16 %v10067, %v10050
        %v10425 = vpack.c.b16 %v10068, %v10051
        %v10426 = vpack.c.b16 %v10069, %v10052
        %v10427 = vpack.c.b16 %v10070, %v10053
        %v10428 = vpack.c.b16 %v10071, %v10054
        %v10429 = vpack.c.b16 %v10072, %v10055
        %v10430 = vpack.c.b16 %v10073, %v10056
        %v10431 = vpack.c.b16 %v10074, %v10057
        %v10432 = vpack.c.b16 %v10075, %v10058
        %v10433 = vpack.c.b16 %v10076, %v10059
        %v10434 = vpack.c.b16 %v10094, %v10077
        %v10435 = vpack.c.b16 %v10095, %v10078
        %v10436 = vpack.c.b16 %v10096, %v10079
        %v10437 = vpack.c.b16 %v10097, %v10080
        %v10438 = vpack.c.b16 %v10098, %v10081
        %v10439 = vpack.c.b16 %v10099, %v10082
        %v10440 = vpack.c.b16 %v10100, %v10083
        %v10441 = vpack.c.b16 %v10101, %v10084
        %v10442 = vpack.c.b16 %v10102, %v10085
        %v10443 = vpack.c.b16 %v10103, %v10086
        %v10444 = vpack.c.b16 %v10104, %v10087
        %v10445 = vpack.c.b16 %v10105, %v10088
        %v10446 = vpack.c.b16 %v10106, %v10089
        %v10447 = vpack.c.b16 %v10107, %v10090
        %v10448 = vpack.c.b16 %v10108, %v10091
        %v10449 = vpack.c.b16 %v10109, %v10092
        %v10450 = vpack.c.b16 %v10110, %v10093
        %v10451 = vpack.c.b16 %v10128, %v10111
        %v10452 = vpack.c.b16 %v10129, %v10112
        %v10453 = vpack.c.b16 %v10130, %v10113
        %v10454 = vpack.c.b16 %v10131, %v10114
        %v10455 = vpack.c.b16 %v10132, %v10115
        %v10456 = vpack.c.b16 %v10133, %v10116
        %v10457 = vpack.c.b16 %v10134, %v10117
        %v10458 = vpack.c.b16 %v10135, %v10118
        %v10459 = vpack.c.b16 %v10136, %v10119
        %v10460 = vpack.c.b16 %v10137, %v10120
        %v10461 = vpack.c.b16 %v10138, %v10121
        %v10462 = vpack.c.b16 %v10139, %v10122
        %v10463 = vpack.c.b16 %v10140, %v10123
        %v10464 = vpack.c.b16 %v10141, %v10124
        %v10465 = vpack.c.b16 %v10142, %v10125
        %v10466 = vpack.c.b16 %v10143, %v10126
        %v10467 = vpack.c.b16 %v10144, %v10127
        %v10468 = vpack.c.b16 %v10162, %v10145
        %v10469 = vpack.c.b16 %v10163, %v10146
        %v10470 = vpack.c.b16 %v10164, %v10147
        %v10471 = vpack.c.b16 %v10165, %v10148
        %v10472 = vpack.c.b16 %v10166, %v10149
        %v10473 = vpack.c.b16 %v10167, %v10150
        %v10474 = vpack.c.b16 %v10168, %v10151
        %v10475 = vpack.c.b16 %v10169, %v10152
        %v10476 = vpack.c.b16 %v10170, %v10153
        %v10477 = vpack.c.b16 %v10171, %v10154
        %v10478 = vpack.c.b16 %v10172, %v10155
        %v10479 = vpack.c.b16 %v10173, %v10156
        %v10480 = vpack.c.b16 %v10174, %v10157
        %v10481 = vpack.c.b16 %v10175, %v10158
        %v10482 = vpack.c.b16 %v10176, %v10159
        %v10483 = vpack.c.b16 %v10177, %v10160
        %v10484 = vpack.c.b16 %v10178, %v10161
        %v10485 = vpack.c.b16 %v10196, %v10179
        %v10486 = vpack.c.b16 %v10197, %v10180
        %v10487 = vpack.c.b16 %v10198, %v10181
        %v10488 = vpack.c.b16 %v10199, %v10182
        %v10489 = vpack.c.b16 %v10200, %v10183
        %v10490 = vpack.c.b16 %v10201, %v10184
        %v10491 = vpack.c.b16 %v10202, %v10185
        %v10492 = vpack.c.b16 %v10203, %v10186
        %v10493 = vpack.c.b16 %v10204, %v10187
        %v10494 = vpack.c.b16 %v10205, %v10188
        %v10495 = vpack.c.b16 %v10206, %v10189
        %v10496 = vpack.c.b16 %v10207, %v10190
        %v10497 = vpack.c.b16 %v10208, %v10191
        %v10498 = vpack.c.b16 %v10209, %v10192
        %v10499 = vpack.c.b16 %v10210, %v10193
        %v10500 = vpack.c.b16 %v10211, %v10194
        %v10501 = vpack.c.b16 %v10212, %v10195
        %v10502 = vpack.c.b16 %v10230, %v10213
        %v10503 = vpack.c.b16 %v10231, %v10214
        %v10504 = vpack.c.b16 %v10232, %v10215
        %v10505 = vpack.c.b16 %v10233, %v10216
        %v10506 = vpack.c.b16 %v10234, %v10217
        %v10507 = vpack.c.b16 %v10235, %v10218
        %v10508 = vpack.c.b16 %v10236, %v10219
        %v10509 = vpack.c.b16 %v10237, %v10220
        %v10510 = vpack.c.b16 %v10238, %v10221
        %v10511 = vpack.c.b16 %v10239, %v10222
        %v10512 = vpack.c.b16 %v10240, %v10223
        %v10513 = vpack.c.b16 %v10241, %v10224
        %v10514 = vpack.c.b16 %v10242, %v10225
        %v10515 = vpack.c.b16 %v10243, %v10226
        %v10516 = vpack.c.b16 %v10244, %v10227
        %v10517 = vpack.c.b16 %v10245, %v10228
        %v10518 = vpack.c.b16 %v10246, %v10229
        %v10519 = vpack.c.b16 %v10264, %v10247
        %v10520 = vpack.c.b16 %v10265, %v10248
        %v10521 = vpack.c.b16 %v10266, %v10249
        %v10522 = vpack.c.b16 %v10267, %v10250
        %v10523 = vpack.c.b16 %v10268, %v10251
        %v10524 = vpack.c.b16 %v10269, %v10252
        %v10525 = vpack.c.b16 %v10270, %v10253
        %v10526 = vpack.c.b16 %v10271, %v10254
        %v10527 = vpack.c.b16 %v10272, %v10255
        %v10528 = vpack.c.b16 %v10273, %v10256
        %v10529 = vpack.c.b16 %v10274, %v10257
        %v10530 = vpack.c.b16 %v10275, %v10258
        %v10531 = vpack.c.b16 %v10276, %v10259
        %v10532 = vpack.c.b16 %v10277, %v10260
        %v10533 = vpack.c.b16 %v10278, %v10261
        %v10534 = vpack.c.b16 %v10279, %v10262
        %v10535 = vpack.c.b16 %v10280, %v10263
        %v10536 = vpack.c.b16 %v10298, %v10281
        %v10537 = vpack.c.b16 %v10299, %v10282
        %v10538 = vpack.c.b16 %v10300, %v10283
        %v10539 = vpack.c.b16 %v10301, %v10284
        %v10540 = vpack.c.b16 %v10302, %v10285
        %v10541 = vpack.c.b16 %v10303, %v10286
        %v10542 = vpack.c.b16 %v10304, %v10287
        %v10543 = vpack.c.b16 %v10305, %v10288
        %v10544 = vpack.c.b16 %v10306, %v10289
        %v10545 = vpack.c.b16 %v10307, %v10290
        %v10546 = vpack.c.b16 %v10308, %v10291
        %v10547 = vpack.c.b16 %v10309, %v10292
        %v10548 = vpack.c.b16 %v10310, %v10293
        %v10549 = vpack.c.b16 %v10311, %v10294
        %v10550 = vpack.c.b16 %v10312, %v10295
        %v10551 = vpack.c.b16 %v10313, %v10296
        %v10552 = vpack.c.b16 %v10314, %v10297
        %v10553 = vpack.c.b16 %v10332, %v10315
        %v10554 = vpack.c.b16 %v10333, %v10316
        %v10555 = vpack.c.b16 %v10334, %v10317
        %v10556 = vpack.c.b16 %v10335, %v10318
        %v10557 = vpack.c.b16 %v10336, %v10319
        %v10558 = vpack.c.b16 %v10337, %v10320
        %v10559 = vpack.c.b16 %v10338, %v10321
        %v10560 = vpack.c.b16 %v10339, %v10322
        %v10561 = vpack.c.b16 %v10340, %v10323
        %v10562 = vpack.c.b16 %v10341, %v10324
        %v10563 = vpack.c.b16 %v10342, %v10325
        %v10564 = vpack.c.b16 %v10343, %v10326
        %v10565 = vpack.c.b16 %v10344, %v10327
        %v10566 = vpack.c.b16 %v10345, %v10328
        %v10567 = vpack.c.b16 %v10346, %v10329
        %v10568 = vpack.c.b16 %v10347, %v10330
        %v10569 = vpack.c.b16 %v10348, %v10331
        %v10570 = vpack.c.b16 %v10366, %v10349
        %v10571 = vpack.c.b16 %v10367, %v10350
        %v10572 = vpack.c.b16 %v10368, %v10351
        %v10573 = vpack.c.b16 %v10369, %v10352
        %v10574 = vpack.c.b16 %v10370, %v10353
        %v10575 = vpack.c.b16 %v10371, %v10354
        %v10576 = vpack.c.b16 %v10372, %v10355
        %v10577 = vpack.c.b16 %v10373, %v10356
        %v10578 = vpack.c.b16 %v10374, %v10357
        %v10579 = vpack.c.b16 %v10375, %v10358
        %v10580 = vpack.c.b16 %v10376, %v10359
        %v10581 = vpack.c.b16 %v10377, %v10360
        %v10582 = vpack.c.b16 %v10378, %v10361
        %v10583 = vpack.c.b16 %v10379, %v10362
        %v10584 = vpack.c.b16 %v10380, %v10363
        %v10585 = vpack.c.b16 %v10381, %v10364
        %v10586 = vpack.c.b16 %v10382, %v10365
        %v10792 = vsel %vm5667, %v7215, 0
        %v10795 = vsel %vm5667, %v7217, 0
        %v10798 = vsel %vm5667, %v7219, 0
        %v10801 = vsel %vm5667, %v7221, 0
        %10803 = vmatprep.subr.bf16.mxu0 %v10503
        %10804 = vmatpush1.bf16.msra.mxu0 %v10502
        %10805 = vmatprep.subr.bf16.mxu0 %v10486
        %10806 = vmatpush1.bf16.msra.mxu0 %v10485
        %10807 = vmatprep.subr.bf16.mxu0 %v10469
        %10808 = vmatpush1.bf16.msra.mxu0 %v10468
        %10809 = vmatprep.subr.bf16.mxu0 %v10452
        %10810 = vmatpush1.bf16.msra.mxu0 %v10451
        %10811 = vmatprep.subr.bf16.mxu0 %v10435
        %10812 = vmatpush1.bf16.msra.mxu0 %v10434
        %10813 = vmatprep.subr.bf16.mxu0 %v10418
        %10814 = vmatpush1.bf16.msra.mxu0 %v10417
        %10815 = vmatprep.subr.bf16.mxu0 %v10401
        %10816 = vmatpush1.bf16.msra.mxu0 %v10400
        %10817 = vmatprep.subr.bf16.mxu0 %v10384
        %10818 = vmatpush1.bf16.msra.mxu0 %v10383
        %10819 = vmatprep.subr.bf16.mxu0 0
        %10820 = vmatpush2.bf16.msra.mxu0 0
        %10821 = vmatprep.subr.bf16.mxu0 0
        %10822 = vmatpush2.bf16.msra.mxu0 0
        %10823 = vmatprep.subr.bf16.mxu0 0
        %10824 = vmatpush2.bf16.msra.mxu0 0
        %10825 = vmatprep.subr.bf16.mxu0 0
        %10826 = vmatpush2.bf16.msra.mxu0 0
        %10827 = vmatprep.subr.bf16.mxu0 %v10571
        %10828 = vmatpush2.bf16.msra.mxu0 %v10570
        %10829 = vmatprep.subr.bf16.mxu0 %v10554
        %10830 = vmatpush2.bf16.msra.mxu0 %v10553
        %10831 = vmatprep.subr.bf16.mxu0 %v10537
        %10832 = vmatpush2.bf16.msra.mxu0 %v10536
        %10833 = vmatprep.subr.bf16.mxu0 %v10520
        %10834 = vmatpush2.bf16.msra.mxu0 %v10519
        %10835 = vmatprep.mubr.bf16.mxu0 %v10792
        %10836 = vmatmul.mubr.bf16.gmra.mxu0 %v7214
        %v10837 = vpop.f32.mrf.mxu0
        %v10838 = vadd.f32 %v9145, %v10837
        %v10839 = vpop.f32.mrf.mxu0
        %v10840 = vadd.f32 %v9147, %v10839
        %v10841 = vpop.f32.mrf.mxu0
        %v10842 = vadd.f32 %v9149, %v10841
        %v10843 = vpop.f32.mrf.mxu0
        %v10844 = vadd.f32 %v9151, %v10843
        %10845 = vmatprep.mubr.bf16.mxu0 %v10795
        %10846 = vmatmul.mubr.bf16.gmra.mxu0 %v7216
        %v10847 = vpop.f32.mrf.mxu0
        %v10848 = vadd.f32 %v9155, %v10847
        %v10849 = vpop.f32.mrf.mxu0
        %v10850 = vadd.f32 %v9157, %v10849
        %v10851 = vpop.f32.mrf.mxu0
        %v10852 = vadd.f32 %v9159, %v10851
        %v10853 = vpop.f32.mrf.mxu0
        %v10854 = vadd.f32 %v9161, %v10853
        %10855 = vmatprep.mubr.bf16.mxu0 %v10798
        %10856 = vmatmul.mubr.bf16.gmra.mxu0 %v7218
        %v10857 = vpop.f32.mrf.mxu0
        %v10858 = vadd.f32 %v9165, %v10857
        %v10859 = vpop.f32.mrf.mxu0
        %v10860 = vadd.f32 %v9167, %v10859
        %v10861 = vpop.f32.mrf.mxu0
        %v10862 = vadd.f32 %v9169, %v10861
        %v10863 = vpop.f32.mrf.mxu0
        %v10864 = vadd.f32 %v9171, %v10863
        %10865 = vmatprep.mubr.bf16.mxu0 %v10801
        %10866 = vmatmul.mubr.bf16.gmra.mxu0 %v7220
        %v10867 = vpop.f32.mrf.mxu0
        %v10868 = vadd.f32 %v9175, %v10867
        %v10869 = vpop.f32.mrf.mxu0
        %v10870 = vadd.f32 %v9177, %v10869
        %v10871 = vpop.f32.mrf.mxu0
        %v10872 = vadd.f32 %v9179, %v10871
        %v10873 = vpop.f32.mrf.mxu0
        %v10874 = vadd.f32 %v9181, %v10873
        %10875 = vdwg.mxu0
        %10876 = vmatprep.subr.bf16.mxu0 %v10505
        %10877 = vmatpush1.bf16.msra.mxu0 %v10504
        %10878 = vmatprep.subr.bf16.mxu0 %v10488
        %10879 = vmatpush1.bf16.msra.mxu0 %v10487
        %10880 = vmatprep.subr.bf16.mxu0 %v10471
        %10881 = vmatpush1.bf16.msra.mxu0 %v10470
        %10882 = vmatprep.subr.bf16.mxu0 %v10454
        %10883 = vmatpush1.bf16.msra.mxu0 %v10453
        %10884 = vmatprep.subr.bf16.mxu0 %v10437
        %10885 = vmatpush1.bf16.msra.mxu0 %v10436
        %10886 = vmatprep.subr.bf16.mxu0 %v10420
        %10887 = vmatpush1.bf16.msra.mxu0 %v10419
        %10888 = vmatprep.subr.bf16.mxu0 %v10403
        %10889 = vmatpush1.bf16.msra.mxu0 %v10402
        %10890 = vmatprep.subr.bf16.mxu0 %v10386
        %10891 = vmatpush1.bf16.msra.mxu0 %v10385
        %10892 = vmatprep.subr.bf16.mxu0 0
        %10893 = vmatpush2.bf16.msra.mxu0 0
        %10894 = vmatprep.subr.bf16.mxu0 0
        %10895 = vmatpush2.bf16.msra.mxu0 0
        %10896 = vmatprep.subr.bf16.mxu0 0
        %10897 = vmatpush2.bf16.msra.mxu0 0
        %10898 = vmatprep.subr.bf16.mxu0 0
        %10899 = vmatpush2.bf16.msra.mxu0 0
        %10900 = vmatprep.subr.bf16.mxu0 %v10573
        %10901 = vmatpush2.bf16.msra.mxu0 %v10572
        %10902 = vmatprep.subr.bf16.mxu0 %v10556
        %10903 = vmatpush2.bf16.msra.mxu0 %v10555
        %10904 = vmatprep.subr.bf16.mxu0 %v10539
        %10905 = vmatpush2.bf16.msra.mxu0 %v10538
        %10906 = vmatprep.subr.bf16.mxu0 %v10522
        %10907 = vmatpush2.bf16.msra.mxu0 %v10521
        %10908 = vmatprep.mubr.bf16.mxu0 %v10792
        %10909 = vmatmul.mubr.bf16.gmra.mxu0 %v7214
        %v10910 = vpop.f32.mrf.mxu0
        %v10911 = vadd.f32 %v9218, %v10910
        %v10912 = vpop.f32.mrf.mxu0
        %v10913 = vadd.f32 %v9220, %v10912
        %v10914 = vpop.f32.mrf.mxu0
        %v10915 = vadd.f32 %v9222, %v10914
        %v10916 = vpop.f32.mrf.mxu0
        %v10917 = vadd.f32 %v9224, %v10916
        %10918 = vmatprep.mubr.bf16.mxu0 %v10795
        %10919 = vmatmul.mubr.bf16.gmra.mxu0 %v7216
        %v10920 = vpop.f32.mrf.mxu0
        %v10921 = vadd.f32 %v9228, %v10920
        %v10922 = vpop.f32.mrf.mxu0
        %v10923 = vadd.f32 %v9230, %v10922
        %v10924 = vpop.f32.mrf.mxu0
        %v10925 = vadd.f32 %v9232, %v10924
        %v10926 = vpop.f32.mrf.mxu0
        %v10927 = vadd.f32 %v9234, %v10926
        %10928 = vmatprep.mubr.bf16.mxu0 %v10798
        %10929 = vmatmul.mubr.bf16.gmra.mxu0 %v7218
        %v10930 = vpop.f32.mrf.mxu0
        %v10931 = vadd.f32 %v9238, %v10930
        %v10932 = vpop.f32.mrf.mxu0
        %v10933 = vadd.f32 %v9240, %v10932
        %v10934 = vpop.f32.mrf.mxu0
        %v10935 = vadd.f32 %v9242, %v10934
        %v10936 = vpop.f32.mrf.mxu0
        %v10937 = vadd.f32 %v9244, %v10936
        %10938 = vmatprep.mubr.bf16.mxu0 %v10801
        %10939 = vmatmul.mubr.bf16.gmra.mxu0 %v7220
        %v10940 = vpop.f32.mrf.mxu0
        %v10941 = vadd.f32 %v9248, %v10940
        %v10942 = vpop.f32.mrf.mxu0
        %v10943 = vadd.f32 %v9250, %v10942
        %v10944 = vpop.f32.mrf.mxu0
        %v10945 = vadd.f32 %v9252, %v10944
        %v10946 = vpop.f32.mrf.mxu0
        %v10947 = vadd.f32 %v9254, %v10946
        %10948 = vdwg.mxu0
        %10949 = vmatprep.subr.bf16.mxu0 %v10507
        %10950 = vmatpush1.bf16.msra.mxu0 %v10506
        %10951 = vmatprep.subr.bf16.mxu0 %v10490
        %10952 = vmatpush1.bf16.msra.mxu0 %v10489
        %10953 = vmatprep.subr.bf16.mxu0 %v10473
        %10954 = vmatpush1.bf16.msra.mxu0 %v10472
        %10955 = vmatprep.subr.bf16.mxu0 %v10456
        %10956 = vmatpush1.bf16.msra.mxu0 %v10455
        %10957 = vmatprep.subr.bf16.mxu0 %v10439
        %10958 = vmatpush1.bf16.msra.mxu0 %v10438
        %10959 = vmatprep.subr.bf16.mxu0 %v10422
        %10960 = vmatpush1.bf16.msra.mxu0 %v10421
        %10961 = vmatprep.subr.bf16.mxu0 %v10405
        %10962 = vmatpush1.bf16.msra.mxu0 %v10404
        %10963 = vmatprep.subr.bf16.mxu0 %v10388
        %10964 = vmatpush1.bf16.msra.mxu0 %v10387
        %10965 = vmatprep.subr.bf16.mxu0 0
        %10966 = vmatpush2.bf16.msra.mxu0 0
        %10967 = vmatprep.subr.bf16.mxu0 0
        %10968 = vmatpush2.bf16.msra.mxu0 0
        %10969 = vmatprep.subr.bf16.mxu0 0
        %10970 = vmatpush2.bf16.msra.mxu0 0
        %10971 = vmatprep.subr.bf16.mxu0 0
        %10972 = vmatpush2.bf16.msra.mxu0 0
        %10973 = vmatprep.subr.bf16.mxu0 %v10575
        %10974 = vmatpush2.bf16.msra.mxu0 %v10574
        %10975 = vmatprep.subr.bf16.mxu0 %v10558
        %10976 = vmatpush2.bf16.msra.mxu0 %v10557
        %10977 = vmatprep.subr.bf16.mxu0 %v10541
        %10978 = vmatpush2.bf16.msra.mxu0 %v10540
        %10979 = vmatprep.subr.bf16.mxu0 %v10524
        %10980 = vmatpush2.bf16.msra.mxu0 %v10523
        %10981 = vmatprep.mubr.bf16.mxu0 %v10792
        %10982 = vmatmul.mubr.bf16.gmra.mxu0 %v7214
        %v10983 = vpop.f32.mrf.mxu0
        %v10984 = vadd.f32 %v9291, %v10983
        %v10985 = vpop.f32.mrf.mxu0
        %v10986 = vadd.f32 %v9293, %v10985
        %v10987 = vpop.f32.mrf.mxu0
        %v10988 = vadd.f32 %v9295, %v10987
        %v10989 = vpop.f32.mrf.mxu0
        %v10990 = vadd.f32 %v9297, %v10989
        %10991 = vmatprep.mubr.bf16.mxu0 %v10795
        %10992 = vmatmul.mubr.bf16.gmra.mxu0 %v7216
        %v10993 = vpop.f32.mrf.mxu0
        %v10994 = vadd.f32 %v9301, %v10993
        %v10995 = vpop.f32.mrf.mxu0
        %v10996 = vadd.f32 %v9303, %v10995
        %v10997 = vpop.f32.mrf.mxu0
        %v10998 = vadd.f32 %v9305, %v10997
        %v10999 = vpop.f32.mrf.mxu0
        %v11000 = vadd.f32 %v9307, %v10999
        %11001 = vmatprep.mubr.bf16.mxu0 %v10798
        %11002 = vmatmul.mubr.bf16.gmra.mxu0 %v7218
        %v11003 = vpop.f32.mrf.mxu0
        %v11004 = vadd.f32 %v9311, %v11003
        %v11005 = vpop.f32.mrf.mxu0
        %v11006 = vadd.f32 %v9313, %v11005
        %v11007 = vpop.f32.mrf.mxu0
        %v11008 = vadd.f32 %v9315, %v11007
        %v11009 = vpop.f32.mrf.mxu0
        %v11010 = vadd.f32 %v9317, %v11009
        %11011 = vmatprep.mubr.bf16.mxu0 %v10801
        %11012 = vmatmul.mubr.bf16.gmra.mxu0 %v7220
        %v11013 = vpop.f32.mrf.mxu0
        %v11014 = vadd.f32 %v9321, %v11013
        %v11015 = vpop.f32.mrf.mxu0
        %v11016 = vadd.f32 %v9323, %v11015
        %v11017 = vpop.f32.mrf.mxu0
        %v11018 = vadd.f32 %v9325, %v11017
        %v11019 = vpop.f32.mrf.mxu0
        %v11020 = vadd.f32 %v9327, %v11019
        %11021 = vdwg.mxu0
        %11022 = vmatprep.subr.bf16.mxu0 %v10509
        %11023 = vmatpush1.bf16.msra.mxu0 %v10508
        %11024 = vmatprep.subr.bf16.mxu0 %v10492
        %11025 = vmatpush1.bf16.msra.mxu0 %v10491
        %11026 = vmatprep.subr.bf16.mxu0 %v10475
        %11027 = vmatpush1.bf16.msra.mxu0 %v10474
        %11028 = vmatprep.subr.bf16.mxu0 %v10458
        %11029 = vmatpush1.bf16.msra.mxu0 %v10457
        %11030 = vmatprep.subr.bf16.mxu0 %v10441
        %11031 = vmatpush1.bf16.msra.mxu0 %v10440
        %11032 = vmatprep.subr.bf16.mxu0 %v10424
        %11033 = vmatpush1.bf16.msra.mxu0 %v10423
        %11034 = vmatprep.subr.bf16.mxu0 %v10407
        %11035 = vmatpush1.bf16.msra.mxu0 %v10406
        %11036 = vmatprep.subr.bf16.mxu0 %v10390
        %11037 = vmatpush1.bf16.msra.mxu0 %v10389
        %11038 = vmatprep.subr.bf16.mxu0 0
        %11039 = vmatpush2.bf16.msra.mxu0 0
        %11040 = vmatprep.subr.bf16.mxu0 0
        %11041 = vmatpush2.bf16.msra.mxu0 0
        %11042 = vmatprep.subr.bf16.mxu0 0
        %11043 = vmatpush2.bf16.msra.mxu0 0
        %11044 = vmatprep.subr.bf16.mxu0 0
        %11045 = vmatpush2.bf16.msra.mxu0 0
        %11046 = vmatprep.subr.bf16.mxu0 %v10577
        %11047 = vmatpush2.bf16.msra.mxu0 %v10576
        %11048 = vmatprep.subr.bf16.mxu0 %v10560
        %11049 = vmatpush2.bf16.msra.mxu0 %v10559
        %11050 = vmatprep.subr.bf16.mxu0 %v10543
        %11051 = vmatpush2.bf16.msra.mxu0 %v10542
        %11052 = vmatprep.subr.bf16.mxu0 %v10526
        %11053 = vmatpush2.bf16.msra.mxu0 %v10525
        %11054 = vmatprep.mubr.bf16.mxu0 %v10792
        %11055 = vmatmul.mubr.bf16.gmra.mxu0 %v7214
        %v11056 = vpop.f32.mrf.mxu0
        %v11057 = vadd.f32 %v9364, %v11056
        %v11058 = vpop.f32.mrf.mxu0
        %v11059 = vadd.f32 %v9366, %v11058
        %v11060 = vpop.f32.mrf.mxu0
        %v11061 = vadd.f32 %v9368, %v11060
        %v11062 = vpop.f32.mrf.mxu0
        %v11063 = vadd.f32 %v9370, %v11062
        %11064 = vmatprep.mubr.bf16.mxu0 %v10795
        %11065 = vmatmul.mubr.bf16.gmra.mxu0 %v7216
        %v11066 = vpop.f32.mrf.mxu0
        %v11067 = vadd.f32 %v9374, %v11066
        %v11068 = vpop.f32.mrf.mxu0
        %v11069 = vadd.f32 %v9376, %v11068
        %v11070 = vpop.f32.mrf.mxu0
        %v11071 = vadd.f32 %v9378, %v11070
        %v11072 = vpop.f32.mrf.mxu0
        %v11073 = vadd.f32 %v9380, %v11072
        %11074 = vmatprep.mubr.bf16.mxu0 %v10798
        %11075 = vmatmul.mubr.bf16.gmra.mxu0 %v7218
        %v11076 = vpop.f32.mrf.mxu0
        %v11077 = vadd.f32 %v9384, %v11076
        %v11078 = vpop.f32.mrf.mxu0
        %v11079 = vadd.f32 %v9386, %v11078
        %v11080 = vpop.f32.mrf.mxu0
        %v11081 = vadd.f32 %v9388, %v11080
        %v11082 = vpop.f32.mrf.mxu0
        %v11083 = vadd.f32 %v9390, %v11082
        %11084 = vmatprep.mubr.bf16.mxu0 %v10801
        %11085 = vmatmul.mubr.bf16.gmra.mxu0 %v7220
        %v11086 = vpop.f32.mrf.mxu0
        %v11087 = vadd.f32 %v9394, %v11086
        %v11088 = vpop.f32.mrf.mxu0
        %v11089 = vadd.f32 %v9396, %v11088
        %v11090 = vpop.f32.mrf.mxu0
        %v11091 = vadd.f32 %v9398, %v11090
        %v11092 = vpop.f32.mrf.mxu0
        %v11093 = vadd.f32 %v9400, %v11092
        %11094 = vdwg.mxu0
        %11095 = vmatprep.subr.bf16.mxu0 %v10511
        %11096 = vmatpush1.bf16.msra.mxu0 %v10510
        %11097 = vmatprep.subr.bf16.mxu0 %v10494
        %11098 = vmatpush1.bf16.msra.mxu0 %v10493
        %11099 = vmatprep.subr.bf16.mxu0 %v10477
        %11100 = vmatpush1.bf16.msra.mxu0 %v10476
        %11101 = vmatprep.subr.bf16.mxu0 %v10460
        %11102 = vmatpush1.bf16.msra.mxu0 %v10459
        %11103 = vmatprep.subr.bf16.mxu0 %v10443
        %11104 = vmatpush1.bf16.msra.mxu0 %v10442
        %11105 = vmatprep.subr.bf16.mxu0 %v10426
        %11106 = vmatpush1.bf16.msra.mxu0 %v10425
        %11107 = vmatprep.subr.bf16.mxu0 %v10409
        %11108 = vmatpush1.bf16.msra.mxu0 %v10408
        %11109 = vmatprep.subr.bf16.mxu0 %v10392
        %11110 = vmatpush1.bf16.msra.mxu0 %v10391
        %11111 = vmatprep.subr.bf16.mxu0 0
        %11112 = vmatpush2.bf16.msra.mxu0 0
        %11113 = vmatprep.subr.bf16.mxu0 0
        %11114 = vmatpush2.bf16.msra.mxu0 0
        %11115 = vmatprep.subr.bf16.mxu0 0
        %11116 = vmatpush2.bf16.msra.mxu0 0
        %11117 = vmatprep.subr.bf16.mxu0 0
        %11118 = vmatpush2.bf16.msra.mxu0 0
        %11119 = vmatprep.subr.bf16.mxu0 %v10579
        %11120 = vmatpush2.bf16.msra.mxu0 %v10578
        %11121 = vmatprep.subr.bf16.mxu0 %v10562
        %11122 = vmatpush2.bf16.msra.mxu0 %v10561
        %11123 = vmatprep.subr.bf16.mxu0 %v10545
        %11124 = vmatpush2.bf16.msra.mxu0 %v10544
        %11125 = vmatprep.subr.bf16.mxu0 %v10528
        %11126 = vmatpush2.bf16.msra.mxu0 %v10527
        %11127 = vmatprep.mubr.bf16.mxu0 %v10792
        %11128 = vmatmul.mubr.bf16.gmra.mxu0 %v7214
        %v11129 = vpop.f32.mrf.mxu0
        %v11130 = vadd.f32 %v9437, %v11129
        %v11131 = vpop.f32.mrf.mxu0
        %v11132 = vadd.f32 %v9439, %v11131
        %v11133 = vpop.f32.mrf.mxu0
        %v11134 = vadd.f32 %v9441, %v11133
        %v11135 = vpop.f32.mrf.mxu0
        %v11136 = vadd.f32 %v9443, %v11135
        %11137 = vmatprep.mubr.bf16.mxu0 %v10795
        %11138 = vmatmul.mubr.bf16.gmra.mxu0 %v7216
        %v11139 = vpop.f32.mrf.mxu0
        %v11140 = vadd.f32 %v9447, %v11139
        %v11141 = vpop.f32.mrf.mxu0
        %v11142 = vadd.f32 %v9449, %v11141
        %v11143 = vpop.f32.mrf.mxu0
        %v11144 = vadd.f32 %v9451, %v11143
        %v11145 = vpop.f32.mrf.mxu0
        %v11146 = vadd.f32 %v9453, %v11145
        %11147 = vmatprep.mubr.bf16.mxu0 %v10798
        %11148 = vmatmul.mubr.bf16.gmra.mxu0 %v7218
        %v11149 = vpop.f32.mrf.mxu0
        %v11150 = vadd.f32 %v9457, %v11149
        %v11151 = vpop.f32.mrf.mxu0
        %v11152 = vadd.f32 %v9459, %v11151
        %v11153 = vpop.f32.mrf.mxu0
        %v11154 = vadd.f32 %v9461, %v11153
        %v11155 = vpop.f32.mrf.mxu0
        %v11156 = vadd.f32 %v9463, %v11155
        %11157 = vmatprep.mubr.bf16.mxu0 %v10801
        %11158 = vmatmul.mubr.bf16.gmra.mxu0 %v7220
        %v11159 = vpop.f32.mrf.mxu0
        %v11160 = vadd.f32 %v9467, %v11159
        %v11161 = vpop.f32.mrf.mxu0
        %v11162 = vadd.f32 %v9469, %v11161
        %v11163 = vpop.f32.mrf.mxu0
        %v11164 = vadd.f32 %v9471, %v11163
        %v11165 = vpop.f32.mrf.mxu0
        %v11166 = vadd.f32 %v9473, %v11165
        %11167 = vdwg.mxu0
        %11168 = vmatprep.subr.bf16.mxu0 %v10513
        %11169 = vmatpush1.bf16.msra.mxu0 %v10512
        %11170 = vmatprep.subr.bf16.mxu0 %v10496
        %11171 = vmatpush1.bf16.msra.mxu0 %v10495
        %11172 = vmatprep.subr.bf16.mxu0 %v10479
        %11173 = vmatpush1.bf16.msra.mxu0 %v10478
        %11174 = vmatprep.subr.bf16.mxu0 %v10462
        %11175 = vmatpush1.bf16.msra.mxu0 %v10461
        %11176 = vmatprep.subr.bf16.mxu0 %v10445
        %11177 = vmatpush1.bf16.msra.mxu0 %v10444
        %11178 = vmatprep.subr.bf16.mxu0 %v10428
        %11179 = vmatpush1.bf16.msra.mxu0 %v10427
        %11180 = vmatprep.subr.bf16.mxu0 %v10411
        %11181 = vmatpush1.bf16.msra.mxu0 %v10410
        %11182 = vmatprep.subr.bf16.mxu0 %v10394
        %11183 = vmatpush1.bf16.msra.mxu0 %v10393
        %11184 = vmatprep.subr.bf16.mxu0 0
        %11185 = vmatpush2.bf16.msra.mxu0 0
        %11186 = vmatprep.subr.bf16.mxu0 0
        %11187 = vmatpush2.bf16.msra.mxu0 0
        %11188 = vmatprep.subr.bf16.mxu0 0
        %11189 = vmatpush2.bf16.msra.mxu0 0
        %11190 = vmatprep.subr.bf16.mxu0 0
        %11191 = vmatpush2.bf16.msra.mxu0 0
        %11192 = vmatprep.subr.bf16.mxu0 %v10581
        %11193 = vmatpush2.bf16.msra.mxu0 %v10580
        %11194 = vmatprep.subr.bf16.mxu0 %v10564
        %11195 = vmatpush2.bf16.msra.mxu0 %v10563
        %11196 = vmatprep.subr.bf16.mxu0 %v10547
        %11197 = vmatpush2.bf16.msra.mxu0 %v10546
        %11198 = vmatprep.subr.bf16.mxu0 %v10530
        %11199 = vmatpush2.bf16.msra.mxu0 %v10529
        %11200 = vmatprep.mubr.bf16.mxu0 %v10792
        %11201 = vmatmul.mubr.bf16.gmra.mxu0 %v7214
        %v11202 = vpop.f32.mrf.mxu0
        %v11203 = vadd.f32 %v9510, %v11202
        %v11204 = vpop.f32.mrf.mxu0
        %v11205 = vadd.f32 %v9512, %v11204
        %v11206 = vpop.f32.mrf.mxu0
        %v11207 = vadd.f32 %v9514, %v11206
        %v11208 = vpop.f32.mrf.mxu0
        %v11209 = vadd.f32 %v9516, %v11208
        %11210 = vmatprep.mubr.bf16.mxu0 %v10795
        %11211 = vmatmul.mubr.bf16.gmra.mxu0 %v7216
        %v11212 = vpop.f32.mrf.mxu0
        %v11213 = vadd.f32 %v9520, %v11212
        %v11214 = vpop.f32.mrf.mxu0
        %v11215 = vadd.f32 %v9522, %v11214
        %v11216 = vpop.f32.mrf.mxu0
        %v11217 = vadd.f32 %v9524, %v11216
        %v11218 = vpop.f32.mrf.mxu0
        %v11219 = vadd.f32 %v9526, %v11218
        %11220 = vmatprep.mubr.bf16.mxu0 %v10798
        %11221 = vmatmul.mubr.bf16.gmra.mxu0 %v7218
        %v11222 = vpop.f32.mrf.mxu0
        %v11223 = vadd.f32 %v9530, %v11222
        %v11224 = vpop.f32.mrf.mxu0
        %v11225 = vadd.f32 %v9532, %v11224
        %v11226 = vpop.f32.mrf.mxu0
        %v11227 = vadd.f32 %v9534, %v11226
        %v11228 = vpop.f32.mrf.mxu0
        %v11229 = vadd.f32 %v9536, %v11228
        %11230 = vmatprep.mubr.bf16.mxu0 %v10801
        %11231 = vmatmul.mubr.bf16.gmra.mxu0 %v7220
        %v11232 = vpop.f32.mrf.mxu0
        %v11233 = vadd.f32 %v9540, %v11232
        %v11234 = vpop.f32.mrf.mxu0
        %v11235 = vadd.f32 %v9542, %v11234
        %v11236 = vpop.f32.mrf.mxu0
        %v11237 = vadd.f32 %v9544, %v11236
        %v11238 = vpop.f32.mrf.mxu0
        %v11239 = vadd.f32 %v9546, %v11238
        %11240 = vdwg.mxu0
        %11241 = vmatprep.subr.bf16.mxu0 %v10515
        %11242 = vmatpush1.bf16.msra.mxu0 %v10514
        %11243 = vmatprep.subr.bf16.mxu0 %v10498
        %11244 = vmatpush1.bf16.msra.mxu0 %v10497
        %11245 = vmatprep.subr.bf16.mxu0 %v10481
        %11246 = vmatpush1.bf16.msra.mxu0 %v10480
        %11247 = vmatprep.subr.bf16.mxu0 %v10464
        %11248 = vmatpush1.bf16.msra.mxu0 %v10463
        %11249 = vmatprep.subr.bf16.mxu0 %v10447
        %11250 = vmatpush1.bf16.msra.mxu0 %v10446
        %11251 = vmatprep.subr.bf16.mxu0 %v10430
        %11252 = vmatpush1.bf16.msra.mxu0 %v10429
        %11253 = vmatprep.subr.bf16.mxu0 %v10413
        %11254 = vmatpush1.bf16.msra.mxu0 %v10412
        %11255 = vmatprep.subr.bf16.mxu0 %v10396
        %11256 = vmatpush1.bf16.msra.mxu0 %v10395
        %11257 = vmatprep.subr.bf16.mxu0 0
        %11258 = vmatpush2.bf16.msra.mxu0 0
        %11259 = vmatprep.subr.bf16.mxu0 0
        %11260 = vmatpush2.bf16.msra.mxu0 0
        %11261 = vmatprep.subr.bf16.mxu0 0
        %11262 = vmatpush2.bf16.msra.mxu0 0
        %11263 = vmatprep.subr.bf16.mxu0 0
        %11264 = vmatpush2.bf16.msra.mxu0 0
        %11265 = vmatprep.subr.bf16.mxu0 %v10583
        %11266 = vmatpush2.bf16.msra.mxu0 %v10582
        %11267 = vmatprep.subr.bf16.mxu0 %v10566
        %11268 = vmatpush2.bf16.msra.mxu0 %v10565
        %11269 = vmatprep.subr.bf16.mxu0 %v10549
        %11270 = vmatpush2.bf16.msra.mxu0 %v10548
        %11271 = vmatprep.subr.bf16.mxu0 %v10532
        %11272 = vmatpush2.bf16.msra.mxu0 %v10531
        %11273 = vmatprep.mubr.bf16.mxu0 %v10792
        %11274 = vmatmul.mubr.bf16.gmra.mxu0 %v7214
        %v11275 = vpop.f32.mrf.mxu0
        %v11276 = vadd.f32 %v9583, %v11275
        %v11277 = vpop.f32.mrf.mxu0
        %v11278 = vadd.f32 %v9585, %v11277
        %v11279 = vpop.f32.mrf.mxu0
        %v11280 = vadd.f32 %v9587, %v11279
        %v11281 = vpop.f32.mrf.mxu0
        %v11282 = vadd.f32 %v9589, %v11281
        %11283 = vmatprep.mubr.bf16.mxu0 %v10795
        %11284 = vmatmul.mubr.bf16.gmra.mxu0 %v7216
        %v11285 = vpop.f32.mrf.mxu0
        %v11286 = vadd.f32 %v9593, %v11285
        %v11287 = vpop.f32.mrf.mxu0
        %v11288 = vadd.f32 %v9595, %v11287
        %v11289 = vpop.f32.mrf.mxu0
        %v11290 = vadd.f32 %v9597, %v11289
        %v11291 = vpop.f32.mrf.mxu0
        %v11292 = vadd.f32 %v9599, %v11291
        %11293 = vmatprep.mubr.bf16.mxu0 %v10798
        %11294 = vmatmul.mubr.bf16.gmra.mxu0 %v7218
        %v11295 = vpop.f32.mrf.mxu0
        %v11296 = vadd.f32 %v9603, %v11295
        %v11297 = vpop.f32.mrf.mxu0
        %v11298 = vadd.f32 %v9605, %v11297
        %v11299 = vpop.f32.mrf.mxu0
        %v11300 = vadd.f32 %v9607, %v11299
        %v11301 = vpop.f32.mrf.mxu0
        %v11302 = vadd.f32 %v9609, %v11301
        %11303 = vmatprep.mubr.bf16.mxu0 %v10801
        %11304 = vmatmul.mubr.bf16.gmra.mxu0 %v7220
        %v11305 = vpop.f32.mrf.mxu0
        %v11306 = vadd.f32 %v9613, %v11305
        %v11307 = vpop.f32.mrf.mxu0
        %v11308 = vadd.f32 %v9615, %v11307
        %v11309 = vpop.f32.mrf.mxu0
        %v11310 = vadd.f32 %v9617, %v11309
        %v11311 = vpop.f32.mrf.mxu0
        %v11312 = vadd.f32 %v9619, %v11311
        %11313 = vdwg.mxu0
        %11314 = vmatprep.subr.bf16.mxu0 %v10517
        %11315 = vmatpush1.bf16.msra.mxu0 %v10516
        %11316 = vmatprep.subr.bf16.mxu0 %v10500
        %11317 = vmatpush1.bf16.msra.mxu0 %v10499
        %11318 = vmatprep.subr.bf16.mxu0 %v10483
        %11319 = vmatpush1.bf16.msra.mxu0 %v10482
        %11320 = vmatprep.subr.bf16.mxu0 %v10466
        %11321 = vmatpush1.bf16.msra.mxu0 %v10465
        %11322 = vmatprep.subr.bf16.mxu0 %v10449
        %11323 = vmatpush1.bf16.msra.mxu0 %v10448
        %11324 = vmatprep.subr.bf16.mxu0 %v10432
        %11325 = vmatpush1.bf16.msra.mxu0 %v10431
        %11326 = vmatprep.subr.bf16.mxu0 %v10415
        %11327 = vmatpush1.bf16.msra.mxu0 %v10414
        %11328 = vmatprep.subr.bf16.mxu0 %v10398
        %11329 = vmatpush1.bf16.msra.mxu0 %v10397
        %11330 = vmatprep.subr.bf16.mxu0 0
        %11331 = vmatpush2.bf16.msra.mxu0 0
        %11332 = vmatprep.subr.bf16.mxu0 0
        %11333 = vmatpush2.bf16.msra.mxu0 0
        %11334 = vmatprep.subr.bf16.mxu0 0
        %11335 = vmatpush2.bf16.msra.mxu0 0
        %11336 = vmatprep.subr.bf16.mxu0 0
        %11337 = vmatpush2.bf16.msra.mxu0 0
        %11338 = vmatprep.subr.bf16.mxu0 %v10585
        %11339 = vmatpush2.bf16.msra.mxu0 %v10584
        %11340 = vmatprep.subr.bf16.mxu0 %v10568
        %11341 = vmatpush2.bf16.msra.mxu0 %v10567
        %11342 = vmatprep.subr.bf16.mxu0 %v10551
        %11343 = vmatpush2.bf16.msra.mxu0 %v10550
        %11344 = vmatprep.subr.bf16.mxu0 %v10534
        %11345 = vmatpush2.bf16.msra.mxu0 %v10533
        %11346 = vmatprep.mubr.bf16.mxu0 %v10792
        %11347 = vmatmul.mubr.bf16.gmra.mxu0 %v7214
        %v11348 = vpop.f32.mrf.mxu0
        %v11349 = vadd.f32 %v9656, %v11348
        %v11350 = vpop.f32.mrf.mxu0
        %v11351 = vadd.f32 %v9658, %v11350
        %v11352 = vpop.f32.mrf.mxu0
        %v11353 = vadd.f32 %v9660, %v11352
        %v11354 = vpop.f32.mrf.mxu0
        %v11355 = vadd.f32 %v9662, %v11354
        %11356 = vmatprep.mubr.bf16.mxu0 %v10795
        %11357 = vmatmul.mubr.bf16.gmra.mxu0 %v7216
        %v11358 = vpop.f32.mrf.mxu0
        %v11359 = vadd.f32 %v9666, %v11358
        %v11360 = vpop.f32.mrf.mxu0
        %v11361 = vadd.f32 %v9668, %v11360
        %v11362 = vpop.f32.mrf.mxu0
        %v11363 = vadd.f32 %v9670, %v11362
        %v11364 = vpop.f32.mrf.mxu0
        %v11365 = vadd.f32 %v9672, %v11364
        %11366 = vmatprep.mubr.bf16.mxu0 %v10798
        %11367 = vmatmul.mubr.bf16.gmra.mxu0 %v7218
        %v11368 = vpop.f32.mrf.mxu0
        %v11369 = vadd.f32 %v9676, %v11368
        %v11370 = vpop.f32.mrf.mxu0
        %v11371 = vadd.f32 %v9678, %v11370
        %v11372 = vpop.f32.mrf.mxu0
        %v11373 = vadd.f32 %v9680, %v11372
        %v11374 = vpop.f32.mrf.mxu0
        %v11375 = vadd.f32 %v9682, %v11374
        %11376 = vmatprep.mubr.bf16.mxu0 %v10801
        %11377 = vmatmul.mubr.bf16.gmra.mxu0 %v7220
        %v11378 = vpop.f32.mrf.mxu0
        %v11379 = vadd.f32 %v9686, %v11378
        %v11380 = vpop.f32.mrf.mxu0
        %v11381 = vadd.f32 %v9688, %v11380
        %v11382 = vpop.f32.mrf.mxu0
        %v11383 = vadd.f32 %v9690, %v11382
        %v11384 = vpop.f32.mrf.mxu0
        %v11385 = vadd.f32 %v9692, %v11384
        %11386 = vdwg.mxu0
        %11387 = vmatprep.subr.bf16.mxu0 0
        %11388 = vmatpush1.bf16.msra.mxu0 %v10518
        %11389 = vmatprep.subr.bf16.mxu0 0
        %11390 = vmatpush1.bf16.msra.mxu0 %v10501
        %11391 = vmatprep.subr.bf16.mxu0 0
        %11392 = vmatpush1.bf16.msra.mxu0 %v10484
        %11393 = vmatprep.subr.bf16.mxu0 0
        %11394 = vmatpush1.bf16.msra.mxu0 %v10467
        %11395 = vmatprep.subr.bf16.mxu0 0
        %11396 = vmatpush1.bf16.msra.mxu0 %v10450
        %11397 = vmatprep.subr.bf16.mxu0 0
        %11398 = vmatpush1.bf16.msra.mxu0 %v10433
        %11399 = vmatprep.subr.bf16.mxu0 0
        %11400 = vmatpush1.bf16.msra.mxu0 %v10416
        %11401 = vmatprep.subr.bf16.mxu0 0
        %11402 = vmatpush1.bf16.msra.mxu0 %v10399
        %11403 = vmatprep.subr.bf16.mxu0 0
        %11404 = vmatpush2.bf16.msra.mxu0 0
        %11405 = vmatprep.subr.bf16.mxu0 0
        %11406 = vmatpush2.bf16.msra.mxu0 0
        %11407 = vmatprep.subr.bf16.mxu0 0
        %11408 = vmatpush2.bf16.msra.mxu0 0
        %11409 = vmatprep.subr.bf16.mxu0 0
        %11410 = vmatpush2.bf16.msra.mxu0 0
        %11411 = vmatprep.subr.bf16.mxu0 0
        %11412 = vmatpush2.bf16.msra.mxu0 %v10586
        %11413 = vmatprep.subr.bf16.mxu0 0
        %11414 = vmatpush2.bf16.msra.mxu0 %v10569
        %11415 = vmatprep.subr.bf16.mxu0 0
        %11416 = vmatpush2.bf16.msra.mxu0 %v10552
        %11417 = vmatprep.subr.bf16.mxu0 0
        %11418 = vmatpush2.bf16.msra.mxu0 %v10535
        %11419 = vmatprep.mubr.bf16.mxu0 %v10792
        %11420 = vmatmul.mubr.bf16.gmra.mxu0 %v7214
        %v11421 = vpop.f32.mrf.mxu0
        %v11422 = vadd.f32 %v9729, %v11421
        %v11423 = vpop.f32.mrf.mxu0
        %v11424 = vpop.f32.mrf.mxu0
        %v11425 = vadd.f32 %v9732, %v11424
        %v11426 = vpop.f32.mrf.mxu0
        %11427 = vmatprep.mubr.bf16.mxu0 %v10795
        %11428 = vmatmul.mubr.bf16.gmra.mxu0 %v7216
        %v11429 = vpop.f32.mrf.mxu0
        %v11430 = vadd.f32 %v9737, %v11429
        %v11431 = vpop.f32.mrf.mxu0
        %v11432 = vpop.f32.mrf.mxu0
        %v11433 = vadd.f32 %v9740, %v11432
        %v11434 = vpop.f32.mrf.mxu0
        %11435 = vmatprep.mubr.bf16.mxu0 %v10798
        %11436 = vmatmul.mubr.bf16.gmra.mxu0 %v7218
        %v11437 = vpop.f32.mrf.mxu0
        %v11438 = vadd.f32 %v9745, %v11437
        %v11439 = vpop.f32.mrf.mxu0
        %v11440 = vpop.f32.mrf.mxu0
        %v11441 = vadd.f32 %v9748, %v11440
        %v11442 = vpop.f32.mrf.mxu0
        %11443 = vmatprep.mubr.bf16.mxu0 %v10801
        %11444 = vmatmul.mubr.bf16.gmra.mxu0 %v7220
        %v11445 = vpop.f32.mrf.mxu0
        %v11446 = vadd.f32 %v9753, %v11445
        %v11447 = vpop.f32.mrf.mxu0
        %v11448 = vpop.f32.mrf.mxu0
        %v11449 = vadd.f32 %v9756, %v11448
        %v11450 = vpop.f32.mrf.mxu0
        %11451 = vdwg.mxu0
        %v11452 = vld [vmem:[%s13] sm:$0xff]
        %v11453 = vld [vmem:[%s13 + $0x8] sm:$0xff]
        %v11454 = vld [vmem:[%s13 + $0x10] sm:$0x1]
        %v11458 = vlaneseq
        %v11459 = vshrl.u32 %v11458, 7
        %v11460 = vsub.s32 0, %v11459
        %v11461 = vrot.slane %v11452, %v11460
        %v11462 = vlaneseq
        %v11463 = vshrl.u32 %v11462, 7
        %v11464 = vsub.s32 1, %v11463
        %v11465 = vrot.slane %v11452, %v11464
        %v11466 = vlaneseq
        %v11467 = vshrl.u32 %v11466, 7
        %v11468 = vsub.s32 2, %v11467
        %v11469 = vrot.slane %v11452, %v11468
        %v11470 = vlaneseq
        %v11471 = vshrl.u32 %v11470, 7
        %v11472 = vsub.s32 3, %v11471
        %v11473 = vrot.slane %v11452, %v11472
        %v11474 = vlaneseq
        %v11475 = vshrl.u32 %v11474, 7
        %v11476 = vsub.s32 4, %v11475
        %v11477 = vrot.slane %v11452, %v11476
        %v11478 = vlaneseq
        %v11479 = vshrl.u32 %v11478, 7
        %v11480 = vsub.s32 5, %v11479
        %v11481 = vrot.slane %v11452, %v11480
        %v11482 = vlaneseq
        %v11483 = vshrl.u32 %v11482, 7
        %v11484 = vsub.s32 6, %v11483
        %v11485 = vrot.slane %v11452, %v11484
        %v11486 = vlaneseq
        %v11487 = vshrl.u32 %v11486, 7
        %v11488 = vsub.s32 7, %v11487
        %v11489 = vrot.slane %v11452, %v11488
        %v11490 = vlaneseq
        %v11491 = vshrl.u32 %v11490, 7
        %v11492 = vsub.s32 0, %v11491
        %v11493 = vrot.slane %v11453, %v11492
        %v11494 = vlaneseq
        %v11495 = vshrl.u32 %v11494, 7
        %v11496 = vsub.s32 1, %v11495
        %v11497 = vrot.slane %v11453, %v11496
        %v11498 = vlaneseq
        %v11499 = vshrl.u32 %v11498, 7
        %v11500 = vsub.s32 2, %v11499
        %v11501 = vrot.slane %v11453, %v11500
        %v11502 = vlaneseq
        %v11503 = vshrl.u32 %v11502, 7
        %v11504 = vsub.s32 3, %v11503
        %v11505 = vrot.slane %v11453, %v11504
        %v11506 = vlaneseq
        %v11507 = vshrl.u32 %v11506, 7
        %v11508 = vsub.s32 4, %v11507
        %v11509 = vrot.slane %v11453, %v11508
        %v11510 = vlaneseq
        %v11511 = vshrl.u32 %v11510, 7
        %v11512 = vsub.s32 5, %v11511
        %v11513 = vrot.slane %v11453, %v11512
        %v11514 = vlaneseq
        %v11515 = vshrl.u32 %v11514, 7
        %v11516 = vsub.s32 6, %v11515
        %v11517 = vrot.slane %v11453, %v11516
        %v11518 = vlaneseq
        %v11519 = vshrl.u32 %v11518, 7
        %v11520 = vsub.s32 7, %v11519
        %v11521 = vrot.slane %v11453, %v11520
        %v11522 = vlaneseq
        %v11523 = vshrl.u32 %v11522, 7
        %v11524 = vsub.s32 0, %v11523
        %v11525 = vrot.slane %v11454, %v11524
        %v11543 = vadd.f32 %v10838, %v11461
        %v11544 = vadd.f32 %v10840, %v11465
        %v11545 = vadd.f32 %v10911, %v11469
        %v11546 = vadd.f32 %v10913, %v11473
        %v11547 = vadd.f32 %v10984, %v11477
        %v11548 = vadd.f32 %v10986, %v11481
        %v11549 = vadd.f32 %v11057, %v11485
        %v11550 = vadd.f32 %v11059, %v11489
        %v11551 = vadd.f32 %v11130, %v11493
        %v11552 = vadd.f32 %v11132, %v11497
        %v11553 = vadd.f32 %v11203, %v11501
        %v11554 = vadd.f32 %v11205, %v11505
        %v11555 = vadd.f32 %v11276, %v11509
        %v11556 = vadd.f32 %v11278, %v11513
        %v11557 = vadd.f32 %v11349, %v11517
        %v11558 = vadd.f32 %v11351, %v11521
        %v11559 = vadd.f32 %v11422, %v11525
        %v11560 = vadd.f32 %v10842, %v11461
        %v11561 = vadd.f32 %v10844, %v11465
        %v11562 = vadd.f32 %v10915, %v11469
        %v11563 = vadd.f32 %v10917, %v11473
        %v11564 = vadd.f32 %v10988, %v11477
        %v11565 = vadd.f32 %v10990, %v11481
        %v11566 = vadd.f32 %v11061, %v11485
        %v11567 = vadd.f32 %v11063, %v11489
        %v11568 = vadd.f32 %v11134, %v11493
        %v11569 = vadd.f32 %v11136, %v11497
        %v11570 = vadd.f32 %v11207, %v11501
        %v11571 = vadd.f32 %v11209, %v11505
        %v11572 = vadd.f32 %v11280, %v11509
        %v11573 = vadd.f32 %v11282, %v11513
        %v11574 = vadd.f32 %v11353, %v11517
        %v11575 = vadd.f32 %v11355, %v11521
        %v11576 = vadd.f32 %v11425, %v11525
        %v11577 = vadd.f32 %v10848, %v11461
        %v11578 = vadd.f32 %v10850, %v11465
        %v11579 = vadd.f32 %v10921, %v11469
        %v11580 = vadd.f32 %v10923, %v11473
        %v11581 = vadd.f32 %v10994, %v11477
        %v11582 = vadd.f32 %v10996, %v11481
        %v11583 = vadd.f32 %v11067, %v11485
        %v11584 = vadd.f32 %v11069, %v11489
        %v11585 = vadd.f32 %v11140, %v11493
        %v11586 = vadd.f32 %v11142, %v11497
        %v11587 = vadd.f32 %v11213, %v11501
        %v11588 = vadd.f32 %v11215, %v11505
        %v11589 = vadd.f32 %v11286, %v11509
        %v11590 = vadd.f32 %v11288, %v11513
        %v11591 = vadd.f32 %v11359, %v11517
        %v11592 = vadd.f32 %v11361, %v11521
        %v11593 = vadd.f32 %v11430, %v11525
        %v11594 = vadd.f32 %v10852, %v11461
        %v11595 = vadd.f32 %v10854, %v11465
        %v11596 = vadd.f32 %v10925, %v11469
        %v11597 = vadd.f32 %v10927, %v11473
        %v11598 = vadd.f32 %v10998, %v11477
        %v11599 = vadd.f32 %v11000, %v11481
        %v11600 = vadd.f32 %v11071, %v11485
        %v11601 = vadd.f32 %v11073, %v11489
        %v11602 = vadd.f32 %v11144, %v11493
        %v11603 = vadd.f32 %v11146, %v11497
        %v11604 = vadd.f32 %v11217, %v11501
        %v11605 = vadd.f32 %v11219, %v11505
        %v11606 = vadd.f32 %v11290, %v11509
        %v11607 = vadd.f32 %v11292, %v11513
        %v11608 = vadd.f32 %v11363, %v11517
        %v11609 = vadd.f32 %v11365, %v11521
        %v11610 = vadd.f32 %v11433, %v11525
        %v11611 = vadd.f32 %v10858, %v11461
        %v11612 = vadd.f32 %v10860, %v11465
        %v11613 = vadd.f32 %v10931, %v11469
        %v11614 = vadd.f32 %v10933, %v11473
        %v11615 = vadd.f32 %v11004, %v11477
        %v11616 = vadd.f32 %v11006, %v11481
        %v11617 = vadd.f32 %v11077, %v11485
        %v11618 = vadd.f32 %v11079, %v11489
        %v11619 = vadd.f32 %v11150, %v11493
        %v11620 = vadd.f32 %v11152, %v11497
        %v11621 = vadd.f32 %v11223, %v11501
        %v11622 = vadd.f32 %v11225, %v11505
        %v11623 = vadd.f32 %v11296, %v11509
        %v11624 = vadd.f32 %v11298, %v11513
        %v11625 = vadd.f32 %v11369, %v11517
        %v11626 = vadd.f32 %v11371, %v11521
        %v11627 = vadd.f32 %v11438, %v11525
        %v11628 = vadd.f32 %v10862, %v11461
        %v11629 = vadd.f32 %v10864, %v11465
        %v11630 = vadd.f32 %v10935, %v11469
        %v11631 = vadd.f32 %v10937, %v11473
        %v11632 = vadd.f32 %v11008, %v11477
        %v11633 = vadd.f32 %v11010, %v11481
        %v11634 = vadd.f32 %v11081, %v11485
        %v11635 = vadd.f32 %v11083, %v11489
        %v11636 = vadd.f32 %v11154, %v11493
        %v11637 = vadd.f32 %v11156, %v11497
        %v11638 = vadd.f32 %v11227, %v11501
        %v11639 = vadd.f32 %v11229, %v11505
        %v11640 = vadd.f32 %v11300, %v11509
        %v11641 = vadd.f32 %v11302, %v11513
        %v11642 = vadd.f32 %v11373, %v11517
        %v11643 = vadd.f32 %v11375, %v11521
        %v11644 = vadd.f32 %v11441, %v11525
        %v11645 = vadd.f32 %v10868, %v11461
        %v11646 = vadd.f32 %v10870, %v11465
        %v11647 = vadd.f32 %v10941, %v11469
        %v11648 = vadd.f32 %v10943, %v11473
        %v11649 = vadd.f32 %v11014, %v11477
        %v11650 = vadd.f32 %v11016, %v11481
        %v11651 = vadd.f32 %v11087, %v11485
        %v11652 = vadd.f32 %v11089, %v11489
        %v11653 = vadd.f32 %v11160, %v11493
        %v11654 = vadd.f32 %v11162, %v11497
        %v11655 = vadd.f32 %v11233, %v11501
        %v11656 = vadd.f32 %v11235, %v11505
        %v11657 = vadd.f32 %v11306, %v11509
        %v11658 = vadd.f32 %v11308, %v11513
        %v11659 = vadd.f32 %v11379, %v11517
        %v11660 = vadd.f32 %v11381, %v11521
        %v11661 = vadd.f32 %v11446, %v11525
        %v11662 = vadd.f32 %v10872, %v11461
        %v11663 = vadd.f32 %v10874, %v11465
        %v11664 = vadd.f32 %v10945, %v11469
        %v11665 = vadd.f32 %v10947, %v11473
        %v11666 = vadd.f32 %v11018, %v11477
        %v11667 = vadd.f32 %v11020, %v11481
        %v11668 = vadd.f32 %v11091, %v11485
        %v11669 = vadd.f32 %v11093, %v11489
        %v11670 = vadd.f32 %v11164, %v11493
        %v11671 = vadd.f32 %v11166, %v11497
        %v11672 = vadd.f32 %v11237, %v11501
        %v11673 = vadd.f32 %v11239, %v11505
        %v11674 = vadd.f32 %v11310, %v11509
        %v11675 = vadd.f32 %v11312, %v11513
        %v11676 = vadd.f32 %v11383, %v11517
        %v11677 = vadd.f32 %v11385, %v11521
        %v11678 = vadd.f32 %v11449, %v11525
        %v11679 = vadd.f32 %v11543, %v517
        %v11680 = vadd.f32 %v11544, %v518
        %v11681 = vadd.f32 %v11545, %v519
        %v11682 = vadd.f32 %v11546, %v520
        %v11683 = vadd.f32 %v11547, %v521
        %v11684 = vadd.f32 %v11548, %v522
        %v11685 = vadd.f32 %v11549, %v523
        %v11686 = vadd.f32 %v11550, %v524
        %v11687 = vadd.f32 %v11551, %v525
        %v11688 = vadd.f32 %v11552, %v526
        %v11689 = vadd.f32 %v11553, %v527
        %v11690 = vadd.f32 %v11554, %v528
        %v11691 = vadd.f32 %v11555, %v529
        %v11692 = vadd.f32 %v11556, %v530
        %v11693 = vadd.f32 %v11557, %v531
        %v11694 = vadd.f32 %v11558, %v532
        %v11695 = vadd.f32 %v11559, %v533
        %v11696 = vadd.f32 %v11560, %v534
        %v11697 = vadd.f32 %v11561, %v535
        %v11698 = vadd.f32 %v11562, %v536
        %v11699 = vadd.f32 %v11563, %v537
        %v11700 = vadd.f32 %v11564, %v538
        %v11701 = vadd.f32 %v11565, %v539
        %v11702 = vadd.f32 %v11566, %v540
        %v11703 = vadd.f32 %v11567, %v541
        %v11704 = vadd.f32 %v11568, %v542
        %v11705 = vadd.f32 %v11569, %v543
        %v11706 = vadd.f32 %v11570, %v544
        %v11707 = vadd.f32 %v11571, %v545
        %v11708 = vadd.f32 %v11572, %v546
        %v11709 = vadd.f32 %v11573, %v547
        %v11710 = vadd.f32 %v11574, %v548
        %v11711 = vadd.f32 %v11575, %v549
        %v11712 = vadd.f32 %v11576, %v550
        %v11713 = vadd.f32 %v11577, %v551
        %v11714 = vadd.f32 %v11578, %v552
        %v11715 = vadd.f32 %v11579, %v553
        %v11716 = vadd.f32 %v11580, %v554
        %v11717 = vadd.f32 %v11581, %v555
        %v11718 = vadd.f32 %v11582, %v556
        %v11719 = vadd.f32 %v11583, %v557
        %v11720 = vadd.f32 %v11584, %v558
        %v11721 = vadd.f32 %v11585, %v559
        %v11722 = vadd.f32 %v11586, %v560
        %v11723 = vadd.f32 %v11587, %v561
        %v11724 = vadd.f32 %v11588, %v562
        %v11725 = vadd.f32 %v11589, %v563
        %v11726 = vadd.f32 %v11590, %v564
        %v11727 = vadd.f32 %v11591, %v565
        %v11728 = vadd.f32 %v11592, %v566
        %v11729 = vadd.f32 %v11593, %v567
        %v11730 = vadd.f32 %v11594, %v568
        %v11731 = vadd.f32 %v11595, %v569
        %v11732 = vadd.f32 %v11596, %v570
        %v11733 = vadd.f32 %v11597, %v571
        %v11734 = vadd.f32 %v11598, %v572
        %v11735 = vadd.f32 %v11599, %v573
        %v11736 = vadd.f32 %v11600, %v574
        %v11737 = vadd.f32 %v11601, %v575
        %v11738 = vadd.f32 %v11602, %v576
        %v11739 = vadd.f32 %v11603, %v577
        %v11740 = vadd.f32 %v11604, %v578
        %v11741 = vadd.f32 %v11605, %v579
        %v11742 = vadd.f32 %v11606, %v580
        %v11743 = vadd.f32 %v11607, %v581
        %v11744 = vadd.f32 %v11608, %v582
        %v11745 = vadd.f32 %v11609, %v583
        %v11746 = vadd.f32 %v11610, %v584
        %v11747 = vadd.f32 %v11611, %v585
        %v11748 = vadd.f32 %v11612, %v586
        %v11749 = vadd.f32 %v11613, %v587
        %v11750 = vadd.f32 %v11614, %v588
        %v11751 = vadd.f32 %v11615, %v589
        %v11752 = vadd.f32 %v11616, %v590
        %v11753 = vadd.f32 %v11617, %v591
        %v11754 = vadd.f32 %v11618, %v592
        %v11755 = vadd.f32 %v11619, %v593
        %v11756 = vadd.f32 %v11620, %v594
        %v11757 = vadd.f32 %v11621, %v595
        %v11758 = vadd.f32 %v11622, %v596
        %v11759 = vadd.f32 %v11623, %v597
        %v11760 = vadd.f32 %v11624, %v598
        %v11761 = vadd.f32 %v11625, %v599
        %v11762 = vadd.f32 %v11626, %v600
        %v11763 = vadd.f32 %v11627, %v601
        %v11764 = vadd.f32 %v11628, %v602
        %v11765 = vadd.f32 %v11629, %v603
        %v11766 = vadd.f32 %v11630, %v604
        %v11767 = vadd.f32 %v11631, %v605
        %v11768 = vadd.f32 %v11632, %v606
        %v11769 = vadd.f32 %v11633, %v607
        %v11770 = vadd.f32 %v11634, %v608
        %v11771 = vadd.f32 %v11635, %v609
        %v11772 = vadd.f32 %v11636, %v610
        %v11773 = vadd.f32 %v11637, %v611
        %v11774 = vadd.f32 %v11638, %v612
        %v11775 = vadd.f32 %v11639, %v613
        %v11776 = vadd.f32 %v11640, %v614
        %v11777 = vadd.f32 %v11641, %v615
        %v11778 = vadd.f32 %v11642, %v616
        %v11779 = vadd.f32 %v11643, %v617
        %v11780 = vadd.f32 %v11644, %v618
        %v11781 = vadd.f32 %v11645, %v619
        %v11782 = vadd.f32 %v11646, %v620
        %v11783 = vadd.f32 %v11647, %v621
        %v11784 = vadd.f32 %v11648, %v622
        %v11785 = vadd.f32 %v11649, %v623
        %v11786 = vadd.f32 %v11650, %v624
        %v11787 = vadd.f32 %v11651, %v625
        %v11788 = vadd.f32 %v11652, %v626
        %v11789 = vadd.f32 %v11653, %v627
        %v11790 = vadd.f32 %v11654, %v628
        %v11791 = vadd.f32 %v11655, %v629
        %v11792 = vadd.f32 %v11656, %v630
        %v11793 = vadd.f32 %v11657, %v631
        %v11794 = vadd.f32 %v11658, %v632
        %v11795 = vadd.f32 %v11659, %v633
        %v11796 = vadd.f32 %v11660, %v634
        %v11797 = vadd.f32 %v11661, %v635
        %v11798 = vadd.f32 %v11662, %v636
        %v11799 = vadd.f32 %v11663, %v637
        %v11800 = vadd.f32 %v11664, %v638
        %v11801 = vadd.f32 %v11665, %v639
        %v11802 = vadd.f32 %v11666, %v640
        %v11803 = vadd.f32 %v11667, %v641
        %v11804 = vadd.f32 %v11668, %v642
        %v11805 = vadd.f32 %v11669, %v643
        %v11806 = vadd.f32 %v11670, %v644
        %v11807 = vadd.f32 %v11671, %v645
        %v11808 = vadd.f32 %v11672, %v646
        %v11809 = vadd.f32 %v11673, %v647
        %v11810 = vadd.f32 %v11674, %v648
        %v11811 = vadd.f32 %v11675, %v649
        %v11812 = vadd.f32 %v11676, %v650
        %v11813 = vadd.f32 %v11677, %v651
        %v11814 = vadd.f32 %v11678, %v652
        %v11815 = vmax.f32 %v11679, 0.0
        %v11816 = vmax.f32 %v11680, 0.0
        %v11817 = vmax.f32 %v11681, 0.0
        %v11818 = vmax.f32 %v11682, 0.0
        %v11819 = vmax.f32 %v11683, 0.0
        %v11820 = vmax.f32 %v11684, 0.0
        %v11821 = vmax.f32 %v11685, 0.0
        %v11822 = vmax.f32 %v11686, 0.0
        %v11823 = vmax.f32 %v11687, 0.0
        %v11824 = vmax.f32 %v11688, 0.0
        %v11825 = vmax.f32 %v11689, 0.0
        %v11826 = vmax.f32 %v11690, 0.0
        %v11827 = vmax.f32 %v11691, 0.0
        %v11828 = vmax.f32 %v11692, 0.0
        %v11829 = vmax.f32 %v11693, 0.0
        %v11830 = vmax.f32 %v11694, 0.0
        %v11831 = vmax.f32 %v11695, 0.0
        %v11832 = vmax.f32 %v11696, 0.0
        %v11833 = vmax.f32 %v11697, 0.0
        %v11834 = vmax.f32 %v11698, 0.0
        %v11835 = vmax.f32 %v11699, 0.0
        %v11836 = vmax.f32 %v11700, 0.0
        %v11837 = vmax.f32 %v11701, 0.0
        %v11838 = vmax.f32 %v11702, 0.0
        %v11839 = vmax.f32 %v11703, 0.0
        %v11840 = vmax.f32 %v11704, 0.0
        %v11841 = vmax.f32 %v11705, 0.0
        %v11842 = vmax.f32 %v11706, 0.0
        %v11843 = vmax.f32 %v11707, 0.0
        %v11844 = vmax.f32 %v11708, 0.0
        %v11845 = vmax.f32 %v11709, 0.0
        %v11846 = vmax.f32 %v11710, 0.0
        %v11847 = vmax.f32 %v11711, 0.0
        %v11848 = vmax.f32 %v11712, 0.0
        %v11849 = vmax.f32 %v11713, 0.0
        %v11850 = vmax.f32 %v11714, 0.0
        %v11851 = vmax.f32 %v11715, 0.0
        %v11852 = vmax.f32 %v11716, 0.0
        %v11853 = vmax.f32 %v11717, 0.0
        %v11854 = vmax.f32 %v11718, 0.0
        %v11855 = vmax.f32 %v11719, 0.0
        %v11856 = vmax.f32 %v11720, 0.0
        %v11857 = vmax.f32 %v11721, 0.0
        %v11858 = vmax.f32 %v11722, 0.0
        %v11859 = vmax.f32 %v11723, 0.0
        %v11860 = vmax.f32 %v11724, 0.0
        %v11861 = vmax.f32 %v11725, 0.0
        %v11862 = vmax.f32 %v11726, 0.0
        %v11863 = vmax.f32 %v11727, 0.0
        %v11864 = vmax.f32 %v11728, 0.0
        %v11865 = vmax.f32 %v11729, 0.0
        %v11866 = vmax.f32 %v11730, 0.0
        %v11867 = vmax.f32 %v11731, 0.0
        %v11868 = vmax.f32 %v11732, 0.0
        %v11869 = vmax.f32 %v11733, 0.0
        %v11870 = vmax.f32 %v11734, 0.0
        %v11871 = vmax.f32 %v11735, 0.0
        %v11872 = vmax.f32 %v11736, 0.0
        %v11873 = vmax.f32 %v11737, 0.0
        %v11874 = vmax.f32 %v11738, 0.0
        %v11875 = vmax.f32 %v11739, 0.0
        %v11876 = vmax.f32 %v11740, 0.0
        %v11877 = vmax.f32 %v11741, 0.0
        %v11878 = vmax.f32 %v11742, 0.0
        %v11879 = vmax.f32 %v11743, 0.0
        %v11880 = vmax.f32 %v11744, 0.0
        %v11881 = vmax.f32 %v11745, 0.0
        %v11882 = vmax.f32 %v11746, 0.0
        %v11883 = vmax.f32 %v11747, 0.0
        %v11884 = vmax.f32 %v11748, 0.0
        %v11885 = vmax.f32 %v11749, 0.0
        %v11886 = vmax.f32 %v11750, 0.0
        %v11887 = vmax.f32 %v11751, 0.0
        %v11888 = vmax.f32 %v11752, 0.0
        %v11889 = vmax.f32 %v11753, 0.0
        %v11890 = vmax.f32 %v11754, 0.0
        %v11891 = vmax.f32 %v11755, 0.0
        %v11892 = vmax.f32 %v11756, 0.0
        %v11893 = vmax.f32 %v11757, 0.0
        %v11894 = vmax.f32 %v11758, 0.0
        %v11895 = vmax.f32 %v11759, 0.0
        %v11896 = vmax.f32 %v11760, 0.0
        %v11897 = vmax.f32 %v11761, 0.0
        %v11898 = vmax.f32 %v11762, 0.0
        %v11899 = vmax.f32 %v11763, 0.0
        %v11900 = vmax.f32 %v11764, 0.0
        %v11901 = vmax.f32 %v11765, 0.0
        %v11902 = vmax.f32 %v11766, 0.0
        %v11903 = vmax.f32 %v11767, 0.0
        %v11904 = vmax.f32 %v11768, 0.0
        %v11905 = vmax.f32 %v11769, 0.0
        %v11906 = vmax.f32 %v11770, 0.0
        %v11907 = vmax.f32 %v11771, 0.0
        %v11908 = vmax.f32 %v11772, 0.0
        %v11909 = vmax.f32 %v11773, 0.0
        %v11910 = vmax.f32 %v11774, 0.0
        %v11911 = vmax.f32 %v11775, 0.0
        %v11912 = vmax.f32 %v11776, 0.0
        %v11913 = vmax.f32 %v11777, 0.0
        %v11914 = vmax.f32 %v11778, 0.0
        %v11915 = vmax.f32 %v11779, 0.0
        %v11916 = vmax.f32 %v11780, 0.0
        %v11917 = vmax.f32 %v11781, 0.0
        %v11918 = vmax.f32 %v11782, 0.0
        %v11919 = vmax.f32 %v11783, 0.0
        %v11920 = vmax.f32 %v11784, 0.0
        %v11921 = vmax.f32 %v11785, 0.0
        %v11922 = vmax.f32 %v11786, 0.0
        %v11923 = vmax.f32 %v11787, 0.0
        %v11924 = vmax.f32 %v11788, 0.0
        %v11925 = vmax.f32 %v11789, 0.0
        %v11926 = vmax.f32 %v11790, 0.0
        %v11927 = vmax.f32 %v11791, 0.0
        %v11928 = vmax.f32 %v11792, 0.0
        %v11929 = vmax.f32 %v11793, 0.0
        %v11930 = vmax.f32 %v11794, 0.0
        %v11931 = vmax.f32 %v11795, 0.0
        %v11932 = vmax.f32 %v11796, 0.0
        %v11933 = vmax.f32 %v11797, 0.0
        %v11934 = vmax.f32 %v11798, 0.0
        %v11935 = vmax.f32 %v11799, 0.0
        %v11936 = vmax.f32 %v11800, 0.0
        %v11937 = vmax.f32 %v11801, 0.0
        %v11938 = vmax.f32 %v11802, 0.0
        %v11939 = vmax.f32 %v11803, 0.0
        %v11940 = vmax.f32 %v11804, 0.0
        %v11941 = vmax.f32 %v11805, 0.0
        %v11942 = vmax.f32 %v11806, 0.0
        %v11943 = vmax.f32 %v11807, 0.0
        %v11944 = vmax.f32 %v11808, 0.0
        %v11945 = vmax.f32 %v11809, 0.0
        %v11946 = vmax.f32 %v11810, 0.0
        %v11947 = vmax.f32 %v11811, 0.0
        %v11948 = vmax.f32 %v11812, 0.0
        %v11949 = vmax.f32 %v11813, 0.0
        %v11950 = vmax.f32 %v11814, 0.0
        %11951 = vst [vmem:[%s495] sm:$0xff] %v11815
        %11952 = vst [vmem:[%s495 + $0x8] sm:$0xff] %v11816
        %11953 = vst [vmem:[%s495 + $0x10] sm:$0xff] %v11817
        %11954 = vst [vmem:[%s495 + $0x18] sm:$0xff] %v11818
        %11955 = vst [vmem:[%s495 + $0x20] sm:$0xff] %v11819
        %11956 = vst [vmem:[%s495 + $0x28] sm:$0xff] %v11820
        %11957 = vst [vmem:[%s495 + $0x30] sm:$0xff] %v11821
        %11958 = vst [vmem:[%s495 + $0x38] sm:$0xff] %v11822
        %11959 = vst [vmem:[%s495 + $0x40] sm:$0xff] %v11823
        %11960 = vst [vmem:[%s495 + $0x48] sm:$0xff] %v11824
        %11961 = vst [vmem:[%s495 + $0x50] sm:$0xff] %v11825
        %11962 = vst [vmem:[%s495 + $0x58] sm:$0xff] %v11826
        %11963 = vst [vmem:[%s495 + $0x60] sm:$0xff] %v11827
        %11964 = vst [vmem:[%s495 + $0x68] sm:$0xff] %v11828
        %11965 = vst [vmem:[%s495 + $0x70] sm:$0xff] %v11829
        %11966 = vst [vmem:[%s495 + $0x78] sm:$0xff] %v11830
        %11967 = vst.msk [vmem:[%s495 + $0x80] sm:$0xff] %vm2309, %v11831
        %11968 = vst [vmem:[%s495 + $0x88] sm:$0xff] %v11832
        %11969 = vst [vmem:[%s495 + $0x90] sm:$0xff] %v11833
        %11970 = vst [vmem:[%s495 + $0x98] sm:$0xff] %v11834
        %11971 = vst [vmem:[%s495 + $0xa0] sm:$0xff] %v11835
        %11972 = vst [vmem:[%s495 + $0xa8] sm:$0xff] %v11836
        %11973 = vst [vmem:[%s495 + $0xb0] sm:$0xff] %v11837
        %11974 = vst [vmem:[%s495 + $0xb8] sm:$0xff] %v11838
        %11975 = vst [vmem:[%s495 + $0xc0] sm:$0xff] %v11839
        %11976 = vst [vmem:[%s495 + $0xc8] sm:$0xff] %v11840
        %11977 = vst [vmem:[%s495 + $0xd0] sm:$0xff] %v11841
        %11978 = vst [vmem:[%s495 + $0xd8] sm:$0xff] %v11842
        %11979 = vst [vmem:[%s495 + $0xe0] sm:$0xff] %v11843
        %11980 = vst [vmem:[%s495 + $0xe8] sm:$0xff] %v11844
        %11981 = vst [vmem:[%s495 + $0xf0] sm:$0xff] %v11845
        %11982 = vst [vmem:[%s495 + $0xf8] sm:$0xff] %v11846
        %11983 = vst [vmem:[%s495 + $0x100] sm:$0xff] %v11847
        %11984 = vst.msk [vmem:[%s495 + $0x108] sm:$0xff] %vm2309, %v11848
        %11985 = vst [vmem:[%s495 + $0x110] sm:$0xff] %v11849
        %11986 = vst [vmem:[%s495 + $0x118] sm:$0xff] %v11850
        %11987 = vst [vmem:[%s495 + $0x120] sm:$0xff] %v11851
        %11988 = vst [vmem:[%s495 + $0x128] sm:$0xff] %v11852
        %11989 = vst [vmem:[%s495 + $0x130] sm:$0xff] %v11853
        %11990 = vst [vmem:[%s495 + $0x138] sm:$0xff] %v11854
        %11991 = vst [vmem:[%s495 + $0x140] sm:$0xff] %v11855
        %11992 = vst [vmem:[%s495 + $0x148] sm:$0xff] %v11856
        %11993 = vst [vmem:[%s495 + $0x150] sm:$0xff] %v11857
        %11994 = vst [vmem:[%s495 + $0x158] sm:$0xff] %v11858
        %11995 = vst [vmem:[%s495 + $0x160] sm:$0xff] %v11859
        %11996 = vst [vmem:[%s495 + $0x168] sm:$0xff] %v11860
        %11997 = vst [vmem:[%s495 + $0x170] sm:$0xff] %v11861
        %11998 = vst [vmem:[%s495 + $0x178] sm:$0xff] %v11862
        %11999 = vst [vmem:[%s495 + $0x180] sm:$0xff] %v11863
        %12000 = vst [vmem:[%s495 + $0x188] sm:$0xff] %v11864
        %12001 = vst.msk [vmem:[%s495 + $0x190] sm:$0xff] %vm2309, %v11865
        %12002 = vst [vmem:[%s495 + $0x198] sm:$0xff] %v11866
        %12003 = vst [vmem:[%s495 + $0x1a0] sm:$0xff] %v11867
        %12004 = vst [vmem:[%s495 + $0x1a8] sm:$0xff] %v11868
        %12005 = vst [vmem:[%s495 + $0x1b0] sm:$0xff] %v11869
        %12006 = vst [vmem:[%s495 + $0x1b8] sm:$0xff] %v11870
        %12007 = vst [vmem:[%s495 + $0x1c0] sm:$0xff] %v11871
        %12008 = vst [vmem:[%s495 + $0x1c8] sm:$0xff] %v11872
        %12009 = vst [vmem:[%s495 + $0x1d0] sm:$0xff] %v11873
        %12010 = vst [vmem:[%s495 + $0x1d8] sm:$0xff] %v11874
        %12011 = vst [vmem:[%s495 + $0x1e0] sm:$0xff] %v11875
        %12012 = vst [vmem:[%s495 + $0x1e8] sm:$0xff] %v11876
        %12013 = vst [vmem:[%s495 + $0x1f0] sm:$0xff] %v11877
        %12014 = vst [vmem:[%s495 + $0x1f8] sm:$0xff] %v11878
        %12015 = vst [vmem:[%s495 + $0x200] sm:$0xff] %v11879
        %12016 = vst [vmem:[%s495 + $0x208] sm:$0xff] %v11880
        %12017 = vst [vmem:[%s495 + $0x210] sm:$0xff] %v11881
        %12018 = vst.msk [vmem:[%s495 + $0x218] sm:$0xff] %vm2309, %v11882
        %12019 = vst [vmem:[%s495 + $0x220] sm:$0xff] %v11883
        %12020 = vst [vmem:[%s495 + $0x228] sm:$0xff] %v11884
        %12021 = vst [vmem:[%s495 + $0x230] sm:$0xff] %v11885
        %12022 = vst [vmem:[%s495 + $0x238] sm:$0xff] %v11886
        %12023 = vst [vmem:[%s495 + $0x240] sm:$0xff] %v11887
        %12024 = vst [vmem:[%s495 + $0x248] sm:$0xff] %v11888
        %12025 = vst [vmem:[%s495 + $0x250] sm:$0xff] %v11889
        %12026 = vst [vmem:[%s495 + $0x258] sm:$0xff] %v11890
        %12027 = vst [vmem:[%s495 + $0x260] sm:$0xff] %v11891
        %12028 = vst [vmem:[%s495 + $0x268] sm:$0xff] %v11892
        %12029 = vst [vmem:[%s495 + $0x270] sm:$0xff] %v11893
        %12030 = vst [vmem:[%s495 + $0x278] sm:$0xff] %v11894
        %12031 = vst [vmem:[%s495 + $0x280] sm:$0xff] %v11895
        %12032 = vst [vmem:[%s495 + $0x288] sm:$0xff] %v11896
        %12033 = vst [vmem:[%s495 + $0x290] sm:$0xff] %v11897
        %12034 = vst [vmem:[%s495 + $0x298] sm:$0xff] %v11898
        %12035 = vst.msk [vmem:[%s495 + $0x2a0] sm:$0xff] %vm2309, %v11899
        %12036 = vst [vmem:[%s495 + $0x2a8] sm:$0xff] %v11900
        %12037 = vst [vmem:[%s495 + $0x2b0] sm:$0xff] %v11901
        %12038 = vst [vmem:[%s495 + $0x2b8] sm:$0xff] %v11902
        %12039 = vst [vmem:[%s495 + $0x2c0] sm:$0xff] %v11903
        %12040 = vst [vmem:[%s495 + $0x2c8] sm:$0xff] %v11904
        %12041 = vst [vmem:[%s495 + $0x2d0] sm:$0xff] %v11905
        %12042 = vst [vmem:[%s495 + $0x2d8] sm:$0xff] %v11906
        %12043 = vst [vmem:[%s495 + $0x2e0] sm:$0xff] %v11907
        %12044 = vst [vmem:[%s495 + $0x2e8] sm:$0xff] %v11908
        %12045 = vst [vmem:[%s495 + $0x2f0] sm:$0xff] %v11909
        %12046 = vst [vmem:[%s495 + $0x2f8] sm:$0xff] %v11910
        %12047 = vst [vmem:[%s495 + $0x300] sm:$0xff] %v11911
        %12048 = vst [vmem:[%s495 + $0x308] sm:$0xff] %v11912
        %12049 = vst [vmem:[%s495 + $0x310] sm:$0xff] %v11913
        %12050 = vst [vmem:[%s495 + $0x318] sm:$0xff] %v11914
        %12051 = vst [vmem:[%s495 + $0x320] sm:$0xff] %v11915
        %12052 = vst.msk [vmem:[%s495 + $0x328] sm:$0xff] %vm2309, %v11916
        %12053 = vst [vmem:[%s495 + $0x330] sm:$0xff] %v11917
        %12054 = vst [vmem:[%s495 + $0x338] sm:$0xff] %v11918
        %12055 = vst [vmem:[%s495 + $0x340] sm:$0xff] %v11919
        %12056 = vst [vmem:[%s495 + $0x348] sm:$0xff] %v11920
        %12057 = vst [vmem:[%s495 + $0x350] sm:$0xff] %v11921
        %12058 = vst [vmem:[%s495 + $0x358] sm:$0xff] %v11922
        %12059 = vst [vmem:[%s495 + $0x360] sm:$0xff] %v11923
        %12060 = vst [vmem:[%s495 + $0x368] sm:$0xff] %v11924
        %12061 = vst [vmem:[%s495 + $0x370] sm:$0xff] %v11925
        %12062 = vst [vmem:[%s495 + $0x378] sm:$0xff] %v11926
        %12063 = vst [vmem:[%s495 + $0x380] sm:$0xff] %v11927
        %12064 = vst [vmem:[%s495 + $0x388] sm:$0xff] %v11928
        %12065 = vst [vmem:[%s495 + $0x390] sm:$0xff] %v11929
        %12066 = vst [vmem:[%s495 + $0x398] sm:$0xff] %v11930
        %12067 = vst [vmem:[%s495 + $0x3a0] sm:$0xff] %v11931
        %12068 = vst [vmem:[%s495 + $0x3a8] sm:$0xff] %v11932
        %12069 = vst.msk [vmem:[%s495 + $0x3b0] sm:$0xff] %vm2309, %v11933
        %12070 = vst [vmem:[%s495 + $0x3b8] sm:$0xff] %v11934
        %12071 = vst [vmem:[%s495 + $0x3c0] sm:$0xff] %v11935
        %12072 = vst [vmem:[%s495 + $0x3c8] sm:$0xff] %v11936
        %12073 = vst [vmem:[%s495 + $0x3d0] sm:$0xff] %v11937
        %12074 = vst [vmem:[%s495 + $0x3d8] sm:$0xff] %v11938
        %12075 = vst [vmem:[%s495 + $0x3e0] sm:$0xff] %v11939
        %12076 = vst [vmem:[%s495 + $0x3e8] sm:$0xff] %v11940
        %12077 = vst [vmem:[%s495 + $0x3f0] sm:$0xff] %v11941
        %12078 = vst [vmem:[%s495 + $0x3f8] sm:$0xff] %v11942
        %12079 = vst [vmem:[%s495 + $0x400] sm:$0xff] %v11943
        %12080 = vst [vmem:[%s495 + $0x408] sm:$0xff] %v11944
        %12081 = vst [vmem:[%s495 + $0x410] sm:$0xff] %v11945
        %12082 = vst [vmem:[%s495 + $0x418] sm:$0xff] %v11946
        %12083 = vst [vmem:[%s495 + $0x420] sm:$0xff] %v11947
        %12084 = vst [vmem:[%s495 + $0x428] sm:$0xff] %v11948
        %12085 = vst [vmem:[%s495 + $0x430] sm:$0xff] %v11949
        %12086 = vst.msk [vmem:[%s495 + $0x438] sm:$0xff] %vm2309, %v11950
        %s12087 = sand.u32 %s345, 1
        %s12088 = scalar_lea.sflag [#allocation3], %s12087
        %s12089 = sand.u32 %s345, 1
        %s12090 = smul.addr %s12089, 1088
        %s12091 = scalar_lea.vmem [#allocation2], %s12090
        // Predicated region
        $region77: #{block8_forward.1} parent=75 // pred_check
          %p12092 = pneg %p355
        $region78: #{block8_forward.1} parent=75 // pred_check_branch
          %12094 = sbr.rel (%p12092) target = $region80
        $region79: #{block8_forward.1} parent=75 // pred_region
          %s12095 = smul.u32 8, %s28
          %s12097 = ssub.s32 17408, 17408
          %12098 = vsyncadd %s12088, %s12097
          %s12099 = smul.addr %s12095, 17
          %s12100 = smul.addr %s12099, 128
          %s12101 = scalar_lea.hbm %s14, %s12100
          %s12102 = sshll.u32 %s12091, 4
          %s12103 = int_to_ptr.vmem [resolvable:$true] %s12102
          %12108 = dma.vmem_to_hbm [thread:$0]  %s12103, 17408, %s12101, %s12088, 2176, 2176, 136
        $region80: #{block8_forward.1} parent=75 // pred_fallthru
          _
      $region76: #{block8_forward.1} parent=5 // pred_fallthru
        _
      %p12109 = scmp.le.s32.totalorder 2, %s23
      // Predicated region
      $region81: #{block8_forward.1} parent=5 // pred_check
        %p12110 = pneg %p12109
      $region82: #{block8_forward.1} parent=5 // pred_check_branch
        %12112 = sbr.rel (%p12110) target = $region84
      $region83: #{block8_forward.1} parent=5 // pred_region
        %s12113 = ssub.s32 %s23, 2
        // Predicated region
        $region85: #{block8_forward.1} parent=83 // pred_check
          %p12114 = pneg %p361
        $region86: #{block8_forward.1} parent=83 // pred_check_branch
          %12116 = sbr.rel (%p12114) target = $region88
        $region87: #{block8_forward.1} parent=83 // pred_region
          %s12117 = sand.u32 %s346, 1
          %s12118 = scalar_lea.sflag [#allocation3], %s12117
          %s12119 = sand.u32 %s346, 1
          %s12120 = smul.addr %s12119, 1088
          %s12121 = scalar_lea.vmem [#allocation2], %s12120
          %12122 = dma.done %s12118, 17408
        $region88: #{block8_forward.1} parent=83 // pred_fallthru
          _
      $region84: #{block8_forward.1} parent=5 // pred_fallthru
        _
    $region6: #{block8_forward.1} parent=1 // loop_footer
      %s27 = sadd.s32 1, %s23
    $region7: #{block8_forward.1} parent=1 // loop_footer_branch
      %22 = sbr.rel target = $region3
    $region8: #{block8_forward.1} parent=1 // loop_exit
      _
    %12123 = vsyncpa [#allocation3], 1
    %s12124 = scalar_lea.sflag [#allocation3], 1
    %12125 = vsyncpa %s12124, 1

</llo_original>
